<compile_context>
chip_gen: v6e
topology: v6e:2x2x1
jax: 0.10.0
libtpu: 0.0.40
codegen_flags: <defaults>
</compile_context>

<pallas_src>
import jax
import jax.numpy as jnp
from jax.experimental import pallas as pl
from jax.experimental.pallas import tpu as pltpu


def _round_up(n, m):
    return ((n + m - 1) // m) * m


def dqn_kernel(x_ref, w1_ref, b1_ref, w2_ref, b2_ref, w3_ref, b3_ref, o_ref):
    # Layer 1: Linear + ReLU  (bf16 MXU inputs, f32 accumulation).
    x = x_ref[...].astype(jnp.bfloat16)
    h1 = jnp.dot(x, w1_ref[...], preferred_element_type=jnp.float32)
    h1 = jnp.maximum(h1 + b1_ref[...], 0.0)
    # Dropout(0.2): identity (eval-mode semantics).

    # Layer 2: Linear + ReLU.
    h2 = jnp.dot(h1.astype(jnp.bfloat16), w2_ref[...],
                 preferred_element_type=jnp.float32)
    h2 = jnp.maximum(h2 + b2_ref[...], 0.0)
    # Dropout(0.2): identity (eval-mode semantics).

    # Layer 3: Linear (Q-values).
    out = jnp.dot(h2.astype(jnp.bfloat16), w3_ref[...],
                  preferred_element_type=jnp.float32)
    o_ref[...] = (out + b3_ref[...]).astype(o_ref.dtype)


def _choose_batch_tiling(B, block_b):
    """Padding-aware batch tiling; >= 2 even tiles when possible (v7x megacore)."""
    b8 = _round_up(max(B, 1), 8)            # sublane-aligned batch
    n_tiles = max(1, pl.cdiv(b8, block_b))  # minimum tiles under the cap
    if b8 >= 16:
        n_tiles = max(n_tiles, 2)           # keep both v7x TCs busy
        if n_tiles % 2 == 1:
            n_tiles += 1                    # even split across the 2 TCs
    tb = _round_up(pl.cdiv(b8, n_tiles), 8)  # balanced tiles -> < 8 rows pad/tile
    n_tiles = pl.cdiv(b8, tb)
    return tb, n_tiles, tb * n_tiles


def dqn_forward(x, params, *, block_b=1024, out_dtype=jnp.float32):
    """Run the fused 3-layer MLP, tiled over the batch dimension.

    x: (B, feature_dim + 81) float32
    params: dict with w1 (F,1024), b1 (1,1024), w2 (1024,1024), b2 (1,1024),
            w3 (1024,outputs), b3 (1,outputs)  -- all float32.
    """
    w1, b1 = params["w1"], params["b1"]
    w2, b2 = params["w2"], params["b2"]
    w3, b3 = params["w3"], params["b3"]

    B, in1 = x.shape
    hidden = w1.shape[1]
    outputs = w3.shape[1]

    # --- Lane-dense contraction: pad in_features up to a multiple of 128.
    in_pad = _round_up(in1, 128)
    if in_pad != in1:
        x = jnp.pad(x, ((0, 0), (0, in_pad - in1)))
        w1 = jnp.pad(w1, ((0, in_pad - in1), (0, 0)))

    # --- Lane-dense output: pad tiny `outputs` dim up to a multiple of 128.
    o_pad = _round_up(max(outputs, 1), 128)
    if o_pad != outputs:
        w3 = jnp.pad(w3, ((0, 0), (0, o_pad - outputs)))
        b3 = jnp.pad(b3, ((0, 0), (0, o_pad - outputs)))

    # --- bf16 weights (halves the dominant weight DMA); f32 accumulation in-kernel.
    w1 = w1.astype(jnp.bfloat16)
    w2 = w2.astype(jnp.bfloat16)
    w3 = w3.astype(jnp.bfloat16)

    # --- Batch tiling (padding-aware, megacore-friendly).
    tb, n_tiles, b_pad = _choose_batch_tiling(B, block_b)
    if b_pad != B:
        x = jnp.pad(x, ((0, b_pad - B), (0, 0)))

    out_itemsize = jnp.dtype(out_dtype).itemsize
    cost = pl.CostEstimate(
        flops=2 * b_pad * (in_pad * hidden + hidden * hidden + hidden * o_pad),
        transcendentals=0,
        bytes_accessed=(x.size * 4 + b_pad * o_pad * out_itemsize
                        + w1.size * 2 + w2.size * 2 + w3.size * 2
                        + b1.size * 4 + b2.size * 4 + b3.size * 4),
    )

    buffered_cls = getattr(pl, "Buffered", None)

    def resident_spec(shape, single_buffered):
        # Constant index_map -> DMA'd once, VMEM-resident across batch tiles.
        if single_buffered and buffered_cls is not None:
            return pl.BlockSpec(shape, lambda i: (0, 0),
                                pipeline_mode=buffered_cls(1))
        return pl.BlockSpec(shape, lambda i: (0, 0))

    def run(single_buffered):
        return pl.pallas_call(
            dqn_kernel,
            out_shape=jax.ShapeDtypeStruct((b_pad, o_pad), out_dtype),
            grid_spec=pltpu.PrefetchScalarGridSpec(
                num_scalar_prefetch=0,
                grid=(n_tiles,),
                in_specs=[
                    # x: tiled over batch.
                    pl.BlockSpec((tb, in_pad), lambda i: (i, 0)),
                    # Weights / biases: whole-array, constant block index.
                    resident_spec(w1.shape, single_buffered),
                    resident_spec(b1.shape, single_buffered),
                    resident_spec(w2.shape, single_buffered),
                    resident_spec(b2.shape, single_buffered),
                    resident_spec(w3.shape, single_buffered),
                    resident_spec(b3.shape, single_buffered),
                ],
                out_specs=pl.BlockSpec((tb, o_pad), lambda i: (i, 0)),
            ),
            compiler_params=pltpu.CompilerParams(
                dimension_semantics=("parallel",),   # batch tiles shard across TCs
                # 48 MiB scoped VMEM: fits tb<=1024 (weights ~2.5 MiB + x/out
                # buffers ~2 MiB + ~12 MiB f32/bf16 temps) and stays below the
                # v7x 64 MiB physical per-TC VMEM; v5e/v6e have 128 MiB.
                vmem_limit_bytes=48 << 20,
            ),
            cost_estimate=cost,
        )(x, w1, b1, w2, b2, w3, b3)

    try:
        # Single-buffered resident weights (saves ~2.5 MiB of VMEM headroom).
        out = run(True)
    except Exception:
        # Fallback: default (double-buffered) specs if Buffered(1) is rejected.
        out = run(False)

    # Strip batch / output padding.
    return out[:B, :outputs]


def init_params(key, feature_dim, outputs):
    """Deterministic parameter init (torch.nn.Linear-style uniform fan-in)."""
    in1 = feature_dim + 81
    dims = [(in1, 1024), (1024, 1024), (1024, outputs)]
    params = {}
    for i, (fin, fout) in enumerate(dims, start=1):
        key, kw, kb = jax.random.split(key, 3)
        bound = 1.0 / jnp.sqrt(fin)
        params[f"w{i}"] = jax.random.uniform(
            kw, (fin, fout), jnp.float32, -bound, bound)
        params[f"b{i}"] = jax.random.uniform(
            kb, (1, fout), jnp.float32, -bound, bound)
    return params


if __name__ == "__main__":
    # Small, deterministic example consistent with the module:
    # feature_dim = 47  ->  in_features = 47 + 81 = 128
    B = 2
    feature_dim = 47
    outputs = 8

    key = jax.random.PRNGKey(0)
    key, kx = jax.random.split(key)
    x = jax.random.normal(kx, (B, feature_dim + 81), dtype=jnp.float32)

    params = init_params(key, feature_dim, outputs)

    y = dqn_forward(x, params)
    jax.block_until_ready(y)

    # Reference in plain JAX, matching the kernel's bf16-weight /
    # bf16-activation-input, f32-accumulate numerics (eval-mode dropout).
    w1r = params["w1"].astype(jnp.bfloat16).astype(jnp.float32)
    w2r = params["w2"].astype(jnp.bfloat16).astype(jnp.float32)
    w3r = params["w3"].astype(jnp.bfloat16).astype(jnp.float32)
    xb = x.astype(jnp.bfloat16).astype(jnp.float32)
    h1 = jnp.maximum(xb @ w1r + params["b1"], 0.0)
    h1 = h1.astype(jnp.bfloat16).astype(jnp.float32)
    h2 = jnp.maximum(h1 @ w2r + params["b2"], 0.0)
    h2 = h2.astype(jnp.bfloat16).astype(jnp.float32)
    y_ref = h2 @ w3r + params["b3"]

    assert y.shape == (B, outputs)
    assert jnp.allclose(y, y_ref, atol=2e-3, rtol=2e-3), \
        float(jnp.max(jnp.abs(y - y_ref)))

    print("KERNEL_OK")
</pallas_src>

<mosaic_0001>
module attributes {stable_mosaic.version = 11 : i64} {
  func.func @dqn_kernel(%arg0: i32, %arg1: memref<8x128xf32, #tpu.memory_space<vmem>>, %arg2: memref<128x1024xbf16, #tpu.memory_space<vmem>>, %arg3: memref<1x1024xf32, #tpu.memory_space<vmem>>, %arg4: memref<1024x1024xbf16, #tpu.memory_space<vmem>>, %arg5: memref<1x1024xf32, #tpu.memory_space<vmem>>, %arg6: memref<1024x128xbf16, #tpu.memory_space<vmem>>, %arg7: memref<1x128xf32, #tpu.memory_space<vmem>>, %arg8: memref<8x128xf32, #tpu.memory_space<vmem>>) attributes {dimension_semantics = [#tpu.dimension_semantics<parallel>], iteration_bounds = array<i64: 1>, scalar_prefetch = 0 : i64, scratch_operands = 0 : i64, tpu.core_type = #tpu.core_type<tc>, window_params = [{transform_indices = @transform_0, window_bounds = array<i64: 8, 128>}, {pipeline_mode = #tpu.pipeline_mode<synchronous>, transform_indices = @transform_1, window_bounds = array<i64: 128, 1024>}, {pipeline_mode = #tpu.pipeline_mode<synchronous>, transform_indices = @transform_2, window_bounds = array<i64: 1, 1024>}, {pipeline_mode = #tpu.pipeline_mode<synchronous>, transform_indices = @transform_3, window_bounds = array<i64: 1024, 1024>}, {pipeline_mode = #tpu.pipeline_mode<synchronous>, transform_indices = @transform_4, window_bounds = array<i64: 1, 1024>}, {pipeline_mode = #tpu.pipeline_mode<synchronous>, transform_indices = @transform_5, window_bounds = array<i64: 1024, 128>}, {pipeline_mode = #tpu.pipeline_mode<synchronous>, transform_indices = @transform_6, window_bounds = array<i64: 1, 128>}, {transform_indices = @transform_7, window_bounds = array<i64: 8, 128>}]} {
    %c0 = arith.constant 0 : index
    %c0_0 = arith.constant 0 : index
    %0 = vector.load %arg1[%c0, %c0_0] : memref<8x128xf32, #tpu.memory_space<vmem>>, vector<8x128xf32>
    %1 = arith.truncf %0 : vector<8x128xf32> to vector<8x128xbf16>
    %c0_1 = arith.constant 0 : index
    %c0_2 = arith.constant 0 : index
    %2 = vector.load %arg2[%c0_1, %c0_2] : memref<128x1024xbf16, #tpu.memory_space<vmem>>, vector<128x1024xbf16>
    %cst = arith.constant dense<0.000000e+00> : vector<8x1024xf32>
    %3 = tpu.matmul %1, %2, %cst {dimension_numbers = #tpu.dot_dimension_numbers<[1], [0], [0], [1], [0, 0, 1, 1], [], []>} : vector<8x128xbf16>, vector<128x1024xbf16>, vector<8x1024xf32> -> vector<8x1024xf32>
    %c0_3 = arith.constant 0 : index
    %c0_4 = arith.constant 0 : index
    %4 = vector.load %arg3[%c0_3, %c0_4] : memref<1x1024xf32, #tpu.memory_space<vmem>>, vector<1x1024xf32>
    %5 = vector.broadcast %4 : vector<1x1024xf32> to vector<8x1024xf32>
    %6 = arith.addf %3, %5 : vector<8x1024xf32>
    %cst_5 = arith.constant 0.000000e+00 : f32
    %7 = vector.broadcast %cst_5 : f32 to vector<8x1024xf32>
    %8 = arith.maximumf %6, %7 : vector<8x1024xf32>
    %9 = arith.truncf %8 : vector<8x1024xf32> to vector<8x1024xbf16>
    %c0_6 = arith.constant 0 : index
    %c0_7 = arith.constant 0 : index
    %10 = vector.load %arg4[%c0_6, %c0_7] : memref<1024x1024xbf16, #tpu.memory_space<vmem>>, vector<1024x1024xbf16>
    %cst_8 = arith.constant dense<0.000000e+00> : vector<8x1024xf32>
    %11 = tpu.matmul %9, %10, %cst_8 {dimension_numbers = #tpu.dot_dimension_numbers<[1], [0], [0], [1], [0, 0, 1, 1], [], []>} : vector<8x1024xbf16>, vector<1024x1024xbf16>, vector<8x1024xf32> -> vector<8x1024xf32>
    %c0_9 = arith.constant 0 : index
    %c0_10 = arith.constant 0 : index
    %12 = vector.load %arg5[%c0_9, %c0_10] : memref<1x1024xf32, #tpu.memory_space<vmem>>, vector<1x1024xf32>
    %13 = vector.broadcast %12 : vector<1x1024xf32> to vector<8x1024xf32>
    %14 = arith.addf %11, %13 : vector<8x1024xf32>
    %cst_11 = arith.constant 0.000000e+00 : f32
    %15 = vector.broadcast %cst_11 : f32 to vector<8x1024xf32>
    %16 = arith.maximumf %14, %15 : vector<8x1024xf32>
    %17 = arith.truncf %16 : vector<8x1024xf32> to vector<8x1024xbf16>
    %c0_12 = arith.constant 0 : index
    %c0_13 = arith.constant 0 : index
    %18 = vector.load %arg6[%c0_12, %c0_13] : memref<1024x128xbf16, #tpu.memory_space<vmem>>, vector<1024x128xbf16>
    %cst_14 = arith.constant dense<0.000000e+00> : vector<8x128xf32>
    %19 = tpu.matmul %17, %18, %cst_14 {dimension_numbers = #tpu.dot_dimension_numbers<[1], [0], [0], [1], [0, 0, 1, 1], [], []>} : vector<8x1024xbf16>, vector<1024x128xbf16>, vector<8x128xf32> -> vector<8x128xf32>
    %c0_15 = arith.constant 0 : index
    %c0_16 = arith.constant 0 : index
    %20 = vector.load %arg7[%c0_15, %c0_16] : memref<1x128xf32, #tpu.memory_space<vmem>>, vector<1x128xf32>
    %21 = vector.broadcast %20 : vector<1x128xf32> to vector<8x128xf32>
    %22 = arith.addf %19, %21 : vector<8x128xf32>
    %c0_17 = arith.constant 0 : index
    %c0_18 = arith.constant 0 : index
    %23 = vector.load %arg8[%c0_17, %c0_18] : memref<8x128xf32, #tpu.memory_space<vmem>>, vector<8x128xf32>
    tpu.vector_store %arg8[%c0_17, %c0_18], %22 {strides = array<i32>} : memref<8x128xf32, #tpu.memory_space<vmem>>, vector<8x128xf32>,
    return
  }
  func.func @transform_0(%arg0: i32) -> (i32, i32) {
    %c0_i32 = arith.constant 0 : i32
    %c0_i32_0 = arith.constant 0 : i32
    return %arg0, %c0_i32 : i32, i32
  }
  func.func @transform_1(%arg0: i32) -> (i32, i32) {
    %c0_i32 = arith.constant 0 : i32
    %c0_i32_0 = arith.constant 0 : i32
    %c0_i32_1 = arith.constant 0 : i32
    return %c0_i32, %c0_i32_0 : i32, i32
  }
  func.func @transform_2(%arg0: i32) -> (i32, i32) {
    %c0_i32 = arith.constant 0 : i32
    %c0_i32_0 = arith.constant 0 : i32
    %c0_i32_1 = arith.constant 0 : i32
    return %c0_i32, %c0_i32_0 : i32, i32
  }
  func.func @transform_3(%arg0: i32) -> (i32, i32) {
    %c0_i32 = arith.constant 0 : i32
    %c0_i32_0 = arith.constant 0 : i32
    %c0_i32_1 = arith.constant 0 : i32
    return %c0_i32, %c0_i32_0 : i32, i32
  }
  func.func @transform_4(%arg0: i32) -> (i32, i32) {
    %c0_i32 = arith.constant 0 : i32
    %c0_i32_0 = arith.constant 0 : i32
    %c0_i32_1 = arith.constant 0 : i32
    return %c0_i32, %c0_i32_0 : i32, i32
  }
  func.func @transform_5(%arg0: i32) -> (i32, i32) {
    %c0_i32 = arith.constant 0 : i32
    %c0_i32_0 = arith.constant 0 : i32
    %c0_i32_1 = arith.constant 0 : i32
    return %c0_i32, %c0_i32_0 : i32, i32
  }
  func.func @transform_6(%arg0: i32) -> (i32, i32) {
    %c0_i32 = arith.constant 0 : i32
    %c0_i32_0 = arith.constant 0 : i32
    %c0_i32_1 = arith.constant 0 : i32
    return %c0_i32, %c0_i32_0 : i32, i32
  }
  func.func @transform_7(%arg0: i32) -> (i32, i32) {
    %c0_i32 = arith.constant 0 : i32
    %c0_i32_0 = arith.constant 0 : i32
    return %arg0, %c0_i32 : i32, i32
  }
}

module attributes {stable_mosaic.version = 11 : i64} {
  func.func @dqn_kernel(%arg0: i32, %arg1: memref<8x128xf32, #tpu.memory_space<vmem>>, %arg2: memref<128x1024xbf16, #tpu.memory_space<vmem>>, %arg3: memref<1x1024xf32, #tpu.memory_space<vmem>>, %arg4: memref<1024x1024xbf16, #tpu.memory_space<vmem>>, %arg5: memref<1x1024xf32, #tpu.memory_space<vmem>>, %arg6: memref<1024x128xbf16, #tpu.memory_space<vmem>>, %arg7: memref<1x128xf32, #tpu.memory_space<vmem>>, %arg8: memref<8x128xf32, #tpu.memory_space<vmem>>) attributes {dimension_semantics = [#tpu.dimension_semantics<parallel>], iteration_bounds = array<i64: 1>, scalar_prefetch = 0 : i64, scratch_operands = 0 : i64, tpu.core_type = #tpu.core_type<tc>, window_params = [{transform_indices = @transform_0, window_bounds = array<i64: 8, 128>}, {pipeline_mode = #tpu.pipeline_mode<synchronous>, transform_indices = @transform_1, window_bounds = array<i64: 128, 1024>}, {pipeline_mode = #tpu.pipeline_mode<synchronous>, transform_indices = @transform_2, window_bounds = array<i64: 1, 1024>}, {pipeline_mode = #tpu.pipeline_mode<synchronous>, transform_indices = @transform_3, window_bounds = array<i64: 1024, 1024>}, {pipeline_mode = #tpu.pipeline_mode<synchronous>, transform_indices = @transform_4, window_bounds = array<i64: 1, 1024>}, {pipeline_mode = #tpu.pipeline_mode<synchronous>, transform_indices = @transform_5, window_bounds = array<i64: 1024, 128>}, {pipeline_mode = #tpu.pipeline_mode<synchronous>, transform_indices = @transform_6, window_bounds = array<i64: 1, 128>}, {transform_indices = @transform_7, window_bounds = array<i64: 8, 128>}]} {
    %c0 = arith.constant 0 : index
    %c0_0 = arith.constant 0 : index
    %0 = vector.load %arg1[%c0, %c0_0] : memref<8x128xf32, #tpu.memory_space<vmem>>, vector<8x128xf32>
    %1 = arith.truncf %0 : vector<8x128xf32> to vector<8x128xbf16>
    %c0_1 = arith.constant 0 : index
    %c0_2 = arith.constant 0 : index
    %2 = vector.load %arg2[%c0_1, %c0_2] : memref<128x1024xbf16, #tpu.memory_space<vmem>>, vector<128x1024xbf16>
    %cst = arith.constant dense<0.000000e+00> : vector<8x1024xf32>
    %3 = tpu.matmul %1, %2, %cst {dimension_numbers = #tpu.dot_dimension_numbers<[1], [0], [0], [1], [0, 0, 1, 1], [], []>} : vector<8x128xbf16>, vector<128x1024xbf16>, vector<8x1024xf32> -> vector<8x1024xf32>
    %c0_3 = arith.constant 0 : index
    %c0_4 = arith.constant 0 : index
    %4 = vector.load %arg3[%c0_3, %c0_4] : memref<1x1024xf32, #tpu.memory_space<vmem>>, vector<1x1024xf32>
    %5 = vector.broadcast %4 : vector<1x1024xf32> to vector<8x1024xf32>
    %6 = arith.addf %3, %5 : vector<8x1024xf32>
    %cst_5 = arith.constant 0.000000e+00 : f32
    %7 = vector.broadcast %cst_5 : f32 to vector<8x1024xf32>
    %8 = arith.maximumf %6, %7 : vector<8x1024xf32>
    %9 = arith.truncf %8 : vector<8x1024xf32> to vector<8x1024xbf16>
    %c0_6 = arith.constant 0 : index
    %c0_7 = arith.constant 0 : index
    %10 = vector.load %arg4[%c0_6, %c0_7] : memref<1024x1024xbf16, #tpu.memory_space<vmem>>, vector<1024x1024xbf16>
    %cst_8 = arith.constant dense<0.000000e+00> : vector<8x1024xf32>
    %11 = tpu.matmul %9, %10, %cst_8 {dimension_numbers = #tpu.dot_dimension_numbers<[1], [0], [0], [1], [0, 0, 1, 1], [], []>} : vector<8x1024xbf16>, vector<1024x1024xbf16>, vector<8x1024xf32> -> vector<8x1024xf32>
    %c0_9 = arith.constant 0 : index
    %c0_10 = arith.constant 0 : index
    %12 = vector.load %arg5[%c0_9, %c0_10] : memref<1x1024xf32, #tpu.memory_space<vmem>>, vector<1x1024xf32>
    %13 = vector.broadcast %12 : vector<1x1024xf32> to vector<8x1024xf32>
    %14 = arith.addf %11, %13 : vector<8x1024xf32>
    %cst_11 = arith.constant 0.000000e+00 : f32
    %15 = vector.broadcast %cst_11 : f32 to vector<8x1024xf32>
    %16 = arith.maximumf %14, %15 : vector<8x1024xf32>
    %17 = arith.truncf %16 : vector<8x1024xf32> to vector<8x1024xbf16>
    %c0_12 = arith.constant 0 : index
    %c0_13 = arith.constant 0 : index
    %18 = vector.load %arg6[%c0_12, %c0_13] : memref<1024x128xbf16, #tpu.memory_space<vmem>>, vector<1024x128xbf16>
    %cst_14 = arith.constant dense<0.000000e+00> : vector<8x128xf32>
    %19 = tpu.matmul %17, %18, %cst_14 {dimension_numbers = #tpu.dot_dimension_numbers<[1], [0], [0], [1], [0, 0, 1, 1], [], []>} : vector<8x1024xbf16>, vector<1024x128xbf16>, vector<8x128xf32> -> vector<8x128xf32>
    %c0_15 = arith.constant 0 : index
    %c0_16 = arith.constant 0 : index
    %20 = vector.load %arg7[%c0_15, %c0_16] : memref<1x128xf32, #tpu.memory_space<vmem>>, vector<1x128xf32>
    %21 = vector.broadcast %20 : vector<1x128xf32> to vector<8x128xf32>
    %22 = arith.addf %19, %21 : vector<8x128xf32>
    %c0_17 = arith.constant 0 : index
    %c0_18 = arith.constant 0 : index
    %23 = vector.load %arg8[%c0_17, %c0_18] : memref<8x128xf32, #tpu.memory_space<vmem>>, vector<8x128xf32>
    tpu.vector_store %arg8[%c0_17, %c0_18], %22 {strides = array<i32>} : memref<8x128xf32, #tpu.memory_space<vmem>>, vector<8x128xf32>,
    return
  }
  func.func @transform_0(%arg0: i32) -> (i32, i32) {
    %c0_i32 = arith.constant 0 : i32
    %c0_i32_0 = arith.constant 0 : i32
    return %arg0, %c0_i32 : i32, i32
  }
  func.func @transform_1(%arg0: i32) -> (i32, i32) {
    %c0_i32 = arith.constant 0 : i32
    %c0_i32_0 = arith.constant 0 : i32
    %c0_i32_1 = arith.constant 0 : i32
    return %c0_i32, %c0_i32_0 : i32, i32
  }
  func.func @transform_2(%arg0: i32) -> (i32, i32) {
    %c0_i32 = arith.constant 0 : i32
    %c0_i32_0 = arith.constant 0 : i32
    %c0_i32_1 = arith.constant 0 : i32
    return %c0_i32, %c0_i32_0 : i32, i32
  }
  func.func @transform_3(%arg0: i32) -> (i32, i32) {
    %c0_i32 = arith.constant 0 : i32
    %c0_i32_0 = arith.constant 0 : i32
    %c0_i32_1 = arith.constant 0 : i32
    return %c0_i32, %c0_i32_0 : i32, i32
  }
  func.func @transform_4(%arg0: i32) -> (i32, i32) {
    %c0_i32 = arith.constant 0 : i32
    %c0_i32_0 = arith.constant 0 : i32
    %c0_i32_1 = arith.constant 0 : i32
    return %c0_i32, %c0_i32_0 : i32, i32
  }
  func.func @transform_5(%arg0: i32) -> (i32, i32) {
    %c0_i32 = arith.constant 0 : i32
    %c0_i32_0 = arith.constant 0 : i32
    %c0_i32_1 = arith.constant 0 : i32
    return %c0_i32, %c0_i32_0 : i32, i32
  }
  func.func @transform_6(%arg0: i32) -> (i32, i32) {
    %c0_i32 = arith.constant 0 : i32
    %c0_i32_0 = arith.constant 0 : i32
    %c0_i32_1 = arith.constant 0 : i32
    return %c0_i32, %c0_i32_0 : i32, i32
  }
  func.func @transform_7(%arg0: i32) -> (i32, i32) {
    %c0_i32 = arith.constant 0 : i32
    %c0_i32_0 = arith.constant 0 : i32
    return %arg0, %c0_i32 : i32, i32
  }
}

</mosaic_0001>

<llo_original>
// kernel: tpu_custom_call.1
$region0: #{tpu_custom_call.1}
  #allocation0 [shape = 'u32[]', space=smem, size = 0x4, offset = 0x4, fixed_abs, tag = 'smem constant byte address 0x4 - core index']
  #allocation1 [shape = 'u32[144,128]{1,0:T(1,128)}', space=vmem, size = 0x12000, scoped, tag = 'internal scratch']
  %s0 = inlined_call_operand.hbm [shape: f32[8,128], index: 0, kind: input, shape index: {}]
  %s1 = inlined_call_operand.hbm [shape: bf16[128,1024], index: 1, kind: input, shape index: {}]
  %s2 = inlined_call_operand.hbm [shape: f32[1,1024], index: 2, kind: input, shape index: {}]
  %s3 = inlined_call_operand.hbm [shape: bf16[1024,1024], index: 3, kind: input, shape index: {}]
  %s4 = inlined_call_operand.hbm [shape: f32[1,1024], index: 4, kind: input, shape index: {}]
  %s5 = inlined_call_operand.hbm [shape: bf16[1024,128], index: 5, kind: input, shape index: {}]
  %s6 = inlined_call_operand.hbm [shape: f32[1,128], index: 6, kind: input, shape index: {}]
  %s7 = inlined_call_operand.hbm [shape: f32[8,128], index: 7, kind: output, shape index: {}]
  %s8 = sld [smem:[#allocation0]]
  $region66: #{tpu_custom_call.1} parent=0
    _
  %s10 = ssub.s32 1, %s8
  %s11 = scalar_select 0, %s10, %s8
  $region1: #{tpu_custom_call.1} parent=0
    #allocation2 [shape = 'u8[4096]{0}', space=vmem, size = 0x1000, scoped, tag = 'input window, operand 0, single buffered']
    #allocation3 [shape = 's32[1]{0}', space=sflag, size = 0x4, scoped, tag = 'scoped memory for tpu_custom_call.1']
    #allocation4 [shape = 's32[1]{0}', space=sflag, size = 0x4, scoped, tag = 'scoped memory for tpu_custom_call.1']
    #allocation5 [shape = 'u8[262144]{0}', space=vmem, size = 0x40000, scoped, tag = 'input window, operand 1, single buffered']
    #allocation6 [shape = 's32[1]{0}', space=sflag, size = 0x4, scoped, tag = 'scoped memory for tpu_custom_call.1']
    #allocation7 [shape = 'u8[4096]{0}', space=vmem, size = 0x1000, scoped, tag = 'input window, operand 2, single buffered']
    #allocation8 [shape = 'u8[2097152]{0}', space=vmem, size = 0x200000, scoped, tag = 'input window, operand 3, single buffered']
    #allocation9 [shape = 's32[1]{0}', space=sflag, size = 0x4, scoped, tag = 'scoped memory for tpu_custom_call.1']
    #allocation10 [shape = 'u8[4096]{0}', space=vmem, size = 0x1000, scoped, tag = 'input window, operand 4, single buffered']
    #allocation11 [shape = 'u8[262144]{0}', space=vmem, size = 0x40000, scoped, tag = 'input window, operand 5, single buffered']
    #allocation12 [shape = 's32[1]{0}', space=sflag, size = 0x4, scoped, tag = 'scoped memory for tpu_custom_call.1']
    #allocation13 [shape = 'u8[512]{0}', space=vmem, size = 0x400, scoped, tag = 'input window, operand 6, single buffered']
    #allocation14 [shape = 'u8[4096]{0}', space=vmem, size = 0x1000, scoped, tag = 'output window, operand 0, single buffered']
    %12 = vsyncpa [#allocation3], 0
    %13 = vsyncpa [#allocation6], 0
    %14 = vsyncpa [#allocation9], 0
    %15 = vsyncpa [#allocation12], 0
    %16 = vsyncpa [#allocation4], 0
    // Predicated region
    $region2: #{tpu_custom_call.1} parent=1 // pred_check
      _
    $region3: #{tpu_custom_call.1} parent=1 // pred_check_branch
      %18 = sbr.rel (0) target = $region5
    $region4: #{tpu_custom_call.1} parent=1 // pred_region
      %s20 = ssub.s32 128, 128
      %21 = vsyncadd [#allocation3], %s20
      %s23 = sshll.u32 [#allocation2], 4
      %s24 = int_to_ptr.vmem [resolvable:$true] %s23
      %26 = dma.hbm_to_vmem [thread:$0]  %s0, 128, %s24, [#allocation3]
    $region5: #{tpu_custom_call.1} parent=1 // pred_fallthru
      _
    // Predicated region
    $region6: #{tpu_custom_call.1} parent=1 // pred_check
      _
    $region7: #{tpu_custom_call.1} parent=1 // pred_check_branch
      %28 = sbr.rel (0) target = $region9
    $region8: #{tpu_custom_call.1} parent=1 // pred_region
      %s30 = ssub.s32 8192, 8192
      %31 = vsyncadd [#allocation6], %s30
      %s32 = sshll.u32 [#allocation5], 4
      %s33 = int_to_ptr.vmem [resolvable:$true] %s32
      %38 = dma.hbm_to_vmem [thread:$0]  %s1, 8192, %s33, [#allocation6], 512, 512, 32
    $region9: #{tpu_custom_call.1} parent=1 // pred_fallthru
      _
    // Predicated region
    $region10: #{tpu_custom_call.1} parent=1 // pred_check
      _
    $region11: #{tpu_custom_call.1} parent=1 // pred_check_branch
      %40 = sbr.rel (0) target = $region13
    $region12: #{tpu_custom_call.1} parent=1 // pred_region
      %s42 = ssub.s32 128, 128
      %43 = vsyncadd [#allocation6], %s42
      %s45 = sshll.u32 [#allocation7], 4
      %s46 = int_to_ptr.vmem [resolvable:$true] %s45
      %48 = dma.hbm_to_vmem [thread:$0]  %s2, 128, %s46, [#allocation6]
    $region13: #{tpu_custom_call.1} parent=1 // pred_fallthru
      _
    // Predicated region
    $region14: #{tpu_custom_call.1} parent=1 // pred_check
      _
    $region15: #{tpu_custom_call.1} parent=1 // pred_check_branch
      %50 = sbr.rel (0) target = $region17
    $region16: #{tpu_custom_call.1} parent=1 // pred_region
      %s52 = ssub.s32 65536, 65536
      %53 = vsyncadd [#allocation9], %s52
      %s54 = sshll.u32 [#allocation8], 4
      %s55 = int_to_ptr.vmem [resolvable:$true] %s54
      %60 = dma.hbm_to_vmem [thread:$0]  %s3, 65536, %s55, [#allocation9], 512, 512, 32
    $region17: #{tpu_custom_call.1} parent=1 // pred_fallthru
      _
    // Predicated region
    $region18: #{tpu_custom_call.1} parent=1 // pred_check
      _
    $region19: #{tpu_custom_call.1} parent=1 // pred_check_branch
      %62 = sbr.rel (0) target = $region21
    $region20: #{tpu_custom_call.1} parent=1 // pred_region
      %s64 = ssub.s32 128, 128
      %65 = vsyncadd [#allocation9], %s64
      %s67 = sshll.u32 [#allocation10], 4
      %s68 = int_to_ptr.vmem [resolvable:$true] %s67
      %70 = dma.hbm_to_vmem [thread:$0]  %s4, 128, %s68, [#allocation9]
    $region21: #{tpu_custom_call.1} parent=1 // pred_fallthru
      _
    // Predicated region
    $region22: #{tpu_custom_call.1} parent=1 // pred_check
      _
    $region23: #{tpu_custom_call.1} parent=1 // pred_check_branch
      %72 = sbr.rel (0) target = $region25
    $region24: #{tpu_custom_call.1} parent=1 // pred_region
      %s74 = ssub.s32 8192, 8192
      %75 = vsyncadd [#allocation12], %s74
      %s76 = sshll.u32 [#allocation11], 4
      %s77 = int_to_ptr.vmem [resolvable:$true] %s76
      %82 = dma.hbm_to_vmem [thread:$0]  %s5, 8192, %s77, [#allocation12], 64, 64, 4
    $region25: #{tpu_custom_call.1} parent=1 // pred_fallthru
      _
    // Predicated region
    $region26: #{tpu_custom_call.1} parent=1 // pred_check
      _
    $region27: #{tpu_custom_call.1} parent=1 // pred_check_branch
      %84 = sbr.rel (0) target = $region29
    $region28: #{tpu_custom_call.1} parent=1 // pred_region
      %s86 = ssub.s32 16, 16
      %87 = vsyncadd [#allocation12], %s86
      %s89 = sshll.u32 [#allocation13], 4
      %s90 = int_to_ptr.vmem [resolvable:$true] %s89
      %92 = dma.hbm_to_vmem [thread:$0]  %s6, 16, %s90, [#allocation12]
    $region29: #{tpu_custom_call.1} parent=1 // pred_fallthru
      _
    // Predicated region
    $region30: #{tpu_custom_call.1} parent=1 // pred_check
      _
    $region31: #{tpu_custom_call.1} parent=1 // pred_check_branch
      %94 = sbr.rel (0) target = $region33
    $region32: #{tpu_custom_call.1} parent=1 // pred_region
      %95 = dma.done [#allocation3], 128
    $region33: #{tpu_custom_call.1} parent=1 // pred_fallthru
      _
    // Predicated region
    $region34: #{tpu_custom_call.1} parent=1 // pred_check
      _
    $region35: #{tpu_custom_call.1} parent=1 // pred_check_branch
      %97 = sbr.rel (0) target = $region37
    $region36: #{tpu_custom_call.1} parent=1 // pred_region
      %98 = dma.done [#allocation6], 8192
    $region37: #{tpu_custom_call.1} parent=1 // pred_fallthru
      _
    // Predicated region
    $region38: #{tpu_custom_call.1} parent=1 // pred_check
      _
    $region39: #{tpu_custom_call.1} parent=1 // pred_check_branch
      %100 = sbr.rel (0) target = $region41
    $region40: #{tpu_custom_call.1} parent=1 // pred_region
      %101 = dma.done [#allocation6], 128
    $region41: #{tpu_custom_call.1} parent=1 // pred_fallthru
      _
    // Predicated region
    $region42: #{tpu_custom_call.1} parent=1 // pred_check
      _
    $region43: #{tpu_custom_call.1} parent=1 // pred_check_branch
      %103 = sbr.rel (0) target = $region45
    $region44: #{tpu_custom_call.1} parent=1 // pred_region
      %104 = dma.done [#allocation9], 65536
    $region45: #{tpu_custom_call.1} parent=1 // pred_fallthru
      _
    // Predicated region
    $region46: #{tpu_custom_call.1} parent=1 // pred_check
      _
    $region47: #{tpu_custom_call.1} parent=1 // pred_check_branch
      %106 = sbr.rel (0) target = $region49
    $region48: #{tpu_custom_call.1} parent=1 // pred_region
      %107 = dma.done [#allocation9], 128
    $region49: #{tpu_custom_call.1} parent=1 // pred_fallthru
      _
    // Predicated region
    $region50: #{tpu_custom_call.1} parent=1 // pred_check
      _
    $region51: #{tpu_custom_call.1} parent=1 // pred_check_branch
      %109 = sbr.rel (0) target = $region53
    $region52: #{tpu_custom_call.1} parent=1 // pred_region
      %110 = dma.done [#allocation12], 8192
    $region53: #{tpu_custom_call.1} parent=1 // pred_fallthru
      _
    // Predicated region
    $region54: #{tpu_custom_call.1} parent=1 // pred_check
      _
    $region55: #{tpu_custom_call.1} parent=1 // pred_check_branch
      %112 = sbr.rel (0) target = $region57
    $region56: #{tpu_custom_call.1} parent=1 // pred_region
      %113 = dma.done [#allocation12], 16
    $region57: #{tpu_custom_call.1} parent=1 // pred_fallthru
      _
    %v115 = vld [vmem:[#allocation2] sm:$0xff]
    %v116 = vpack.c.bf16 %v115, %v115
    %v117 = vld [vmem:[#allocation5] sm:$0xff]
    %v118 = vld [vmem:[#allocation5 + $0x8] sm:$0xff]
    %v119 = vld [vmem:[#allocation5 + $0x10] sm:$0xff]
    %v120 = vld [vmem:[#allocation5 + $0x18] sm:$0xff]
    %v121 = vld [vmem:[#allocation5 + $0x20] sm:$0xff]
    %v122 = vld [vmem:[#allocation5 + $0x28] sm:$0xff]
    %v123 = vld [vmem:[#allocation5 + $0x30] sm:$0xff]
    %v124 = vld [vmem:[#allocation5 + $0x38] sm:$0xff]
    %v125 = vld [vmem:[#allocation5 + $0x40] sm:$0xff]
    %v126 = vld [vmem:[#allocation5 + $0x48] sm:$0xff]
    %v127 = vld [vmem:[#allocation5 + $0x50] sm:$0xff]
    %v128 = vld [vmem:[#allocation5 + $0x58] sm:$0xff]
    %v129 = vld [vmem:[#allocation5 + $0x60] sm:$0xff]
    %v130 = vld [vmem:[#allocation5 + $0x68] sm:$0xff]
    %v131 = vld [vmem:[#allocation5 + $0x70] sm:$0xff]
    %v132 = vld [vmem:[#allocation5 + $0x78] sm:$0xff]
    %v133 = vld [vmem:[#allocation5 + $0x80] sm:$0xff]
    %v134 = vld [vmem:[#allocation5 + $0x88] sm:$0xff]
    %v135 = vld [vmem:[#allocation5 + $0x90] sm:$0xff]
    %v136 = vld [vmem:[#allocation5 + $0x98] sm:$0xff]
    %v137 = vld [vmem:[#allocation5 + $0xa0] sm:$0xff]
    %v138 = vld [vmem:[#allocation5 + $0xa8] sm:$0xff]
    %v139 = vld [vmem:[#allocation5 + $0xb0] sm:$0xff]
    %v140 = vld [vmem:[#allocation5 + $0xb8] sm:$0xff]
    %v141 = vld [vmem:[#allocation5 + $0xc0] sm:$0xff]
    %v142 = vld [vmem:[#allocation5 + $0xc8] sm:$0xff]
    %v143 = vld [vmem:[#allocation5 + $0xd0] sm:$0xff]
    %v144 = vld [vmem:[#allocation5 + $0xd8] sm:$0xff]
    %v145 = vld [vmem:[#allocation5 + $0xe0] sm:$0xff]
    %v146 = vld [vmem:[#allocation5 + $0xe8] sm:$0xff]
    %v147 = vld [vmem:[#allocation5 + $0xf0] sm:$0xff]
    %v148 = vld [vmem:[#allocation5 + $0xf8] sm:$0xff]
    %v149 = vld [vmem:[#allocation5 + $0x100] sm:$0xff]
    %v150 = vld [vmem:[#allocation5 + $0x108] sm:$0xff]
    %v151 = vld [vmem:[#allocation5 + $0x110] sm:$0xff]
    %v152 = vld [vmem:[#allocation5 + $0x118] sm:$0xff]
    %v153 = vld [vmem:[#allocation5 + $0x120] sm:$0xff]
    %v154 = vld [vmem:[#allocation5 + $0x128] sm:$0xff]
    %v155 = vld [vmem:[#allocation5 + $0x130] sm:$0xff]
    %v156 = vld [vmem:[#allocation5 + $0x138] sm:$0xff]
    %v157 = vld [vmem:[#allocation5 + $0x140] sm:$0xff]
    %v158 = vld [vmem:[#allocation5 + $0x148] sm:$0xff]
    %v159 = vld [vmem:[#allocation5 + $0x150] sm:$0xff]
    %v160 = vld [vmem:[#allocation5 + $0x158] sm:$0xff]
    %v161 = vld [vmem:[#allocation5 + $0x160] sm:$0xff]
    %v162 = vld [vmem:[#allocation5 + $0x168] sm:$0xff]
    %v163 = vld [vmem:[#allocation5 + $0x170] sm:$0xff]
    %v164 = vld [vmem:[#allocation5 + $0x178] sm:$0xff]
    %v165 = vld [vmem:[#allocation5 + $0x180] sm:$0xff]
    %v166 = vld [vmem:[#allocation5 + $0x188] sm:$0xff]
    %v167 = vld [vmem:[#allocation5 + $0x190] sm:$0xff]
    %v168 = vld [vmem:[#allocation5 + $0x198] sm:$0xff]
    %v169 = vld [vmem:[#allocation5 + $0x1a0] sm:$0xff]
    %v170 = vld [vmem:[#allocation5 + $0x1a8] sm:$0xff]
    %v171 = vld [vmem:[#allocation5 + $0x1b0] sm:$0xff]
    %v172 = vld [vmem:[#allocation5 + $0x1b8] sm:$0xff]
    %v173 = vld [vmem:[#allocation5 + $0x1c0] sm:$0xff]
    %v174 = vld [vmem:[#allocation5 + $0x1c8] sm:$0xff]
    %v175 = vld [vmem:[#allocation5 + $0x1d0] sm:$0xff]
    %v176 = vld [vmem:[#allocation5 + $0x1d8] sm:$0xff]
    %v177 = vld [vmem:[#allocation5 + $0x1e0] sm:$0xff]
    %v178 = vld [vmem:[#allocation5 + $0x1e8] sm:$0xff]
    %v179 = vld [vmem:[#allocation5 + $0x1f0] sm:$0xff]
    %v180 = vld [vmem:[#allocation5 + $0x1f8] sm:$0xff]
    %v181 = vld [vmem:[#allocation7] sm:$0xff]
    %v183 = vlaneseq
    %v184 = vshrl.u32 %v183, 7
    %v185 = vsub.s32 0, %v184
    %v186 = vrot.slane %v181, %v185
    %v187 = vlaneseq
    %v188 = vshrl.u32 %v187, 7
    %v189 = vsub.s32 1, %v188
    %v190 = vrot.slane %v181, %v189
    %v191 = vlaneseq
    %v192 = vshrl.u32 %v191, 7
    %v193 = vsub.s32 2, %v192
    %v194 = vrot.slane %v181, %v193
    %v195 = vlaneseq
    %v196 = vshrl.u32 %v195, 7
    %v197 = vsub.s32 3, %v196
    %v198 = vrot.slane %v181, %v197
    %v199 = vlaneseq
    %v200 = vshrl.u32 %v199, 7
    %v201 = vsub.s32 4, %v200
    %v202 = vrot.slane %v181, %v201
    %v203 = vlaneseq
    %v204 = vshrl.u32 %v203, 7
    %v205 = vsub.s32 5, %v204
    %v206 = vrot.slane %v181, %v205
    %v207 = vlaneseq
    %v208 = vshrl.u32 %v207, 7
    %v209 = vsub.s32 6, %v208
    %v210 = vrot.slane %v181, %v209
    %v211 = vlaneseq
    %v212 = vshrl.u32 %v211, 7
    %v213 = vsub.s32 7, %v212
    %v214 = vrot.slane %v181, %v213
    %v287 = vunpack.c.l.b16 %v117
    %v288 = vunpack.c.h.b16 %v117
    %v289 = vunpack.c.l.b16 %v118
    %v290 = vunpack.c.h.b16 %v118
    %v291 = vunpack.c.l.b16 %v119
    %v292 = vunpack.c.h.b16 %v119
    %v293 = vunpack.c.l.b16 %v120
    %v294 = vunpack.c.h.b16 %v120
    %v295 = vunpack.c.l.b16 %v121
    %v296 = vunpack.c.h.b16 %v121
    %v297 = vunpack.c.l.b16 %v122
    %v298 = vunpack.c.h.b16 %v122
    %v299 = vunpack.c.l.b16 %v123
    %v300 = vunpack.c.h.b16 %v123
    %v301 = vunpack.c.l.b16 %v124
    %v302 = vunpack.c.h.b16 %v124
    %v303 = vunpack.c.l.b16 %v125
    %v304 = vunpack.c.h.b16 %v125
    %v305 = vunpack.c.l.b16 %v126
    %v306 = vunpack.c.h.b16 %v126
    %v307 = vunpack.c.l.b16 %v127
    %v308 = vunpack.c.h.b16 %v127
    %v309 = vunpack.c.l.b16 %v128
    %v310 = vunpack.c.h.b16 %v128
    %v311 = vunpack.c.l.b16 %v129
    %v312 = vunpack.c.h.b16 %v129
    %v313 = vunpack.c.l.b16 %v130
    %v314 = vunpack.c.h.b16 %v130
    %v315 = vunpack.c.l.b16 %v131
    %v316 = vunpack.c.h.b16 %v131
    %v317 = vunpack.c.l.b16 %v132
    %v318 = vunpack.c.h.b16 %v132
    %v319 = vunpack.c.l.b16 %v133
    %v320 = vunpack.c.h.b16 %v133
    %v321 = vunpack.c.l.b16 %v134
    %v322 = vunpack.c.h.b16 %v134
    %v323 = vunpack.c.l.b16 %v135
    %v324 = vunpack.c.h.b16 %v135
    %v325 = vunpack.c.l.b16 %v136
    %v326 = vunpack.c.h.b16 %v136
    %v327 = vunpack.c.l.b16 %v137
    %v328 = vunpack.c.h.b16 %v137
    %v329 = vunpack.c.l.b16 %v138
    %v330 = vunpack.c.h.b16 %v138
    %v331 = vunpack.c.l.b16 %v139
    %v332 = vunpack.c.h.b16 %v139
    %v333 = vunpack.c.l.b16 %v140
    %v334 = vunpack.c.h.b16 %v140
    %v335 = vunpack.c.l.b16 %v141
    %v336 = vunpack.c.h.b16 %v141
    %v337 = vunpack.c.l.b16 %v142
    %v338 = vunpack.c.h.b16 %v142
    %v339 = vunpack.c.l.b16 %v143
    %v340 = vunpack.c.h.b16 %v143
    %v341 = vunpack.c.l.b16 %v144
    %v342 = vunpack.c.h.b16 %v144
    %v343 = vunpack.c.l.b16 %v145
    %v344 = vunpack.c.h.b16 %v145
    %v345 = vunpack.c.l.b16 %v146
    %v346 = vunpack.c.h.b16 %v146
    %v347 = vunpack.c.l.b16 %v147
    %v348 = vunpack.c.h.b16 %v147
    %v349 = vunpack.c.l.b16 %v148
    %v350 = vunpack.c.h.b16 %v148
    %v351 = vunpack.c.l.b16 %v149
    %v352 = vunpack.c.h.b16 %v149
    %v353 = vunpack.c.l.b16 %v150
    %v354 = vunpack.c.h.b16 %v150
    %v355 = vunpack.c.l.b16 %v151
    %v356 = vunpack.c.h.b16 %v151
    %v357 = vunpack.c.l.b16 %v152
    %v358 = vunpack.c.h.b16 %v152
    %v359 = vunpack.c.l.b16 %v153
    %v360 = vunpack.c.h.b16 %v153
    %v361 = vunpack.c.l.b16 %v154
    %v362 = vunpack.c.h.b16 %v154
    %v363 = vunpack.c.l.b16 %v155
    %v364 = vunpack.c.h.b16 %v155
    %v365 = vunpack.c.l.b16 %v156
    %v366 = vunpack.c.h.b16 %v156
    %v367 = vunpack.c.l.b16 %v157
    %v368 = vunpack.c.h.b16 %v157
    %v369 = vunpack.c.l.b16 %v158
    %v370 = vunpack.c.h.b16 %v158
    %v371 = vunpack.c.l.b16 %v159
    %v372 = vunpack.c.h.b16 %v159
    %v373 = vunpack.c.l.b16 %v160
    %v374 = vunpack.c.h.b16 %v160
    %v375 = vunpack.c.l.b16 %v161
    %v376 = vunpack.c.h.b16 %v161
    %v377 = vunpack.c.l.b16 %v162
    %v378 = vunpack.c.h.b16 %v162
    %v379 = vunpack.c.l.b16 %v163
    %v380 = vunpack.c.h.b16 %v163
    %v381 = vunpack.c.l.b16 %v164
    %v382 = vunpack.c.h.b16 %v164
    %v383 = vunpack.c.l.b16 %v165
    %v384 = vunpack.c.h.b16 %v165
    %v385 = vunpack.c.l.b16 %v166
    %v386 = vunpack.c.h.b16 %v166
    %v387 = vunpack.c.l.b16 %v167
    %v388 = vunpack.c.h.b16 %v167
    %v389 = vunpack.c.l.b16 %v168
    %v390 = vunpack.c.h.b16 %v168
    %v391 = vunpack.c.l.b16 %v169
    %v392 = vunpack.c.h.b16 %v169
    %v393 = vunpack.c.l.b16 %v170
    %v394 = vunpack.c.h.b16 %v170
    %v395 = vunpack.c.l.b16 %v171
    %v396 = vunpack.c.h.b16 %v171
    %v397 = vunpack.c.l.b16 %v172
    %v398 = vunpack.c.h.b16 %v172
    %v399 = vunpack.c.l.b16 %v173
    %v400 = vunpack.c.h.b16 %v173
    %v401 = vunpack.c.l.b16 %v174
    %v402 = vunpack.c.h.b16 %v174
    %v403 = vunpack.c.l.b16 %v175
    %v404 = vunpack.c.h.b16 %v175
    %v405 = vunpack.c.l.b16 %v176
    %v406 = vunpack.c.h.b16 %v176
    %v407 = vunpack.c.l.b16 %v177
    %v408 = vunpack.c.h.b16 %v177
    %v409 = vunpack.c.l.b16 %v178
    %v410 = vunpack.c.h.b16 %v178
    %v411 = vunpack.c.l.b16 %v179
    %v412 = vunpack.c.h.b16 %v179
    %v413 = vunpack.c.l.b16 %v180
    %v414 = vunpack.c.h.b16 %v180
    %v415 = vpack.c.b16 %v295, %v287
    %v416 = vpack.c.b16 %v296, %v288
    %v417 = vpack.c.b16 %v297, %v289
    %v418 = vpack.c.b16 %v298, %v290
    %v419 = vpack.c.b16 %v299, %v291
    %v420 = vpack.c.b16 %v300, %v292
    %v421 = vpack.c.b16 %v301, %v293
    %v422 = vpack.c.b16 %v302, %v294
    %v423 = vpack.c.b16 %v311, %v303
    %v424 = vpack.c.b16 %v312, %v304
    %v425 = vpack.c.b16 %v313, %v305
    %v426 = vpack.c.b16 %v314, %v306
    %v427 = vpack.c.b16 %v315, %v307
    %v428 = vpack.c.b16 %v316, %v308
    %v429 = vpack.c.b16 %v317, %v309
    %v430 = vpack.c.b16 %v318, %v310
    %v431 = vpack.c.b16 %v327, %v319
    %v432 = vpack.c.b16 %v328, %v320
    %v433 = vpack.c.b16 %v329, %v321
    %v434 = vpack.c.b16 %v330, %v322
    %v435 = vpack.c.b16 %v331, %v323
    %v436 = vpack.c.b16 %v332, %v324
    %v437 = vpack.c.b16 %v333, %v325
    %v438 = vpack.c.b16 %v334, %v326
    %v439 = vpack.c.b16 %v343, %v335
    %v440 = vpack.c.b16 %v344, %v336
    %v441 = vpack.c.b16 %v345, %v337
    %v442 = vpack.c.b16 %v346, %v338
    %v443 = vpack.c.b16 %v347, %v339
    %v444 = vpack.c.b16 %v348, %v340
    %v445 = vpack.c.b16 %v349, %v341
    %v446 = vpack.c.b16 %v350, %v342
    %v447 = vpack.c.b16 %v359, %v351
    %v448 = vpack.c.b16 %v360, %v352
    %v449 = vpack.c.b16 %v361, %v353
    %v450 = vpack.c.b16 %v362, %v354
    %v451 = vpack.c.b16 %v363, %v355
    %v452 = vpack.c.b16 %v364, %v356
    %v453 = vpack.c.b16 %v365, %v357
    %v454 = vpack.c.b16 %v366, %v358
    %v455 = vpack.c.b16 %v375, %v367
    %v456 = vpack.c.b16 %v376, %v368
    %v457 = vpack.c.b16 %v377, %v369
    %v458 = vpack.c.b16 %v378, %v370
    %v459 = vpack.c.b16 %v379, %v371
    %v460 = vpack.c.b16 %v380, %v372
    %v461 = vpack.c.b16 %v381, %v373
    %v462 = vpack.c.b16 %v382, %v374
    %v463 = vpack.c.b16 %v391, %v383
    %v464 = vpack.c.b16 %v392, %v384
    %v465 = vpack.c.b16 %v393, %v385
    %v466 = vpack.c.b16 %v394, %v386
    %v467 = vpack.c.b16 %v395, %v387
    %v468 = vpack.c.b16 %v396, %v388
    %v469 = vpack.c.b16 %v397, %v389
    %v470 = vpack.c.b16 %v398, %v390
    %v471 = vpack.c.b16 %v407, %v399
    %v472 = vpack.c.b16 %v408, %v400
    %v473 = vpack.c.b16 %v409, %v401
    %v474 = vpack.c.b16 %v410, %v402
    %v475 = vpack.c.b16 %v411, %v403
    %v476 = vpack.c.b16 %v412, %v404
    %v477 = vpack.c.b16 %v413, %v405
    %v478 = vpack.c.b16 %v414, %v406
    %543 = vmatprep.subr.bf16.mxu0 %v472
    %544 = vmatpush1.bf16.msra.mxu0 %v471
    %545 = vmatprep.subr.bf16.mxu0 %v464
    %546 = vmatpush1.bf16.msra.mxu0 %v463
    %547 = vmatprep.subr.bf16.mxu0 %v456
    %548 = vmatpush1.bf16.msra.mxu0 %v455
    %549 = vmatprep.subr.bf16.mxu0 %v448
    %550 = vmatpush1.bf16.msra.mxu0 %v447
    %551 = vmatprep.subr.bf16.mxu0 %v440
    %552 = vmatpush1.bf16.msra.mxu0 %v439
    %553 = vmatprep.subr.bf16.mxu0 %v432
    %554 = vmatpush1.bf16.msra.mxu0 %v431
    %555 = vmatprep.subr.bf16.mxu0 %v424
    %556 = vmatpush1.bf16.msra.mxu0 %v423
    %557 = vmatprep.subr.bf16.mxu0 %v416
    %558 = vmatpush1.bf16.msra.mxu0 %v415
    %559 = vmatprep.subr.bf16.mxu0 0
    %560 = vmatpush2.bf16.msra.mxu0 0
    %561 = vmatprep.subr.bf16.mxu0 0
    %562 = vmatpush2.bf16.msra.mxu0 0
    %563 = vmatprep.subr.bf16.mxu0 0
    %564 = vmatpush2.bf16.msra.mxu0 0
    %565 = vmatprep.subr.bf16.mxu0 0
    %566 = vmatpush2.bf16.msra.mxu0 0
    %567 = vmatprep.subr.bf16.mxu0 0
    %568 = vmatpush2.bf16.msra.mxu0 0
    %569 = vmatprep.subr.bf16.mxu0 0
    %570 = vmatpush2.bf16.msra.mxu0 0
    %571 = vmatprep.subr.bf16.mxu0 0
    %572 = vmatpush2.bf16.msra.mxu0 0
    %573 = vmatprep.subr.bf16.mxu0 0
    %574 = vmatpush2.bf16.msra.mxu0 0
    %575 = vmatprep.mubr.bf16.mxu0 0
    %576 = vmatmul.mubr.bf16.gmra.mxu0 %v116
    %v577 = vpop.f32.mrf.mxu0
    %v578 = vadd.f32 %v186, %v577
    %v579 = vpop.f32.mrf.mxu0
    %v580 = vadd.f32 %v190, %v579
    %v581 = vpop.f32.mrf.mxu0
    %v582 = vpop.f32.mrf.mxu0
    %583 = vdwg.mxu0
    %584 = vmatprep.subr.bf16.mxu0 %v474
    %585 = vmatpush1.bf16.msra.mxu0 %v473
    %586 = vmatprep.subr.bf16.mxu0 %v466
    %587 = vmatpush1.bf16.msra.mxu0 %v465
    %588 = vmatprep.subr.bf16.mxu0 %v458
    %589 = vmatpush1.bf16.msra.mxu0 %v457
    %590 = vmatprep.subr.bf16.mxu0 %v450
    %591 = vmatpush1.bf16.msra.mxu0 %v449
    %592 = vmatprep.subr.bf16.mxu0 %v442
    %593 = vmatpush1.bf16.msra.mxu0 %v441
    %594 = vmatprep.subr.bf16.mxu0 %v434
    %595 = vmatpush1.bf16.msra.mxu0 %v433
    %596 = vmatprep.subr.bf16.mxu0 %v426
    %597 = vmatpush1.bf16.msra.mxu0 %v425
    %598 = vmatprep.subr.bf16.mxu0 %v418
    %599 = vmatpush1.bf16.msra.mxu0 %v417
    %600 = vmatprep.subr.bf16.mxu0 0
    %601 = vmatpush2.bf16.msra.mxu0 0
    %602 = vmatprep.subr.bf16.mxu0 0
    %603 = vmatpush2.bf16.msra.mxu0 0
    %604 = vmatprep.subr.bf16.mxu0 0
    %605 = vmatpush2.bf16.msra.mxu0 0
    %606 = vmatprep.subr.bf16.mxu0 0
    %607 = vmatpush2.bf16.msra.mxu0 0
    %608 = vmatprep.subr.bf16.mxu0 0
    %609 = vmatpush2.bf16.msra.mxu0 0
    %610 = vmatprep.subr.bf16.mxu0 0
    %611 = vmatpush2.bf16.msra.mxu0 0
    %612 = vmatprep.subr.bf16.mxu0 0
    %613 = vmatpush2.bf16.msra.mxu0 0
    %614 = vmatprep.subr.bf16.mxu0 0
    %615 = vmatpush2.bf16.msra.mxu0 0
    %616 = vmatprep.mubr.bf16.mxu0 0
    %617 = vmatmul.mubr.bf16.gmra.mxu0 %v116
    %v618 = vpop.f32.mrf.mxu0
    %v619 = vadd.f32 %v194, %v618
    %v620 = vpop.f32.mrf.mxu0
    %v621 = vadd.f32 %v198, %v620
    %v622 = vpop.f32.mrf.mxu0
    %v623 = vpop.f32.mrf.mxu0
    %624 = vdwg.mxu0
    %625 = vmatprep.subr.bf16.mxu0 %v476
    %626 = vmatpush1.bf16.msra.mxu0 %v475
    %627 = vmatprep.subr.bf16.mxu0 %v468
    %628 = vmatpush1.bf16.msra.mxu0 %v467
    %629 = vmatprep.subr.bf16.mxu0 %v460
    %630 = vmatpush1.bf16.msra.mxu0 %v459
    %631 = vmatprep.subr.bf16.mxu0 %v452
    %632 = vmatpush1.bf16.msra.mxu0 %v451
    %633 = vmatprep.subr.bf16.mxu0 %v444
    %634 = vmatpush1.bf16.msra.mxu0 %v443
    %635 = vmatprep.subr.bf16.mxu0 %v436
    %636 = vmatpush1.bf16.msra.mxu0 %v435
    %637 = vmatprep.subr.bf16.mxu0 %v428
    %638 = vmatpush1.bf16.msra.mxu0 %v427
    %639 = vmatprep.subr.bf16.mxu0 %v420
    %640 = vmatpush1.bf16.msra.mxu0 %v419
    %641 = vmatprep.subr.bf16.mxu0 0
    %642 = vmatpush2.bf16.msra.mxu0 0
    %643 = vmatprep.subr.bf16.mxu0 0
    %644 = vmatpush2.bf16.msra.mxu0 0
    %645 = vmatprep.subr.bf16.mxu0 0
    %646 = vmatpush2.bf16.msra.mxu0 0
    %647 = vmatprep.subr.bf16.mxu0 0
    %648 = vmatpush2.bf16.msra.mxu0 0
    %649 = vmatprep.subr.bf16.mxu0 0
    %650 = vmatpush2.bf16.msra.mxu0 0
    %651 = vmatprep.subr.bf16.mxu0 0
    %652 = vmatpush2.bf16.msra.mxu0 0
    %653 = vmatprep.subr.bf16.mxu0 0
    %654 = vmatpush2.bf16.msra.mxu0 0
    %655 = vmatprep.subr.bf16.mxu0 0
    %656 = vmatpush2.bf16.msra.mxu0 0
    %657 = vmatprep.mubr.bf16.mxu0 0
    %658 = vmatmul.mubr.bf16.gmra.mxu0 %v116
    %v659 = vpop.f32.mrf.mxu0
    %v660 = vadd.f32 %v202, %v659
    %v661 = vpop.f32.mrf.mxu0
    %v662 = vadd.f32 %v206, %v661
    %v663 = vpop.f32.mrf.mxu0
    %v664 = vpop.f32.mrf.mxu0
    %665 = vdwg.mxu0
    %666 = vmatprep.subr.bf16.mxu0 %v478
    %667 = vmatpush1.bf16.msra.mxu0 %v477
    %668 = vmatprep.subr.bf16.mxu0 %v470
    %669 = vmatpush1.bf16.msra.mxu0 %v469
    %670 = vmatprep.subr.bf16.mxu0 %v462
    %671 = vmatpush1.bf16.msra.mxu0 %v461
    %672 = vmatprep.subr.bf16.mxu0 %v454
    %673 = vmatpush1.bf16.msra.mxu0 %v453
    %674 = vmatprep.subr.bf16.mxu0 %v446
    %675 = vmatpush1.bf16.msra.mxu0 %v445
    %676 = vmatprep.subr.bf16.mxu0 %v438
    %677 = vmatpush1.bf16.msra.mxu0 %v437
    %678 = vmatprep.subr.bf16.mxu0 %v430
    %679 = vmatpush1.bf16.msra.mxu0 %v429
    %680 = vmatprep.subr.bf16.mxu0 %v422
    %681 = vmatpush1.bf16.msra.mxu0 %v421
    %682 = vmatprep.subr.bf16.mxu0 0
    %683 = vmatpush2.bf16.msra.mxu0 0
    %684 = vmatprep.subr.bf16.mxu0 0
    %685 = vmatpush2.bf16.msra.mxu0 0
    %686 = vmatprep.subr.bf16.mxu0 0
    %687 = vmatpush2.bf16.msra.mxu0 0
    %688 = vmatprep.subr.bf16.mxu0 0
    %689 = vmatpush2.bf16.msra.mxu0 0
    %690 = vmatprep.subr.bf16.mxu0 0
    %691 = vmatpush2.bf16.msra.mxu0 0
    %692 = vmatprep.subr.bf16.mxu0 0
    %693 = vmatpush2.bf16.msra.mxu0 0
    %694 = vmatprep.subr.bf16.mxu0 0
    %695 = vmatpush2.bf16.msra.mxu0 0
    %696 = vmatprep.subr.bf16.mxu0 0
    %697 = vmatpush2.bf16.msra.mxu0 0
    %698 = vmatprep.mubr.bf16.mxu0 0
    %699 = vmatmul.mubr.bf16.gmra.mxu0 %v116
    %v700 = vpop.f32.mrf.mxu0
    %v701 = vadd.f32 %v210, %v700
    %v702 = vpop.f32.mrf.mxu0
    %v703 = vadd.f32 %v214, %v702
    %v704 = vpop.f32.mrf.mxu0
    %v705 = vpop.f32.mrf.mxu0
    %706 = vdwg.mxu0
    %v707 = vmax.f32 %v578, 0.0
    %v708 = vmax.f32 %v580, 0.0
    %v709 = vmax.f32 %v619, 0.0
    %v710 = vmax.f32 %v621, 0.0
    %v711 = vmax.f32 %v660, 0.0
    %v712 = vmax.f32 %v662, 0.0
    %v713 = vmax.f32 %v701, 0.0
    %v714 = vmax.f32 %v703, 0.0
    %v715 = vpack.c.bf16 %v707, %v707
    %v716 = vpack.c.bf16 %v708, %v708
    %v717 = vpack.c.bf16 %v709, %v709
    %v718 = vpack.c.bf16 %v710, %v710
    %v719 = vpack.c.bf16 %v711, %v711
    %v720 = vpack.c.bf16 %v712, %v712
    %v721 = vpack.c.bf16 %v713, %v713
    %v722 = vpack.c.bf16 %v714, %v714
    %v723 = vld [vmem:[#allocation8] sm:$0xff]
    %v724 = vld [vmem:[#allocation8 + $0x8] sm:$0xff]
    %v725 = vld [vmem:[#allocation8 + $0x10] sm:$0xff]
    %v726 = vld [vmem:[#allocation8 + $0x18] sm:$0xff]
    %v727 = vld [vmem:[#allocation8 + $0x20] sm:$0xff]
    %v728 = vld [vmem:[#allocation8 + $0x28] sm:$0xff]
    %v729 = vld [vmem:[#allocation8 + $0x30] sm:$0xff]
    %v730 = vld [vmem:[#allocation8 + $0x38] sm:$0xff]
    %v731 = vld [vmem:[#allocation8 + $0x40] sm:$0xff]
    %v732 = vld [vmem:[#allocation8 + $0x48] sm:$0xff]
    %v733 = vld [vmem:[#allocation8 + $0x50] sm:$0xff]
    %v734 = vld [vmem:[#allocation8 + $0x58] sm:$0xff]
    %v735 = vld [vmem:[#allocation8 + $0x60] sm:$0xff]
    %v736 = vld [vmem:[#allocation8 + $0x68] sm:$0xff]
    %v737 = vld [vmem:[#allocation8 + $0x70] sm:$0xff]
    %v738 = vld [vmem:[#allocation8 + $0x78] sm:$0xff]
    %v739 = vld [vmem:[#allocation8 + $0x80] sm:$0xff]
    %v740 = vld [vmem:[#allocation8 + $0x88] sm:$0xff]
    %v741 = vld [vmem:[#allocation8 + $0x90] sm:$0xff]
    %v742 = vld [vmem:[#allocation8 + $0x98] sm:$0xff]
    %v743 = vld [vmem:[#allocation8 + $0xa0] sm:$0xff]
    %v744 = vld [vmem:[#allocation8 + $0xa8] sm:$0xff]
    %v745 = vld [vmem:[#allocation8 + $0xb0] sm:$0xff]
    %v746 = vld [vmem:[#allocation8 + $0xb8] sm:$0xff]
    %v747 = vld [vmem:[#allocation8 + $0xc0] sm:$0xff]
    %v748 = vld [vmem:[#allocation8 + $0xc8] sm:$0xff]
    %v749 = vld [vmem:[#allocation8 + $0xd0] sm:$0xff]
    %v750 = vld [vmem:[#allocation8 + $0xd8] sm:$0xff]
    %v751 = vld [vmem:[#allocation8 + $0xe0] sm:$0xff]
    %v752 = vld [vmem:[#allocation8 + $0xe8] sm:$0xff]
    %v753 = vld [vmem:[#allocation8 + $0xf0] sm:$0xff]
    %v754 = vld [vmem:[#allocation8 + $0xf8] sm:$0xff]
    %v755 = vld [vmem:[#allocation8 + $0x100] sm:$0xff]
    %v756 = vld [vmem:[#allocation8 + $0x108] sm:$0xff]
    %v757 = vld [vmem:[#allocation8 + $0x110] sm:$0xff]
    %v758 = vld [vmem:[#allocation8 + $0x118] sm:$0xff]
    %v759 = vld [vmem:[#allocation8 + $0x120] sm:$0xff]
    %v760 = vld [vmem:[#allocation8 + $0x128] sm:$0xff]
    %v761 = vld [vmem:[#allocation8 + $0x130] sm:$0xff]
    %v762 = vld [vmem:[#allocation8 + $0x138] sm:$0xff]
    %v763 = vld [vmem:[#allocation8 + $0x140] sm:$0xff]
    %v764 = vld [vmem:[#allocation8 + $0x148] sm:$0xff]
    %v765 = vld [vmem:[#allocation8 + $0x150] sm:$0xff]
    %v766 = vld [vmem:[#allocation8 + $0x158] sm:$0xff]
    %v767 = vld [vmem:[#allocation8 + $0x160] sm:$0xff]
    %v768 = vld [vmem:[#allocation8 + $0x168] sm:$0xff]
    %v769 = vld [vmem:[#allocation8 + $0x170] sm:$0xff]
    %v770 = vld [vmem:[#allocation8 + $0x178] sm:$0xff]
    %v771 = vld [vmem:[#allocation8 + $0x180] sm:$0xff]
    %v772 = vld [vmem:[#allocation8 + $0x188] sm:$0xff]
    %v773 = vld [vmem:[#allocation8 + $0x190] sm:$0xff]
    %v774 = vld [vmem:[#allocation8 + $0x198] sm:$0xff]
    %v775 = vld [vmem:[#allocation8 + $0x1a0] sm:$0xff]
    %v776 = vld [vmem:[#allocation8 + $0x1a8] sm:$0xff]
    %v777 = vld [vmem:[#allocation8 + $0x1b0] sm:$0xff]
    %v778 = vld [vmem:[#allocation8 + $0x1b8] sm:$0xff]
    %v779 = vld [vmem:[#allocation8 + $0x1c0] sm:$0xff]
    %v780 = vld [vmem:[#allocation8 + $0x1c8] sm:$0xff]
    %v781 = vld [vmem:[#allocation8 + $0x1d0] sm:$0xff]
    %v782 = vld [vmem:[#allocation8 + $0x1d8] sm:$0xff]
    %v783 = vld [vmem:[#allocation8 + $0x1e0] sm:$0xff]
    %v784 = vld [vmem:[#allocation8 + $0x1e8] sm:$0xff]
    %v785 = vld [vmem:[#allocation8 + $0x1f0] sm:$0xff]
    %v786 = vld [vmem:[#allocation8 + $0x1f8] sm:$0xff]
    %v787 = vld [vmem:[#allocation8 + $0x200] sm:$0xff]
    %v788 = vld [vmem:[#allocation8 + $0x208] sm:$0xff]
    %v789 = vld [vmem:[#allocation8 + $0x210] sm:$0xff]
    %v790 = vld [vmem:[#allocation8 + $0x218] sm:$0xff]
    %v791 = vld [vmem:[#allocation8 + $0x220] sm:$0xff]
    %v792 = vld [vmem:[#allocation8 + $0x228] sm:$0xff]
    %v793 = vld [vmem:[#allocation8 + $0x230] sm:$0xff]
    %v794 = vld [vmem:[#allocation8 + $0x238] sm:$0xff]
    %v795 = vld [vmem:[#allocation8 + $0x240] sm:$0xff]
    %v796 = vld [vmem:[#allocation8 + $0x248] sm:$0xff]
    %v797 = vld [vmem:[#allocation8 + $0x250] sm:$0xff]
    %v798 = vld [vmem:[#allocation8 + $0x258] sm:$0xff]
    %v799 = vld [vmem:[#allocation8 + $0x260] sm:$0xff]
    %v800 = vld [vmem:[#allocation8 + $0x268] sm:$0xff]
    %v801 = vld [vmem:[#allocation8 + $0x270] sm:$0xff]
    %v802 = vld [vmem:[#allocation8 + $0x278] sm:$0xff]
    %v803 = vld [vmem:[#allocation8 + $0x280] sm:$0xff]
    %v804 = vld [vmem:[#allocation8 + $0x288] sm:$0xff]
    %v805 = vld [vmem:[#allocation8 + $0x290] sm:$0xff]
    %v806 = vld [vmem:[#allocation8 + $0x298] sm:$0xff]
    %v807 = vld [vmem:[#allocation8 + $0x2a0] sm:$0xff]
    %v808 = vld [vmem:[#allocation8 + $0x2a8] sm:$0xff]
    %v809 = vld [vmem:[#allocation8 + $0x2b0] sm:$0xff]
    %v810 = vld [vmem:[#allocation8 + $0x2b8] sm:$0xff]
    %v811 = vld [vmem:[#allocation8 + $0x2c0] sm:$0xff]
    %v812 = vld [vmem:[#allocation8 + $0x2c8] sm:$0xff]
    %v813 = vld [vmem:[#allocation8 + $0x2d0] sm:$0xff]
    %v814 = vld [vmem:[#allocation8 + $0x2d8] sm:$0xff]
    %v815 = vld [vmem:[#allocation8 + $0x2e0] sm:$0xff]
    %v816 = vld [vmem:[#allocation8 + $0x2e8] sm:$0xff]
    %v817 = vld [vmem:[#allocation8 + $0x2f0] sm:$0xff]
    %v818 = vld [vmem:[#allocation8 + $0x2f8] sm:$0xff]
    %v819 = vld [vmem:[#allocation8 + $0x300] sm:$0xff]
    %v820 = vld [vmem:[#allocation8 + $0x308] sm:$0xff]
    %v821 = vld [vmem:[#allocation8 + $0x310] sm:$0xff]
    %v822 = vld [vmem:[#allocation8 + $0x318] sm:$0xff]
    %v823 = vld [vmem:[#allocation8 + $0x320] sm:$0xff]
    %v824 = vld [vmem:[#allocation8 + $0x328] sm:$0xff]
    %v825 = vld [vmem:[#allocation8 + $0x330] sm:$0xff]
    %v826 = vld [vmem:[#allocation8 + $0x338] sm:$0xff]
    %v827 = vld [vmem:[#allocation8 + $0x340] sm:$0xff]
    %v828 = vld [vmem:[#allocation8 + $0x348] sm:$0xff]
    %v829 = vld [vmem:[#allocation8 + $0x350] sm:$0xff]
    %v830 = vld [vmem:[#allocation8 + $0x358] sm:$0xff]
    %v831 = vld [vmem:[#allocation8 + $0x360] sm:$0xff]
    %v832 = vld [vmem:[#allocation8 + $0x368] sm:$0xff]
    %v833 = vld [vmem:[#allocation8 + $0x370] sm:$0xff]
    %v834 = vld [vmem:[#allocation8 + $0x378] sm:$0xff]
    %v835 = vld [vmem:[#allocation8 + $0x380] sm:$0xff]
    %v836 = vld [vmem:[#allocation8 + $0x388] sm:$0xff]
    %v837 = vld [vmem:[#allocation8 + $0x390] sm:$0xff]
    %v838 = vld [vmem:[#allocation8 + $0x398] sm:$0xff]
    %v839 = vld [vmem:[#allocation8 + $0x3a0] sm:$0xff]
    %v840 = vld [vmem:[#allocation8 + $0x3a8] sm:$0xff]
    %v841 = vld [vmem:[#allocation8 + $0x3b0] sm:$0xff]
    %v842 = vld [vmem:[#allocation8 + $0x3b8] sm:$0xff]
    %v843 = vld [vmem:[#allocation8 + $0x3c0] sm:$0xff]
    %v844 = vld [vmem:[#allocation8 + $0x3c8] sm:$0xff]
    %v845 = vld [vmem:[#allocation8 + $0x3d0] sm:$0xff]
    %v846 = vld [vmem:[#allocation8 + $0x3d8] sm:$0xff]
    %v847 = vld [vmem:[#allocation8 + $0x3e0] sm:$0xff]
    %v848 = vld [vmem:[#allocation8 + $0x3e8] sm:$0xff]
    %v849 = vld [vmem:[#allocation8 + $0x3f0] sm:$0xff]
    %v850 = vld [vmem:[#allocation8 + $0x3f8] sm:$0xff]
    %v851 = vld [vmem:[#allocation8 + $0x400] sm:$0xff]
    %v852 = vld [vmem:[#allocation8 + $0x408] sm:$0xff]
    %v853 = vld [vmem:[#allocation8 + $0x410] sm:$0xff]
    %v854 = vld [vmem:[#allocation8 + $0x418] sm:$0xff]
    %v855 = vld [vmem:[#allocation8 + $0x420] sm:$0xff]
    %v856 = vld [vmem:[#allocation8 + $0x428] sm:$0xff]
    %v857 = vld [vmem:[#allocation8 + $0x430] sm:$0xff]
    %v858 = vld [vmem:[#allocation8 + $0x438] sm:$0xff]
    %v859 = vld [vmem:[#allocation8 + $0x440] sm:$0xff]
    %v860 = vld [vmem:[#allocation8 + $0x448] sm:$0xff]
    %v861 = vld [vmem:[#allocation8 + $0x450] sm:$0xff]
    %v862 = vld [vmem:[#allocation8 + $0x458] sm:$0xff]
    %v863 = vld [vmem:[#allocation8 + $0x460] sm:$0xff]
    %v864 = vld [vmem:[#allocation8 + $0x468] sm:$0xff]
    %v865 = vld [vmem:[#allocation8 + $0x470] sm:$0xff]
    %v866 = vld [vmem:[#allocation8 + $0x478] sm:$0xff]
    %v867 = vld [vmem:[#allocation8 + $0x480] sm:$0xff]
    %v868 = vld [vmem:[#allocation8 + $0x488] sm:$0xff]
    %v869 = vld [vmem:[#allocation8 + $0x490] sm:$0xff]
    %v870 = vld [vmem:[#allocation8 + $0x498] sm:$0xff]
    %v871 = vld [vmem:[#allocation8 + $0x4a0] sm:$0xff]
    %v872 = vld [vmem:[#allocation8 + $0x4a8] sm:$0xff]
    %v873 = vld [vmem:[#allocation8 + $0x4b0] sm:$0xff]
    %v874 = vld [vmem:[#allocation8 + $0x4b8] sm:$0xff]
    %v875 = vld [vmem:[#allocation8 + $0x4c0] sm:$0xff]
    %v876 = vld [vmem:[#allocation8 + $0x4c8] sm:$0xff]
    %v877 = vld [vmem:[#allocation8 + $0x4d0] sm:$0xff]
    %v878 = vld [vmem:[#allocation8 + $0x4d8] sm:$0xff]
    %v879 = vld [vmem:[#allocation8 + $0x4e0] sm:$0xff]
    %v880 = vld [vmem:[#allocation8 + $0x4e8] sm:$0xff]
    %v881 = vld [vmem:[#allocation8 + $0x4f0] sm:$0xff]
    %v882 = vld [vmem:[#allocation8 + $0x4f8] sm:$0xff]
    %v883 = vld [vmem:[#allocation8 + $0x500] sm:$0xff]
    %v884 = vld [vmem:[#allocation8 + $0x508] sm:$0xff]
    %v885 = vld [vmem:[#allocation8 + $0x510] sm:$0xff]
    %v886 = vld [vmem:[#allocation8 + $0x518] sm:$0xff]
    %v887 = vld [vmem:[#allocation8 + $0x520] sm:$0xff]
    %v888 = vld [vmem:[#allocation8 + $0x528] sm:$0xff]
    %v889 = vld [vmem:[#allocation8 + $0x530] sm:$0xff]
    %v890 = vld [vmem:[#allocation8 + $0x538] sm:$0xff]
    %v891 = vld [vmem:[#allocation8 + $0x540] sm:$0xff]
    %v892 = vld [vmem:[#allocation8 + $0x548] sm:$0xff]
    %v893 = vld [vmem:[#allocation8 + $0x550] sm:$0xff]
    %v894 = vld [vmem:[#allocation8 + $0x558] sm:$0xff]
    %v895 = vld [vmem:[#allocation8 + $0x560] sm:$0xff]
    %v896 = vld [vmem:[#allocation8 + $0x568] sm:$0xff]
    %v897 = vld [vmem:[#allocation8 + $0x570] sm:$0xff]
    %v898 = vld [vmem:[#allocation8 + $0x578] sm:$0xff]
    %v899 = vld [vmem:[#allocation8 + $0x580] sm:$0xff]
    %v900 = vld [vmem:[#allocation8 + $0x588] sm:$0xff]
    %v901 = vld [vmem:[#allocation8 + $0x590] sm:$0xff]
    %v902 = vld [vmem:[#allocation8 + $0x598] sm:$0xff]
    %v903 = vld [vmem:[#allocation8 + $0x5a0] sm:$0xff]
    %v904 = vld [vmem:[#allocation8 + $0x5a8] sm:$0xff]
    %v905 = vld [vmem:[#allocation8 + $0x5b0] sm:$0xff]
    %v906 = vld [vmem:[#allocation8 + $0x5b8] sm:$0xff]
    %v907 = vld [vmem:[#allocation8 + $0x5c0] sm:$0xff]
    %v908 = vld [vmem:[#allocation8 + $0x5c8] sm:$0xff]
    %v909 = vld [vmem:[#allocation8 + $0x5d0] sm:$0xff]
    %v910 = vld [vmem:[#allocation8 + $0x5d8] sm:$0xff]
    %v911 = vld [vmem:[#allocation8 + $0x5e0] sm:$0xff]
    %v912 = vld [vmem:[#allocation8 + $0x5e8] sm:$0xff]
    %v913 = vld [vmem:[#allocation8 + $0x5f0] sm:$0xff]
    %v914 = vld [vmem:[#allocation8 + $0x5f8] sm:$0xff]
    %v915 = vld [vmem:[#allocation8 + $0x600] sm:$0xff]
    %v916 = vld [vmem:[#allocation8 + $0x608] sm:$0xff]
    %v917 = vld [vmem:[#allocation8 + $0x610] sm:$0xff]
    %v918 = vld [vmem:[#allocation8 + $0x618] sm:$0xff]
    %v919 = vld [vmem:[#allocation8 + $0x620] sm:$0xff]
    %v920 = vld [vmem:[#allocation8 + $0x628] sm:$0xff]
    %v921 = vld [vmem:[#allocation8 + $0x630] sm:$0xff]
    %v922 = vld [vmem:[#allocation8 + $0x638] sm:$0xff]
    %v923 = vld [vmem:[#allocation8 + $0x640] sm:$0xff]
    %v924 = vld [vmem:[#allocation8 + $0x648] sm:$0xff]
    %v925 = vld [vmem:[#allocation8 + $0x650] sm:$0xff]
    %v926 = vld [vmem:[#allocation8 + $0x658] sm:$0xff]
    %v927 = vld [vmem:[#allocation8 + $0x660] sm:$0xff]
    %v928 = vld [vmem:[#allocation8 + $0x668] sm:$0xff]
    %v929 = vld [vmem:[#allocation8 + $0x670] sm:$0xff]
    %v930 = vld [vmem:[#allocation8 + $0x678] sm:$0xff]
    %v931 = vld [vmem:[#allocation8 + $0x680] sm:$0xff]
    %v932 = vld [vmem:[#allocation8 + $0x688] sm:$0xff]
    %v933 = vld [vmem:[#allocation8 + $0x690] sm:$0xff]
    %v934 = vld [vmem:[#allocation8 + $0x698] sm:$0xff]
    %v935 = vld [vmem:[#allocation8 + $0x6a0] sm:$0xff]
    %v936 = vld [vmem:[#allocation8 + $0x6a8] sm:$0xff]
    %v937 = vld [vmem:[#allocation8 + $0x6b0] sm:$0xff]
    %v938 = vld [vmem:[#allocation8 + $0x6b8] sm:$0xff]
    %v939 = vld [vmem:[#allocation8 + $0x6c0] sm:$0xff]
    %v940 = vld [vmem:[#allocation8 + $0x6c8] sm:$0xff]
    %v941 = vld [vmem:[#allocation8 + $0x6d0] sm:$0xff]
    %v942 = vld [vmem:[#allocation8 + $0x6d8] sm:$0xff]
    %v943 = vld [vmem:[#allocation8 + $0x6e0] sm:$0xff]
    %v944 = vld [vmem:[#allocation8 + $0x6e8] sm:$0xff]
    %v945 = vld [vmem:[#allocation8 + $0x6f0] sm:$0xff]
    %v946 = vld [vmem:[#allocation8 + $0x6f8] sm:$0xff]
    %v947 = vld [vmem:[#allocation8 + $0x700] sm:$0xff]
    %v948 = vld [vmem:[#allocation8 + $0x708] sm:$0xff]
    %v949 = vld [vmem:[#allocation8 + $0x710] sm:$0xff]
    %v950 = vld [vmem:[#allocation8 + $0x718] sm:$0xff]
    %v951 = vld [vmem:[#allocation8 + $0x720] sm:$0xff]
    %v952 = vld [vmem:[#allocation8 + $0x728] sm:$0xff]
    %v953 = vld [vmem:[#allocation8 + $0x730] sm:$0xff]
    %v954 = vld [vmem:[#allocation8 + $0x738] sm:$0xff]
    %v955 = vld [vmem:[#allocation8 + $0x740] sm:$0xff]
    %v956 = vld [vmem:[#allocation8 + $0x748] sm:$0xff]
    %v957 = vld [vmem:[#allocation8 + $0x750] sm:$0xff]
    %v958 = vld [vmem:[#allocation8 + $0x758] sm:$0xff]
    %v959 = vld [vmem:[#allocation8 + $0x760] sm:$0xff]
    %v960 = vld [vmem:[#allocation8 + $0x768] sm:$0xff]
    %v961 = vld [vmem:[#allocation8 + $0x770] sm:$0xff]
    %v962 = vld [vmem:[#allocation8 + $0x778] sm:$0xff]
    %v963 = vld [vmem:[#allocation8 + $0x780] sm:$0xff]
    %v964 = vld [vmem:[#allocation8 + $0x788] sm:$0xff]
    %v965 = vld [vmem:[#allocation8 + $0x790] sm:$0xff]
    %v966 = vld [vmem:[#allocation8 + $0x798] sm:$0xff]
    %v967 = vld [vmem:[#allocation8 + $0x7a0] sm:$0xff]
    %v968 = vld [vmem:[#allocation8 + $0x7a8] sm:$0xff]
    %v969 = vld [vmem:[#allocation8 + $0x7b0] sm:$0xff]
    %v970 = vld [vmem:[#allocation8 + $0x7b8] sm:$0xff]
    %v971 = vld [vmem:[#allocation8 + $0x7c0] sm:$0xff]
    %v972 = vld [vmem:[#allocation8 + $0x7c8] sm:$0xff]
    %v973 = vld [vmem:[#allocation8 + $0x7d0] sm:$0xff]
    %v974 = vld [vmem:[#allocation8 + $0x7d8] sm:$0xff]
    %v975 = vld [vmem:[#allocation8 + $0x7e0] sm:$0xff]
    %v976 = vld [vmem:[#allocation8 + $0x7e8] sm:$0xff]
    %v977 = vld [vmem:[#allocation8 + $0x7f0] sm:$0xff]
    %v978 = vld [vmem:[#allocation8 + $0x7f8] sm:$0xff]
    %v979 = vld [vmem:[#allocation8 + $0x800] sm:$0xff]
    %v980 = vld [vmem:[#allocation8 + $0x808] sm:$0xff]
    %v981 = vld [vmem:[#allocation8 + $0x810] sm:$0xff]
    %v982 = vld [vmem:[#allocation8 + $0x818] sm:$0xff]
    %v983 = vld [vmem:[#allocation8 + $0x820] sm:$0xff]
    %v984 = vld [vmem:[#allocation8 + $0x828] sm:$0xff]
    %v985 = vld [vmem:[#allocation8 + $0x830] sm:$0xff]
    %v986 = vld [vmem:[#allocation8 + $0x838] sm:$0xff]
    %v987 = vld [vmem:[#allocation8 + $0x840] sm:$0xff]
    %v988 = vld [vmem:[#allocation8 + $0x848] sm:$0xff]
    %v989 = vld [vmem:[#allocation8 + $0x850] sm:$0xff]
    %v990 = vld [vmem:[#allocation8 + $0x858] sm:$0xff]
    %v991 = vld [vmem:[#allocation8 + $0x860] sm:$0xff]
    %v992 = vld [vmem:[#allocation8 + $0x868] sm:$0xff]
    %v993 = vld [vmem:[#allocation8 + $0x870] sm:$0xff]
    %v994 = vld [vmem:[#allocation8 + $0x878] sm:$0xff]
    %v995 = vld [vmem:[#allocation8 + $0x880] sm:$0xff]
    %v996 = vld [vmem:[#allocation8 + $0x888] sm:$0xff]
    %v997 = vld [vmem:[#allocation8 + $0x890] sm:$0xff]
    %v998 = vld [vmem:[#allocation8 + $0x898] sm:$0xff]
    %v999 = vld [vmem:[#allocation8 + $0x8a0] sm:$0xff]
    %v1000 = vld [vmem:[#allocation8 + $0x8a8] sm:$0xff]
    %v1001 = vld [vmem:[#allocation8 + $0x8b0] sm:$0xff]
    %v1002 = vld [vmem:[#allocation8 + $0x8b8] sm:$0xff]
    %v1003 = vld [vmem:[#allocation8 + $0x8c0] sm:$0xff]
    %v1004 = vld [vmem:[#allocation8 + $0x8c8] sm:$0xff]
    %v1005 = vld [vmem:[#allocation8 + $0x8d0] sm:$0xff]
    %v1006 = vld [vmem:[#allocation8 + $0x8d8] sm:$0xff]
    %v1007 = vld [vmem:[#allocation8 + $0x8e0] sm:$0xff]
    %v1008 = vld [vmem:[#allocation8 + $0x8e8] sm:$0xff]
    %v1009 = vld [vmem:[#allocation8 + $0x8f0] sm:$0xff]
    %v1010 = vld [vmem:[#allocation8 + $0x8f8] sm:$0xff]
    %v1011 = vld [vmem:[#allocation8 + $0x900] sm:$0xff]
    %v1012 = vld [vmem:[#allocation8 + $0x908] sm:$0xff]
    %v1013 = vld [vmem:[#allocation8 + $0x910] sm:$0xff]
    %v1014 = vld [vmem:[#allocation8 + $0x918] sm:$0xff]
    %v1015 = vld [vmem:[#allocation8 + $0x920] sm:$0xff]
    %v1016 = vld [vmem:[#allocation8 + $0x928] sm:$0xff]
    %v1017 = vld [vmem:[#allocation8 + $0x930] sm:$0xff]
    %v1018 = vld [vmem:[#allocation8 + $0x938] sm:$0xff]
    %v1019 = vld [vmem:[#allocation8 + $0x940] sm:$0xff]
    %v1020 = vld [vmem:[#allocation8 + $0x948] sm:$0xff]
    %v1021 = vld [vmem:[#allocation8 + $0x950] sm:$0xff]
    %v1022 = vld [vmem:[#allocation8 + $0x958] sm:$0xff]
    %v1023 = vld [vmem:[#allocation8 + $0x960] sm:$0xff]
    %v1024 = vld [vmem:[#allocation8 + $0x968] sm:$0xff]
    %v1025 = vld [vmem:[#allocation8 + $0x970] sm:$0xff]
    %v1026 = vld [vmem:[#allocation8 + $0x978] sm:$0xff]
    %v1027 = vld [vmem:[#allocation8 + $0x980] sm:$0xff]
    %v1028 = vld [vmem:[#allocation8 + $0x988] sm:$0xff]
    %v1029 = vld [vmem:[#allocation8 + $0x990] sm:$0xff]
    %v1030 = vld [vmem:[#allocation8 + $0x998] sm:$0xff]
    %v1031 = vld [vmem:[#allocation8 + $0x9a0] sm:$0xff]
    %v1032 = vld [vmem:[#allocation8 + $0x9a8] sm:$0xff]
    %v1033 = vld [vmem:[#allocation8 + $0x9b0] sm:$0xff]
    %v1034 = vld [vmem:[#allocation8 + $0x9b8] sm:$0xff]
    %v1035 = vld [vmem:[#allocation8 + $0x9c0] sm:$0xff]
    %v1036 = vld [vmem:[#allocation8 + $0x9c8] sm:$0xff]
    %v1037 = vld [vmem:[#allocation8 + $0x9d0] sm:$0xff]
    %v1038 = vld [vmem:[#allocation8 + $0x9d8] sm:$0xff]
    %v1039 = vld [vmem:[#allocation8 + $0x9e0] sm:$0xff]
    %v1040 = vld [vmem:[#allocation8 + $0x9e8] sm:$0xff]
    %v1041 = vld [vmem:[#allocation8 + $0x9f0] sm:$0xff]
    %v1042 = vld [vmem:[#allocation8 + $0x9f8] sm:$0xff]
    %v1043 = vld [vmem:[#allocation8 + $0xa00] sm:$0xff]
    %v1044 = vld [vmem:[#allocation8 + $0xa08] sm:$0xff]
    %v1045 = vld [vmem:[#allocation8 + $0xa10] sm:$0xff]
    %v1046 = vld [vmem:[#allocation8 + $0xa18] sm:$0xff]
    %v1047 = vld [vmem:[#allocation8 + $0xa20] sm:$0xff]
    %v1048 = vld [vmem:[#allocation8 + $0xa28] sm:$0xff]
    %v1049 = vld [vmem:[#allocation8 + $0xa30] sm:$0xff]
    %v1050 = vld [vmem:[#allocation8 + $0xa38] sm:$0xff]
    %v1051 = vld [vmem:[#allocation8 + $0xa40] sm:$0xff]
    %v1052 = vld [vmem:[#allocation8 + $0xa48] sm:$0xff]
    %v1053 = vld [vmem:[#allocation8 + $0xa50] sm:$0xff]
    %v1054 = vld [vmem:[#allocation8 + $0xa58] sm:$0xff]
    %v1055 = vld [vmem:[#allocation8 + $0xa60] sm:$0xff]
    %v1056 = vld [vmem:[#allocation8 + $0xa68] sm:$0xff]
    %v1057 = vld [vmem:[#allocation8 + $0xa70] sm:$0xff]
    %v1058 = vld [vmem:[#allocation8 + $0xa78] sm:$0xff]
    %v1059 = vld [vmem:[#allocation8 + $0xa80] sm:$0xff]
    %v1060 = vld [vmem:[#allocation8 + $0xa88] sm:$0xff]
    %v1061 = vld [vmem:[#allocation8 + $0xa90] sm:$0xff]
    %v1062 = vld [vmem:[#allocation8 + $0xa98] sm:$0xff]
    %v1063 = vld [vmem:[#allocation8 + $0xaa0] sm:$0xff]
    %v1064 = vld [vmem:[#allocation8 + $0xaa8] sm:$0xff]
    %v1065 = vld [vmem:[#allocation8 + $0xab0] sm:$0xff]
    %v1066 = vld [vmem:[#allocation8 + $0xab8] sm:$0xff]
    %v1067 = vld [vmem:[#allocation8 + $0xac0] sm:$0xff]
    %v1068 = vld [vmem:[#allocation8 + $0xac8] sm:$0xff]
    %v1069 = vld [vmem:[#allocation8 + $0xad0] sm:$0xff]
    %v1070 = vld [vmem:[#allocation8 + $0xad8] sm:$0xff]
    %v1071 = vld [vmem:[#allocation8 + $0xae0] sm:$0xff]
    %v1072 = vld [vmem:[#allocation8 + $0xae8] sm:$0xff]
    %v1073 = vld [vmem:[#allocation8 + $0xaf0] sm:$0xff]
    %v1074 = vld [vmem:[#allocation8 + $0xaf8] sm:$0xff]
    %v1075 = vld [vmem:[#allocation8 + $0xb00] sm:$0xff]
    %v1076 = vld [vmem:[#allocation8 + $0xb08] sm:$0xff]
    %v1077 = vld [vmem:[#allocation8 + $0xb10] sm:$0xff]
    %v1078 = vld [vmem:[#allocation8 + $0xb18] sm:$0xff]
    %v1079 = vld [vmem:[#allocation8 + $0xb20] sm:$0xff]
    %v1080 = vld [vmem:[#allocation8 + $0xb28] sm:$0xff]
    %v1081 = vld [vmem:[#allocation8 + $0xb30] sm:$0xff]
    %v1082 = vld [vmem:[#allocation8 + $0xb38] sm:$0xff]
    %v1083 = vld [vmem:[#allocation8 + $0xb40] sm:$0xff]
    %v1084 = vld [vmem:[#allocation8 + $0xb48] sm:$0xff]
    %v1085 = vld [vmem:[#allocation8 + $0xb50] sm:$0xff]
    %v1086 = vld [vmem:[#allocation8 + $0xb58] sm:$0xff]
    %v1087 = vld [vmem:[#allocation8 + $0xb60] sm:$0xff]
    %v1088 = vld [vmem:[#allocation8 + $0xb68] sm:$0xff]
    %v1089 = vld [vmem:[#allocation8 + $0xb70] sm:$0xff]
    %v1090 = vld [vmem:[#allocation8 + $0xb78] sm:$0xff]
    %v1091 = vld [vmem:[#allocation8 + $0xb80] sm:$0xff]
    %v1092 = vld [vmem:[#allocation8 + $0xb88] sm:$0xff]
    %v1093 = vld [vmem:[#allocation8 + $0xb90] sm:$0xff]
    %v1094 = vld [vmem:[#allocation8 + $0xb98] sm:$0xff]
    %v1095 = vld [vmem:[#allocation8 + $0xba0] sm:$0xff]
    %v1096 = vld [vmem:[#allocation8 + $0xba8] sm:$0xff]
    %v1097 = vld [vmem:[#allocation8 + $0xbb0] sm:$0xff]
    %v1098 = vld [vmem:[#allocation8 + $0xbb8] sm:$0xff]
    %v1099 = vld [vmem:[#allocation8 + $0xbc0] sm:$0xff]
    %v1100 = vld [vmem:[#allocation8 + $0xbc8] sm:$0xff]
    %v1101 = vld [vmem:[#allocation8 + $0xbd0] sm:$0xff]
    %v1102 = vld [vmem:[#allocation8 + $0xbd8] sm:$0xff]
    %v1103 = vld [vmem:[#allocation8 + $0xbe0] sm:$0xff]
    %v1104 = vld [vmem:[#allocation8 + $0xbe8] sm:$0xff]
    %v1105 = vld [vmem:[#allocation8 + $0xbf0] sm:$0xff]
    %v1106 = vld [vmem:[#allocation8 + $0xbf8] sm:$0xff]
    %v1107 = vld [vmem:[#allocation8 + $0xc00] sm:$0xff]
    %v1108 = vld [vmem:[#allocation8 + $0xc08] sm:$0xff]
    %v1109 = vld [vmem:[#allocation8 + $0xc10] sm:$0xff]
    %v1110 = vld [vmem:[#allocation8 + $0xc18] sm:$0xff]
    %v1111 = vld [vmem:[#allocation8 + $0xc20] sm:$0xff]
    %v1112 = vld [vmem:[#allocation8 + $0xc28] sm:$0xff]
    %v1113 = vld [vmem:[#allocation8 + $0xc30] sm:$0xff]
    %v1114 = vld [vmem:[#allocation8 + $0xc38] sm:$0xff]
    %v1115 = vld [vmem:[#allocation8 + $0xc40] sm:$0xff]
    %v1116 = vld [vmem:[#allocation8 + $0xc48] sm:$0xff]
    %v1117 = vld [vmem:[#allocation8 + $0xc50] sm:$0xff]
    %v1118 = vld [vmem:[#allocation8 + $0xc58] sm:$0xff]
    %v1119 = vld [vmem:[#allocation8 + $0xc60] sm:$0xff]
    %v1120 = vld [vmem:[#allocation8 + $0xc68] sm:$0xff]
    %v1121 = vld [vmem:[#allocation8 + $0xc70] sm:$0xff]
    %v1122 = vld [vmem:[#allocation8 + $0xc78] sm:$0xff]
    %v1123 = vld [vmem:[#allocation8 + $0xc80] sm:$0xff]
    %v1124 = vld [vmem:[#allocation8 + $0xc88] sm:$0xff]
    %v1125 = vld [vmem:[#allocation8 + $0xc90] sm:$0xff]
    %v1126 = vld [vmem:[#allocation8 + $0xc98] sm:$0xff]
    %v1127 = vld [vmem:[#allocation8 + $0xca0] sm:$0xff]
    %v1128 = vld [vmem:[#allocation8 + $0xca8] sm:$0xff]
    %v1129 = vld [vmem:[#allocation8 + $0xcb0] sm:$0xff]
    %v1130 = vld [vmem:[#allocation8 + $0xcb8] sm:$0xff]
    %v1131 = vld [vmem:[#allocation8 + $0xcc0] sm:$0xff]
    %v1132 = vld [vmem:[#allocation8 + $0xcc8] sm:$0xff]
    %v1133 = vld [vmem:[#allocation8 + $0xcd0] sm:$0xff]
    %v1134 = vld [vmem:[#allocation8 + $0xcd8] sm:$0xff]
    %v1135 = vld [vmem:[#allocation8 + $0xce0] sm:$0xff]
    %v1136 = vld [vmem:[#allocation8 + $0xce8] sm:$0xff]
    %v1137 = vld [vmem:[#allocation8 + $0xcf0] sm:$0xff]
    %v1138 = vld [vmem:[#allocation8 + $0xcf8] sm:$0xff]
    %v1139 = vld [vmem:[#allocation8 + $0xd00] sm:$0xff]
    %v1140 = vld [vmem:[#allocation8 + $0xd08] sm:$0xff]
    %v1141 = vld [vmem:[#allocation8 + $0xd10] sm:$0xff]
    %v1142 = vld [vmem:[#allocation8 + $0xd18] sm:$0xff]
    %v1143 = vld [vmem:[#allocation8 + $0xd20] sm:$0xff]
    %v1144 = vld [vmem:[#allocation8 + $0xd28] sm:$0xff]
    %v1145 = vld [vmem:[#allocation8 + $0xd30] sm:$0xff]
    %v1146 = vld [vmem:[#allocation8 + $0xd38] sm:$0xff]
    %v1147 = vld [vmem:[#allocation8 + $0xd40] sm:$0xff]
    %v1148 = vld [vmem:[#allocation8 + $0xd48] sm:$0xff]
    %v1149 = vld [vmem:[#allocation8 + $0xd50] sm:$0xff]
    %v1150 = vld [vmem:[#allocation8 + $0xd58] sm:$0xff]
    %v1151 = vld [vmem:[#allocation8 + $0xd60] sm:$0xff]
    %v1152 = vld [vmem:[#allocation8 + $0xd68] sm:$0xff]
    %v1153 = vld [vmem:[#allocation8 + $0xd70] sm:$0xff]
    %v1154 = vld [vmem:[#allocation8 + $0xd78] sm:$0xff]
    %v1155 = vld [vmem:[#allocation8 + $0xd80] sm:$0xff]
    %v1156 = vld [vmem:[#allocation8 + $0xd88] sm:$0xff]
    %v1157 = vld [vmem:[#allocation8 + $0xd90] sm:$0xff]
    %v1158 = vld [vmem:[#allocation8 + $0xd98] sm:$0xff]
    %v1159 = vld [vmem:[#allocation8 + $0xda0] sm:$0xff]
    %v1160 = vld [vmem:[#allocation8 + $0xda8] sm:$0xff]
    %v1161 = vld [vmem:[#allocation8 + $0xdb0] sm:$0xff]
    %v1162 = vld [vmem:[#allocation8 + $0xdb8] sm:$0xff]
    %v1163 = vld [vmem:[#allocation8 + $0xdc0] sm:$0xff]
    %v1164 = vld [vmem:[#allocation8 + $0xdc8] sm:$0xff]
    %v1165 = vld [vmem:[#allocation8 + $0xdd0] sm:$0xff]
    %v1166 = vld [vmem:[#allocation8 + $0xdd8] sm:$0xff]
    %v1167 = vld [vmem:[#allocation8 + $0xde0] sm:$0xff]
    %v1168 = vld [vmem:[#allocation8 + $0xde8] sm:$0xff]
    %v1169 = vld [vmem:[#allocation8 + $0xdf0] sm:$0xff]
    %v1170 = vld [vmem:[#allocation8 + $0xdf8] sm:$0xff]
    %v1171 = vld [vmem:[#allocation8 + $0xe00] sm:$0xff]
    %v1172 = vld [vmem:[#allocation8 + $0xe08] sm:$0xff]
    %v1173 = vld [vmem:[#allocation8 + $0xe10] sm:$0xff]
    %v1174 = vld [vmem:[#allocation8 + $0xe18] sm:$0xff]
    %v1175 = vld [vmem:[#allocation8 + $0xe20] sm:$0xff]
    %v1176 = vld [vmem:[#allocation8 + $0xe28] sm:$0xff]
    %v1177 = vld [vmem:[#allocation8 + $0xe30] sm:$0xff]
    %v1178 = vld [vmem:[#allocation8 + $0xe38] sm:$0xff]
    %v1179 = vld [vmem:[#allocation8 + $0xe40] sm:$0xff]
    %v1180 = vld [vmem:[#allocation8 + $0xe48] sm:$0xff]
    %v1181 = vld [vmem:[#allocation8 + $0xe50] sm:$0xff]
    %v1182 = vld [vmem:[#allocation8 + $0xe58] sm:$0xff]
    %v1183 = vld [vmem:[#allocation8 + $0xe60] sm:$0xff]
    %v1184 = vld [vmem:[#allocation8 + $0xe68] sm:$0xff]
    %v1185 = vld [vmem:[#allocation8 + $0xe70] sm:$0xff]
    %v1186 = vld [vmem:[#allocation8 + $0xe78] sm:$0xff]
    %v1187 = vld [vmem:[#allocation8 + $0xe80] sm:$0xff]
    %v1188 = vld [vmem:[#allocation8 + $0xe88] sm:$0xff]
    %v1189 = vld [vmem:[#allocation8 + $0xe90] sm:$0xff]
    %v1190 = vld [vmem:[#allocation8 + $0xe98] sm:$0xff]
    %v1191 = vld [vmem:[#allocation8 + $0xea0] sm:$0xff]
    %v1192 = vld [vmem:[#allocation8 + $0xea8] sm:$0xff]
    %v1193 = vld [vmem:[#allocation8 + $0xeb0] sm:$0xff]
    %v1194 = vld [vmem:[#allocation8 + $0xeb8] sm:$0xff]
    %v1195 = vld [vmem:[#allocation8 + $0xec0] sm:$0xff]
    %v1196 = vld [vmem:[#allocation8 + $0xec8] sm:$0xff]
    %v1197 = vld [vmem:[#allocation8 + $0xed0] sm:$0xff]
    %v1198 = vld [vmem:[#allocation8 + $0xed8] sm:$0xff]
    %v1199 = vld [vmem:[#allocation8 + $0xee0] sm:$0xff]
    %v1200 = vld [vmem:[#allocation8 + $0xee8] sm:$0xff]
    %v1201 = vld [vmem:[#allocation8 + $0xef0] sm:$0xff]
    %v1202 = vld [vmem:[#allocation8 + $0xef8] sm:$0xff]
    %v1203 = vld [vmem:[#allocation8 + $0xf00] sm:$0xff]
    %v1204 = vld [vmem:[#allocation8 + $0xf08] sm:$0xff]
    %v1205 = vld [vmem:[#allocation8 + $0xf10] sm:$0xff]
    %v1206 = vld [vmem:[#allocation8 + $0xf18] sm:$0xff]
    %v1207 = vld [vmem:[#allocation8 + $0xf20] sm:$0xff]
    %v1208 = vld [vmem:[#allocation8 + $0xf28] sm:$0xff]
    %v1209 = vld [vmem:[#allocation8 + $0xf30] sm:$0xff]
    %v1210 = vld [vmem:[#allocation8 + $0xf38] sm:$0xff]
    %v1211 = vld [vmem:[#allocation8 + $0xf40] sm:$0xff]
    %v1212 = vld [vmem:[#allocation8 + $0xf48] sm:$0xff]
    %v1213 = vld [vmem:[#allocation8 + $0xf50] sm:$0xff]
    %v1214 = vld [vmem:[#allocation8 + $0xf58] sm:$0xff]
    %v1215 = vld [vmem:[#allocation8 + $0xf60] sm:$0xff]
    %v1216 = vld [vmem:[#allocation8 + $0xf68] sm:$0xff]
    %v1217 = vld [vmem:[#allocation8 + $0xf70] sm:$0xff]
    %v1218 = vld [vmem:[#allocation8 + $0xf78] sm:$0xff]
    %v1219 = vld [vmem:[#allocation8 + $0xf80] sm:$0xff]
    %v1220 = vld [vmem:[#allocation8 + $0xf88] sm:$0xff]
    %v1221 = vld [vmem:[#allocation8 + $0xf90] sm:$0xff]
    %v1222 = vld [vmem:[#allocation8 + $0xf98] sm:$0xff]
    %v1223 = vld [vmem:[#allocation8 + $0xfa0] sm:$0xff]
    %v1224 = vld [vmem:[#allocation8 + $0xfa8] sm:$0xff]
    %v1225 = vld [vmem:[#allocation8 + $0xfb0] sm:$0xff]
    %v1226 = vld [vmem:[#allocation8 + $0xfb8] sm:$0xff]
    %v1227 = vld [vmem:[#allocation8 + $0xfc0] sm:$0xff]
    %v1228 = vld [vmem:[#allocation8 + $0xfc8] sm:$0xff]
    %v1229 = vld [vmem:[#allocation8 + $0xfd0] sm:$0xff]
    %v1230 = vld [vmem:[#allocation8 + $0xfd8] sm:$0xff]
    %v1231 = vld [vmem:[#allocation8 + $0xfe0] sm:$0xff]
    %v1232 = vld [vmem:[#allocation8 + $0xfe8] sm:$0xff]
    %v1233 = vld [vmem:[#allocation8 + $0xff0] sm:$0xff]
    %v1234 = vld [vmem:[#allocation8 + $0xff8] sm:$0xff]
    %v1235 = vld [vmem:[#allocation10] sm:$0xff]
    %v1237 = vlaneseq
    %v1238 = vshrl.u32 %v1237, 7
    %v1239 = vsub.s32 0, %v1238
    %v1240 = vrot.slane %v1235, %v1239
    %v1241 = vlaneseq
    %v1242 = vshrl.u32 %v1241, 7
    %v1243 = vsub.s32 1, %v1242
    %v1244 = vrot.slane %v1235, %v1243
    %v1245 = vlaneseq
    %v1246 = vshrl.u32 %v1245, 7
    %v1247 = vsub.s32 2, %v1246
    %v1248 = vrot.slane %v1235, %v1247
    %v1249 = vlaneseq
    %v1250 = vshrl.u32 %v1249, 7
    %v1251 = vsub.s32 3, %v1250
    %v1252 = vrot.slane %v1235, %v1251
    %v1253 = vlaneseq
    %v1254 = vshrl.u32 %v1253, 7
    %v1255 = vsub.s32 4, %v1254
    %v1256 = vrot.slane %v1235, %v1255
    %v1257 = vlaneseq
    %v1258 = vshrl.u32 %v1257, 7
    %v1259 = vsub.s32 5, %v1258
    %v1260 = vrot.slane %v1235, %v1259
    %v1261 = vlaneseq
    %v1262 = vshrl.u32 %v1261, 7
    %v1263 = vsub.s32 6, %v1262
    %v1264 = vrot.slane %v1235, %v1263
    %v1265 = vlaneseq
    %v1266 = vshrl.u32 %v1265, 7
    %v1267 = vsub.s32 7, %v1266
    %v1268 = vrot.slane %v1235, %v1267
    %v1789 = vunpack.c.l.b16 %v723
    %v1790 = vunpack.c.h.b16 %v723
    %v1791 = vunpack.c.l.b16 %v724
    %v1792 = vunpack.c.h.b16 %v724
    %v1793 = vunpack.c.l.b16 %v725
    %v1794 = vunpack.c.h.b16 %v725
    %v1795 = vunpack.c.l.b16 %v726
    %v1796 = vunpack.c.h.b16 %v726
    %v1797 = vunpack.c.l.b16 %v727
    %v1798 = vunpack.c.h.b16 %v727
    %v1799 = vunpack.c.l.b16 %v728
    %v1800 = vunpack.c.h.b16 %v728
    %v1801 = vunpack.c.l.b16 %v729
    %v1802 = vunpack.c.h.b16 %v729
    %v1803 = vunpack.c.l.b16 %v730
    %v1804 = vunpack.c.h.b16 %v730
    %v1805 = vunpack.c.l.b16 %v731
    %v1806 = vunpack.c.h.b16 %v731
    %v1807 = vunpack.c.l.b16 %v732
    %v1808 = vunpack.c.h.b16 %v732
    %v1809 = vunpack.c.l.b16 %v733
    %v1810 = vunpack.c.h.b16 %v733
    %v1811 = vunpack.c.l.b16 %v734
    %v1812 = vunpack.c.h.b16 %v734
    %v1813 = vunpack.c.l.b16 %v735
    %v1814 = vunpack.c.h.b16 %v735
    %v1815 = vunpack.c.l.b16 %v736
    %v1816 = vunpack.c.h.b16 %v736
    %v1817 = vunpack.c.l.b16 %v737
    %v1818 = vunpack.c.h.b16 %v737
    %v1819 = vunpack.c.l.b16 %v738
    %v1820 = vunpack.c.h.b16 %v738
    %v1821 = vunpack.c.l.b16 %v739
    %v1822 = vunpack.c.h.b16 %v739
    %v1823 = vunpack.c.l.b16 %v740
    %v1824 = vunpack.c.h.b16 %v740
    %v1825 = vunpack.c.l.b16 %v741
    %v1826 = vunpack.c.h.b16 %v741
    %v1827 = vunpack.c.l.b16 %v742
    %v1828 = vunpack.c.h.b16 %v742
    %v1829 = vunpack.c.l.b16 %v743
    %v1830 = vunpack.c.h.b16 %v743
    %v1831 = vunpack.c.l.b16 %v744
    %v1832 = vunpack.c.h.b16 %v744
    %v1833 = vunpack.c.l.b16 %v745
    %v1834 = vunpack.c.h.b16 %v745
    %v1835 = vunpack.c.l.b16 %v746
    %v1836 = vunpack.c.h.b16 %v746
    %v1837 = vunpack.c.l.b16 %v747
    %v1838 = vunpack.c.h.b16 %v747
    %v1839 = vunpack.c.l.b16 %v748
    %v1840 = vunpack.c.h.b16 %v748
    %v1841 = vunpack.c.l.b16 %v749
    %v1842 = vunpack.c.h.b16 %v749
    %v1843 = vunpack.c.l.b16 %v750
    %v1844 = vunpack.c.h.b16 %v750
    %v1845 = vunpack.c.l.b16 %v751
    %v1846 = vunpack.c.h.b16 %v751
    %v1847 = vunpack.c.l.b16 %v752
    %v1848 = vunpack.c.h.b16 %v752
    %v1849 = vunpack.c.l.b16 %v753
    %v1850 = vunpack.c.h.b16 %v753
    %v1851 = vunpack.c.l.b16 %v754
    %v1852 = vunpack.c.h.b16 %v754
    %v1853 = vunpack.c.l.b16 %v755
    %v1854 = vunpack.c.h.b16 %v755
    %v1855 = vunpack.c.l.b16 %v756
    %v1856 = vunpack.c.h.b16 %v756
    %v1857 = vunpack.c.l.b16 %v757
    %v1858 = vunpack.c.h.b16 %v757
    %v1859 = vunpack.c.l.b16 %v758
    %v1860 = vunpack.c.h.b16 %v758
    %v1861 = vunpack.c.l.b16 %v759
    %v1862 = vunpack.c.h.b16 %v759
    %v1863 = vunpack.c.l.b16 %v760
    %v1864 = vunpack.c.h.b16 %v760
    %v1865 = vunpack.c.l.b16 %v761
    %v1866 = vunpack.c.h.b16 %v761
    %v1867 = vunpack.c.l.b16 %v762
    %v1868 = vunpack.c.h.b16 %v762
    %v1869 = vunpack.c.l.b16 %v763
    %v1870 = vunpack.c.h.b16 %v763
    %v1871 = vunpack.c.l.b16 %v764
    %v1872 = vunpack.c.h.b16 %v764
    %v1873 = vunpack.c.l.b16 %v765
    %v1874 = vunpack.c.h.b16 %v765
    %v1875 = vunpack.c.l.b16 %v766
    %v1876 = vunpack.c.h.b16 %v766
    %v1877 = vunpack.c.l.b16 %v767
    %v1878 = vunpack.c.h.b16 %v767
    %v1879 = vunpack.c.l.b16 %v768
    %v1880 = vunpack.c.h.b16 %v768
    %v1881 = vunpack.c.l.b16 %v769
    %v1882 = vunpack.c.h.b16 %v769
    %v1883 = vunpack.c.l.b16 %v770
    %v1884 = vunpack.c.h.b16 %v770
    %v1885 = vunpack.c.l.b16 %v771
    %v1886 = vunpack.c.h.b16 %v771
    %v1887 = vunpack.c.l.b16 %v772
    %v1888 = vunpack.c.h.b16 %v772
    %v1889 = vunpack.c.l.b16 %v773
    %v1890 = vunpack.c.h.b16 %v773
    %v1891 = vunpack.c.l.b16 %v774
    %v1892 = vunpack.c.h.b16 %v774
    %v1893 = vunpack.c.l.b16 %v775
    %v1894 = vunpack.c.h.b16 %v775
    %v1895 = vunpack.c.l.b16 %v776
    %v1896 = vunpack.c.h.b16 %v776
    %v1897 = vunpack.c.l.b16 %v777
    %v1898 = vunpack.c.h.b16 %v777
    %v1899 = vunpack.c.l.b16 %v778
    %v1900 = vunpack.c.h.b16 %v778
    %v1901 = vunpack.c.l.b16 %v779
    %v1902 = vunpack.c.h.b16 %v779
    %v1903 = vunpack.c.l.b16 %v780
    %v1904 = vunpack.c.h.b16 %v780
    %v1905 = vunpack.c.l.b16 %v781
    %v1906 = vunpack.c.h.b16 %v781
    %v1907 = vunpack.c.l.b16 %v782
    %v1908 = vunpack.c.h.b16 %v782
    %v1909 = vunpack.c.l.b16 %v783
    %v1910 = vunpack.c.h.b16 %v783
    %v1911 = vunpack.c.l.b16 %v784
    %v1912 = vunpack.c.h.b16 %v784
    %v1913 = vunpack.c.l.b16 %v785
    %v1914 = vunpack.c.h.b16 %v785
    %v1915 = vunpack.c.l.b16 %v786
    %v1916 = vunpack.c.h.b16 %v786
    %v1917 = vunpack.c.l.b16 %v787
    %v1918 = vunpack.c.h.b16 %v787
    %v1919 = vunpack.c.l.b16 %v788
    %v1920 = vunpack.c.h.b16 %v788
    %v1921 = vunpack.c.l.b16 %v789
    %v1922 = vunpack.c.h.b16 %v789
    %v1923 = vunpack.c.l.b16 %v790
    %v1924 = vunpack.c.h.b16 %v790
    %v1925 = vunpack.c.l.b16 %v791
    %v1926 = vunpack.c.h.b16 %v791
    %v1927 = vunpack.c.l.b16 %v792
    %v1928 = vunpack.c.h.b16 %v792
    %v1929 = vunpack.c.l.b16 %v793
    %v1930 = vunpack.c.h.b16 %v793
    %v1931 = vunpack.c.l.b16 %v794
    %v1932 = vunpack.c.h.b16 %v794
    %v1933 = vunpack.c.l.b16 %v795
    %v1934 = vunpack.c.h.b16 %v795
    %v1935 = vunpack.c.l.b16 %v796
    %v1936 = vunpack.c.h.b16 %v796
    %v1937 = vunpack.c.l.b16 %v797
    %v1938 = vunpack.c.h.b16 %v797
    %v1939 = vunpack.c.l.b16 %v798
    %v1940 = vunpack.c.h.b16 %v798
    %v1941 = vunpack.c.l.b16 %v799
    %v1942 = vunpack.c.h.b16 %v799
    %v1943 = vunpack.c.l.b16 %v800
    %v1944 = vunpack.c.h.b16 %v800
    %v1945 = vunpack.c.l.b16 %v801
    %v1946 = vunpack.c.h.b16 %v801
    %v1947 = vunpack.c.l.b16 %v802
    %v1948 = vunpack.c.h.b16 %v802
    %v1949 = vunpack.c.l.b16 %v803
    %v1950 = vunpack.c.h.b16 %v803
    %v1951 = vunpack.c.l.b16 %v804
    %v1952 = vunpack.c.h.b16 %v804
    %v1953 = vunpack.c.l.b16 %v805
    %v1954 = vunpack.c.h.b16 %v805
    %v1955 = vunpack.c.l.b16 %v806
    %v1956 = vunpack.c.h.b16 %v806
    %v1957 = vunpack.c.l.b16 %v807
    %v1958 = vunpack.c.h.b16 %v807
    %v1959 = vunpack.c.l.b16 %v808
    %v1960 = vunpack.c.h.b16 %v808
    %v1961 = vunpack.c.l.b16 %v809
    %v1962 = vunpack.c.h.b16 %v809
    %v1963 = vunpack.c.l.b16 %v810
    %v1964 = vunpack.c.h.b16 %v810
    %v1965 = vunpack.c.l.b16 %v811
    %v1966 = vunpack.c.h.b16 %v811
    %v1967 = vunpack.c.l.b16 %v812
    %v1968 = vunpack.c.h.b16 %v812
    %v1969 = vunpack.c.l.b16 %v813
    %v1970 = vunpack.c.h.b16 %v813
    %v1971 = vunpack.c.l.b16 %v814
    %v1972 = vunpack.c.h.b16 %v814
    %v1973 = vunpack.c.l.b16 %v815
    %v1974 = vunpack.c.h.b16 %v815
    %v1975 = vunpack.c.l.b16 %v816
    %v1976 = vunpack.c.h.b16 %v816
    %v1977 = vunpack.c.l.b16 %v817
    %v1978 = vunpack.c.h.b16 %v817
    %v1979 = vunpack.c.l.b16 %v818
    %v1980 = vunpack.c.h.b16 %v818
    %v1981 = vunpack.c.l.b16 %v819
    %v1982 = vunpack.c.h.b16 %v819
    %v1983 = vunpack.c.l.b16 %v820
    %v1984 = vunpack.c.h.b16 %v820
    %v1985 = vunpack.c.l.b16 %v821
    %v1986 = vunpack.c.h.b16 %v821
    %v1987 = vunpack.c.l.b16 %v822
    %v1988 = vunpack.c.h.b16 %v822
    %v1989 = vunpack.c.l.b16 %v823
    %v1990 = vunpack.c.h.b16 %v823
    %v1991 = vunpack.c.l.b16 %v824
    %v1992 = vunpack.c.h.b16 %v824
    %v1993 = vunpack.c.l.b16 %v825
    %v1994 = vunpack.c.h.b16 %v825
    %v1995 = vunpack.c.l.b16 %v826
    %v1996 = vunpack.c.h.b16 %v826
    %v1997 = vunpack.c.l.b16 %v827
    %v1998 = vunpack.c.h.b16 %v827
    %v1999 = vunpack.c.l.b16 %v828
    %v2000 = vunpack.c.h.b16 %v828
    %v2001 = vunpack.c.l.b16 %v829
    %v2002 = vunpack.c.h.b16 %v829
    %v2003 = vunpack.c.l.b16 %v830
    %v2004 = vunpack.c.h.b16 %v830
    %v2005 = vunpack.c.l.b16 %v831
    %v2006 = vunpack.c.h.b16 %v831
    %v2007 = vunpack.c.l.b16 %v832
    %v2008 = vunpack.c.h.b16 %v832
    %v2009 = vunpack.c.l.b16 %v833
    %v2010 = vunpack.c.h.b16 %v833
    %v2011 = vunpack.c.l.b16 %v834
    %v2012 = vunpack.c.h.b16 %v834
    %v2013 = vunpack.c.l.b16 %v835
    %v2014 = vunpack.c.h.b16 %v835
    %v2015 = vunpack.c.l.b16 %v836
    %v2016 = vunpack.c.h.b16 %v836
    %v2017 = vunpack.c.l.b16 %v837
    %v2018 = vunpack.c.h.b16 %v837
    %v2019 = vunpack.c.l.b16 %v838
    %v2020 = vunpack.c.h.b16 %v838
    %v2021 = vunpack.c.l.b16 %v839
    %v2022 = vunpack.c.h.b16 %v839
    %v2023 = vunpack.c.l.b16 %v840
    %v2024 = vunpack.c.h.b16 %v840
    %v2025 = vunpack.c.l.b16 %v841
    %v2026 = vunpack.c.h.b16 %v841
    %v2027 = vunpack.c.l.b16 %v842
    %v2028 = vunpack.c.h.b16 %v842
    %v2029 = vunpack.c.l.b16 %v843
    %v2030 = vunpack.c.h.b16 %v843
    %v2031 = vunpack.c.l.b16 %v844
    %v2032 = vunpack.c.h.b16 %v844
    %v2033 = vunpack.c.l.b16 %v845
    %v2034 = vunpack.c.h.b16 %v845
    %v2035 = vunpack.c.l.b16 %v846
    %v2036 = vunpack.c.h.b16 %v846
    %v2037 = vunpack.c.l.b16 %v847
    %v2038 = vunpack.c.h.b16 %v847
    %v2039 = vunpack.c.l.b16 %v848
    %v2040 = vunpack.c.h.b16 %v848
    %v2041 = vunpack.c.l.b16 %v849
    %v2042 = vunpack.c.h.b16 %v849
    %v2043 = vunpack.c.l.b16 %v850
    %v2044 = vunpack.c.h.b16 %v850
    %v2045 = vunpack.c.l.b16 %v851
    %v2046 = vunpack.c.h.b16 %v851
    %v2047 = vunpack.c.l.b16 %v852
    %v2048 = vunpack.c.h.b16 %v852
    %v2049 = vunpack.c.l.b16 %v853
    %v2050 = vunpack.c.h.b16 %v853
    %v2051 = vunpack.c.l.b16 %v854
    %v2052 = vunpack.c.h.b16 %v854
    %v2053 = vunpack.c.l.b16 %v855
    %v2054 = vunpack.c.h.b16 %v855
    %v2055 = vunpack.c.l.b16 %v856
    %v2056 = vunpack.c.h.b16 %v856
    %v2057 = vunpack.c.l.b16 %v857
    %v2058 = vunpack.c.h.b16 %v857
    %v2059 = vunpack.c.l.b16 %v858
    %v2060 = vunpack.c.h.b16 %v858
    %v2061 = vunpack.c.l.b16 %v859
    %v2062 = vunpack.c.h.b16 %v859
    %v2063 = vunpack.c.l.b16 %v860
    %v2064 = vunpack.c.h.b16 %v860
    %v2065 = vunpack.c.l.b16 %v861
    %v2066 = vunpack.c.h.b16 %v861
    %v2067 = vunpack.c.l.b16 %v862
    %v2068 = vunpack.c.h.b16 %v862
    %v2069 = vunpack.c.l.b16 %v863
    %v2070 = vunpack.c.h.b16 %v863
    %v2071 = vunpack.c.l.b16 %v864
    %v2072 = vunpack.c.h.b16 %v864
    %v2073 = vunpack.c.l.b16 %v865
    %v2074 = vunpack.c.h.b16 %v865
    %v2075 = vunpack.c.l.b16 %v866
    %v2076 = vunpack.c.h.b16 %v866
    %v2077 = vunpack.c.l.b16 %v867
    %v2078 = vunpack.c.h.b16 %v867
    %v2079 = vunpack.c.l.b16 %v868
    %v2080 = vunpack.c.h.b16 %v868
    %v2081 = vunpack.c.l.b16 %v869
    %v2082 = vunpack.c.h.b16 %v869
    %v2083 = vunpack.c.l.b16 %v870
    %v2084 = vunpack.c.h.b16 %v870
    %v2085 = vunpack.c.l.b16 %v871
    %v2086 = vunpack.c.h.b16 %v871
    %v2087 = vunpack.c.l.b16 %v872
    %v2088 = vunpack.c.h.b16 %v872
    %v2089 = vunpack.c.l.b16 %v873
    %v2090 = vunpack.c.h.b16 %v873
    %v2091 = vunpack.c.l.b16 %v874
    %v2092 = vunpack.c.h.b16 %v874
    %v2093 = vunpack.c.l.b16 %v875
    %v2094 = vunpack.c.h.b16 %v875
    %v2095 = vunpack.c.l.b16 %v876
    %v2096 = vunpack.c.h.b16 %v876
    %v2097 = vunpack.c.l.b16 %v877
    %v2098 = vunpack.c.h.b16 %v877
    %v2099 = vunpack.c.l.b16 %v878
    %v2100 = vunpack.c.h.b16 %v878
    %v2101 = vunpack.c.l.b16 %v879
    %v2102 = vunpack.c.h.b16 %v879
    %v2103 = vunpack.c.l.b16 %v880
    %v2104 = vunpack.c.h.b16 %v880
    %v2105 = vunpack.c.l.b16 %v881
    %v2106 = vunpack.c.h.b16 %v881
    %v2107 = vunpack.c.l.b16 %v882
    %v2108 = vunpack.c.h.b16 %v882
    %v2109 = vunpack.c.l.b16 %v883
    %v2110 = vunpack.c.h.b16 %v883
    %v2111 = vunpack.c.l.b16 %v884
    %v2112 = vunpack.c.h.b16 %v884
    %v2113 = vunpack.c.l.b16 %v885
    %v2114 = vunpack.c.h.b16 %v885
    %v2115 = vunpack.c.l.b16 %v886
    %v2116 = vunpack.c.h.b16 %v886
    %v2117 = vunpack.c.l.b16 %v887
    %v2118 = vunpack.c.h.b16 %v887
    %v2119 = vunpack.c.l.b16 %v888
    %v2120 = vunpack.c.h.b16 %v888
    %v2121 = vunpack.c.l.b16 %v889
    %v2122 = vunpack.c.h.b16 %v889
    %v2123 = vunpack.c.l.b16 %v890
    %v2124 = vunpack.c.h.b16 %v890
    %v2125 = vunpack.c.l.b16 %v891
    %v2126 = vunpack.c.h.b16 %v891
    %v2127 = vunpack.c.l.b16 %v892
    %v2128 = vunpack.c.h.b16 %v892
    %v2129 = vunpack.c.l.b16 %v893
    %v2130 = vunpack.c.h.b16 %v893
    %v2131 = vunpack.c.l.b16 %v894
    %v2132 = vunpack.c.h.b16 %v894
    %v2133 = vunpack.c.l.b16 %v895
    %v2134 = vunpack.c.h.b16 %v895
    %v2135 = vunpack.c.l.b16 %v896
    %v2136 = vunpack.c.h.b16 %v896
    %v2137 = vunpack.c.l.b16 %v897
    %v2138 = vunpack.c.h.b16 %v897
    %v2139 = vunpack.c.l.b16 %v898
    %v2140 = vunpack.c.h.b16 %v898
    %v2141 = vunpack.c.l.b16 %v899
    %v2142 = vunpack.c.h.b16 %v899
    %v2143 = vunpack.c.l.b16 %v900
    %v2144 = vunpack.c.h.b16 %v900
    %v2145 = vunpack.c.l.b16 %v901
    %v2146 = vunpack.c.h.b16 %v901
    %v2147 = vunpack.c.l.b16 %v902
    %v2148 = vunpack.c.h.b16 %v902
    %v2149 = vunpack.c.l.b16 %v903
    %v2150 = vunpack.c.h.b16 %v903
    %v2151 = vunpack.c.l.b16 %v904
    %v2152 = vunpack.c.h.b16 %v904
    %v2153 = vunpack.c.l.b16 %v905
    %v2154 = vunpack.c.h.b16 %v905
    %v2155 = vunpack.c.l.b16 %v906
    %v2156 = vunpack.c.h.b16 %v906
    %v2157 = vunpack.c.l.b16 %v907
    %v2158 = vunpack.c.h.b16 %v907
    %v2159 = vunpack.c.l.b16 %v908
    %v2160 = vunpack.c.h.b16 %v908
    %v2161 = vunpack.c.l.b16 %v909
    %v2162 = vunpack.c.h.b16 %v909
    %v2163 = vunpack.c.l.b16 %v910
    %v2164 = vunpack.c.h.b16 %v910
    %v2165 = vunpack.c.l.b16 %v911
    %v2166 = vunpack.c.h.b16 %v911
    %v2167 = vunpack.c.l.b16 %v912
    %v2168 = vunpack.c.h.b16 %v912
    %v2169 = vunpack.c.l.b16 %v913
    %v2170 = vunpack.c.h.b16 %v913
    %v2171 = vunpack.c.l.b16 %v914
    %v2172 = vunpack.c.h.b16 %v914
    %v2173 = vunpack.c.l.b16 %v915
    %v2174 = vunpack.c.h.b16 %v915
    %v2175 = vunpack.c.l.b16 %v916
    %v2176 = vunpack.c.h.b16 %v916
    %v2177 = vunpack.c.l.b16 %v917
    %v2178 = vunpack.c.h.b16 %v917
    %v2179 = vunpack.c.l.b16 %v918
    %v2180 = vunpack.c.h.b16 %v918
    %v2181 = vunpack.c.l.b16 %v919
    %v2182 = vunpack.c.h.b16 %v919
    %v2183 = vunpack.c.l.b16 %v920
    %v2184 = vunpack.c.h.b16 %v920
    %v2185 = vunpack.c.l.b16 %v921
    %v2186 = vunpack.c.h.b16 %v921
    %v2187 = vunpack.c.l.b16 %v922
    %v2188 = vunpack.c.h.b16 %v922
    %v2189 = vunpack.c.l.b16 %v923
    %v2190 = vunpack.c.h.b16 %v923
    %v2191 = vunpack.c.l.b16 %v924
    %v2192 = vunpack.c.h.b16 %v924
    %v2193 = vunpack.c.l.b16 %v925
    %v2194 = vunpack.c.h.b16 %v925
    %v2195 = vunpack.c.l.b16 %v926
    %v2196 = vunpack.c.h.b16 %v926
    %v2197 = vunpack.c.l.b16 %v927
    %v2198 = vunpack.c.h.b16 %v927
    %v2199 = vunpack.c.l.b16 %v928
    %v2200 = vunpack.c.h.b16 %v928
    %v2201 = vunpack.c.l.b16 %v929
    %v2202 = vunpack.c.h.b16 %v929
    %v2203 = vunpack.c.l.b16 %v930
    %v2204 = vunpack.c.h.b16 %v930
    %v2205 = vunpack.c.l.b16 %v931
    %v2206 = vunpack.c.h.b16 %v931
    %v2207 = vunpack.c.l.b16 %v932
    %v2208 = vunpack.c.h.b16 %v932
    %v2209 = vunpack.c.l.b16 %v933
    %v2210 = vunpack.c.h.b16 %v933
    %v2211 = vunpack.c.l.b16 %v934
    %v2212 = vunpack.c.h.b16 %v934
    %v2213 = vunpack.c.l.b16 %v935
    %v2214 = vunpack.c.h.b16 %v935
    %v2215 = vunpack.c.l.b16 %v936
    %v2216 = vunpack.c.h.b16 %v936
    %v2217 = vunpack.c.l.b16 %v937
    %v2218 = vunpack.c.h.b16 %v937
    %v2219 = vunpack.c.l.b16 %v938
    %v2220 = vunpack.c.h.b16 %v938
    %v2221 = vunpack.c.l.b16 %v939
    %v2222 = vunpack.c.h.b16 %v939
    %v2223 = vunpack.c.l.b16 %v940
    %v2224 = vunpack.c.h.b16 %v940
    %v2225 = vunpack.c.l.b16 %v941
    %v2226 = vunpack.c.h.b16 %v941
    %v2227 = vunpack.c.l.b16 %v942
    %v2228 = vunpack.c.h.b16 %v942
    %v2229 = vunpack.c.l.b16 %v943
    %v2230 = vunpack.c.h.b16 %v943
    %v2231 = vunpack.c.l.b16 %v944
    %v2232 = vunpack.c.h.b16 %v944
    %v2233 = vunpack.c.l.b16 %v945
    %v2234 = vunpack.c.h.b16 %v945
    %v2235 = vunpack.c.l.b16 %v946
    %v2236 = vunpack.c.h.b16 %v946
    %v2237 = vunpack.c.l.b16 %v947
    %v2238 = vunpack.c.h.b16 %v947
    %v2239 = vunpack.c.l.b16 %v948
    %v2240 = vunpack.c.h.b16 %v948
    %v2241 = vunpack.c.l.b16 %v949
    %v2242 = vunpack.c.h.b16 %v949
    %v2243 = vunpack.c.l.b16 %v950
    %v2244 = vunpack.c.h.b16 %v950
    %v2245 = vunpack.c.l.b16 %v951
    %v2246 = vunpack.c.h.b16 %v951
    %v2247 = vunpack.c.l.b16 %v952
    %v2248 = vunpack.c.h.b16 %v952
    %v2249 = vunpack.c.l.b16 %v953
    %v2250 = vunpack.c.h.b16 %v953
    %v2251 = vunpack.c.l.b16 %v954
    %v2252 = vunpack.c.h.b16 %v954
    %v2253 = vunpack.c.l.b16 %v955
    %v2254 = vunpack.c.h.b16 %v955
    %v2255 = vunpack.c.l.b16 %v956
    %v2256 = vunpack.c.h.b16 %v956
    %v2257 = vunpack.c.l.b16 %v957
    %v2258 = vunpack.c.h.b16 %v957
    %v2259 = vunpack.c.l.b16 %v958
    %v2260 = vunpack.c.h.b16 %v958
    %v2261 = vunpack.c.l.b16 %v959
    %v2262 = vunpack.c.h.b16 %v959
    %v2263 = vunpack.c.l.b16 %v960
    %v2264 = vunpack.c.h.b16 %v960
    %v2265 = vunpack.c.l.b16 %v961
    %v2266 = vunpack.c.h.b16 %v961
    %v2267 = vunpack.c.l.b16 %v962
    %v2268 = vunpack.c.h.b16 %v962
    %v2269 = vunpack.c.l.b16 %v963
    %v2270 = vunpack.c.h.b16 %v963
    %v2271 = vunpack.c.l.b16 %v964
    %v2272 = vunpack.c.h.b16 %v964
    %v2273 = vunpack.c.l.b16 %v965
    %v2274 = vunpack.c.h.b16 %v965
    %v2275 = vunpack.c.l.b16 %v966
    %v2276 = vunpack.c.h.b16 %v966
    %v2277 = vunpack.c.l.b16 %v967
    %v2278 = vunpack.c.h.b16 %v967
    %v2279 = vunpack.c.l.b16 %v968
    %v2280 = vunpack.c.h.b16 %v968
    %v2281 = vunpack.c.l.b16 %v969
    %v2282 = vunpack.c.h.b16 %v969
    %v2283 = vunpack.c.l.b16 %v970
    %v2284 = vunpack.c.h.b16 %v970
    %v2285 = vunpack.c.l.b16 %v971
    %v2286 = vunpack.c.h.b16 %v971
    %v2287 = vunpack.c.l.b16 %v972
    %v2288 = vunpack.c.h.b16 %v972
    %v2289 = vunpack.c.l.b16 %v973
    %v2290 = vunpack.c.h.b16 %v973
    %v2291 = vunpack.c.l.b16 %v974
    %v2292 = vunpack.c.h.b16 %v974
    %v2293 = vunpack.c.l.b16 %v975
    %v2294 = vunpack.c.h.b16 %v975
    %v2295 = vunpack.c.l.b16 %v976
    %v2296 = vunpack.c.h.b16 %v976
    %v2297 = vunpack.c.l.b16 %v977
    %v2298 = vunpack.c.h.b16 %v977
    %v2299 = vunpack.c.l.b16 %v978
    %v2300 = vunpack.c.h.b16 %v978
    %v2301 = vunpack.c.l.b16 %v979
    %v2302 = vunpack.c.h.b16 %v979
    %v2303 = vunpack.c.l.b16 %v980
    %v2304 = vunpack.c.h.b16 %v980
    %v2305 = vunpack.c.l.b16 %v981
    %v2306 = vunpack.c.h.b16 %v981
    %v2307 = vunpack.c.l.b16 %v982
    %v2308 = vunpack.c.h.b16 %v982
    %v2309 = vunpack.c.l.b16 %v983
    %v2310 = vunpack.c.h.b16 %v983
    %v2311 = vunpack.c.l.b16 %v984
    %v2312 = vunpack.c.h.b16 %v984
    %v2313 = vunpack.c.l.b16 %v985
    %v2314 = vunpack.c.h.b16 %v985
    %v2315 = vunpack.c.l.b16 %v986
    %v2316 = vunpack.c.h.b16 %v986
    %v2317 = vunpack.c.l.b16 %v987
    %v2318 = vunpack.c.h.b16 %v987
    %v2319 = vunpack.c.l.b16 %v988
    %v2320 = vunpack.c.h.b16 %v988
    %v2321 = vunpack.c.l.b16 %v989
    %v2322 = vunpack.c.h.b16 %v989
    %v2323 = vunpack.c.l.b16 %v990
    %v2324 = vunpack.c.h.b16 %v990
    %v2325 = vunpack.c.l.b16 %v991
    %v2326 = vunpack.c.h.b16 %v991
    %v2327 = vunpack.c.l.b16 %v992
    %v2328 = vunpack.c.h.b16 %v992
    %v2329 = vunpack.c.l.b16 %v993
    %v2330 = vunpack.c.h.b16 %v993
    %v2331 = vunpack.c.l.b16 %v994
    %v2332 = vunpack.c.h.b16 %v994
    %v2333 = vunpack.c.l.b16 %v995
    %v2334 = vunpack.c.h.b16 %v995
    %v2335 = vunpack.c.l.b16 %v996
    %v2336 = vunpack.c.h.b16 %v996
    %v2337 = vunpack.c.l.b16 %v997
    %v2338 = vunpack.c.h.b16 %v997
    %v2339 = vunpack.c.l.b16 %v998
    %v2340 = vunpack.c.h.b16 %v998
    %v2341 = vunpack.c.l.b16 %v999
    %v2342 = vunpack.c.h.b16 %v999
    %v2343 = vunpack.c.l.b16 %v1000
    %v2344 = vunpack.c.h.b16 %v1000
    %v2345 = vunpack.c.l.b16 %v1001
    %v2346 = vunpack.c.h.b16 %v1001
    %v2347 = vunpack.c.l.b16 %v1002
    %v2348 = vunpack.c.h.b16 %v1002
    %v2349 = vunpack.c.l.b16 %v1003
    %v2350 = vunpack.c.h.b16 %v1003
    %v2351 = vunpack.c.l.b16 %v1004
    %v2352 = vunpack.c.h.b16 %v1004
    %v2353 = vunpack.c.l.b16 %v1005
    %v2354 = vunpack.c.h.b16 %v1005
    %v2355 = vunpack.c.l.b16 %v1006
    %v2356 = vunpack.c.h.b16 %v1006
    %v2357 = vunpack.c.l.b16 %v1007
    %v2358 = vunpack.c.h.b16 %v1007
    %v2359 = vunpack.c.l.b16 %v1008
    %v2360 = vunpack.c.h.b16 %v1008
    %v2361 = vunpack.c.l.b16 %v1009
    %v2362 = vunpack.c.h.b16 %v1009
    %v2363 = vunpack.c.l.b16 %v1010
    %v2364 = vunpack.c.h.b16 %v1010
    %v2365 = vunpack.c.l.b16 %v1011
    %v2366 = vunpack.c.h.b16 %v1011
    %v2367 = vunpack.c.l.b16 %v1012
    %v2368 = vunpack.c.h.b16 %v1012
    %v2369 = vunpack.c.l.b16 %v1013
    %v2370 = vunpack.c.h.b16 %v1013
    %v2371 = vunpack.c.l.b16 %v1014
    %v2372 = vunpack.c.h.b16 %v1014
    %v2373 = vunpack.c.l.b16 %v1015
    %v2374 = vunpack.c.h.b16 %v1015
    %v2375 = vunpack.c.l.b16 %v1016
    %v2376 = vunpack.c.h.b16 %v1016
    %v2377 = vunpack.c.l.b16 %v1017
    %v2378 = vunpack.c.h.b16 %v1017
    %v2379 = vunpack.c.l.b16 %v1018
    %v2380 = vunpack.c.h.b16 %v1018
    %v2381 = vunpack.c.l.b16 %v1019
    %v2382 = vunpack.c.h.b16 %v1019
    %v2383 = vunpack.c.l.b16 %v1020
    %v2384 = vunpack.c.h.b16 %v1020
    %v2385 = vunpack.c.l.b16 %v1021
    %v2386 = vunpack.c.h.b16 %v1021
    %v2387 = vunpack.c.l.b16 %v1022
    %v2388 = vunpack.c.h.b16 %v1022
    %v2389 = vunpack.c.l.b16 %v1023
    %v2390 = vunpack.c.h.b16 %v1023
    %v2391 = vunpack.c.l.b16 %v1024
    %v2392 = vunpack.c.h.b16 %v1024
    %v2393 = vunpack.c.l.b16 %v1025
    %v2394 = vunpack.c.h.b16 %v1025
    %v2395 = vunpack.c.l.b16 %v1026
    %v2396 = vunpack.c.h.b16 %v1026
    %v2397 = vunpack.c.l.b16 %v1027
    %v2398 = vunpack.c.h.b16 %v1027
    %v2399 = vunpack.c.l.b16 %v1028
    %v2400 = vunpack.c.h.b16 %v1028
    %v2401 = vunpack.c.l.b16 %v1029
    %v2402 = vunpack.c.h.b16 %v1029
    %v2403 = vunpack.c.l.b16 %v1030
    %v2404 = vunpack.c.h.b16 %v1030
    %v2405 = vunpack.c.l.b16 %v1031
    %v2406 = vunpack.c.h.b16 %v1031
    %v2407 = vunpack.c.l.b16 %v1032
    %v2408 = vunpack.c.h.b16 %v1032
    %v2409 = vunpack.c.l.b16 %v1033
    %v2410 = vunpack.c.h.b16 %v1033
    %v2411 = vunpack.c.l.b16 %v1034
    %v2412 = vunpack.c.h.b16 %v1034
    %v2413 = vunpack.c.l.b16 %v1035
    %v2414 = vunpack.c.h.b16 %v1035
    %v2415 = vunpack.c.l.b16 %v1036
    %v2416 = vunpack.c.h.b16 %v1036
    %v2417 = vunpack.c.l.b16 %v1037
    %v2418 = vunpack.c.h.b16 %v1037
    %v2419 = vunpack.c.l.b16 %v1038
    %v2420 = vunpack.c.h.b16 %v1038
    %v2421 = vunpack.c.l.b16 %v1039
    %v2422 = vunpack.c.h.b16 %v1039
    %v2423 = vunpack.c.l.b16 %v1040
    %v2424 = vunpack.c.h.b16 %v1040
    %v2425 = vunpack.c.l.b16 %v1041
    %v2426 = vunpack.c.h.b16 %v1041
    %v2427 = vunpack.c.l.b16 %v1042
    %v2428 = vunpack.c.h.b16 %v1042
    %v2429 = vunpack.c.l.b16 %v1043
    %v2430 = vunpack.c.h.b16 %v1043
    %v2431 = vunpack.c.l.b16 %v1044
    %v2432 = vunpack.c.h.b16 %v1044
    %v2433 = vunpack.c.l.b16 %v1045
    %v2434 = vunpack.c.h.b16 %v1045
    %v2435 = vunpack.c.l.b16 %v1046
    %v2436 = vunpack.c.h.b16 %v1046
    %v2437 = vunpack.c.l.b16 %v1047
    %v2438 = vunpack.c.h.b16 %v1047
    %v2439 = vunpack.c.l.b16 %v1048
    %v2440 = vunpack.c.h.b16 %v1048
    %v2441 = vunpack.c.l.b16 %v1049
    %v2442 = vunpack.c.h.b16 %v1049
    %v2443 = vunpack.c.l.b16 %v1050
    %v2444 = vunpack.c.h.b16 %v1050
    %v2445 = vunpack.c.l.b16 %v1051
    %v2446 = vunpack.c.h.b16 %v1051
    %v2447 = vunpack.c.l.b16 %v1052
    %v2448 = vunpack.c.h.b16 %v1052
    %v2449 = vunpack.c.l.b16 %v1053
    %v2450 = vunpack.c.h.b16 %v1053
    %v2451 = vunpack.c.l.b16 %v1054
    %v2452 = vunpack.c.h.b16 %v1054
    %v2453 = vunpack.c.l.b16 %v1055
    %v2454 = vunpack.c.h.b16 %v1055
    %v2455 = vunpack.c.l.b16 %v1056
    %v2456 = vunpack.c.h.b16 %v1056
    %v2457 = vunpack.c.l.b16 %v1057
    %v2458 = vunpack.c.h.b16 %v1057
    %v2459 = vunpack.c.l.b16 %v1058
    %v2460 = vunpack.c.h.b16 %v1058
    %v2461 = vunpack.c.l.b16 %v1059
    %v2462 = vunpack.c.h.b16 %v1059
    %v2463 = vunpack.c.l.b16 %v1060
    %v2464 = vunpack.c.h.b16 %v1060
    %v2465 = vunpack.c.l.b16 %v1061
    %v2466 = vunpack.c.h.b16 %v1061
    %v2467 = vunpack.c.l.b16 %v1062
    %v2468 = vunpack.c.h.b16 %v1062
    %v2469 = vunpack.c.l.b16 %v1063
    %v2470 = vunpack.c.h.b16 %v1063
    %v2471 = vunpack.c.l.b16 %v1064
    %v2472 = vunpack.c.h.b16 %v1064
    %v2473 = vunpack.c.l.b16 %v1065
    %v2474 = vunpack.c.h.b16 %v1065
    %v2475 = vunpack.c.l.b16 %v1066
    %v2476 = vunpack.c.h.b16 %v1066
    %v2477 = vunpack.c.l.b16 %v1067
    %v2478 = vunpack.c.h.b16 %v1067
    %v2479 = vunpack.c.l.b16 %v1068
    %v2480 = vunpack.c.h.b16 %v1068
    %v2481 = vunpack.c.l.b16 %v1069
    %v2482 = vunpack.c.h.b16 %v1069
    %v2483 = vunpack.c.l.b16 %v1070
    %v2484 = vunpack.c.h.b16 %v1070
    %v2485 = vunpack.c.l.b16 %v1071
    %v2486 = vunpack.c.h.b16 %v1071
    %v2487 = vunpack.c.l.b16 %v1072
    %v2488 = vunpack.c.h.b16 %v1072
    %v2489 = vunpack.c.l.b16 %v1073
    %v2490 = vunpack.c.h.b16 %v1073
    %v2491 = vunpack.c.l.b16 %v1074
    %v2492 = vunpack.c.h.b16 %v1074
    %v2493 = vunpack.c.l.b16 %v1075
    %v2494 = vunpack.c.h.b16 %v1075
    %v2495 = vunpack.c.l.b16 %v1076
    %v2496 = vunpack.c.h.b16 %v1076
    %v2497 = vunpack.c.l.b16 %v1077
    %v2498 = vunpack.c.h.b16 %v1077
    %v2499 = vunpack.c.l.b16 %v1078
    %v2500 = vunpack.c.h.b16 %v1078
    %v2501 = vunpack.c.l.b16 %v1079
    %v2502 = vunpack.c.h.b16 %v1079
    %v2503 = vunpack.c.l.b16 %v1080
    %v2504 = vunpack.c.h.b16 %v1080
    %v2505 = vunpack.c.l.b16 %v1081
    %v2506 = vunpack.c.h.b16 %v1081
    %v2507 = vunpack.c.l.b16 %v1082
    %v2508 = vunpack.c.h.b16 %v1082
    %v2509 = vunpack.c.l.b16 %v1083
    %v2510 = vunpack.c.h.b16 %v1083
    %v2511 = vunpack.c.l.b16 %v1084
    %v2512 = vunpack.c.h.b16 %v1084
    %v2513 = vunpack.c.l.b16 %v1085
    %v2514 = vunpack.c.h.b16 %v1085
    %v2515 = vunpack.c.l.b16 %v1086
    %v2516 = vunpack.c.h.b16 %v1086
    %v2517 = vunpack.c.l.b16 %v1087
    %v2518 = vunpack.c.h.b16 %v1087
    %v2519 = vunpack.c.l.b16 %v1088
    %v2520 = vunpack.c.h.b16 %v1088
    %v2521 = vunpack.c.l.b16 %v1089
    %v2522 = vunpack.c.h.b16 %v1089
    %v2523 = vunpack.c.l.b16 %v1090
    %v2524 = vunpack.c.h.b16 %v1090
    %v2525 = vunpack.c.l.b16 %v1091
    %v2526 = vunpack.c.h.b16 %v1091
    %v2527 = vunpack.c.l.b16 %v1092
    %v2528 = vunpack.c.h.b16 %v1092
    %v2529 = vunpack.c.l.b16 %v1093
    %v2530 = vunpack.c.h.b16 %v1093
    %v2531 = vunpack.c.l.b16 %v1094
    %v2532 = vunpack.c.h.b16 %v1094
    %v2533 = vunpack.c.l.b16 %v1095
    %v2534 = vunpack.c.h.b16 %v1095
    %v2535 = vunpack.c.l.b16 %v1096
    %v2536 = vunpack.c.h.b16 %v1096
    %v2537 = vunpack.c.l.b16 %v1097
    %v2538 = vunpack.c.h.b16 %v1097
    %v2539 = vunpack.c.l.b16 %v1098
    %v2540 = vunpack.c.h.b16 %v1098
    %v2541 = vunpack.c.l.b16 %v1099
    %v2542 = vunpack.c.h.b16 %v1099
    %v2543 = vunpack.c.l.b16 %v1100
    %v2544 = vunpack.c.h.b16 %v1100
    %v2545 = vunpack.c.l.b16 %v1101
    %v2546 = vunpack.c.h.b16 %v1101
    %v2547 = vunpack.c.l.b16 %v1102
    %v2548 = vunpack.c.h.b16 %v1102
    %v2549 = vunpack.c.l.b16 %v1103
    %v2550 = vunpack.c.h.b16 %v1103
    %v2551 = vunpack.c.l.b16 %v1104
    %v2552 = vunpack.c.h.b16 %v1104
    %v2553 = vunpack.c.l.b16 %v1105
    %v2554 = vunpack.c.h.b16 %v1105
    %v2555 = vunpack.c.l.b16 %v1106
    %v2556 = vunpack.c.h.b16 %v1106
    %v2557 = vunpack.c.l.b16 %v1107
    %v2558 = vunpack.c.h.b16 %v1107
    %v2559 = vunpack.c.l.b16 %v1108
    %v2560 = vunpack.c.h.b16 %v1108
    %v2561 = vunpack.c.l.b16 %v1109
    %v2562 = vunpack.c.h.b16 %v1109
    %v2563 = vunpack.c.l.b16 %v1110
    %v2564 = vunpack.c.h.b16 %v1110
    %v2565 = vunpack.c.l.b16 %v1111
    %v2566 = vunpack.c.h.b16 %v1111
    %v2567 = vunpack.c.l.b16 %v1112
    %v2568 = vunpack.c.h.b16 %v1112
    %v2569 = vunpack.c.l.b16 %v1113
    %v2570 = vunpack.c.h.b16 %v1113
    %v2571 = vunpack.c.l.b16 %v1114
    %v2572 = vunpack.c.h.b16 %v1114
    %v2573 = vunpack.c.l.b16 %v1115
    %v2574 = vunpack.c.h.b16 %v1115
    %v2575 = vunpack.c.l.b16 %v1116
    %v2576 = vunpack.c.h.b16 %v1116
    %v2577 = vunpack.c.l.b16 %v1117
    %v2578 = vunpack.c.h.b16 %v1117
    %v2579 = vunpack.c.l.b16 %v1118
    %v2580 = vunpack.c.h.b16 %v1118
    %v2581 = vunpack.c.l.b16 %v1119
    %v2582 = vunpack.c.h.b16 %v1119
    %v2583 = vunpack.c.l.b16 %v1120
    %v2584 = vunpack.c.h.b16 %v1120
    %v2585 = vunpack.c.l.b16 %v1121
    %v2586 = vunpack.c.h.b16 %v1121
    %v2587 = vunpack.c.l.b16 %v1122
    %v2588 = vunpack.c.h.b16 %v1122
    %v2589 = vunpack.c.l.b16 %v1123
    %v2590 = vunpack.c.h.b16 %v1123
    %v2591 = vunpack.c.l.b16 %v1124
    %v2592 = vunpack.c.h.b16 %v1124
    %v2593 = vunpack.c.l.b16 %v1125
    %v2594 = vunpack.c.h.b16 %v1125
    %v2595 = vunpack.c.l.b16 %v1126
    %v2596 = vunpack.c.h.b16 %v1126
    %v2597 = vunpack.c.l.b16 %v1127
    %v2598 = vunpack.c.h.b16 %v1127
    %v2599 = vunpack.c.l.b16 %v1128
    %v2600 = vunpack.c.h.b16 %v1128
    %v2601 = vunpack.c.l.b16 %v1129
    %v2602 = vunpack.c.h.b16 %v1129
    %v2603 = vunpack.c.l.b16 %v1130
    %v2604 = vunpack.c.h.b16 %v1130
    %v2605 = vunpack.c.l.b16 %v1131
    %v2606 = vunpack.c.h.b16 %v1131
    %v2607 = vunpack.c.l.b16 %v1132
    %v2608 = vunpack.c.h.b16 %v1132
    %v2609 = vunpack.c.l.b16 %v1133
    %v2610 = vunpack.c.h.b16 %v1133
    %v2611 = vunpack.c.l.b16 %v1134
    %v2612 = vunpack.c.h.b16 %v1134
    %v2613 = vunpack.c.l.b16 %v1135
    %v2614 = vunpack.c.h.b16 %v1135
    %v2615 = vunpack.c.l.b16 %v1136
    %v2616 = vunpack.c.h.b16 %v1136
    %v2617 = vunpack.c.l.b16 %v1137
    %v2618 = vunpack.c.h.b16 %v1137
    %v2619 = vunpack.c.l.b16 %v1138
    %v2620 = vunpack.c.h.b16 %v1138
    %v2621 = vunpack.c.l.b16 %v1139
    %v2622 = vunpack.c.h.b16 %v1139
    %v2623 = vunpack.c.l.b16 %v1140
    %v2624 = vunpack.c.h.b16 %v1140
    %v2625 = vunpack.c.l.b16 %v1141
    %v2626 = vunpack.c.h.b16 %v1141
    %v2627 = vunpack.c.l.b16 %v1142
    %v2628 = vunpack.c.h.b16 %v1142
    %v2629 = vunpack.c.l.b16 %v1143
    %v2630 = vunpack.c.h.b16 %v1143
    %v2631 = vunpack.c.l.b16 %v1144
    %v2632 = vunpack.c.h.b16 %v1144
    %v2633 = vunpack.c.l.b16 %v1145
    %v2634 = vunpack.c.h.b16 %v1145
    %v2635 = vunpack.c.l.b16 %v1146
    %v2636 = vunpack.c.h.b16 %v1146
    %v2637 = vunpack.c.l.b16 %v1147
    %v2638 = vunpack.c.h.b16 %v1147
    %v2639 = vunpack.c.l.b16 %v1148
    %v2640 = vunpack.c.h.b16 %v1148
    %v2641 = vunpack.c.l.b16 %v1149
    %v2642 = vunpack.c.h.b16 %v1149
    %v2643 = vunpack.c.l.b16 %v1150
    %v2644 = vunpack.c.h.b16 %v1150
    %v2645 = vunpack.c.l.b16 %v1151
    %v2646 = vunpack.c.h.b16 %v1151
    %v2647 = vunpack.c.l.b16 %v1152
    %v2648 = vunpack.c.h.b16 %v1152
    %v2649 = vunpack.c.l.b16 %v1153
    %v2650 = vunpack.c.h.b16 %v1153
    %v2651 = vunpack.c.l.b16 %v1154
    %v2652 = vunpack.c.h.b16 %v1154
    %v2653 = vunpack.c.l.b16 %v1155
    %v2654 = vunpack.c.h.b16 %v1155
    %v2655 = vunpack.c.l.b16 %v1156
    %v2656 = vunpack.c.h.b16 %v1156
    %v2657 = vunpack.c.l.b16 %v1157
    %v2658 = vunpack.c.h.b16 %v1157
    %v2659 = vunpack.c.l.b16 %v1158
    %v2660 = vunpack.c.h.b16 %v1158
    %v2661 = vunpack.c.l.b16 %v1159
    %v2662 = vunpack.c.h.b16 %v1159
    %v2663 = vunpack.c.l.b16 %v1160
    %v2664 = vunpack.c.h.b16 %v1160
    %v2665 = vunpack.c.l.b16 %v1161
    %v2666 = vunpack.c.h.b16 %v1161
    %v2667 = vunpack.c.l.b16 %v1162
    %v2668 = vunpack.c.h.b16 %v1162
    %v2669 = vunpack.c.l.b16 %v1163
    %v2670 = vunpack.c.h.b16 %v1163
    %v2671 = vunpack.c.l.b16 %v1164
    %v2672 = vunpack.c.h.b16 %v1164
    %v2673 = vunpack.c.l.b16 %v1165
    %v2674 = vunpack.c.h.b16 %v1165
    %v2675 = vunpack.c.l.b16 %v1166
    %v2676 = vunpack.c.h.b16 %v1166
    %v2677 = vunpack.c.l.b16 %v1167
    %v2678 = vunpack.c.h.b16 %v1167
    %v2679 = vunpack.c.l.b16 %v1168
    %v2680 = vunpack.c.h.b16 %v1168
    %v2681 = vunpack.c.l.b16 %v1169
    %v2682 = vunpack.c.h.b16 %v1169
    %v2683 = vunpack.c.l.b16 %v1170
    %v2684 = vunpack.c.h.b16 %v1170
    %v2685 = vunpack.c.l.b16 %v1171
    %v2686 = vunpack.c.h.b16 %v1171
    %v2687 = vunpack.c.l.b16 %v1172
    %v2688 = vunpack.c.h.b16 %v1172
    %v2689 = vunpack.c.l.b16 %v1173
    %v2690 = vunpack.c.h.b16 %v1173
    %v2691 = vunpack.c.l.b16 %v1174
    %v2692 = vunpack.c.h.b16 %v1174
    %v2693 = vunpack.c.l.b16 %v1175
    %v2694 = vunpack.c.h.b16 %v1175
    %v2695 = vunpack.c.l.b16 %v1176
    %v2696 = vunpack.c.h.b16 %v1176
    %v2697 = vunpack.c.l.b16 %v1177
    %v2698 = vunpack.c.h.b16 %v1177
    %v2699 = vunpack.c.l.b16 %v1178
    %v2700 = vunpack.c.h.b16 %v1178
    %v2701 = vunpack.c.l.b16 %v1179
    %v2702 = vunpack.c.h.b16 %v1179
    %v2703 = vunpack.c.l.b16 %v1180
    %v2704 = vunpack.c.h.b16 %v1180
    %v2705 = vunpack.c.l.b16 %v1181
    %v2706 = vunpack.c.h.b16 %v1181
    %v2707 = vunpack.c.l.b16 %v1182
    %v2708 = vunpack.c.h.b16 %v1182
    %v2709 = vunpack.c.l.b16 %v1183
    %v2710 = vunpack.c.h.b16 %v1183
    %v2711 = vunpack.c.l.b16 %v1184
    %v2712 = vunpack.c.h.b16 %v1184
    %v2713 = vunpack.c.l.b16 %v1185
    %v2714 = vunpack.c.h.b16 %v1185
    %v2715 = vunpack.c.l.b16 %v1186
    %v2716 = vunpack.c.h.b16 %v1186
    %v2717 = vunpack.c.l.b16 %v1187
    %v2718 = vunpack.c.h.b16 %v1187
    %v2719 = vunpack.c.l.b16 %v1188
    %v2720 = vunpack.c.h.b16 %v1188
    %v2721 = vunpack.c.l.b16 %v1189
    %v2722 = vunpack.c.h.b16 %v1189
    %v2723 = vunpack.c.l.b16 %v1190
    %v2724 = vunpack.c.h.b16 %v1190
    %v2725 = vunpack.c.l.b16 %v1191
    %v2726 = vunpack.c.h.b16 %v1191
    %v2727 = vunpack.c.l.b16 %v1192
    %v2728 = vunpack.c.h.b16 %v1192
    %v2729 = vunpack.c.l.b16 %v1193
    %v2730 = vunpack.c.h.b16 %v1193
    %v2731 = vunpack.c.l.b16 %v1194
    %v2732 = vunpack.c.h.b16 %v1194
    %v2733 = vunpack.c.l.b16 %v1195
    %v2734 = vunpack.c.h.b16 %v1195
    %v2735 = vunpack.c.l.b16 %v1196
    %v2736 = vunpack.c.h.b16 %v1196
    %v2737 = vunpack.c.l.b16 %v1197
    %v2738 = vunpack.c.h.b16 %v1197
    %v2739 = vunpack.c.l.b16 %v1198
    %v2740 = vunpack.c.h.b16 %v1198
    %v2741 = vunpack.c.l.b16 %v1199
    %v2742 = vunpack.c.h.b16 %v1199
    %v2743 = vunpack.c.l.b16 %v1200
    %v2744 = vunpack.c.h.b16 %v1200
    %v2745 = vunpack.c.l.b16 %v1201
    %v2746 = vunpack.c.h.b16 %v1201
    %v2747 = vunpack.c.l.b16 %v1202
    %v2748 = vunpack.c.h.b16 %v1202
    %v2749 = vunpack.c.l.b16 %v1203
    %v2750 = vunpack.c.h.b16 %v1203
    %v2751 = vunpack.c.l.b16 %v1204
    %v2752 = vunpack.c.h.b16 %v1204
    %v2753 = vunpack.c.l.b16 %v1205
    %v2754 = vunpack.c.h.b16 %v1205
    %v2755 = vunpack.c.l.b16 %v1206
    %v2756 = vunpack.c.h.b16 %v1206
    %v2757 = vunpack.c.l.b16 %v1207
    %v2758 = vunpack.c.h.b16 %v1207
    %v2759 = vunpack.c.l.b16 %v1208
    %v2760 = vunpack.c.h.b16 %v1208
    %v2761 = vunpack.c.l.b16 %v1209
    %v2762 = vunpack.c.h.b16 %v1209
    %v2763 = vunpack.c.l.b16 %v1210
    %v2764 = vunpack.c.h.b16 %v1210
    %v2765 = vunpack.c.l.b16 %v1211
    %v2766 = vunpack.c.h.b16 %v1211
    %v2767 = vunpack.c.l.b16 %v1212
    %v2768 = vunpack.c.h.b16 %v1212
    %v2769 = vunpack.c.l.b16 %v1213
    %v2770 = vunpack.c.h.b16 %v1213
    %v2771 = vunpack.c.l.b16 %v1214
    %v2772 = vunpack.c.h.b16 %v1214
    %v2773 = vunpack.c.l.b16 %v1215
    %v2774 = vunpack.c.h.b16 %v1215
    %v2775 = vunpack.c.l.b16 %v1216
    %v2776 = vunpack.c.h.b16 %v1216
    %v2777 = vunpack.c.l.b16 %v1217
    %v2778 = vunpack.c.h.b16 %v1217
    %v2779 = vunpack.c.l.b16 %v1218
    %v2780 = vunpack.c.h.b16 %v1218
    %v2781 = vunpack.c.l.b16 %v1219
    %v2782 = vunpack.c.h.b16 %v1219
    %v2783 = vunpack.c.l.b16 %v1220
    %v2784 = vunpack.c.h.b16 %v1220
    %v2785 = vunpack.c.l.b16 %v1221
    %v2786 = vunpack.c.h.b16 %v1221
    %v2787 = vunpack.c.l.b16 %v1222
    %v2788 = vunpack.c.h.b16 %v1222
    %v2789 = vunpack.c.l.b16 %v1223
    %v2790 = vunpack.c.h.b16 %v1223
    %v2791 = vunpack.c.l.b16 %v1224
    %v2792 = vunpack.c.h.b16 %v1224
    %v2793 = vunpack.c.l.b16 %v1225
    %v2794 = vunpack.c.h.b16 %v1225
    %v2795 = vunpack.c.l.b16 %v1226
    %v2796 = vunpack.c.h.b16 %v1226
    %v2797 = vunpack.c.l.b16 %v1227
    %v2798 = vunpack.c.h.b16 %v1227
    %v2799 = vunpack.c.l.b16 %v1228
    %v2800 = vunpack.c.h.b16 %v1228
    %v2801 = vunpack.c.l.b16 %v1229
    %v2802 = vunpack.c.h.b16 %v1229
    %v2803 = vunpack.c.l.b16 %v1230
    %v2804 = vunpack.c.h.b16 %v1230
    %v2805 = vunpack.c.l.b16 %v1231
    %v2806 = vunpack.c.h.b16 %v1231
    %v2807 = vunpack.c.l.b16 %v1232
    %v2808 = vunpack.c.h.b16 %v1232
    %v2809 = vunpack.c.l.b16 %v1233
    %v2810 = vunpack.c.h.b16 %v1233
    %v2811 = vunpack.c.l.b16 %v1234
    %v2812 = vunpack.c.h.b16 %v1234
    %v2813 = vpack.c.b16 %v1797, %v1789
    %v2814 = vpack.c.b16 %v1798, %v1790
    %v2815 = vpack.c.b16 %v1799, %v1791
    %v2816 = vpack.c.b16 %v1800, %v1792
    %v2817 = vpack.c.b16 %v1801, %v1793
    %v2818 = vpack.c.b16 %v1802, %v1794
    %v2819 = vpack.c.b16 %v1803, %v1795
    %v2820 = vpack.c.b16 %v1804, %v1796
    %v2821 = vpack.c.b16 %v1813, %v1805
    %v2822 = vpack.c.b16 %v1814, %v1806
    %v2823 = vpack.c.b16 %v1815, %v1807
    %v2824 = vpack.c.b16 %v1816, %v1808
    %v2825 = vpack.c.b16 %v1817, %v1809
    %v2826 = vpack.c.b16 %v1818, %v1810
    %v2827 = vpack.c.b16 %v1819, %v1811
    %v2828 = vpack.c.b16 %v1820, %v1812
    %v2829 = vpack.c.b16 %v1829, %v1821
    %v2830 = vpack.c.b16 %v1830, %v1822
    %v2831 = vpack.c.b16 %v1831, %v1823
    %v2832 = vpack.c.b16 %v1832, %v1824
    %v2833 = vpack.c.b16 %v1833, %v1825
    %v2834 = vpack.c.b16 %v1834, %v1826
    %v2835 = vpack.c.b16 %v1835, %v1827
    %v2836 = vpack.c.b16 %v1836, %v1828
    %v2837 = vpack.c.b16 %v1845, %v1837
    %v2838 = vpack.c.b16 %v1846, %v1838
    %v2839 = vpack.c.b16 %v1847, %v1839
    %v2840 = vpack.c.b16 %v1848, %v1840
    %v2841 = vpack.c.b16 %v1849, %v1841
    %v2842 = vpack.c.b16 %v1850, %v1842
    %v2843 = vpack.c.b16 %v1851, %v1843
    %v2844 = vpack.c.b16 %v1852, %v1844
    %v2845 = vpack.c.b16 %v1861, %v1853
    %v2846 = vpack.c.b16 %v1862, %v1854
    %v2847 = vpack.c.b16 %v1863, %v1855
    %v2848 = vpack.c.b16 %v1864, %v1856
    %v2849 = vpack.c.b16 %v1865, %v1857
    %v2850 = vpack.c.b16 %v1866, %v1858
    %v2851 = vpack.c.b16 %v1867, %v1859
    %v2852 = vpack.c.b16 %v1868, %v1860
    %v2853 = vpack.c.b16 %v1877, %v1869
    %v2854 = vpack.c.b16 %v1878, %v1870
    %v2855 = vpack.c.b16 %v1879, %v1871
    %v2856 = vpack.c.b16 %v1880, %v1872
    %v2857 = vpack.c.b16 %v1881, %v1873
    %v2858 = vpack.c.b16 %v1882, %v1874
    %v2859 = vpack.c.b16 %v1883, %v1875
    %v2860 = vpack.c.b16 %v1884, %v1876
    %v2861 = vpack.c.b16 %v1893, %v1885
    %v2862 = vpack.c.b16 %v1894, %v1886
    %v2863 = vpack.c.b16 %v1895, %v1887
    %v2864 = vpack.c.b16 %v1896, %v1888
    %v2865 = vpack.c.b16 %v1897, %v1889
    %v2866 = vpack.c.b16 %v1898, %v1890
    %v2867 = vpack.c.b16 %v1899, %v1891
    %v2868 = vpack.c.b16 %v1900, %v1892
    %v2869 = vpack.c.b16 %v1909, %v1901
    %v2870 = vpack.c.b16 %v1910, %v1902
    %v2871 = vpack.c.b16 %v1911, %v1903
    %v2872 = vpack.c.b16 %v1912, %v1904
    %v2873 = vpack.c.b16 %v1913, %v1905
    %v2874 = vpack.c.b16 %v1914, %v1906
    %v2875 = vpack.c.b16 %v1915, %v1907
    %v2876 = vpack.c.b16 %v1916, %v1908
    %v2877 = vpack.c.b16 %v1925, %v1917
    %v2878 = vpack.c.b16 %v1926, %v1918
    %v2879 = vpack.c.b16 %v1927, %v1919
    %v2880 = vpack.c.b16 %v1928, %v1920
    %v2881 = vpack.c.b16 %v1929, %v1921
    %v2882 = vpack.c.b16 %v1930, %v1922
    %v2883 = vpack.c.b16 %v1931, %v1923
    %v2884 = vpack.c.b16 %v1932, %v1924
    %v2885 = vpack.c.b16 %v1941, %v1933
    %v2886 = vpack.c.b16 %v1942, %v1934
    %v2887 = vpack.c.b16 %v1943, %v1935
    %v2888 = vpack.c.b16 %v1944, %v1936
    %v2889 = vpack.c.b16 %v1945, %v1937
    %v2890 = vpack.c.b16 %v1946, %v1938
    %v2891 = vpack.c.b16 %v1947, %v1939
    %v2892 = vpack.c.b16 %v1948, %v1940
    %v2893 = vpack.c.b16 %v1957, %v1949
    %v2894 = vpack.c.b16 %v1958, %v1950
    %v2895 = vpack.c.b16 %v1959, %v1951
    %v2896 = vpack.c.b16 %v1960, %v1952
    %v2897 = vpack.c.b16 %v1961, %v1953
    %v2898 = vpack.c.b16 %v1962, %v1954
    %v2899 = vpack.c.b16 %v1963, %v1955
    %v2900 = vpack.c.b16 %v1964, %v1956
    %v2901 = vpack.c.b16 %v1973, %v1965
    %v2902 = vpack.c.b16 %v1974, %v1966
    %v2903 = vpack.c.b16 %v1975, %v1967
    %v2904 = vpack.c.b16 %v1976, %v1968
    %v2905 = vpack.c.b16 %v1977, %v1969
    %v2906 = vpack.c.b16 %v1978, %v1970
    %v2907 = vpack.c.b16 %v1979, %v1971
    %v2908 = vpack.c.b16 %v1980, %v1972
    %v2909 = vpack.c.b16 %v1989, %v1981
    %v2910 = vpack.c.b16 %v1990, %v1982
    %v2911 = vpack.c.b16 %v1991, %v1983
    %v2912 = vpack.c.b16 %v1992, %v1984
    %v2913 = vpack.c.b16 %v1993, %v1985
    %v2914 = vpack.c.b16 %v1994, %v1986
    %v2915 = vpack.c.b16 %v1995, %v1987
    %v2916 = vpack.c.b16 %v1996, %v1988
    %v2917 = vpack.c.b16 %v2005, %v1997
    %v2918 = vpack.c.b16 %v2006, %v1998
    %v2919 = vpack.c.b16 %v2007, %v1999
    %v2920 = vpack.c.b16 %v2008, %v2000
    %v2921 = vpack.c.b16 %v2009, %v2001
    %v2922 = vpack.c.b16 %v2010, %v2002
    %v2923 = vpack.c.b16 %v2011, %v2003
    %v2924 = vpack.c.b16 %v2012, %v2004
    %v2925 = vpack.c.b16 %v2021, %v2013
    %v2926 = vpack.c.b16 %v2022, %v2014
    %v2927 = vpack.c.b16 %v2023, %v2015
    %v2928 = vpack.c.b16 %v2024, %v2016
    %v2929 = vpack.c.b16 %v2025, %v2017
    %v2930 = vpack.c.b16 %v2026, %v2018
    %v2931 = vpack.c.b16 %v2027, %v2019
    %v2932 = vpack.c.b16 %v2028, %v2020
    %v2933 = vpack.c.b16 %v2037, %v2029
    %v2934 = vpack.c.b16 %v2038, %v2030
    %v2935 = vpack.c.b16 %v2039, %v2031
    %v2936 = vpack.c.b16 %v2040, %v2032
    %v2937 = vpack.c.b16 %v2041, %v2033
    %v2938 = vpack.c.b16 %v2042, %v2034
    %v2939 = vpack.c.b16 %v2043, %v2035
    %v2940 = vpack.c.b16 %v2044, %v2036
    %v2941 = vpack.c.b16 %v2053, %v2045
    %v2942 = vpack.c.b16 %v2054, %v2046
    %v2943 = vpack.c.b16 %v2055, %v2047
    %v2944 = vpack.c.b16 %v2056, %v2048
    %v2945 = vpack.c.b16 %v2057, %v2049
    %v2946 = vpack.c.b16 %v2058, %v2050
    %v2947 = vpack.c.b16 %v2059, %v2051
    %v2948 = vpack.c.b16 %v2060, %v2052
    %v2949 = vpack.c.b16 %v2069, %v2061
    %v2950 = vpack.c.b16 %v2070, %v2062
    %v2951 = vpack.c.b16 %v2071, %v2063
    %v2952 = vpack.c.b16 %v2072, %v2064
    %v2953 = vpack.c.b16 %v2073, %v2065
    %v2954 = vpack.c.b16 %v2074, %v2066
    %v2955 = vpack.c.b16 %v2075, %v2067
    %v2956 = vpack.c.b16 %v2076, %v2068
    %v2957 = vpack.c.b16 %v2085, %v2077
    %v2958 = vpack.c.b16 %v2086, %v2078
    %v2959 = vpack.c.b16 %v2087, %v2079
    %v2960 = vpack.c.b16 %v2088, %v2080
    %v2961 = vpack.c.b16 %v2089, %v2081
    %v2962 = vpack.c.b16 %v2090, %v2082
    %v2963 = vpack.c.b16 %v2091, %v2083
    %v2964 = vpack.c.b16 %v2092, %v2084
    %v2965 = vpack.c.b16 %v2101, %v2093
    %v2966 = vpack.c.b16 %v2102, %v2094
    %v2967 = vpack.c.b16 %v2103, %v2095
    %v2968 = vpack.c.b16 %v2104, %v2096
    %v2969 = vpack.c.b16 %v2105, %v2097
    %v2970 = vpack.c.b16 %v2106, %v2098
    %v2971 = vpack.c.b16 %v2107, %v2099
    %v2972 = vpack.c.b16 %v2108, %v2100
    %v2973 = vpack.c.b16 %v2117, %v2109
    %v2974 = vpack.c.b16 %v2118, %v2110
    %v2975 = vpack.c.b16 %v2119, %v2111
    %v2976 = vpack.c.b16 %v2120, %v2112
    %v2977 = vpack.c.b16 %v2121, %v2113
    %v2978 = vpack.c.b16 %v2122, %v2114
    %v2979 = vpack.c.b16 %v2123, %v2115
    %v2980 = vpack.c.b16 %v2124, %v2116
    %v2981 = vpack.c.b16 %v2133, %v2125
    %v2982 = vpack.c.b16 %v2134, %v2126
    %v2983 = vpack.c.b16 %v2135, %v2127
    %v2984 = vpack.c.b16 %v2136, %v2128
    %v2985 = vpack.c.b16 %v2137, %v2129
    %v2986 = vpack.c.b16 %v2138, %v2130
    %v2987 = vpack.c.b16 %v2139, %v2131
    %v2988 = vpack.c.b16 %v2140, %v2132
    %v2989 = vpack.c.b16 %v2149, %v2141
    %v2990 = vpack.c.b16 %v2150, %v2142
    %v2991 = vpack.c.b16 %v2151, %v2143
    %v2992 = vpack.c.b16 %v2152, %v2144
    %v2993 = vpack.c.b16 %v2153, %v2145
    %v2994 = vpack.c.b16 %v2154, %v2146
    %v2995 = vpack.c.b16 %v2155, %v2147
    %v2996 = vpack.c.b16 %v2156, %v2148
    %v2997 = vpack.c.b16 %v2165, %v2157
    %v2998 = vpack.c.b16 %v2166, %v2158
    %v2999 = vpack.c.b16 %v2167, %v2159
    %v3000 = vpack.c.b16 %v2168, %v2160
    %v3001 = vpack.c.b16 %v2169, %v2161
    %v3002 = vpack.c.b16 %v2170, %v2162
    %v3003 = vpack.c.b16 %v2171, %v2163
    %v3004 = vpack.c.b16 %v2172, %v2164
    %v3005 = vpack.c.b16 %v2181, %v2173
    %v3006 = vpack.c.b16 %v2182, %v2174
    %v3007 = vpack.c.b16 %v2183, %v2175
    %v3008 = vpack.c.b16 %v2184, %v2176
    %v3009 = vpack.c.b16 %v2185, %v2177
    %v3010 = vpack.c.b16 %v2186, %v2178
    %v3011 = vpack.c.b16 %v2187, %v2179
    %v3012 = vpack.c.b16 %v2188, %v2180
    %v3013 = vpack.c.b16 %v2197, %v2189
    %v3014 = vpack.c.b16 %v2198, %v2190
    %v3015 = vpack.c.b16 %v2199, %v2191
    %v3016 = vpack.c.b16 %v2200, %v2192
    %v3017 = vpack.c.b16 %v2201, %v2193
    %v3018 = vpack.c.b16 %v2202, %v2194
    %v3019 = vpack.c.b16 %v2203, %v2195
    %v3020 = vpack.c.b16 %v2204, %v2196
    %v3021 = vpack.c.b16 %v2213, %v2205
    %v3022 = vpack.c.b16 %v2214, %v2206
    %v3023 = vpack.c.b16 %v2215, %v2207
    %v3024 = vpack.c.b16 %v2216, %v2208
    %v3025 = vpack.c.b16 %v2217, %v2209
    %v3026 = vpack.c.b16 %v2218, %v2210
    %v3027 = vpack.c.b16 %v2219, %v2211
    %v3028 = vpack.c.b16 %v2220, %v2212
    %v3029 = vpack.c.b16 %v2229, %v2221
    %v3030 = vpack.c.b16 %v2230, %v2222
    %v3031 = vpack.c.b16 %v2231, %v2223
    %v3032 = vpack.c.b16 %v2232, %v2224
    %v3033 = vpack.c.b16 %v2233, %v2225
    %v3034 = vpack.c.b16 %v2234, %v2226
    %v3035 = vpack.c.b16 %v2235, %v2227
    %v3036 = vpack.c.b16 %v2236, %v2228
    %v3037 = vpack.c.b16 %v2245, %v2237
    %v3038 = vpack.c.b16 %v2246, %v2238
    %v3039 = vpack.c.b16 %v2247, %v2239
    %v3040 = vpack.c.b16 %v2248, %v2240
    %v3041 = vpack.c.b16 %v2249, %v2241
    %v3042 = vpack.c.b16 %v2250, %v2242
    %v3043 = vpack.c.b16 %v2251, %v2243
    %v3044 = vpack.c.b16 %v2252, %v2244
    %v3045 = vpack.c.b16 %v2261, %v2253
    %v3046 = vpack.c.b16 %v2262, %v2254
    %v3047 = vpack.c.b16 %v2263, %v2255
    %v3048 = vpack.c.b16 %v2264, %v2256
    %v3049 = vpack.c.b16 %v2265, %v2257
    %v3050 = vpack.c.b16 %v2266, %v2258
    %v3051 = vpack.c.b16 %v2267, %v2259
    %v3052 = vpack.c.b16 %v2268, %v2260
    %v3053 = vpack.c.b16 %v2277, %v2269
    %v3054 = vpack.c.b16 %v2278, %v2270
    %v3055 = vpack.c.b16 %v2279, %v2271
    %v3056 = vpack.c.b16 %v2280, %v2272
    %v3057 = vpack.c.b16 %v2281, %v2273
    %v3058 = vpack.c.b16 %v2282, %v2274
    %v3059 = vpack.c.b16 %v2283, %v2275
    %v3060 = vpack.c.b16 %v2284, %v2276
    %v3061 = vpack.c.b16 %v2293, %v2285
    %v3062 = vpack.c.b16 %v2294, %v2286
    %v3063 = vpack.c.b16 %v2295, %v2287
    %v3064 = vpack.c.b16 %v2296, %v2288
    %v3065 = vpack.c.b16 %v2297, %v2289
    %v3066 = vpack.c.b16 %v2298, %v2290
    %v3067 = vpack.c.b16 %v2299, %v2291
    %v3068 = vpack.c.b16 %v2300, %v2292
    %v3069 = vpack.c.b16 %v2309, %v2301
    %v3070 = vpack.c.b16 %v2310, %v2302
    %v3071 = vpack.c.b16 %v2311, %v2303
    %v3072 = vpack.c.b16 %v2312, %v2304
    %v3073 = vpack.c.b16 %v2313, %v2305
    %v3074 = vpack.c.b16 %v2314, %v2306
    %v3075 = vpack.c.b16 %v2315, %v2307
    %v3076 = vpack.c.b16 %v2316, %v2308
    %v3077 = vpack.c.b16 %v2325, %v2317
    %v3078 = vpack.c.b16 %v2326, %v2318
    %v3079 = vpack.c.b16 %v2327, %v2319
    %v3080 = vpack.c.b16 %v2328, %v2320
    %v3081 = vpack.c.b16 %v2329, %v2321
    %v3082 = vpack.c.b16 %v2330, %v2322
    %v3083 = vpack.c.b16 %v2331, %v2323
    %v3084 = vpack.c.b16 %v2332, %v2324
    %v3085 = vpack.c.b16 %v2341, %v2333
    %v3086 = vpack.c.b16 %v2342, %v2334
    %v3087 = vpack.c.b16 %v2343, %v2335
    %v3088 = vpack.c.b16 %v2344, %v2336
    %v3089 = vpack.c.b16 %v2345, %v2337
    %v3090 = vpack.c.b16 %v2346, %v2338
    %v3091 = vpack.c.b16 %v2347, %v2339
    %v3092 = vpack.c.b16 %v2348, %v2340
    %v3093 = vpack.c.b16 %v2357, %v2349
    %v3094 = vpack.c.b16 %v2358, %v2350
    %v3095 = vpack.c.b16 %v2359, %v2351
    %v3096 = vpack.c.b16 %v2360, %v2352
    %v3097 = vpack.c.b16 %v2361, %v2353
    %v3098 = vpack.c.b16 %v2362, %v2354
    %v3099 = vpack.c.b16 %v2363, %v2355
    %v3100 = vpack.c.b16 %v2364, %v2356
    %v3101 = vpack.c.b16 %v2373, %v2365
    %v3102 = vpack.c.b16 %v2374, %v2366
    %v3103 = vpack.c.b16 %v2375, %v2367
    %v3104 = vpack.c.b16 %v2376, %v2368
    %v3105 = vpack.c.b16 %v2377, %v2369
    %v3106 = vpack.c.b16 %v2378, %v2370
    %v3107 = vpack.c.b16 %v2379, %v2371
    %v3108 = vpack.c.b16 %v2380, %v2372
    %v3109 = vpack.c.b16 %v2389, %v2381
    %v3110 = vpack.c.b16 %v2390, %v2382
    %v3111 = vpack.c.b16 %v2391, %v2383
    %v3112 = vpack.c.b16 %v2392, %v2384
    %v3113 = vpack.c.b16 %v2393, %v2385
    %v3114 = vpack.c.b16 %v2394, %v2386
    %v3115 = vpack.c.b16 %v2395, %v2387
    %v3116 = vpack.c.b16 %v2396, %v2388
    %v3117 = vpack.c.b16 %v2405, %v2397
    %v3118 = vpack.c.b16 %v2406, %v2398
    %v3119 = vpack.c.b16 %v2407, %v2399
    %v3120 = vpack.c.b16 %v2408, %v2400
    %v3121 = vpack.c.b16 %v2409, %v2401
    %v3122 = vpack.c.b16 %v2410, %v2402
    %v3123 = vpack.c.b16 %v2411, %v2403
    %v3124 = vpack.c.b16 %v2412, %v2404
    %v3125 = vpack.c.b16 %v2421, %v2413
    %v3126 = vpack.c.b16 %v2422, %v2414
    %v3127 = vpack.c.b16 %v2423, %v2415
    %v3128 = vpack.c.b16 %v2424, %v2416
    %v3129 = vpack.c.b16 %v2425, %v2417
    %v3130 = vpack.c.b16 %v2426, %v2418
    %v3131 = vpack.c.b16 %v2427, %v2419
    %v3132 = vpack.c.b16 %v2428, %v2420
    %v3133 = vpack.c.b16 %v2437, %v2429
    %v3134 = vpack.c.b16 %v2438, %v2430
    %v3135 = vpack.c.b16 %v2439, %v2431
    %v3136 = vpack.c.b16 %v2440, %v2432
    %v3137 = vpack.c.b16 %v2441, %v2433
    %v3138 = vpack.c.b16 %v2442, %v2434
    %v3139 = vpack.c.b16 %v2443, %v2435
    %v3140 = vpack.c.b16 %v2444, %v2436
    %v3141 = vpack.c.b16 %v2453, %v2445
    %v3142 = vpack.c.b16 %v2454, %v2446
    %v3143 = vpack.c.b16 %v2455, %v2447
    %v3144 = vpack.c.b16 %v2456, %v2448
    %v3145 = vpack.c.b16 %v2457, %v2449
    %v3146 = vpack.c.b16 %v2458, %v2450
    %v3147 = vpack.c.b16 %v2459, %v2451
    %v3148 = vpack.c.b16 %v2460, %v2452
    %v3149 = vpack.c.b16 %v2469, %v2461
    %v3150 = vpack.c.b16 %v2470, %v2462
    %v3151 = vpack.c.b16 %v2471, %v2463
    %v3152 = vpack.c.b16 %v2472, %v2464
    %v3153 = vpack.c.b16 %v2473, %v2465
    %v3154 = vpack.c.b16 %v2474, %v2466
    %v3155 = vpack.c.b16 %v2475, %v2467
    %v3156 = vpack.c.b16 %v2476, %v2468
    %v3157 = vpack.c.b16 %v2485, %v2477
    %v3158 = vpack.c.b16 %v2486, %v2478
    %v3159 = vpack.c.b16 %v2487, %v2479
    %v3160 = vpack.c.b16 %v2488, %v2480
    %v3161 = vpack.c.b16 %v2489, %v2481
    %v3162 = vpack.c.b16 %v2490, %v2482
    %v3163 = vpack.c.b16 %v2491, %v2483
    %v3164 = vpack.c.b16 %v2492, %v2484
    %v3165 = vpack.c.b16 %v2501, %v2493
    %v3166 = vpack.c.b16 %v2502, %v2494
    %v3167 = vpack.c.b16 %v2503, %v2495
    %v3168 = vpack.c.b16 %v2504, %v2496
    %v3169 = vpack.c.b16 %v2505, %v2497
    %v3170 = vpack.c.b16 %v2506, %v2498
    %v3171 = vpack.c.b16 %v2507, %v2499
    %v3172 = vpack.c.b16 %v2508, %v2500
    %v3173 = vpack.c.b16 %v2517, %v2509
    %v3174 = vpack.c.b16 %v2518, %v2510
    %v3175 = vpack.c.b16 %v2519, %v2511
    %v3176 = vpack.c.b16 %v2520, %v2512
    %v3177 = vpack.c.b16 %v2521, %v2513
    %v3178 = vpack.c.b16 %v2522, %v2514
    %v3179 = vpack.c.b16 %v2523, %v2515
    %v3180 = vpack.c.b16 %v2524, %v2516
    %v3181 = vpack.c.b16 %v2533, %v2525
    %v3182 = vpack.c.b16 %v2534, %v2526
    %v3183 = vpack.c.b16 %v2535, %v2527
    %v3184 = vpack.c.b16 %v2536, %v2528
    %v3185 = vpack.c.b16 %v2537, %v2529
    %v3186 = vpack.c.b16 %v2538, %v2530
    %v3187 = vpack.c.b16 %v2539, %v2531
    %v3188 = vpack.c.b16 %v2540, %v2532
    %v3189 = vpack.c.b16 %v2549, %v2541
    %v3190 = vpack.c.b16 %v2550, %v2542
    %v3191 = vpack.c.b16 %v2551, %v2543
    %v3192 = vpack.c.b16 %v2552, %v2544
    %v3193 = vpack.c.b16 %v2553, %v2545
    %v3194 = vpack.c.b16 %v2554, %v2546
    %v3195 = vpack.c.b16 %v2555, %v2547
    %v3196 = vpack.c.b16 %v2556, %v2548
    %v3197 = vpack.c.b16 %v2565, %v2557
    %v3198 = vpack.c.b16 %v2566, %v2558
    %v3199 = vpack.c.b16 %v2567, %v2559
    %v3200 = vpack.c.b16 %v2568, %v2560
    %v3201 = vpack.c.b16 %v2569, %v2561
    %v3202 = vpack.c.b16 %v2570, %v2562
    %v3203 = vpack.c.b16 %v2571, %v2563
    %v3204 = vpack.c.b16 %v2572, %v2564
    %v3205 = vpack.c.b16 %v2581, %v2573
    %v3206 = vpack.c.b16 %v2582, %v2574
    %v3207 = vpack.c.b16 %v2583, %v2575
    %v3208 = vpack.c.b16 %v2584, %v2576
    %v3209 = vpack.c.b16 %v2585, %v2577
    %v3210 = vpack.c.b16 %v2586, %v2578
    %v3211 = vpack.c.b16 %v2587, %v2579
    %v3212 = vpack.c.b16 %v2588, %v2580
    %v3213 = vpack.c.b16 %v2597, %v2589
    %v3214 = vpack.c.b16 %v2598, %v2590
    %v3215 = vpack.c.b16 %v2599, %v2591
    %v3216 = vpack.c.b16 %v2600, %v2592
    %v3217 = vpack.c.b16 %v2601, %v2593
    %v3218 = vpack.c.b16 %v2602, %v2594
    %v3219 = vpack.c.b16 %v2603, %v2595
    %v3220 = vpack.c.b16 %v2604, %v2596
    %v3221 = vpack.c.b16 %v2613, %v2605
    %v3222 = vpack.c.b16 %v2614, %v2606
    %v3223 = vpack.c.b16 %v2615, %v2607
    %v3224 = vpack.c.b16 %v2616, %v2608
    %v3225 = vpack.c.b16 %v2617, %v2609
    %v3226 = vpack.c.b16 %v2618, %v2610
    %v3227 = vpack.c.b16 %v2619, %v2611
    %v3228 = vpack.c.b16 %v2620, %v2612
    %v3229 = vpack.c.b16 %v2629, %v2621
    %v3230 = vpack.c.b16 %v2630, %v2622
    %v3231 = vpack.c.b16 %v2631, %v2623
    %v3232 = vpack.c.b16 %v2632, %v2624
    %v3233 = vpack.c.b16 %v2633, %v2625
    %v3234 = vpack.c.b16 %v2634, %v2626
    %v3235 = vpack.c.b16 %v2635, %v2627
    %v3236 = vpack.c.b16 %v2636, %v2628
    %v3237 = vpack.c.b16 %v2645, %v2637
    %v3238 = vpack.c.b16 %v2646, %v2638
    %v3239 = vpack.c.b16 %v2647, %v2639
    %v3240 = vpack.c.b16 %v2648, %v2640
    %v3241 = vpack.c.b16 %v2649, %v2641
    %v3242 = vpack.c.b16 %v2650, %v2642
    %v3243 = vpack.c.b16 %v2651, %v2643
    %v3244 = vpack.c.b16 %v2652, %v2644
    %v3245 = vpack.c.b16 %v2661, %v2653
    %v3246 = vpack.c.b16 %v2662, %v2654
    %v3247 = vpack.c.b16 %v2663, %v2655
    %v3248 = vpack.c.b16 %v2664, %v2656
    %v3249 = vpack.c.b16 %v2665, %v2657
    %v3250 = vpack.c.b16 %v2666, %v2658
    %v3251 = vpack.c.b16 %v2667, %v2659
    %v3252 = vpack.c.b16 %v2668, %v2660
    %v3253 = vpack.c.b16 %v2677, %v2669
    %v3254 = vpack.c.b16 %v2678, %v2670
    %v3255 = vpack.c.b16 %v2679, %v2671
    %v3256 = vpack.c.b16 %v2680, %v2672
    %v3257 = vpack.c.b16 %v2681, %v2673
    %v3258 = vpack.c.b16 %v2682, %v2674
    %v3259 = vpack.c.b16 %v2683, %v2675
    %v3260 = vpack.c.b16 %v2684, %v2676
    %v3261 = vpack.c.b16 %v2693, %v2685
    %v3262 = vpack.c.b16 %v2694, %v2686
    %v3263 = vpack.c.b16 %v2695, %v2687
    %v3264 = vpack.c.b16 %v2696, %v2688
    %v3265 = vpack.c.b16 %v2697, %v2689
    %v3266 = vpack.c.b16 %v2698, %v2690
    %v3267 = vpack.c.b16 %v2699, %v2691
    %v3268 = vpack.c.b16 %v2700, %v2692
    %v3269 = vpack.c.b16 %v2709, %v2701
    %v3270 = vpack.c.b16 %v2710, %v2702
    %v3271 = vpack.c.b16 %v2711, %v2703
    %v3272 = vpack.c.b16 %v2712, %v2704
    %v3273 = vpack.c.b16 %v2713, %v2705
    %v3274 = vpack.c.b16 %v2714, %v2706
    %v3275 = vpack.c.b16 %v2715, %v2707
    %v3276 = vpack.c.b16 %v2716, %v2708
    %v3277 = vpack.c.b16 %v2725, %v2717
    %v3278 = vpack.c.b16 %v2726, %v2718
    %v3279 = vpack.c.b16 %v2727, %v2719
    %v3280 = vpack.c.b16 %v2728, %v2720
    %v3281 = vpack.c.b16 %v2729, %v2721
    %v3282 = vpack.c.b16 %v2730, %v2722
    %v3283 = vpack.c.b16 %v2731, %v2723
    %v3284 = vpack.c.b16 %v2732, %v2724
    %v3285 = vpack.c.b16 %v2741, %v2733
    %v3286 = vpack.c.b16 %v2742, %v2734
    %v3287 = vpack.c.b16 %v2743, %v2735
    %v3288 = vpack.c.b16 %v2744, %v2736
    %v3289 = vpack.c.b16 %v2745, %v2737
    %v3290 = vpack.c.b16 %v2746, %v2738
    %v3291 = vpack.c.b16 %v2747, %v2739
    %v3292 = vpack.c.b16 %v2748, %v2740
    %v3293 = vpack.c.b16 %v2757, %v2749
    %v3294 = vpack.c.b16 %v2758, %v2750
    %v3295 = vpack.c.b16 %v2759, %v2751
    %v3296 = vpack.c.b16 %v2760, %v2752
    %v3297 = vpack.c.b16 %v2761, %v2753
    %v3298 = vpack.c.b16 %v2762, %v2754
    %v3299 = vpack.c.b16 %v2763, %v2755
    %v3300 = vpack.c.b16 %v2764, %v2756
    %v3301 = vpack.c.b16 %v2773, %v2765
    %v3302 = vpack.c.b16 %v2774, %v2766
    %v3303 = vpack.c.b16 %v2775, %v2767
    %v3304 = vpack.c.b16 %v2776, %v2768
    %v3305 = vpack.c.b16 %v2777, %v2769
    %v3306 = vpack.c.b16 %v2778, %v2770
    %v3307 = vpack.c.b16 %v2779, %v2771
    %v3308 = vpack.c.b16 %v2780, %v2772
    %v3309 = vpack.c.b16 %v2789, %v2781
    %v3310 = vpack.c.b16 %v2790, %v2782
    %v3311 = vpack.c.b16 %v2791, %v2783
    %v3312 = vpack.c.b16 %v2792, %v2784
    %v3313 = vpack.c.b16 %v2793, %v2785
    %v3314 = vpack.c.b16 %v2794, %v2786
    %v3315 = vpack.c.b16 %v2795, %v2787
    %v3316 = vpack.c.b16 %v2796, %v2788
    %v3317 = vpack.c.b16 %v2805, %v2797
    %v3318 = vpack.c.b16 %v2806, %v2798
    %v3319 = vpack.c.b16 %v2807, %v2799
    %v3320 = vpack.c.b16 %v2808, %v2800
    %v3321 = vpack.c.b16 %v2809, %v2801
    %v3322 = vpack.c.b16 %v2810, %v2802
    %v3323 = vpack.c.b16 %v2811, %v2803
    %v3324 = vpack.c.b16 %v2812, %v2804
    %3837 = vmatprep.subr.bf16.mxu0 %v2870
    %3838 = vmatpush1.bf16.msra.mxu0 %v2869
    %3839 = vmatprep.subr.bf16.mxu0 %v2862
    %3840 = vmatpush1.bf16.msra.mxu0 %v2861
    %3841 = vmatprep.subr.bf16.mxu0 %v2854
    %3842 = vmatpush1.bf16.msra.mxu0 %v2853
    %3843 = vmatprep.subr.bf16.mxu0 %v2846
    %3844 = vmatpush1.bf16.msra.mxu0 %v2845
    %3845 = vmatprep.subr.bf16.mxu0 %v2838
    %3846 = vmatpush1.bf16.msra.mxu0 %v2837
    %3847 = vmatprep.subr.bf16.mxu0 %v2830
    %3848 = vmatpush1.bf16.msra.mxu0 %v2829
    %3849 = vmatprep.subr.bf16.mxu0 %v2822
    %3850 = vmatpush1.bf16.msra.mxu0 %v2821
    %3851 = vmatprep.subr.bf16.mxu0 %v2814
    %3852 = vmatpush1.bf16.msra.mxu0 %v2813
    %3853 = vmatprep.subr.bf16.mxu0 %v2934
    %3854 = vmatpush2.bf16.msra.mxu0 %v2933
    %3855 = vmatprep.subr.bf16.mxu0 %v2926
    %3856 = vmatpush2.bf16.msra.mxu0 %v2925
    %3857 = vmatprep.subr.bf16.mxu0 %v2918
    %3858 = vmatpush2.bf16.msra.mxu0 %v2917
    %3859 = vmatprep.subr.bf16.mxu0 %v2910
    %3860 = vmatpush2.bf16.msra.mxu0 %v2909
    %3861 = vmatprep.subr.bf16.mxu0 %v2902
    %3862 = vmatpush2.bf16.msra.mxu0 %v2901
    %3863 = vmatprep.subr.bf16.mxu0 %v2894
    %3864 = vmatpush2.bf16.msra.mxu0 %v2893
    %3865 = vmatprep.subr.bf16.mxu0 %v2886
    %3866 = vmatpush2.bf16.msra.mxu0 %v2885
    %3867 = vmatprep.subr.bf16.mxu0 %v2878
    %3868 = vmatpush2.bf16.msra.mxu0 %v2877
    %3869 = vmatprep.mubr.bf16.mxu0 %v716
    %3870 = vmatmul.mubr.bf16.gmra.mxu0 %v715
    %v3871 = vpop.f32.mrf.mxu0
    %v3872 = vadd.f32 %v1240, %v3871
    %v3873 = vpop.f32.mrf.mxu0
    %v3874 = vadd.f32 %v1244, %v3873
    %v3875 = vpop.f32.mrf.mxu0
    %v3876 = vpop.f32.mrf.mxu0
    %3877 = vdwg.mxu0
    %3878 = vmatprep.subr.bf16.mxu0 %v2998
    %3879 = vmatpush1.bf16.msra.mxu0 %v2997
    %3880 = vmatprep.subr.bf16.mxu0 %v2990
    %3881 = vmatpush1.bf16.msra.mxu0 %v2989
    %3882 = vmatprep.subr.bf16.mxu0 %v2982
    %3883 = vmatpush1.bf16.msra.mxu0 %v2981
    %3884 = vmatprep.subr.bf16.mxu0 %v2974
    %3885 = vmatpush1.bf16.msra.mxu0 %v2973
    %3886 = vmatprep.subr.bf16.mxu0 %v2966
    %3887 = vmatpush1.bf16.msra.mxu0 %v2965
    %3888 = vmatprep.subr.bf16.mxu0 %v2958
    %3889 = vmatpush1.bf16.msra.mxu0 %v2957
    %3890 = vmatprep.subr.bf16.mxu0 %v2950
    %3891 = vmatpush1.bf16.msra.mxu0 %v2949
    %3892 = vmatprep.subr.bf16.mxu0 %v2942
    %3893 = vmatpush1.bf16.msra.mxu0 %v2941
    %3894 = vmatprep.subr.bf16.mxu0 %v3062
    %3895 = vmatpush2.bf16.msra.mxu0 %v3061
    %3896 = vmatprep.subr.bf16.mxu0 %v3054
    %3897 = vmatpush2.bf16.msra.mxu0 %v3053
    %3898 = vmatprep.subr.bf16.mxu0 %v3046
    %3899 = vmatpush2.bf16.msra.mxu0 %v3045
    %3900 = vmatprep.subr.bf16.mxu0 %v3038
    %3901 = vmatpush2.bf16.msra.mxu0 %v3037
    %3902 = vmatprep.subr.bf16.mxu0 %v3030
    %3903 = vmatpush2.bf16.msra.mxu0 %v3029
    %3904 = vmatprep.subr.bf16.mxu0 %v3022
    %3905 = vmatpush2.bf16.msra.mxu0 %v3021
    %3906 = vmatprep.subr.bf16.mxu0 %v3014
    %3907 = vmatpush2.bf16.msra.mxu0 %v3013
    %3908 = vmatprep.subr.bf16.mxu0 %v3006
    %3909 = vmatpush2.bf16.msra.mxu0 %v3005
    %3910 = vmatprep.mubr.bf16.mxu0 %v718
    %3911 = vmatmul.mubr.bf16.gmra.mxu0 %v717
    %v3912 = vpop.f32.mrf.mxu0
    %v3913 = vadd.f32 %v3872, %v3912
    %v3914 = vpop.f32.mrf.mxu0
    %v3915 = vadd.f32 %v3874, %v3914
    %v3916 = vpop.f32.mrf.mxu0
    %v3917 = vpop.f32.mrf.mxu0
    %3918 = vdwg.mxu0
    %3919 = vmatprep.subr.bf16.mxu0 %v3126
    %3920 = vmatpush1.bf16.msra.mxu0 %v3125
    %3921 = vmatprep.subr.bf16.mxu0 %v3118
    %3922 = vmatpush1.bf16.msra.mxu0 %v3117
    %3923 = vmatprep.subr.bf16.mxu0 %v3110
    %3924 = vmatpush1.bf16.msra.mxu0 %v3109
    %3925 = vmatprep.subr.bf16.mxu0 %v3102
    %3926 = vmatpush1.bf16.msra.mxu0 %v3101
    %3927 = vmatprep.subr.bf16.mxu0 %v3094
    %3928 = vmatpush1.bf16.msra.mxu0 %v3093
    %3929 = vmatprep.subr.bf16.mxu0 %v3086
    %3930 = vmatpush1.bf16.msra.mxu0 %v3085
    %3931 = vmatprep.subr.bf16.mxu0 %v3078
    %3932 = vmatpush1.bf16.msra.mxu0 %v3077
    %3933 = vmatprep.subr.bf16.mxu0 %v3070
    %3934 = vmatpush1.bf16.msra.mxu0 %v3069
    %3935 = vmatprep.subr.bf16.mxu0 %v3190
    %3936 = vmatpush2.bf16.msra.mxu0 %v3189
    %3937 = vmatprep.subr.bf16.mxu0 %v3182
    %3938 = vmatpush2.bf16.msra.mxu0 %v3181
    %3939 = vmatprep.subr.bf16.mxu0 %v3174
    %3940 = vmatpush2.bf16.msra.mxu0 %v3173
    %3941 = vmatprep.subr.bf16.mxu0 %v3166
    %3942 = vmatpush2.bf16.msra.mxu0 %v3165
    %3943 = vmatprep.subr.bf16.mxu0 %v3158
    %3944 = vmatpush2.bf16.msra.mxu0 %v3157
    %3945 = vmatprep.subr.bf16.mxu0 %v3150
    %3946 = vmatpush2.bf16.msra.mxu0 %v3149
    %3947 = vmatprep.subr.bf16.mxu0 %v3142
    %3948 = vmatpush2.bf16.msra.mxu0 %v3141
    %3949 = vmatprep.subr.bf16.mxu0 %v3134
    %3950 = vmatpush2.bf16.msra.mxu0 %v3133
    %3951 = vmatprep.mubr.bf16.mxu0 %v720
    %3952 = vmatmul.mubr.bf16.gmra.mxu0 %v719
    %v3953 = vpop.f32.mrf.mxu0
    %v3954 = vadd.f32 %v3913, %v3953
    %v3955 = vpop.f32.mrf.mxu0
    %v3956 = vadd.f32 %v3915, %v3955
    %v3957 = vpop.f32.mrf.mxu0
    %v3958 = vpop.f32.mrf.mxu0
    %3959 = vdwg.mxu0
    %3960 = vmatprep.subr.bf16.mxu0 %v3254
    %3961 = vmatpush1.bf16.msra.mxu0 %v3253
    %3962 = vmatprep.subr.bf16.mxu0 %v3246
    %3963 = vmatpush1.bf16.msra.mxu0 %v3245
    %3964 = vmatprep.subr.bf16.mxu0 %v3238
    %3965 = vmatpush1.bf16.msra.mxu0 %v3237
    %3966 = vmatprep.subr.bf16.mxu0 %v3230
    %3967 = vmatpush1.bf16.msra.mxu0 %v3229
    %3968 = vmatprep.subr.bf16.mxu0 %v3222
    %3969 = vmatpush1.bf16.msra.mxu0 %v3221
    %3970 = vmatprep.subr.bf16.mxu0 %v3214
    %3971 = vmatpush1.bf16.msra.mxu0 %v3213
    %3972 = vmatprep.subr.bf16.mxu0 %v3206
    %3973 = vmatpush1.bf16.msra.mxu0 %v3205
    %3974 = vmatprep.subr.bf16.mxu0 %v3198
    %3975 = vmatpush1.bf16.msra.mxu0 %v3197
    %3976 = vmatprep.subr.bf16.mxu0 %v3318
    %3977 = vmatpush2.bf16.msra.mxu0 %v3317
    %3978 = vmatprep.subr.bf16.mxu0 %v3310
    %3979 = vmatpush2.bf16.msra.mxu0 %v3309
    %3980 = vmatprep.subr.bf16.mxu0 %v3302
    %3981 = vmatpush2.bf16.msra.mxu0 %v3301
    %3982 = vmatprep.subr.bf16.mxu0 %v3294
    %3983 = vmatpush2.bf16.msra.mxu0 %v3293
    %3984 = vmatprep.subr.bf16.mxu0 %v3286
    %3985 = vmatpush2.bf16.msra.mxu0 %v3285
    %3986 = vmatprep.subr.bf16.mxu0 %v3278
    %3987 = vmatpush2.bf16.msra.mxu0 %v3277
    %3988 = vmatprep.subr.bf16.mxu0 %v3270
    %3989 = vmatpush2.bf16.msra.mxu0 %v3269
    %3990 = vmatprep.subr.bf16.mxu0 %v3262
    %3991 = vmatpush2.bf16.msra.mxu0 %v3261
    %3992 = vmatprep.mubr.bf16.mxu0 %v722
    %3993 = vmatmul.mubr.bf16.gmra.mxu0 %v721
    %v3994 = vpop.f32.mrf.mxu0
    %v3995 = vadd.f32 %v3954, %v3994
    %v3996 = vpop.f32.mrf.mxu0
    %v3997 = vadd.f32 %v3956, %v3996
    %v3998 = vpop.f32.mrf.mxu0
    %v3999 = vpop.f32.mrf.mxu0
    %4000 = vdwg.mxu0
    %4001 = vmatprep.subr.bf16.mxu0 %v2872
    %4002 = vmatpush1.bf16.msra.mxu0 %v2871
    %4003 = vmatprep.subr.bf16.mxu0 %v2864
    %4004 = vmatpush1.bf16.msra.mxu0 %v2863
    %4005 = vmatprep.subr.bf16.mxu0 %v2856
    %4006 = vmatpush1.bf16.msra.mxu0 %v2855
    %4007 = vmatprep.subr.bf16.mxu0 %v2848
    %4008 = vmatpush1.bf16.msra.mxu0 %v2847
    %4009 = vmatprep.subr.bf16.mxu0 %v2840
    %4010 = vmatpush1.bf16.msra.mxu0 %v2839
    %4011 = vmatprep.subr.bf16.mxu0 %v2832
    %4012 = vmatpush1.bf16.msra.mxu0 %v2831
    %4013 = vmatprep.subr.bf16.mxu0 %v2824
    %4014 = vmatpush1.bf16.msra.mxu0 %v2823
    %4015 = vmatprep.subr.bf16.mxu0 %v2816
    %4016 = vmatpush1.bf16.msra.mxu0 %v2815
    %4017 = vmatprep.subr.bf16.mxu0 %v2936
    %4018 = vmatpush2.bf16.msra.mxu0 %v2935
    %4019 = vmatprep.subr.bf16.mxu0 %v2928
    %4020 = vmatpush2.bf16.msra.mxu0 %v2927
    %4021 = vmatprep.subr.bf16.mxu0 %v2920
    %4022 = vmatpush2.bf16.msra.mxu0 %v2919
    %4023 = vmatprep.subr.bf16.mxu0 %v2912
    %4024 = vmatpush2.bf16.msra.mxu0 %v2911
    %4025 = vmatprep.subr.bf16.mxu0 %v2904
    %4026 = vmatpush2.bf16.msra.mxu0 %v2903
    %4027 = vmatprep.subr.bf16.mxu0 %v2896
    %4028 = vmatpush2.bf16.msra.mxu0 %v2895
    %4029 = vmatprep.subr.bf16.mxu0 %v2888
    %4030 = vmatpush2.bf16.msra.mxu0 %v2887
    %4031 = vmatprep.subr.bf16.mxu0 %v2880
    %4032 = vmatpush2.bf16.msra.mxu0 %v2879
    %4033 = vmatprep.mubr.bf16.mxu0 %v716
    %4034 = vmatmul.mubr.bf16.gmra.mxu0 %v715
    %v4035 = vpop.f32.mrf.mxu0
    %v4036 = vadd.f32 %v1248, %v4035
    %v4037 = vpop.f32.mrf.mxu0
    %v4038 = vadd.f32 %v1252, %v4037
    %v4039 = vpop.f32.mrf.mxu0
    %v4040 = vpop.f32.mrf.mxu0
    %4041 = vdwg.mxu0
    %4042 = vmatprep.subr.bf16.mxu0 %v3000
    %4043 = vmatpush1.bf16.msra.mxu0 %v2999
    %4044 = vmatprep.subr.bf16.mxu0 %v2992
    %4045 = vmatpush1.bf16.msra.mxu0 %v2991
    %4046 = vmatprep.subr.bf16.mxu0 %v2984
    %4047 = vmatpush1.bf16.msra.mxu0 %v2983
    %4048 = vmatprep.subr.bf16.mxu0 %v2976
    %4049 = vmatpush1.bf16.msra.mxu0 %v2975
    %4050 = vmatprep.subr.bf16.mxu0 %v2968
    %4051 = vmatpush1.bf16.msra.mxu0 %v2967
    %4052 = vmatprep.subr.bf16.mxu0 %v2960
    %4053 = vmatpush1.bf16.msra.mxu0 %v2959
    %4054 = vmatprep.subr.bf16.mxu0 %v2952
    %4055 = vmatpush1.bf16.msra.mxu0 %v2951
    %4056 = vmatprep.subr.bf16.mxu0 %v2944
    %4057 = vmatpush1.bf16.msra.mxu0 %v2943
    %4058 = vmatprep.subr.bf16.mxu0 %v3064
    %4059 = vmatpush2.bf16.msra.mxu0 %v3063
    %4060 = vmatprep.subr.bf16.mxu0 %v3056
    %4061 = vmatpush2.bf16.msra.mxu0 %v3055
    %4062 = vmatprep.subr.bf16.mxu0 %v3048
    %4063 = vmatpush2.bf16.msra.mxu0 %v3047
    %4064 = vmatprep.subr.bf16.mxu0 %v3040
    %4065 = vmatpush2.bf16.msra.mxu0 %v3039
    %4066 = vmatprep.subr.bf16.mxu0 %v3032
    %4067 = vmatpush2.bf16.msra.mxu0 %v3031
    %4068 = vmatprep.subr.bf16.mxu0 %v3024
    %4069 = vmatpush2.bf16.msra.mxu0 %v3023
    %4070 = vmatprep.subr.bf16.mxu0 %v3016
    %4071 = vmatpush2.bf16.msra.mxu0 %v3015
    %4072 = vmatprep.subr.bf16.mxu0 %v3008
    %4073 = vmatpush2.bf16.msra.mxu0 %v3007
    %4074 = vmatprep.mubr.bf16.mxu0 %v718
    %4075 = vmatmul.mubr.bf16.gmra.mxu0 %v717
    %v4076 = vpop.f32.mrf.mxu0
    %v4077 = vadd.f32 %v4036, %v4076
    %v4078 = vpop.f32.mrf.mxu0
    %v4079 = vadd.f32 %v4038, %v4078
    %v4080 = vpop.f32.mrf.mxu0
    %v4081 = vpop.f32.mrf.mxu0
    %4082 = vdwg.mxu0
    %4083 = vmatprep.subr.bf16.mxu0 %v3128
    %4084 = vmatpush1.bf16.msra.mxu0 %v3127
    %4085 = vmatprep.subr.bf16.mxu0 %v3120
    %4086 = vmatpush1.bf16.msra.mxu0 %v3119
    %4087 = vmatprep.subr.bf16.mxu0 %v3112
    %4088 = vmatpush1.bf16.msra.mxu0 %v3111
    %4089 = vmatprep.subr.bf16.mxu0 %v3104
    %4090 = vmatpush1.bf16.msra.mxu0 %v3103
    %4091 = vmatprep.subr.bf16.mxu0 %v3096
    %4092 = vmatpush1.bf16.msra.mxu0 %v3095
    %4093 = vmatprep.subr.bf16.mxu0 %v3088
    %4094 = vmatpush1.bf16.msra.mxu0 %v3087
    %4095 = vmatprep.subr.bf16.mxu0 %v3080
    %4096 = vmatpush1.bf16.msra.mxu0 %v3079
    %4097 = vmatprep.subr.bf16.mxu0 %v3072
    %4098 = vmatpush1.bf16.msra.mxu0 %v3071
    %4099 = vmatprep.subr.bf16.mxu0 %v3192
    %4100 = vmatpush2.bf16.msra.mxu0 %v3191
    %4101 = vmatprep.subr.bf16.mxu0 %v3184
    %4102 = vmatpush2.bf16.msra.mxu0 %v3183
    %4103 = vmatprep.subr.bf16.mxu0 %v3176
    %4104 = vmatpush2.bf16.msra.mxu0 %v3175
    %4105 = vmatprep.subr.bf16.mxu0 %v3168
    %4106 = vmatpush2.bf16.msra.mxu0 %v3167
    %4107 = vmatprep.subr.bf16.mxu0 %v3160
    %4108 = vmatpush2.bf16.msra.mxu0 %v3159
    %4109 = vmatprep.subr.bf16.mxu0 %v3152
    %4110 = vmatpush2.bf16.msra.mxu0 %v3151
    %4111 = vmatprep.subr.bf16.mxu0 %v3144
    %4112 = vmatpush2.bf16.msra.mxu0 %v3143
    %4113 = vmatprep.subr.bf16.mxu0 %v3136
    %4114 = vmatpush2.bf16.msra.mxu0 %v3135
    %4115 = vmatprep.mubr.bf16.mxu0 %v720
    %4116 = vmatmul.mubr.bf16.gmra.mxu0 %v719
    %v4117 = vpop.f32.mrf.mxu0
    %v4118 = vadd.f32 %v4077, %v4117
    %v4119 = vpop.f32.mrf.mxu0
    %v4120 = vadd.f32 %v4079, %v4119
    %v4121 = vpop.f32.mrf.mxu0
    %v4122 = vpop.f32.mrf.mxu0
    %4123 = vdwg.mxu0
    %4124 = vmatprep.subr.bf16.mxu0 %v3256
    %4125 = vmatpush1.bf16.msra.mxu0 %v3255
    %4126 = vmatprep.subr.bf16.mxu0 %v3248
    %4127 = vmatpush1.bf16.msra.mxu0 %v3247
    %4128 = vmatprep.subr.bf16.mxu0 %v3240
    %4129 = vmatpush1.bf16.msra.mxu0 %v3239
    %4130 = vmatprep.subr.bf16.mxu0 %v3232
    %4131 = vmatpush1.bf16.msra.mxu0 %v3231
    %4132 = vmatprep.subr.bf16.mxu0 %v3224
    %4133 = vmatpush1.bf16.msra.mxu0 %v3223
    %4134 = vmatprep.subr.bf16.mxu0 %v3216
    %4135 = vmatpush1.bf16.msra.mxu0 %v3215
    %4136 = vmatprep.subr.bf16.mxu0 %v3208
    %4137 = vmatpush1.bf16.msra.mxu0 %v3207
    %4138 = vmatprep.subr.bf16.mxu0 %v3200
    %4139 = vmatpush1.bf16.msra.mxu0 %v3199
    %4140 = vmatprep.subr.bf16.mxu0 %v3320
    %4141 = vmatpush2.bf16.msra.mxu0 %v3319
    %4142 = vmatprep.subr.bf16.mxu0 %v3312
    %4143 = vmatpush2.bf16.msra.mxu0 %v3311
    %4144 = vmatprep.subr.bf16.mxu0 %v3304
    %4145 = vmatpush2.bf16.msra.mxu0 %v3303
    %4146 = vmatprep.subr.bf16.mxu0 %v3296
    %4147 = vmatpush2.bf16.msra.mxu0 %v3295
    %4148 = vmatprep.subr.bf16.mxu0 %v3288
    %4149 = vmatpush2.bf16.msra.mxu0 %v3287
    %4150 = vmatprep.subr.bf16.mxu0 %v3280
    %4151 = vmatpush2.bf16.msra.mxu0 %v3279
    %4152 = vmatprep.subr.bf16.mxu0 %v3272
    %4153 = vmatpush2.bf16.msra.mxu0 %v3271
    %4154 = vmatprep.subr.bf16.mxu0 %v3264
    %4155 = vmatpush2.bf16.msra.mxu0 %v3263
    %4156 = vmatprep.mubr.bf16.mxu0 %v722
    %4157 = vmatmul.mubr.bf16.gmra.mxu0 %v721
    %v4158 = vpop.f32.mrf.mxu0
    %v4159 = vadd.f32 %v4118, %v4158
    %v4160 = vpop.f32.mrf.mxu0
    %v4161 = vadd.f32 %v4120, %v4160
    %v4162 = vpop.f32.mrf.mxu0
    %v4163 = vpop.f32.mrf.mxu0
    %4164 = vdwg.mxu0
    %4165 = vmatprep.subr.bf16.mxu0 %v2874
    %4166 = vmatpush1.bf16.msra.mxu0 %v2873
    %4167 = vmatprep.subr.bf16.mxu0 %v2866
    %4168 = vmatpush1.bf16.msra.mxu0 %v2865
    %4169 = vmatprep.subr.bf16.mxu0 %v2858
    %4170 = vmatpush1.bf16.msra.mxu0 %v2857
    %4171 = vmatprep.subr.bf16.mxu0 %v2850
    %4172 = vmatpush1.bf16.msra.mxu0 %v2849
    %4173 = vmatprep.subr.bf16.mxu0 %v2842
    %4174 = vmatpush1.bf16.msra.mxu0 %v2841
    %4175 = vmatprep.subr.bf16.mxu0 %v2834
    %4176 = vmatpush1.bf16.msra.mxu0 %v2833
    %4177 = vmatprep.subr.bf16.mxu0 %v2826
    %4178 = vmatpush1.bf16.msra.mxu0 %v2825
    %4179 = vmatprep.subr.bf16.mxu0 %v2818
    %4180 = vmatpush1.bf16.msra.mxu0 %v2817
    %4181 = vmatprep.subr.bf16.mxu0 %v2938
    %4182 = vmatpush2.bf16.msra.mxu0 %v2937
    %4183 = vmatprep.subr.bf16.mxu0 %v2930
    %4184 = vmatpush2.bf16.msra.mxu0 %v2929
    %4185 = vmatprep.subr.bf16.mxu0 %v2922
    %4186 = vmatpush2.bf16.msra.mxu0 %v2921
    %4187 = vmatprep.subr.bf16.mxu0 %v2914
    %4188 = vmatpush2.bf16.msra.mxu0 %v2913
    %4189 = vmatprep.subr.bf16.mxu0 %v2906
    %4190 = vmatpush2.bf16.msra.mxu0 %v2905
    %4191 = vmatprep.subr.bf16.mxu0 %v2898
    %4192 = vmatpush2.bf16.msra.mxu0 %v2897
    %4193 = vmatprep.subr.bf16.mxu0 %v2890
    %4194 = vmatpush2.bf16.msra.mxu0 %v2889
    %4195 = vmatprep.subr.bf16.mxu0 %v2882
    %4196 = vmatpush2.bf16.msra.mxu0 %v2881
    %4197 = vmatprep.mubr.bf16.mxu0 %v716
    %4198 = vmatmul.mubr.bf16.gmra.mxu0 %v715
    %v4199 = vpop.f32.mrf.mxu0
    %v4200 = vadd.f32 %v1256, %v4199
    %v4201 = vpop.f32.mrf.mxu0
    %v4202 = vadd.f32 %v1260, %v4201
    %v4203 = vpop.f32.mrf.mxu0
    %v4204 = vpop.f32.mrf.mxu0
    %4205 = vdwg.mxu0
    %4206 = vmatprep.subr.bf16.mxu0 %v3002
    %4207 = vmatpush1.bf16.msra.mxu0 %v3001
    %4208 = vmatprep.subr.bf16.mxu0 %v2994
    %4209 = vmatpush1.bf16.msra.mxu0 %v2993
    %4210 = vmatprep.subr.bf16.mxu0 %v2986
    %4211 = vmatpush1.bf16.msra.mxu0 %v2985
    %4212 = vmatprep.subr.bf16.mxu0 %v2978
    %4213 = vmatpush1.bf16.msra.mxu0 %v2977
    %4214 = vmatprep.subr.bf16.mxu0 %v2970
    %4215 = vmatpush1.bf16.msra.mxu0 %v2969
    %4216 = vmatprep.subr.bf16.mxu0 %v2962
    %4217 = vmatpush1.bf16.msra.mxu0 %v2961
    %4218 = vmatprep.subr.bf16.mxu0 %v2954
    %4219 = vmatpush1.bf16.msra.mxu0 %v2953
    %4220 = vmatprep.subr.bf16.mxu0 %v2946
    %4221 = vmatpush1.bf16.msra.mxu0 %v2945
    %4222 = vmatprep.subr.bf16.mxu0 %v3066
    %4223 = vmatpush2.bf16.msra.mxu0 %v3065
    %4224 = vmatprep.subr.bf16.mxu0 %v3058
    %4225 = vmatpush2.bf16.msra.mxu0 %v3057
    %4226 = vmatprep.subr.bf16.mxu0 %v3050
    %4227 = vmatpush2.bf16.msra.mxu0 %v3049
    %4228 = vmatprep.subr.bf16.mxu0 %v3042
    %4229 = vmatpush2.bf16.msra.mxu0 %v3041
    %4230 = vmatprep.subr.bf16.mxu0 %v3034
    %4231 = vmatpush2.bf16.msra.mxu0 %v3033
    %4232 = vmatprep.subr.bf16.mxu0 %v3026
    %4233 = vmatpush2.bf16.msra.mxu0 %v3025
    %4234 = vmatprep.subr.bf16.mxu0 %v3018
    %4235 = vmatpush2.bf16.msra.mxu0 %v3017
    %4236 = vmatprep.subr.bf16.mxu0 %v3010
    %4237 = vmatpush2.bf16.msra.mxu0 %v3009
    %4238 = vmatprep.mubr.bf16.mxu0 %v718
    %4239 = vmatmul.mubr.bf16.gmra.mxu0 %v717
    %v4240 = vpop.f32.mrf.mxu0
    %v4241 = vadd.f32 %v4200, %v4240
    %v4242 = vpop.f32.mrf.mxu0
    %v4243 = vadd.f32 %v4202, %v4242
    %v4244 = vpop.f32.mrf.mxu0
    %v4245 = vpop.f32.mrf.mxu0
    %4246 = vdwg.mxu0
    %4247 = vmatprep.subr.bf16.mxu0 %v3130
    %4248 = vmatpush1.bf16.msra.mxu0 %v3129
    %4249 = vmatprep.subr.bf16.mxu0 %v3122
    %4250 = vmatpush1.bf16.msra.mxu0 %v3121
    %4251 = vmatprep.subr.bf16.mxu0 %v3114
    %4252 = vmatpush1.bf16.msra.mxu0 %v3113
    %4253 = vmatprep.subr.bf16.mxu0 %v3106
    %4254 = vmatpush1.bf16.msra.mxu0 %v3105
    %4255 = vmatprep.subr.bf16.mxu0 %v3098
    %4256 = vmatpush1.bf16.msra.mxu0 %v3097
    %4257 = vmatprep.subr.bf16.mxu0 %v3090
    %4258 = vmatpush1.bf16.msra.mxu0 %v3089
    %4259 = vmatprep.subr.bf16.mxu0 %v3082
    %4260 = vmatpush1.bf16.msra.mxu0 %v3081
    %4261 = vmatprep.subr.bf16.mxu0 %v3074
    %4262 = vmatpush1.bf16.msra.mxu0 %v3073
    %4263 = vmatprep.subr.bf16.mxu0 %v3194
    %4264 = vmatpush2.bf16.msra.mxu0 %v3193
    %4265 = vmatprep.subr.bf16.mxu0 %v3186
    %4266 = vmatpush2.bf16.msra.mxu0 %v3185
    %4267 = vmatprep.subr.bf16.mxu0 %v3178
    %4268 = vmatpush2.bf16.msra.mxu0 %v3177
    %4269 = vmatprep.subr.bf16.mxu0 %v3170
    %4270 = vmatpush2.bf16.msra.mxu0 %v3169
    %4271 = vmatprep.subr.bf16.mxu0 %v3162
    %4272 = vmatpush2.bf16.msra.mxu0 %v3161
    %4273 = vmatprep.subr.bf16.mxu0 %v3154
    %4274 = vmatpush2.bf16.msra.mxu0 %v3153
    %4275 = vmatprep.subr.bf16.mxu0 %v3146
    %4276 = vmatpush2.bf16.msra.mxu0 %v3145
    %4277 = vmatprep.subr.bf16.mxu0 %v3138
    %4278 = vmatpush2.bf16.msra.mxu0 %v3137
    %4279 = vmatprep.mubr.bf16.mxu0 %v720
    %4280 = vmatmul.mubr.bf16.gmra.mxu0 %v719
    %v4281 = vpop.f32.mrf.mxu0
    %v4282 = vadd.f32 %v4241, %v4281
    %v4283 = vpop.f32.mrf.mxu0
    %v4284 = vadd.f32 %v4243, %v4283
    %v4285 = vpop.f32.mrf.mxu0
    %v4286 = vpop.f32.mrf.mxu0
    %4287 = vdwg.mxu0
    %4288 = vmatprep.subr.bf16.mxu0 %v3258
    %4289 = vmatpush1.bf16.msra.mxu0 %v3257
    %4290 = vmatprep.subr.bf16.mxu0 %v3250
    %4291 = vmatpush1.bf16.msra.mxu0 %v3249
    %4292 = vmatprep.subr.bf16.mxu0 %v3242
    %4293 = vmatpush1.bf16.msra.mxu0 %v3241
    %4294 = vmatprep.subr.bf16.mxu0 %v3234
    %4295 = vmatpush1.bf16.msra.mxu0 %v3233
    %4296 = vmatprep.subr.bf16.mxu0 %v3226
    %4297 = vmatpush1.bf16.msra.mxu0 %v3225
    %4298 = vmatprep.subr.bf16.mxu0 %v3218
    %4299 = vmatpush1.bf16.msra.mxu0 %v3217
    %4300 = vmatprep.subr.bf16.mxu0 %v3210
    %4301 = vmatpush1.bf16.msra.mxu0 %v3209
    %4302 = vmatprep.subr.bf16.mxu0 %v3202
    %4303 = vmatpush1.bf16.msra.mxu0 %v3201
    %4304 = vmatprep.subr.bf16.mxu0 %v3322
    %4305 = vmatpush2.bf16.msra.mxu0 %v3321
    %4306 = vmatprep.subr.bf16.mxu0 %v3314
    %4307 = vmatpush2.bf16.msra.mxu0 %v3313
    %4308 = vmatprep.subr.bf16.mxu0 %v3306
    %4309 = vmatpush2.bf16.msra.mxu0 %v3305
    %4310 = vmatprep.subr.bf16.mxu0 %v3298
    %4311 = vmatpush2.bf16.msra.mxu0 %v3297
    %4312 = vmatprep.subr.bf16.mxu0 %v3290
    %4313 = vmatpush2.bf16.msra.mxu0 %v3289
    %4314 = vmatprep.subr.bf16.mxu0 %v3282
    %4315 = vmatpush2.bf16.msra.mxu0 %v3281
    %4316 = vmatprep.subr.bf16.mxu0 %v3274
    %4317 = vmatpush2.bf16.msra.mxu0 %v3273
    %4318 = vmatprep.subr.bf16.mxu0 %v3266
    %4319 = vmatpush2.bf16.msra.mxu0 %v3265
    %4320 = vmatprep.mubr.bf16.mxu0 %v722
    %4321 = vmatmul.mubr.bf16.gmra.mxu0 %v721
    %v4322 = vpop.f32.mrf.mxu0
    %v4323 = vadd.f32 %v4282, %v4322
    %v4324 = vpop.f32.mrf.mxu0
    %v4325 = vadd.f32 %v4284, %v4324
    %v4326 = vpop.f32.mrf.mxu0
    %v4327 = vpop.f32.mrf.mxu0
    %4328 = vdwg.mxu0
    %4329 = vmatprep.subr.bf16.mxu0 %v2876
    %4330 = vmatpush1.bf16.msra.mxu0 %v2875
    %4331 = vmatprep.subr.bf16.mxu0 %v2868
    %4332 = vmatpush1.bf16.msra.mxu0 %v2867
    %4333 = vmatprep.subr.bf16.mxu0 %v2860
    %4334 = vmatpush1.bf16.msra.mxu0 %v2859
    %4335 = vmatprep.subr.bf16.mxu0 %v2852
    %4336 = vmatpush1.bf16.msra.mxu0 %v2851
    %4337 = vmatprep.subr.bf16.mxu0 %v2844
    %4338 = vmatpush1.bf16.msra.mxu0 %v2843
    %4339 = vmatprep.subr.bf16.mxu0 %v2836
    %4340 = vmatpush1.bf16.msra.mxu0 %v2835
    %4341 = vmatprep.subr.bf16.mxu0 %v2828
    %4342 = vmatpush1.bf16.msra.mxu0 %v2827
    %4343 = vmatprep.subr.bf16.mxu0 %v2820
    %4344 = vmatpush1.bf16.msra.mxu0 %v2819
    %4345 = vmatprep.subr.bf16.mxu0 %v2940
    %4346 = vmatpush2.bf16.msra.mxu0 %v2939
    %4347 = vmatprep.subr.bf16.mxu0 %v2932
    %4348 = vmatpush2.bf16.msra.mxu0 %v2931
    %4349 = vmatprep.subr.bf16.mxu0 %v2924
    %4350 = vmatpush2.bf16.msra.mxu0 %v2923
    %4351 = vmatprep.subr.bf16.mxu0 %v2916
    %4352 = vmatpush2.bf16.msra.mxu0 %v2915
    %4353 = vmatprep.subr.bf16.mxu0 %v2908
    %4354 = vmatpush2.bf16.msra.mxu0 %v2907
    %4355 = vmatprep.subr.bf16.mxu0 %v2900
    %4356 = vmatpush2.bf16.msra.mxu0 %v2899
    %4357 = vmatprep.subr.bf16.mxu0 %v2892
    %4358 = vmatpush2.bf16.msra.mxu0 %v2891
    %4359 = vmatprep.subr.bf16.mxu0 %v2884
    %4360 = vmatpush2.bf16.msra.mxu0 %v2883
    %4361 = vmatprep.mubr.bf16.mxu0 %v716
    %4362 = vmatmul.mubr.bf16.gmra.mxu0 %v715
    %v4363 = vpop.f32.mrf.mxu0
    %v4364 = vadd.f32 %v1264, %v4363
    %v4365 = vpop.f32.mrf.mxu0
    %v4366 = vadd.f32 %v1268, %v4365
    %v4367 = vpop.f32.mrf.mxu0
    %v4368 = vpop.f32.mrf.mxu0
    %4369 = vdwg.mxu0
    %4370 = vmatprep.subr.bf16.mxu0 %v3004
    %4371 = vmatpush1.bf16.msra.mxu0 %v3003
    %4372 = vmatprep.subr.bf16.mxu0 %v2996
    %4373 = vmatpush1.bf16.msra.mxu0 %v2995
    %4374 = vmatprep.subr.bf16.mxu0 %v2988
    %4375 = vmatpush1.bf16.msra.mxu0 %v2987
    %4376 = vmatprep.subr.bf16.mxu0 %v2980
    %4377 = vmatpush1.bf16.msra.mxu0 %v2979
    %4378 = vmatprep.subr.bf16.mxu0 %v2972
    %4379 = vmatpush1.bf16.msra.mxu0 %v2971
    %4380 = vmatprep.subr.bf16.mxu0 %v2964
    %4381 = vmatpush1.bf16.msra.mxu0 %v2963
    %4382 = vmatprep.subr.bf16.mxu0 %v2956
    %4383 = vmatpush1.bf16.msra.mxu0 %v2955
    %4384 = vmatprep.subr.bf16.mxu0 %v2948
    %4385 = vmatpush1.bf16.msra.mxu0 %v2947
    %4386 = vmatprep.subr.bf16.mxu0 %v3068
    %4387 = vmatpush2.bf16.msra.mxu0 %v3067
    %4388 = vmatprep.subr.bf16.mxu0 %v3060
    %4389 = vmatpush2.bf16.msra.mxu0 %v3059
    %4390 = vmatprep.subr.bf16.mxu0 %v3052
    %4391 = vmatpush2.bf16.msra.mxu0 %v3051
    %4392 = vmatprep.subr.bf16.mxu0 %v3044
    %4393 = vmatpush2.bf16.msra.mxu0 %v3043
    %4394 = vmatprep.subr.bf16.mxu0 %v3036
    %4395 = vmatpush2.bf16.msra.mxu0 %v3035
    %4396 = vmatprep.subr.bf16.mxu0 %v3028
    %4397 = vmatpush2.bf16.msra.mxu0 %v3027
    %4398 = vmatprep.subr.bf16.mxu0 %v3020
    %4399 = vmatpush2.bf16.msra.mxu0 %v3019
    %4400 = vmatprep.subr.bf16.mxu0 %v3012
    %4401 = vmatpush2.bf16.msra.mxu0 %v3011
    %4402 = vmatprep.mubr.bf16.mxu0 %v718
    %4403 = vmatmul.mubr.bf16.gmra.mxu0 %v717
    %v4404 = vpop.f32.mrf.mxu0
    %v4405 = vadd.f32 %v4364, %v4404
    %v4406 = vpop.f32.mrf.mxu0
    %v4407 = vadd.f32 %v4366, %v4406
    %v4408 = vpop.f32.mrf.mxu0
    %v4409 = vpop.f32.mrf.mxu0
    %4410 = vdwg.mxu0
    %4411 = vmatprep.subr.bf16.mxu0 %v3132
    %4412 = vmatpush1.bf16.msra.mxu0 %v3131
    %4413 = vmatprep.subr.bf16.mxu0 %v3124
    %4414 = vmatpush1.bf16.msra.mxu0 %v3123
    %4415 = vmatprep.subr.bf16.mxu0 %v3116
    %4416 = vmatpush1.bf16.msra.mxu0 %v3115
    %4417 = vmatprep.subr.bf16.mxu0 %v3108
    %4418 = vmatpush1.bf16.msra.mxu0 %v3107
    %4419 = vmatprep.subr.bf16.mxu0 %v3100
    %4420 = vmatpush1.bf16.msra.mxu0 %v3099
    %4421 = vmatprep.subr.bf16.mxu0 %v3092
    %4422 = vmatpush1.bf16.msra.mxu0 %v3091
    %4423 = vmatprep.subr.bf16.mxu0 %v3084
    %4424 = vmatpush1.bf16.msra.mxu0 %v3083
    %4425 = vmatprep.subr.bf16.mxu0 %v3076
    %4426 = vmatpush1.bf16.msra.mxu0 %v3075
    %4427 = vmatprep.subr.bf16.mxu0 %v3196
    %4428 = vmatpush2.bf16.msra.mxu0 %v3195
    %4429 = vmatprep.subr.bf16.mxu0 %v3188
    %4430 = vmatpush2.bf16.msra.mxu0 %v3187
    %4431 = vmatprep.subr.bf16.mxu0 %v3180
    %4432 = vmatpush2.bf16.msra.mxu0 %v3179
    %4433 = vmatprep.subr.bf16.mxu0 %v3172
    %4434 = vmatpush2.bf16.msra.mxu0 %v3171
    %4435 = vmatprep.subr.bf16.mxu0 %v3164
    %4436 = vmatpush2.bf16.msra.mxu0 %v3163
    %4437 = vmatprep.subr.bf16.mxu0 %v3156
    %4438 = vmatpush2.bf16.msra.mxu0 %v3155
    %4439 = vmatprep.subr.bf16.mxu0 %v3148
    %4440 = vmatpush2.bf16.msra.mxu0 %v3147
    %4441 = vmatprep.subr.bf16.mxu0 %v3140
    %4442 = vmatpush2.bf16.msra.mxu0 %v3139
    %4443 = vmatprep.mubr.bf16.mxu0 %v720
    %4444 = vmatmul.mubr.bf16.gmra.mxu0 %v719
    %v4445 = vpop.f32.mrf.mxu0
    %v4446 = vadd.f32 %v4405, %v4445
    %v4447 = vpop.f32.mrf.mxu0
    %v4448 = vadd.f32 %v4407, %v4447
    %v4449 = vpop.f32.mrf.mxu0
    %v4450 = vpop.f32.mrf.mxu0
    %4451 = vdwg.mxu0
    %4452 = vmatprep.subr.bf16.mxu0 %v3260
    %4453 = vmatpush1.bf16.msra.mxu0 %v3259
    %4454 = vmatprep.subr.bf16.mxu0 %v3252
    %4455 = vmatpush1.bf16.msra.mxu0 %v3251
    %4456 = vmatprep.subr.bf16.mxu0 %v3244
    %4457 = vmatpush1.bf16.msra.mxu0 %v3243
    %4458 = vmatprep.subr.bf16.mxu0 %v3236
    %4459 = vmatpush1.bf16.msra.mxu0 %v3235
    %4460 = vmatprep.subr.bf16.mxu0 %v3228
    %4461 = vmatpush1.bf16.msra.mxu0 %v3227
    %4462 = vmatprep.subr.bf16.mxu0 %v3220
    %4463 = vmatpush1.bf16.msra.mxu0 %v3219
    %4464 = vmatprep.subr.bf16.mxu0 %v3212
    %4465 = vmatpush1.bf16.msra.mxu0 %v3211
    %4466 = vmatprep.subr.bf16.mxu0 %v3204
    %4467 = vmatpush1.bf16.msra.mxu0 %v3203
    %4468 = vmatprep.subr.bf16.mxu0 %v3324
    %4469 = vmatpush2.bf16.msra.mxu0 %v3323
    %4470 = vmatprep.subr.bf16.mxu0 %v3316
    %4471 = vmatpush2.bf16.msra.mxu0 %v3315
    %4472 = vmatprep.subr.bf16.mxu0 %v3308
    %4473 = vmatpush2.bf16.msra.mxu0 %v3307
    %4474 = vmatprep.subr.bf16.mxu0 %v3300
    %4475 = vmatpush2.bf16.msra.mxu0 %v3299
    %4476 = vmatprep.subr.bf16.mxu0 %v3292
    %4477 = vmatpush2.bf16.msra.mxu0 %v3291
    %4478 = vmatprep.subr.bf16.mxu0 %v3284
    %4479 = vmatpush2.bf16.msra.mxu0 %v3283
    %4480 = vmatprep.subr.bf16.mxu0 %v3276
    %4481 = vmatpush2.bf16.msra.mxu0 %v3275
    %4482 = vmatprep.subr.bf16.mxu0 %v3268
    %4483 = vmatpush2.bf16.msra.mxu0 %v3267
    %4484 = vmatprep.mubr.bf16.mxu0 %v722
    %4485 = vmatmul.mubr.bf16.gmra.mxu0 %v721
    %v4486 = vpop.f32.mrf.mxu0
    %v4487 = vadd.f32 %v4446, %v4486
    %v4488 = vpop.f32.mrf.mxu0
    %v4489 = vadd.f32 %v4448, %v4488
    %v4490 = vpop.f32.mrf.mxu0
    %v4491 = vpop.f32.mrf.mxu0
    %4492 = vdwg.mxu0
    %v4493 = vmax.f32 %v3995, 0.0
    %v4494 = vmax.f32 %v3997, 0.0
    %v4495 = vmax.f32 %v4159, 0.0
    %v4496 = vmax.f32 %v4161, 0.0
    %v4497 = vmax.f32 %v4323, 0.0
    %v4498 = vmax.f32 %v4325, 0.0
    %v4499 = vmax.f32 %v4487, 0.0
    %v4500 = vmax.f32 %v4489, 0.0
    %v4501 = vpack.c.bf16 %v4493, %v4493
    %v4502 = vpack.c.bf16 %v4494, %v4494
    %v4503 = vpack.c.bf16 %v4495, %v4495
    %v4504 = vpack.c.bf16 %v4496, %v4496
    %v4505 = vpack.c.bf16 %v4497, %v4497
    %v4506 = vpack.c.bf16 %v4498, %v4498
    %v4507 = vpack.c.bf16 %v4499, %v4499
    %v4508 = vpack.c.bf16 %v4500, %v4500
    %v4509 = vld [vmem:[#allocation11] sm:$0xf]
    %v4510 = vld [vmem:[#allocation11 + $0x4] sm:$0xf]
    %v4511 = vld [vmem:[#allocation11 + $0x8] sm:$0xf]
    %v4512 = vld [vmem:[#allocation11 + $0xc] sm:$0xf]
    %v4513 = vld [vmem:[#allocation11 + $0x10] sm:$0xf]
    %v4514 = vld [vmem:[#allocation11 + $0x14] sm:$0xf]
    %v4515 = vld [vmem:[#allocation11 + $0x18] sm:$0xf]
    %v4516 = vld [vmem:[#allocation11 + $0x1c] sm:$0xf]
    %v4517 = vld [vmem:[#allocation11 + $0x20] sm:$0xf]
    %v4518 = vld [vmem:[#allocation11 + $0x24] sm:$0xf]
    %v4519 = vld [vmem:[#allocation11 + $0x28] sm:$0xf]
    %v4520 = vld [vmem:[#allocation11 + $0x2c] sm:$0xf]
    %v4521 = vld [vmem:[#allocation11 + $0x30] sm:$0xf]
    %v4522 = vld [vmem:[#allocation11 + $0x34] sm:$0xf]
    %v4523 = vld [vmem:[#allocation11 + $0x38] sm:$0xf]
    %v4524 = vld [vmem:[#allocation11 + $0x3c] sm:$0xf]
    %v4525 = vld [vmem:[#allocation11 + $0x40] sm:$0xf]
    %v4526 = vld [vmem:[#allocation11 + $0x44] sm:$0xf]
    %v4527 = vld [vmem:[#allocation11 + $0x48] sm:$0xf]
    %v4528 = vld [vmem:[#allocation11 + $0x4c] sm:$0xf]
    %v4529 = vld [vmem:[#allocation11 + $0x50] sm:$0xf]
    %v4530 = vld [vmem:[#allocation11 + $0x54] sm:$0xf]
    %v4531 = vld [vmem:[#allocation11 + $0x58] sm:$0xf]
    %v4532 = vld [vmem:[#allocation11 + $0x5c] sm:$0xf]
    %v4533 = vld [vmem:[#allocation11 + $0x60] sm:$0xf]
    %v4534 = vld [vmem:[#allocation11 + $0x64] sm:$0xf]
    %v4535 = vld [vmem:[#allocation11 + $0x68] sm:$0xf]
    %v4536 = vld [vmem:[#allocation11 + $0x6c] sm:$0xf]
    %v4537 = vld [vmem:[#allocation11 + $0x70] sm:$0xf]
    %v4538 = vld [vmem:[#allocation11 + $0x74] sm:$0xf]
    %v4539 = vld [vmem:[#allocation11 + $0x78] sm:$0xf]
    %v4540 = vld [vmem:[#allocation11 + $0x7c] sm:$0xf]
    %v4541 = vld [vmem:[#allocation11 + $0x80] sm:$0xf]
    %v4542 = vld [vmem:[#allocation11 + $0x84] sm:$0xf]
    %v4543 = vld [vmem:[#allocation11 + $0x88] sm:$0xf]
    %v4544 = vld [vmem:[#allocation11 + $0x8c] sm:$0xf]
    %v4545 = vld [vmem:[#allocation11 + $0x90] sm:$0xf]
    %v4546 = vld [vmem:[#allocation11 + $0x94] sm:$0xf]
    %v4547 = vld [vmem:[#allocation11 + $0x98] sm:$0xf]
    %v4548 = vld [vmem:[#allocation11 + $0x9c] sm:$0xf]
    %v4549 = vld [vmem:[#allocation11 + $0xa0] sm:$0xf]
    %v4550 = vld [vmem:[#allocation11 + $0xa4] sm:$0xf]
    %v4551 = vld [vmem:[#allocation11 + $0xa8] sm:$0xf]
    %v4552 = vld [vmem:[#allocation11 + $0xac] sm:$0xf]
    %v4553 = vld [vmem:[#allocation11 + $0xb0] sm:$0xf]
    %v4554 = vld [vmem:[#allocation11 + $0xb4] sm:$0xf]
    %v4555 = vld [vmem:[#allocation11 + $0xb8] sm:$0xf]
    %v4556 = vld [vmem:[#allocation11 + $0xbc] sm:$0xf]
    %v4557 = vld [vmem:[#allocation11 + $0xc0] sm:$0xf]
    %v4558 = vld [vmem:[#allocation11 + $0xc4] sm:$0xf]
    %v4559 = vld [vmem:[#allocation11 + $0xc8] sm:$0xf]
    %v4560 = vld [vmem:[#allocation11 + $0xcc] sm:$0xf]
    %v4561 = vld [vmem:[#allocation11 + $0xd0] sm:$0xf]
    %v4562 = vld [vmem:[#allocation11 + $0xd4] sm:$0xf]
    %v4563 = vld [vmem:[#allocation11 + $0xd8] sm:$0xf]
    %v4564 = vld [vmem:[#allocation11 + $0xdc] sm:$0xf]
    %v4565 = vld [vmem:[#allocation11 + $0xe0] sm:$0xf]
    %v4566 = vld [vmem:[#allocation11 + $0xe4] sm:$0xf]
    %v4567 = vld [vmem:[#allocation11 + $0xe8] sm:$0xf]
    %v4568 = vld [vmem:[#allocation11 + $0xec] sm:$0xf]
    %v4569 = vld [vmem:[#allocation11 + $0xf0] sm:$0xf]
    %v4570 = vld [vmem:[#allocation11 + $0xf4] sm:$0xf]
    %v4571 = vld [vmem:[#allocation11 + $0xf8] sm:$0xf]
    %v4572 = vld [vmem:[#allocation11 + $0xfc] sm:$0xf]
    %v4573 = vld [vmem:[#allocation11 + $0x100] sm:$0xf]
    %v4574 = vld [vmem:[#allocation11 + $0x104] sm:$0xf]
    %v4575 = vld [vmem:[#allocation11 + $0x108] sm:$0xf]
    %v4576 = vld [vmem:[#allocation11 + $0x10c] sm:$0xf]
    %v4577 = vld [vmem:[#allocation11 + $0x110] sm:$0xf]
    %v4578 = vld [vmem:[#allocation11 + $0x114] sm:$0xf]
    %v4579 = vld [vmem:[#allocation11 + $0x118] sm:$0xf]
    %v4580 = vld [vmem:[#allocation11 + $0x11c] sm:$0xf]
    %v4581 = vld [vmem:[#allocation11 + $0x120] sm:$0xf]
    %v4582 = vld [vmem:[#allocation11 + $0x124] sm:$0xf]
    %v4583 = vld [vmem:[#allocation11 + $0x128] sm:$0xf]
    %v4584 = vld [vmem:[#allocation11 + $0x12c] sm:$0xf]
    %v4585 = vld [vmem:[#allocation11 + $0x130] sm:$0xf]
    %v4586 = vld [vmem:[#allocation11 + $0x134] sm:$0xf]
    %v4587 = vld [vmem:[#allocation11 + $0x138] sm:$0xf]
    %v4588 = vld [vmem:[#allocation11 + $0x13c] sm:$0xf]
    %v4589 = vld [vmem:[#allocation11 + $0x140] sm:$0xf]
    %v4590 = vld [vmem:[#allocation11 + $0x144] sm:$0xf]
    %v4591 = vld [vmem:[#allocation11 + $0x148] sm:$0xf]
    %v4592 = vld [vmem:[#allocation11 + $0x14c] sm:$0xf]
    %v4593 = vld [vmem:[#allocation11 + $0x150] sm:$0xf]
    %v4594 = vld [vmem:[#allocation11 + $0x154] sm:$0xf]
    %v4595 = vld [vmem:[#allocation11 + $0x158] sm:$0xf]
    %v4596 = vld [vmem:[#allocation11 + $0x15c] sm:$0xf]
    %v4597 = vld [vmem:[#allocation11 + $0x160] sm:$0xf]
    %v4598 = vld [vmem:[#allocation11 + $0x164] sm:$0xf]
    %v4599 = vld [vmem:[#allocation11 + $0x168] sm:$0xf]
    %v4600 = vld [vmem:[#allocation11 + $0x16c] sm:$0xf]
    %v4601 = vld [vmem:[#allocation11 + $0x170] sm:$0xf]
    %v4602 = vld [vmem:[#allocation11 + $0x174] sm:$0xf]
    %v4603 = vld [vmem:[#allocation11 + $0x178] sm:$0xf]
    %v4604 = vld [vmem:[#allocation11 + $0x17c] sm:$0xf]
    %v4605 = vld [vmem:[#allocation11 + $0x180] sm:$0xf]
    %v4606 = vld [vmem:[#allocation11 + $0x184] sm:$0xf]
    %v4607 = vld [vmem:[#allocation11 + $0x188] sm:$0xf]
    %v4608 = vld [vmem:[#allocation11 + $0x18c] sm:$0xf]
    %v4609 = vld [vmem:[#allocation11 + $0x190] sm:$0xf]
    %v4610 = vld [vmem:[#allocation11 + $0x194] sm:$0xf]
    %v4611 = vld [vmem:[#allocation11 + $0x198] sm:$0xf]
    %v4612 = vld [vmem:[#allocation11 + $0x19c] sm:$0xf]
    %v4613 = vld [vmem:[#allocation11 + $0x1a0] sm:$0xf]
    %v4614 = vld [vmem:[#allocation11 + $0x1a4] sm:$0xf]
    %v4615 = vld [vmem:[#allocation11 + $0x1a8] sm:$0xf]
    %v4616 = vld [vmem:[#allocation11 + $0x1ac] sm:$0xf]
    %v4617 = vld [vmem:[#allocation11 + $0x1b0] sm:$0xf]
    %v4618 = vld [vmem:[#allocation11 + $0x1b4] sm:$0xf]
    %v4619 = vld [vmem:[#allocation11 + $0x1b8] sm:$0xf]
    %v4620 = vld [vmem:[#allocation11 + $0x1bc] sm:$0xf]
    %v4621 = vld [vmem:[#allocation11 + $0x1c0] sm:$0xf]
    %v4622 = vld [vmem:[#allocation11 + $0x1c4] sm:$0xf]
    %v4623 = vld [vmem:[#allocation11 + $0x1c8] sm:$0xf]
    %v4624 = vld [vmem:[#allocation11 + $0x1cc] sm:$0xf]
    %v4625 = vld [vmem:[#allocation11 + $0x1d0] sm:$0xf]
    %v4626 = vld [vmem:[#allocation11 + $0x1d4] sm:$0xf]
    %v4627 = vld [vmem:[#allocation11 + $0x1d8] sm:$0xf]
    %v4628 = vld [vmem:[#allocation11 + $0x1dc] sm:$0xf]
    %v4629 = vld [vmem:[#allocation11 + $0x1e0] sm:$0xf]
    %v4630 = vld [vmem:[#allocation11 + $0x1e4] sm:$0xf]
    %v4631 = vld [vmem:[#allocation11 + $0x1e8] sm:$0xf]
    %v4632 = vld [vmem:[#allocation11 + $0x1ec] sm:$0xf]
    %v4633 = vld [vmem:[#allocation11 + $0x1f0] sm:$0xf]
    %v4634 = vld [vmem:[#allocation11 + $0x1f4] sm:$0xf]
    %v4635 = vld [vmem:[#allocation11 + $0x1f8] sm:$0xf]
    %v4636 = vld [vmem:[#allocation11 + $0x1fc] sm:$0xf]
    %v4637 = vld [vmem:[#allocation13] sm:$0x1]
    %v4639 = vlaneseq
    %v4640 = vshrl.u32 %v4639, 7
    %v4641 = vsub.s32 0, %v4640
    %v4642 = vrot.slane %v4637, %v4641
    %v4772 = vunpack.c.l.b16 %v4509
    %v4773 = vunpack.c.l.b16 %v4510
    %v4774 = vunpack.c.l.b16 %v4511
    %v4775 = vunpack.c.l.b16 %v4512
    %v4776 = vunpack.c.l.b16 %v4513
    %v4777 = vunpack.c.l.b16 %v4514
    %v4778 = vunpack.c.l.b16 %v4515
    %v4779 = vunpack.c.l.b16 %v4516
    %v4780 = vunpack.c.l.b16 %v4517
    %v4781 = vunpack.c.l.b16 %v4518
    %v4782 = vunpack.c.l.b16 %v4519
    %v4783 = vunpack.c.l.b16 %v4520
    %v4784 = vunpack.c.l.b16 %v4521
    %v4785 = vunpack.c.l.b16 %v4522
    %v4786 = vunpack.c.l.b16 %v4523
    %v4787 = vunpack.c.l.b16 %v4524
    %v4788 = vunpack.c.l.b16 %v4525
    %v4789 = vunpack.c.l.b16 %v4526
    %v4790 = vunpack.c.l.b16 %v4527
    %v4791 = vunpack.c.l.b16 %v4528
    %v4792 = vunpack.c.l.b16 %v4529
    %v4793 = vunpack.c.l.b16 %v4530
    %v4794 = vunpack.c.l.b16 %v4531
    %v4795 = vunpack.c.l.b16 %v4532
    %v4796 = vunpack.c.l.b16 %v4533
    %v4797 = vunpack.c.l.b16 %v4534
    %v4798 = vunpack.c.l.b16 %v4535
    %v4799 = vunpack.c.l.b16 %v4536
    %v4800 = vunpack.c.l.b16 %v4537
    %v4801 = vunpack.c.l.b16 %v4538
    %v4802 = vunpack.c.l.b16 %v4539
    %v4803 = vunpack.c.l.b16 %v4540
    %v4804 = vunpack.c.l.b16 %v4541
    %v4805 = vunpack.c.l.b16 %v4542
    %v4806 = vunpack.c.l.b16 %v4543
    %v4807 = vunpack.c.l.b16 %v4544
    %v4808 = vunpack.c.l.b16 %v4545
    %v4809 = vunpack.c.l.b16 %v4546
    %v4810 = vunpack.c.l.b16 %v4547
    %v4811 = vunpack.c.l.b16 %v4548
    %v4812 = vunpack.c.l.b16 %v4549
    %v4813 = vunpack.c.l.b16 %v4550
    %v4814 = vunpack.c.l.b16 %v4551
    %v4815 = vunpack.c.l.b16 %v4552
    %v4816 = vunpack.c.l.b16 %v4553
    %v4817 = vunpack.c.l.b16 %v4554
    %v4818 = vunpack.c.l.b16 %v4555
    %v4819 = vunpack.c.l.b16 %v4556
    %v4820 = vunpack.c.l.b16 %v4557
    %v4821 = vunpack.c.l.b16 %v4558
    %v4822 = vunpack.c.l.b16 %v4559
    %v4823 = vunpack.c.l.b16 %v4560
    %v4824 = vunpack.c.l.b16 %v4561
    %v4825 = vunpack.c.l.b16 %v4562
    %v4826 = vunpack.c.l.b16 %v4563
    %v4827 = vunpack.c.l.b16 %v4564
    %v4828 = vunpack.c.l.b16 %v4565
    %v4829 = vunpack.c.l.b16 %v4566
    %v4830 = vunpack.c.l.b16 %v4567
    %v4831 = vunpack.c.l.b16 %v4568
    %v4832 = vunpack.c.l.b16 %v4569
    %v4833 = vunpack.c.l.b16 %v4570
    %v4834 = vunpack.c.l.b16 %v4571
    %v4835 = vunpack.c.l.b16 %v4572
    %v4836 = vunpack.c.l.b16 %v4573
    %v4837 = vunpack.c.l.b16 %v4574
    %v4838 = vunpack.c.l.b16 %v4575
    %v4839 = vunpack.c.l.b16 %v4576
    %v4840 = vunpack.c.l.b16 %v4577
    %v4841 = vunpack.c.l.b16 %v4578
    %v4842 = vunpack.c.l.b16 %v4579
    %v4843 = vunpack.c.l.b16 %v4580
    %v4844 = vunpack.c.l.b16 %v4581
    %v4845 = vunpack.c.l.b16 %v4582
    %v4846 = vunpack.c.l.b16 %v4583
    %v4847 = vunpack.c.l.b16 %v4584
    %v4848 = vunpack.c.l.b16 %v4585
    %v4849 = vunpack.c.l.b16 %v4586
    %v4850 = vunpack.c.l.b16 %v4587
    %v4851 = vunpack.c.l.b16 %v4588
    %v4852 = vunpack.c.l.b16 %v4589
    %v4853 = vunpack.c.l.b16 %v4590
    %v4854 = vunpack.c.l.b16 %v4591
    %v4855 = vunpack.c.l.b16 %v4592
    %v4856 = vunpack.c.l.b16 %v4593
    %v4857 = vunpack.c.l.b16 %v4594
    %v4858 = vunpack.c.l.b16 %v4595
    %v4859 = vunpack.c.l.b16 %v4596
    %v4860 = vunpack.c.l.b16 %v4597
    %v4861 = vunpack.c.l.b16 %v4598
    %v4862 = vunpack.c.l.b16 %v4599
    %v4863 = vunpack.c.l.b16 %v4600
    %v4864 = vunpack.c.l.b16 %v4601
    %v4865 = vunpack.c.l.b16 %v4602
    %v4866 = vunpack.c.l.b16 %v4603
    %v4867 = vunpack.c.l.b16 %v4604
    %v4868 = vunpack.c.l.b16 %v4605
    %v4869 = vunpack.c.l.b16 %v4606
    %v4870 = vunpack.c.l.b16 %v4607
    %v4871 = vunpack.c.l.b16 %v4608
    %v4872 = vunpack.c.l.b16 %v4609
    %v4873 = vunpack.c.l.b16 %v4610
    %v4874 = vunpack.c.l.b16 %v4611
    %v4875 = vunpack.c.l.b16 %v4612
    %v4876 = vunpack.c.l.b16 %v4613
    %v4877 = vunpack.c.l.b16 %v4614
    %v4878 = vunpack.c.l.b16 %v4615
    %v4879 = vunpack.c.l.b16 %v4616
    %v4880 = vunpack.c.l.b16 %v4617
    %v4881 = vunpack.c.l.b16 %v4618
    %v4882 = vunpack.c.l.b16 %v4619
    %v4883 = vunpack.c.l.b16 %v4620
    %v4884 = vunpack.c.l.b16 %v4621
    %v4885 = vunpack.c.l.b16 %v4622
    %v4886 = vunpack.c.l.b16 %v4623
    %v4887 = vunpack.c.l.b16 %v4624
    %v4888 = vunpack.c.l.b16 %v4625
    %v4889 = vunpack.c.l.b16 %v4626
    %v4890 = vunpack.c.l.b16 %v4627
    %v4891 = vunpack.c.l.b16 %v4628
    %v4892 = vunpack.c.l.b16 %v4629
    %v4893 = vunpack.c.l.b16 %v4630
    %v4894 = vunpack.c.l.b16 %v4631
    %v4895 = vunpack.c.l.b16 %v4632
    %v4896 = vunpack.c.l.b16 %v4633
    %v4897 = vunpack.c.l.b16 %v4634
    %v4898 = vunpack.c.l.b16 %v4635
    %v4899 = vunpack.c.l.b16 %v4636
    %v4900 = vpack.c.b16 %v4773, %v4772
    %v4901 = vpack.c.b16 %v4775, %v4774
    %v4902 = vpack.c.b16 %v4777, %v4776
    %v4903 = vpack.c.b16 %v4779, %v4778
    %v4904 = vpack.c.b16 %v4781, %v4780
    %v4905 = vpack.c.b16 %v4783, %v4782
    %v4906 = vpack.c.b16 %v4785, %v4784
    %v4907 = vpack.c.b16 %v4787, %v4786
    %v4908 = vpack.c.b16 %v4789, %v4788
    %v4909 = vpack.c.b16 %v4791, %v4790
    %v4910 = vpack.c.b16 %v4793, %v4792
    %v4911 = vpack.c.b16 %v4795, %v4794
    %v4912 = vpack.c.b16 %v4797, %v4796
    %v4913 = vpack.c.b16 %v4799, %v4798
    %v4914 = vpack.c.b16 %v4801, %v4800
    %v4915 = vpack.c.b16 %v4803, %v4802
    %v4916 = vpack.c.b16 %v4805, %v4804
    %v4917 = vpack.c.b16 %v4807, %v4806
    %v4918 = vpack.c.b16 %v4809, %v4808
    %v4919 = vpack.c.b16 %v4811, %v4810
    %v4920 = vpack.c.b16 %v4813, %v4812
    %v4921 = vpack.c.b16 %v4815, %v4814
    %v4922 = vpack.c.b16 %v4817, %v4816
    %v4923 = vpack.c.b16 %v4819, %v4818
    %v4924 = vpack.c.b16 %v4821, %v4820
    %v4925 = vpack.c.b16 %v4823, %v4822
    %v4926 = vpack.c.b16 %v4825, %v4824
    %v4927 = vpack.c.b16 %v4827, %v4826
    %v4928 = vpack.c.b16 %v4829, %v4828
    %v4929 = vpack.c.b16 %v4831, %v4830
    %v4930 = vpack.c.b16 %v4833, %v4832
    %v4931 = vpack.c.b16 %v4835, %v4834
    %v4932 = vpack.c.b16 %v4837, %v4836
    %v4933 = vpack.c.b16 %v4839, %v4838
    %v4934 = vpack.c.b16 %v4841, %v4840
    %v4935 = vpack.c.b16 %v4843, %v4842
    %v4936 = vpack.c.b16 %v4845, %v4844
    %v4937 = vpack.c.b16 %v4847, %v4846
    %v4938 = vpack.c.b16 %v4849, %v4848
    %v4939 = vpack.c.b16 %v4851, %v4850
    %v4940 = vpack.c.b16 %v4853, %v4852
    %v4941 = vpack.c.b16 %v4855, %v4854
    %v4942 = vpack.c.b16 %v4857, %v4856
    %v4943 = vpack.c.b16 %v4859, %v4858
    %v4944 = vpack.c.b16 %v4861, %v4860
    %v4945 = vpack.c.b16 %v4863, %v4862
    %v4946 = vpack.c.b16 %v4865, %v4864
    %v4947 = vpack.c.b16 %v4867, %v4866
    %v4948 = vpack.c.b16 %v4869, %v4868
    %v4949 = vpack.c.b16 %v4871, %v4870
    %v4950 = vpack.c.b16 %v4873, %v4872
    %v4951 = vpack.c.b16 %v4875, %v4874
    %v4952 = vpack.c.b16 %v4877, %v4876
    %v4953 = vpack.c.b16 %v4879, %v4878
    %v4954 = vpack.c.b16 %v4881, %v4880
    %v4955 = vpack.c.b16 %v4883, %v4882
    %v4956 = vpack.c.b16 %v4885, %v4884
    %v4957 = vpack.c.b16 %v4887, %v4886
    %v4958 = vpack.c.b16 %v4889, %v4888
    %v4959 = vpack.c.b16 %v4891, %v4890
    %v4960 = vpack.c.b16 %v4893, %v4892
    %v4961 = vpack.c.b16 %v4895, %v4894
    %v4962 = vpack.c.b16 %v4897, %v4896
    %v4963 = vpack.c.b16 %v4899, %v4898
    %5028 = vmatprep.subr.bf16.mxu0 0
    %5029 = vmatpush1.bf16.msra.mxu0 %v4907
    %5030 = vmatprep.subr.bf16.mxu0 0
    %5031 = vmatpush1.bf16.msra.mxu0 %v4906
    %5032 = vmatprep.subr.bf16.mxu0 0
    %5033 = vmatpush1.bf16.msra.mxu0 %v4905
    %5034 = vmatprep.subr.bf16.mxu0 0
    %5035 = vmatpush1.bf16.msra.mxu0 %v4904
    %5036 = vmatprep.subr.bf16.mxu0 0
    %5037 = vmatpush1.bf16.msra.mxu0 %v4903
    %5038 = vmatprep.subr.bf16.mxu0 0
    %5039 = vmatpush1.bf16.msra.mxu0 %v4902
    %5040 = vmatprep.subr.bf16.mxu0 0
    %5041 = vmatpush1.bf16.msra.mxu0 %v4901
    %5042 = vmatprep.subr.bf16.mxu0 0
    %5043 = vmatpush1.bf16.msra.mxu0 %v4900
    %5044 = vmatprep.subr.bf16.mxu0 0
    %5045 = vmatpush2.bf16.msra.mxu0 %v4915
    %5046 = vmatprep.subr.bf16.mxu0 0
    %5047 = vmatpush2.bf16.msra.mxu0 %v4914
    %5048 = vmatprep.subr.bf16.mxu0 0
    %5049 = vmatpush2.bf16.msra.mxu0 %v4913
    %5050 = vmatprep.subr.bf16.mxu0 0
    %5051 = vmatpush2.bf16.msra.mxu0 %v4912
    %5052 = vmatprep.subr.bf16.mxu0 0
    %5053 = vmatpush2.bf16.msra.mxu0 %v4911
    %5054 = vmatprep.subr.bf16.mxu0 0
    %5055 = vmatpush2.bf16.msra.mxu0 %v4910
    %5056 = vmatprep.subr.bf16.mxu0 0
    %5057 = vmatpush2.bf16.msra.mxu0 %v4909
    %5058 = vmatprep.subr.bf16.mxu0 0
    %5059 = vmatpush2.bf16.msra.mxu0 %v4908
    %5060 = vmatprep.mubr.bf16.mxu0 %v4502
    %5061 = vmatmul.mubr.bf16.gmra.mxu0 %v4501
    %v5062 = vpop.f32.mrf.mxu0
    %v5063 = vadd.f32 %v4642, %v5062
    %v5064 = vpop.f32.mrf.mxu0
    %v5065 = vpop.f32.mrf.mxu0
    %v5066 = vpop.f32.mrf.mxu0
    %5067 = vdwg.mxu0
    %5068 = vmatprep.subr.bf16.mxu0 0
    %5069 = vmatpush1.bf16.msra.mxu0 %v4923
    %5070 = vmatprep.subr.bf16.mxu0 0
    %5071 = vmatpush1.bf16.msra.mxu0 %v4922
    %5072 = vmatprep.subr.bf16.mxu0 0
    %5073 = vmatpush1.bf16.msra.mxu0 %v4921
    %5074 = vmatprep.subr.bf16.mxu0 0
    %5075 = vmatpush1.bf16.msra.mxu0 %v4920
    %5076 = vmatprep.subr.bf16.mxu0 0
    %5077 = vmatpush1.bf16.msra.mxu0 %v4919
    %5078 = vmatprep.subr.bf16.mxu0 0
    %5079 = vmatpush1.bf16.msra.mxu0 %v4918
    %5080 = vmatprep.subr.bf16.mxu0 0
    %5081 = vmatpush1.bf16.msra.mxu0 %v4917
    %5082 = vmatprep.subr.bf16.mxu0 0
    %5083 = vmatpush1.bf16.msra.mxu0 %v4916
    %5084 = vmatprep.subr.bf16.mxu0 0
    %5085 = vmatpush2.bf16.msra.mxu0 %v4931
    %5086 = vmatprep.subr.bf16.mxu0 0
    %5087 = vmatpush2.bf16.msra.mxu0 %v4930
    %5088 = vmatprep.subr.bf16.mxu0 0
    %5089 = vmatpush2.bf16.msra.mxu0 %v4929
    %5090 = vmatprep.subr.bf16.mxu0 0
    %5091 = vmatpush2.bf16.msra.mxu0 %v4928
    %5092 = vmatprep.subr.bf16.mxu0 0
    %5093 = vmatpush2.bf16.msra.mxu0 %v4927
    %5094 = vmatprep.subr.bf16.mxu0 0
    %5095 = vmatpush2.bf16.msra.mxu0 %v4926
    %5096 = vmatprep.subr.bf16.mxu0 0
    %5097 = vmatpush2.bf16.msra.mxu0 %v4925
    %5098 = vmatprep.subr.bf16.mxu0 0
    %5099 = vmatpush2.bf16.msra.mxu0 %v4924
    %5100 = vmatprep.mubr.bf16.mxu0 %v4504
    %5101 = vmatmul.mubr.bf16.gmra.mxu0 %v4503
    %v5102 = vpop.f32.mrf.mxu0
    %v5103 = vadd.f32 %v5063, %v5102
    %v5104 = vpop.f32.mrf.mxu0
    %v5105 = vpop.f32.mrf.mxu0
    %v5106 = vpop.f32.mrf.mxu0
    %5107 = vdwg.mxu0
    %5108 = vmatprep.subr.bf16.mxu0 0
    %5109 = vmatpush1.bf16.msra.mxu0 %v4939
    %5110 = vmatprep.subr.bf16.mxu0 0
    %5111 = vmatpush1.bf16.msra.mxu0 %v4938
    %5112 = vmatprep.subr.bf16.mxu0 0
    %5113 = vmatpush1.bf16.msra.mxu0 %v4937
    %5114 = vmatprep.subr.bf16.mxu0 0
    %5115 = vmatpush1.bf16.msra.mxu0 %v4936
    %5116 = vmatprep.subr.bf16.mxu0 0
    %5117 = vmatpush1.bf16.msra.mxu0 %v4935
    %5118 = vmatprep.subr.bf16.mxu0 0
    %5119 = vmatpush1.bf16.msra.mxu0 %v4934
    %5120 = vmatprep.subr.bf16.mxu0 0
    %5121 = vmatpush1.bf16.msra.mxu0 %v4933
    %5122 = vmatprep.subr.bf16.mxu0 0
    %5123 = vmatpush1.bf16.msra.mxu0 %v4932
    %5124 = vmatprep.subr.bf16.mxu0 0
    %5125 = vmatpush2.bf16.msra.mxu0 %v4947
    %5126 = vmatprep.subr.bf16.mxu0 0
    %5127 = vmatpush2.bf16.msra.mxu0 %v4946
    %5128 = vmatprep.subr.bf16.mxu0 0
    %5129 = vmatpush2.bf16.msra.mxu0 %v4945
    %5130 = vmatprep.subr.bf16.mxu0 0
    %5131 = vmatpush2.bf16.msra.mxu0 %v4944
    %5132 = vmatprep.subr.bf16.mxu0 0
    %5133 = vmatpush2.bf16.msra.mxu0 %v4943
    %5134 = vmatprep.subr.bf16.mxu0 0
    %5135 = vmatpush2.bf16.msra.mxu0 %v4942
    %5136 = vmatprep.subr.bf16.mxu0 0
    %5137 = vmatpush2.bf16.msra.mxu0 %v4941
    %5138 = vmatprep.subr.bf16.mxu0 0
    %5139 = vmatpush2.bf16.msra.mxu0 %v4940
    %5140 = vmatprep.mubr.bf16.mxu0 %v4506
    %5141 = vmatmul.mubr.bf16.gmra.mxu0 %v4505
    %v5142 = vpop.f32.mrf.mxu0
    %v5143 = vadd.f32 %v5103, %v5142
    %v5144 = vpop.f32.mrf.mxu0
    %v5145 = vpop.f32.mrf.mxu0
    %v5146 = vpop.f32.mrf.mxu0
    %5147 = vdwg.mxu0
    %5148 = vmatprep.subr.bf16.mxu0 0
    %5149 = vmatpush1.bf16.msra.mxu0 %v4955
    %5150 = vmatprep.subr.bf16.mxu0 0
    %5151 = vmatpush1.bf16.msra.mxu0 %v4954
    %5152 = vmatprep.subr.bf16.mxu0 0
    %5153 = vmatpush1.bf16.msra.mxu0 %v4953
    %5154 = vmatprep.subr.bf16.mxu0 0
    %5155 = vmatpush1.bf16.msra.mxu0 %v4952
    %5156 = vmatprep.subr.bf16.mxu0 0
    %5157 = vmatpush1.bf16.msra.mxu0 %v4951
    %5158 = vmatprep.subr.bf16.mxu0 0
    %5159 = vmatpush1.bf16.msra.mxu0 %v4950
    %5160 = vmatprep.subr.bf16.mxu0 0
    %5161 = vmatpush1.bf16.msra.mxu0 %v4949
    %5162 = vmatprep.subr.bf16.mxu0 0
    %5163 = vmatpush1.bf16.msra.mxu0 %v4948
    %5164 = vmatprep.subr.bf16.mxu0 0
    %5165 = vmatpush2.bf16.msra.mxu0 %v4963
    %5166 = vmatprep.subr.bf16.mxu0 0
    %5167 = vmatpush2.bf16.msra.mxu0 %v4962
    %5168 = vmatprep.subr.bf16.mxu0 0
    %5169 = vmatpush2.bf16.msra.mxu0 %v4961
    %5170 = vmatprep.subr.bf16.mxu0 0
    %5171 = vmatpush2.bf16.msra.mxu0 %v4960
    %5172 = vmatprep.subr.bf16.mxu0 0
    %5173 = vmatpush2.bf16.msra.mxu0 %v4959
    %5174 = vmatprep.subr.bf16.mxu0 0
    %5175 = vmatpush2.bf16.msra.mxu0 %v4958
    %5176 = vmatprep.subr.bf16.mxu0 0
    %5177 = vmatpush2.bf16.msra.mxu0 %v4957
    %5178 = vmatprep.subr.bf16.mxu0 0
    %5179 = vmatpush2.bf16.msra.mxu0 %v4956
    %5180 = vmatprep.mubr.bf16.mxu0 %v4508
    %5181 = vmatmul.mubr.bf16.gmra.mxu0 %v4507
    %v5182 = vpop.f32.mrf.mxu0
    %v5183 = vadd.f32 %v5143, %v5182
    %v5184 = vpop.f32.mrf.mxu0
    %v5185 = vpop.f32.mrf.mxu0
    %v5186 = vpop.f32.mrf.mxu0
    %5187 = vdwg.mxu0
    %5188 = vst [vmem:[#allocation14] sm:$0xff] %v5183
    // Predicated region
    $region58: #{tpu_custom_call.1} parent=1 // pred_check
      _
    $region59: #{tpu_custom_call.1} parent=1 // pred_check_branch
      %5190 = sbr.rel (0) target = $region61
    $region60: #{tpu_custom_call.1} parent=1 // pred_region
      %s5192 = ssub.s32 128, 128
      %5193 = vsyncadd [#allocation4], %s5192
      %s5195 = sshll.u32 [#allocation14], 4
      %s5196 = int_to_ptr.vmem [resolvable:$true] %s5195
      %5198 = dma.vmem_to_hbm [thread:$0]  %s5196, 128, %s7, [#allocation4]
    $region61: #{tpu_custom_call.1} parent=1 // pred_fallthru
      _
    // Predicated region
    $region62: #{tpu_custom_call.1} parent=1 // pred_check
      _
    $region63: #{tpu_custom_call.1} parent=1 // pred_check_branch
      %5200 = sbr.rel (0) target = $region65
    $region64: #{tpu_custom_call.1} parent=1 // pred_region
      %5201 = dma.done [#allocation4], 128
    $region65: #{tpu_custom_call.1} parent=1 // pred_fallthru
      _
    %5202 = vsyncpa [#allocation3], 1
    %5203 = vsyncpa [#allocation6], 1
    %5204 = vsyncpa [#allocation9], 1
    %5205 = vsyncpa [#allocation12], 1
    %5206 = vsyncpa [#allocation4], 1

// kernel: tpu_custom_call.1
$region0: #{tpu_custom_call.1}
  #allocation0 [shape = 'u32[]', space=smem, size = 0x4, offset = 0x4, fixed_abs, tag = 'smem constant byte address 0x4 - core index']
  #allocation1 [shape = 'u32[144,128]{1,0:T(1,128)}', space=vmem, size = 0x12000, scoped, tag = 'internal scratch']
  %s0 = inlined_call_operand.hbm [shape: f32[8,128], index: 0, kind: input, shape index: {}]
  %s1 = inlined_call_operand.hbm [shape: bf16[128,1024], index: 1, kind: input, shape index: {}]
  %s2 = inlined_call_operand.hbm [shape: f32[1,1024], index: 2, kind: input, shape index: {}]
  %s3 = inlined_call_operand.hbm [shape: bf16[1024,1024], index: 3, kind: input, shape index: {}]
  %s4 = inlined_call_operand.hbm [shape: f32[1,1024], index: 4, kind: input, shape index: {}]
  %s5 = inlined_call_operand.hbm [shape: bf16[1024,128], index: 5, kind: input, shape index: {}]
  %s6 = inlined_call_operand.hbm [shape: f32[1,128], index: 6, kind: input, shape index: {}]
  %s7 = inlined_call_operand.hbm [shape: f32[8,128], index: 7, kind: output, shape index: {}]
  %s8 = sld [smem:[#allocation0]]
  $region66: #{tpu_custom_call.1} parent=0
    _
  %s10 = ssub.s32 1, %s8
  %s11 = scalar_select 0, %s10, %s8
  $region1: #{tpu_custom_call.1} parent=0
    #allocation2 [shape = 'u8[4096]{0}', space=vmem, size = 0x1000, scoped, tag = 'input window, operand 0, single buffered']
    #allocation3 [shape = 's32[1]{0}', space=sflag, size = 0x4, scoped, tag = 'scoped memory for tpu_custom_call.1']
    #allocation4 [shape = 's32[1]{0}', space=sflag, size = 0x4, scoped, tag = 'scoped memory for tpu_custom_call.1']
    #allocation5 [shape = 'u8[262144]{0}', space=vmem, size = 0x40000, scoped, tag = 'input window, operand 1, single buffered']
    #allocation6 [shape = 's32[1]{0}', space=sflag, size = 0x4, scoped, tag = 'scoped memory for tpu_custom_call.1']
    #allocation7 [shape = 'u8[4096]{0}', space=vmem, size = 0x1000, scoped, tag = 'input window, operand 2, single buffered']
    #allocation8 [shape = 'u8[2097152]{0}', space=vmem, size = 0x200000, scoped, tag = 'input window, operand 3, single buffered']
    #allocation9 [shape = 's32[1]{0}', space=sflag, size = 0x4, scoped, tag = 'scoped memory for tpu_custom_call.1']
    #allocation10 [shape = 'u8[4096]{0}', space=vmem, size = 0x1000, scoped, tag = 'input window, operand 4, single buffered']
    #allocation11 [shape = 'u8[262144]{0}', space=vmem, size = 0x40000, scoped, tag = 'input window, operand 5, single buffered']
    #allocation12 [shape = 's32[1]{0}', space=sflag, size = 0x4, scoped, tag = 'scoped memory for tpu_custom_call.1']
    #allocation13 [shape = 'u8[512]{0}', space=vmem, size = 0x400, scoped, tag = 'input window, operand 6, single buffered']
    #allocation14 [shape = 'u8[4096]{0}', space=vmem, size = 0x1000, scoped, tag = 'output window, operand 0, single buffered']
    %12 = vsyncpa [#allocation3], 0
    %13 = vsyncpa [#allocation6], 0
    %14 = vsyncpa [#allocation9], 0
    %15 = vsyncpa [#allocation12], 0
    %16 = vsyncpa [#allocation4], 0
    // Predicated region
    $region2: #{tpu_custom_call.1} parent=1 // pred_check
      _
    $region3: #{tpu_custom_call.1} parent=1 // pred_check_branch
      %18 = sbr.rel (0) target = $region5
    $region4: #{tpu_custom_call.1} parent=1 // pred_region
      %s20 = ssub.s32 128, 128
      %21 = vsyncadd [#allocation3], %s20
      %s23 = sshll.u32 [#allocation2], 4
      %s24 = int_to_ptr.vmem [resolvable:$true] %s23
      %26 = dma.hbm_to_vmem [thread:$0]  %s0, 128, %s24, [#allocation3]
    $region5: #{tpu_custom_call.1} parent=1 // pred_fallthru
      _
    // Predicated region
    $region6: #{tpu_custom_call.1} parent=1 // pred_check
      _
    $region7: #{tpu_custom_call.1} parent=1 // pred_check_branch
      %28 = sbr.rel (0) target = $region9
    $region8: #{tpu_custom_call.1} parent=1 // pred_region
      %s30 = ssub.s32 8192, 8192
      %31 = vsyncadd [#allocation6], %s30
      %s32 = sshll.u32 [#allocation5], 4
      %s33 = int_to_ptr.vmem [resolvable:$true] %s32
      %38 = dma.hbm_to_vmem [thread:$0]  %s1, 8192, %s33, [#allocation6], 512, 512, 32
    $region9: #{tpu_custom_call.1} parent=1 // pred_fallthru
      _
    // Predicated region
    $region10: #{tpu_custom_call.1} parent=1 // pred_check
      _
    $region11: #{tpu_custom_call.1} parent=1 // pred_check_branch
      %40 = sbr.rel (0) target = $region13
    $region12: #{tpu_custom_call.1} parent=1 // pred_region
      %s42 = ssub.s32 128, 128
      %43 = vsyncadd [#allocation6], %s42
      %s45 = sshll.u32 [#allocation7], 4
      %s46 = int_to_ptr.vmem [resolvable:$true] %s45
      %48 = dma.hbm_to_vmem [thread:$0]  %s2, 128, %s46, [#allocation6]
    $region13: #{tpu_custom_call.1} parent=1 // pred_fallthru
      _
    // Predicated region
    $region14: #{tpu_custom_call.1} parent=1 // pred_check
      _
    $region15: #{tpu_custom_call.1} parent=1 // pred_check_branch
      %50 = sbr.rel (0) target = $region17
    $region16: #{tpu_custom_call.1} parent=1 // pred_region
      %s52 = ssub.s32 65536, 65536
      %53 = vsyncadd [#allocation9], %s52
      %s54 = sshll.u32 [#allocation8], 4
      %s55 = int_to_ptr.vmem [resolvable:$true] %s54
      %60 = dma.hbm_to_vmem [thread:$0]  %s3, 65536, %s55, [#allocation9], 512, 512, 32
    $region17: #{tpu_custom_call.1} parent=1 // pred_fallthru
      _
    // Predicated region
    $region18: #{tpu_custom_call.1} parent=1 // pred_check
      _
    $region19: #{tpu_custom_call.1} parent=1 // pred_check_branch
      %62 = sbr.rel (0) target = $region21
    $region20: #{tpu_custom_call.1} parent=1 // pred_region
      %s64 = ssub.s32 128, 128
      %65 = vsyncadd [#allocation9], %s64
      %s67 = sshll.u32 [#allocation10], 4
      %s68 = int_to_ptr.vmem [resolvable:$true] %s67
      %70 = dma.hbm_to_vmem [thread:$0]  %s4, 128, %s68, [#allocation9]
    $region21: #{tpu_custom_call.1} parent=1 // pred_fallthru
      _
    // Predicated region
    $region22: #{tpu_custom_call.1} parent=1 // pred_check
      _
    $region23: #{tpu_custom_call.1} parent=1 // pred_check_branch
      %72 = sbr.rel (0) target = $region25
    $region24: #{tpu_custom_call.1} parent=1 // pred_region
      %s74 = ssub.s32 8192, 8192
      %75 = vsyncadd [#allocation12], %s74
      %s76 = sshll.u32 [#allocation11], 4
      %s77 = int_to_ptr.vmem [resolvable:$true] %s76
      %82 = dma.hbm_to_vmem [thread:$0]  %s5, 8192, %s77, [#allocation12], 64, 64, 4
    $region25: #{tpu_custom_call.1} parent=1 // pred_fallthru
      _
    // Predicated region
    $region26: #{tpu_custom_call.1} parent=1 // pred_check
      _
    $region27: #{tpu_custom_call.1} parent=1 // pred_check_branch
      %84 = sbr.rel (0) target = $region29
    $region28: #{tpu_custom_call.1} parent=1 // pred_region
      %s86 = ssub.s32 16, 16
      %87 = vsyncadd [#allocation12], %s86
      %s89 = sshll.u32 [#allocation13], 4
      %s90 = int_to_ptr.vmem [resolvable:$true] %s89
      %92 = dma.hbm_to_vmem [thread:$0]  %s6, 16, %s90, [#allocation12]
    $region29: #{tpu_custom_call.1} parent=1 // pred_fallthru
      _
    // Predicated region
    $region30: #{tpu_custom_call.1} parent=1 // pred_check
      _
    $region31: #{tpu_custom_call.1} parent=1 // pred_check_branch
      %94 = sbr.rel (0) target = $region33
    $region32: #{tpu_custom_call.1} parent=1 // pred_region
      %95 = dma.done [#allocation3], 128
    $region33: #{tpu_custom_call.1} parent=1 // pred_fallthru
      _
    // Predicated region
    $region34: #{tpu_custom_call.1} parent=1 // pred_check
      _
    $region35: #{tpu_custom_call.1} parent=1 // pred_check_branch
      %97 = sbr.rel (0) target = $region37
    $region36: #{tpu_custom_call.1} parent=1 // pred_region
      %98 = dma.done [#allocation6], 8192
    $region37: #{tpu_custom_call.1} parent=1 // pred_fallthru
      _
    // Predicated region
    $region38: #{tpu_custom_call.1} parent=1 // pred_check
      _
    $region39: #{tpu_custom_call.1} parent=1 // pred_check_branch
      %100 = sbr.rel (0) target = $region41
    $region40: #{tpu_custom_call.1} parent=1 // pred_region
      %101 = dma.done [#allocation6], 128
    $region41: #{tpu_custom_call.1} parent=1 // pred_fallthru
      _
    // Predicated region
    $region42: #{tpu_custom_call.1} parent=1 // pred_check
      _
    $region43: #{tpu_custom_call.1} parent=1 // pred_check_branch
      %103 = sbr.rel (0) target = $region45
    $region44: #{tpu_custom_call.1} parent=1 // pred_region
      %104 = dma.done [#allocation9], 65536
    $region45: #{tpu_custom_call.1} parent=1 // pred_fallthru
      _
    // Predicated region
    $region46: #{tpu_custom_call.1} parent=1 // pred_check
      _
    $region47: #{tpu_custom_call.1} parent=1 // pred_check_branch
      %106 = sbr.rel (0) target = $region49
    $region48: #{tpu_custom_call.1} parent=1 // pred_region
      %107 = dma.done [#allocation9], 128
    $region49: #{tpu_custom_call.1} parent=1 // pred_fallthru
      _
    // Predicated region
    $region50: #{tpu_custom_call.1} parent=1 // pred_check
      _
    $region51: #{tpu_custom_call.1} parent=1 // pred_check_branch
      %109 = sbr.rel (0) target = $region53
    $region52: #{tpu_custom_call.1} parent=1 // pred_region
      %110 = dma.done [#allocation12], 8192
    $region53: #{tpu_custom_call.1} parent=1 // pred_fallthru
      _
    // Predicated region
    $region54: #{tpu_custom_call.1} parent=1 // pred_check
      _
    $region55: #{tpu_custom_call.1} parent=1 // pred_check_branch
      %112 = sbr.rel (0) target = $region57
    $region56: #{tpu_custom_call.1} parent=1 // pred_region
      %113 = dma.done [#allocation12], 16
    $region57: #{tpu_custom_call.1} parent=1 // pred_fallthru
      _
    %v115 = vld [vmem:[#allocation2] sm:$0xff]
    %v116 = vpack.c.bf16 %v115, %v115
    %v117 = vld [vmem:[#allocation5] sm:$0xff]
    %v118 = vld [vmem:[#allocation5 + $0x8] sm:$0xff]
    %v119 = vld [vmem:[#allocation5 + $0x10] sm:$0xff]
    %v120 = vld [vmem:[#allocation5 + $0x18] sm:$0xff]
    %v121 = vld [vmem:[#allocation5 + $0x20] sm:$0xff]
    %v122 = vld [vmem:[#allocation5 + $0x28] sm:$0xff]
    %v123 = vld [vmem:[#allocation5 + $0x30] sm:$0xff]
    %v124 = vld [vmem:[#allocation5 + $0x38] sm:$0xff]
    %v125 = vld [vmem:[#allocation5 + $0x40] sm:$0xff]
    %v126 = vld [vmem:[#allocation5 + $0x48] sm:$0xff]
    %v127 = vld [vmem:[#allocation5 + $0x50] sm:$0xff]
    %v128 = vld [vmem:[#allocation5 + $0x58] sm:$0xff]
    %v129 = vld [vmem:[#allocation5 + $0x60] sm:$0xff]
    %v130 = vld [vmem:[#allocation5 + $0x68] sm:$0xff]
    %v131 = vld [vmem:[#allocation5 + $0x70] sm:$0xff]
    %v132 = vld [vmem:[#allocation5 + $0x78] sm:$0xff]
    %v133 = vld [vmem:[#allocation5 + $0x80] sm:$0xff]
    %v134 = vld [vmem:[#allocation5 + $0x88] sm:$0xff]
    %v135 = vld [vmem:[#allocation5 + $0x90] sm:$0xff]
    %v136 = vld [vmem:[#allocation5 + $0x98] sm:$0xff]
    %v137 = vld [vmem:[#allocation5 + $0xa0] sm:$0xff]
    %v138 = vld [vmem:[#allocation5 + $0xa8] sm:$0xff]
    %v139 = vld [vmem:[#allocation5 + $0xb0] sm:$0xff]
    %v140 = vld [vmem:[#allocation5 + $0xb8] sm:$0xff]
    %v141 = vld [vmem:[#allocation5 + $0xc0] sm:$0xff]
    %v142 = vld [vmem:[#allocation5 + $0xc8] sm:$0xff]
    %v143 = vld [vmem:[#allocation5 + $0xd0] sm:$0xff]
    %v144 = vld [vmem:[#allocation5 + $0xd8] sm:$0xff]
    %v145 = vld [vmem:[#allocation5 + $0xe0] sm:$0xff]
    %v146 = vld [vmem:[#allocation5 + $0xe8] sm:$0xff]
    %v147 = vld [vmem:[#allocation5 + $0xf0] sm:$0xff]
    %v148 = vld [vmem:[#allocation5 + $0xf8] sm:$0xff]
    %v149 = vld [vmem:[#allocation5 + $0x100] sm:$0xff]
    %v150 = vld [vmem:[#allocation5 + $0x108] sm:$0xff]
    %v151 = vld [vmem:[#allocation5 + $0x110] sm:$0xff]
    %v152 = vld [vmem:[#allocation5 + $0x118] sm:$0xff]
    %v153 = vld [vmem:[#allocation5 + $0x120] sm:$0xff]
    %v154 = vld [vmem:[#allocation5 + $0x128] sm:$0xff]
    %v155 = vld [vmem:[#allocation5 + $0x130] sm:$0xff]
    %v156 = vld [vmem:[#allocation5 + $0x138] sm:$0xff]
    %v157 = vld [vmem:[#allocation5 + $0x140] sm:$0xff]
    %v158 = vld [vmem:[#allocation5 + $0x148] sm:$0xff]
    %v159 = vld [vmem:[#allocation5 + $0x150] sm:$0xff]
    %v160 = vld [vmem:[#allocation5 + $0x158] sm:$0xff]
    %v161 = vld [vmem:[#allocation5 + $0x160] sm:$0xff]
    %v162 = vld [vmem:[#allocation5 + $0x168] sm:$0xff]
    %v163 = vld [vmem:[#allocation5 + $0x170] sm:$0xff]
    %v164 = vld [vmem:[#allocation5 + $0x178] sm:$0xff]
    %v165 = vld [vmem:[#allocation5 + $0x180] sm:$0xff]
    %v166 = vld [vmem:[#allocation5 + $0x188] sm:$0xff]
    %v167 = vld [vmem:[#allocation5 + $0x190] sm:$0xff]
    %v168 = vld [vmem:[#allocation5 + $0x198] sm:$0xff]
    %v169 = vld [vmem:[#allocation5 + $0x1a0] sm:$0xff]
    %v170 = vld [vmem:[#allocation5 + $0x1a8] sm:$0xff]
    %v171 = vld [vmem:[#allocation5 + $0x1b0] sm:$0xff]
    %v172 = vld [vmem:[#allocation5 + $0x1b8] sm:$0xff]
    %v173 = vld [vmem:[#allocation5 + $0x1c0] sm:$0xff]
    %v174 = vld [vmem:[#allocation5 + $0x1c8] sm:$0xff]
    %v175 = vld [vmem:[#allocation5 + $0x1d0] sm:$0xff]
    %v176 = vld [vmem:[#allocation5 + $0x1d8] sm:$0xff]
    %v177 = vld [vmem:[#allocation5 + $0x1e0] sm:$0xff]
    %v178 = vld [vmem:[#allocation5 + $0x1e8] sm:$0xff]
    %v179 = vld [vmem:[#allocation5 + $0x1f0] sm:$0xff]
    %v180 = vld [vmem:[#allocation5 + $0x1f8] sm:$0xff]
    %v181 = vld [vmem:[#allocation7] sm:$0xff]
    %v183 = vlaneseq
    %v184 = vshrl.u32 %v183, 7
    %v185 = vsub.s32 0, %v184
    %v186 = vrot.slane %v181, %v185
    %v187 = vlaneseq
    %v188 = vshrl.u32 %v187, 7
    %v189 = vsub.s32 1, %v188
    %v190 = vrot.slane %v181, %v189
    %v191 = vlaneseq
    %v192 = vshrl.u32 %v191, 7
    %v193 = vsub.s32 2, %v192
    %v194 = vrot.slane %v181, %v193
    %v195 = vlaneseq
    %v196 = vshrl.u32 %v195, 7
    %v197 = vsub.s32 3, %v196
    %v198 = vrot.slane %v181, %v197
    %v199 = vlaneseq
    %v200 = vshrl.u32 %v199, 7
    %v201 = vsub.s32 4, %v200
    %v202 = vrot.slane %v181, %v201
    %v203 = vlaneseq
    %v204 = vshrl.u32 %v203, 7
    %v205 = vsub.s32 5, %v204
    %v206 = vrot.slane %v181, %v205
    %v207 = vlaneseq
    %v208 = vshrl.u32 %v207, 7
    %v209 = vsub.s32 6, %v208
    %v210 = vrot.slane %v181, %v209
    %v211 = vlaneseq
    %v212 = vshrl.u32 %v211, 7
    %v213 = vsub.s32 7, %v212
    %v214 = vrot.slane %v181, %v213
    %v287 = vunpack.c.l.b16 %v117
    %v288 = vunpack.c.h.b16 %v117
    %v289 = vunpack.c.l.b16 %v118
    %v290 = vunpack.c.h.b16 %v118
    %v291 = vunpack.c.l.b16 %v119
    %v292 = vunpack.c.h.b16 %v119
    %v293 = vunpack.c.l.b16 %v120
    %v294 = vunpack.c.h.b16 %v120
    %v295 = vunpack.c.l.b16 %v121
    %v296 = vunpack.c.h.b16 %v121
    %v297 = vunpack.c.l.b16 %v122
    %v298 = vunpack.c.h.b16 %v122
    %v299 = vunpack.c.l.b16 %v123
    %v300 = vunpack.c.h.b16 %v123
    %v301 = vunpack.c.l.b16 %v124
    %v302 = vunpack.c.h.b16 %v124
    %v303 = vunpack.c.l.b16 %v125
    %v304 = vunpack.c.h.b16 %v125
    %v305 = vunpack.c.l.b16 %v126
    %v306 = vunpack.c.h.b16 %v126
    %v307 = vunpack.c.l.b16 %v127
    %v308 = vunpack.c.h.b16 %v127
    %v309 = vunpack.c.l.b16 %v128
    %v310 = vunpack.c.h.b16 %v128
    %v311 = vunpack.c.l.b16 %v129
    %v312 = vunpack.c.h.b16 %v129
    %v313 = vunpack.c.l.b16 %v130
    %v314 = vunpack.c.h.b16 %v130
    %v315 = vunpack.c.l.b16 %v131
    %v316 = vunpack.c.h.b16 %v131
    %v317 = vunpack.c.l.b16 %v132
    %v318 = vunpack.c.h.b16 %v132
    %v319 = vunpack.c.l.b16 %v133
    %v320 = vunpack.c.h.b16 %v133
    %v321 = vunpack.c.l.b16 %v134
    %v322 = vunpack.c.h.b16 %v134
    %v323 = vunpack.c.l.b16 %v135
    %v324 = vunpack.c.h.b16 %v135
    %v325 = vunpack.c.l.b16 %v136
    %v326 = vunpack.c.h.b16 %v136
    %v327 = vunpack.c.l.b16 %v137
    %v328 = vunpack.c.h.b16 %v137
    %v329 = vunpack.c.l.b16 %v138
    %v330 = vunpack.c.h.b16 %v138
    %v331 = vunpack.c.l.b16 %v139
    %v332 = vunpack.c.h.b16 %v139
    %v333 = vunpack.c.l.b16 %v140
    %v334 = vunpack.c.h.b16 %v140
    %v335 = vunpack.c.l.b16 %v141
    %v336 = vunpack.c.h.b16 %v141
    %v337 = vunpack.c.l.b16 %v142
    %v338 = vunpack.c.h.b16 %v142
    %v339 = vunpack.c.l.b16 %v143
    %v340 = vunpack.c.h.b16 %v143
    %v341 = vunpack.c.l.b16 %v144
    %v342 = vunpack.c.h.b16 %v144
    %v343 = vunpack.c.l.b16 %v145
    %v344 = vunpack.c.h.b16 %v145
    %v345 = vunpack.c.l.b16 %v146
    %v346 = vunpack.c.h.b16 %v146
    %v347 = vunpack.c.l.b16 %v147
    %v348 = vunpack.c.h.b16 %v147
    %v349 = vunpack.c.l.b16 %v148
    %v350 = vunpack.c.h.b16 %v148
    %v351 = vunpack.c.l.b16 %v149
    %v352 = vunpack.c.h.b16 %v149
    %v353 = vunpack.c.l.b16 %v150
    %v354 = vunpack.c.h.b16 %v150
    %v355 = vunpack.c.l.b16 %v151
    %v356 = vunpack.c.h.b16 %v151
    %v357 = vunpack.c.l.b16 %v152
    %v358 = vunpack.c.h.b16 %v152
    %v359 = vunpack.c.l.b16 %v153
    %v360 = vunpack.c.h.b16 %v153
    %v361 = vunpack.c.l.b16 %v154
    %v362 = vunpack.c.h.b16 %v154
    %v363 = vunpack.c.l.b16 %v155
    %v364 = vunpack.c.h.b16 %v155
    %v365 = vunpack.c.l.b16 %v156
    %v366 = vunpack.c.h.b16 %v156
    %v367 = vunpack.c.l.b16 %v157
    %v368 = vunpack.c.h.b16 %v157
    %v369 = vunpack.c.l.b16 %v158
    %v370 = vunpack.c.h.b16 %v158
    %v371 = vunpack.c.l.b16 %v159
    %v372 = vunpack.c.h.b16 %v159
    %v373 = vunpack.c.l.b16 %v160
    %v374 = vunpack.c.h.b16 %v160
    %v375 = vunpack.c.l.b16 %v161
    %v376 = vunpack.c.h.b16 %v161
    %v377 = vunpack.c.l.b16 %v162
    %v378 = vunpack.c.h.b16 %v162
    %v379 = vunpack.c.l.b16 %v163
    %v380 = vunpack.c.h.b16 %v163
    %v381 = vunpack.c.l.b16 %v164
    %v382 = vunpack.c.h.b16 %v164
    %v383 = vunpack.c.l.b16 %v165
    %v384 = vunpack.c.h.b16 %v165
    %v385 = vunpack.c.l.b16 %v166
    %v386 = vunpack.c.h.b16 %v166
    %v387 = vunpack.c.l.b16 %v167
    %v388 = vunpack.c.h.b16 %v167
    %v389 = vunpack.c.l.b16 %v168
    %v390 = vunpack.c.h.b16 %v168
    %v391 = vunpack.c.l.b16 %v169
    %v392 = vunpack.c.h.b16 %v169
    %v393 = vunpack.c.l.b16 %v170
    %v394 = vunpack.c.h.b16 %v170
    %v395 = vunpack.c.l.b16 %v171
    %v396 = vunpack.c.h.b16 %v171
    %v397 = vunpack.c.l.b16 %v172
    %v398 = vunpack.c.h.b16 %v172
    %v399 = vunpack.c.l.b16 %v173
    %v400 = vunpack.c.h.b16 %v173
    %v401 = vunpack.c.l.b16 %v174
    %v402 = vunpack.c.h.b16 %v174
    %v403 = vunpack.c.l.b16 %v175
    %v404 = vunpack.c.h.b16 %v175
    %v405 = vunpack.c.l.b16 %v176
    %v406 = vunpack.c.h.b16 %v176
    %v407 = vunpack.c.l.b16 %v177
    %v408 = vunpack.c.h.b16 %v177
    %v409 = vunpack.c.l.b16 %v178
    %v410 = vunpack.c.h.b16 %v178
    %v411 = vunpack.c.l.b16 %v179
    %v412 = vunpack.c.h.b16 %v179
    %v413 = vunpack.c.l.b16 %v180
    %v414 = vunpack.c.h.b16 %v180
    %v415 = vpack.c.b16 %v295, %v287
    %v416 = vpack.c.b16 %v296, %v288
    %v417 = vpack.c.b16 %v297, %v289
    %v418 = vpack.c.b16 %v298, %v290
    %v419 = vpack.c.b16 %v299, %v291
    %v420 = vpack.c.b16 %v300, %v292
    %v421 = vpack.c.b16 %v301, %v293
    %v422 = vpack.c.b16 %v302, %v294
    %v423 = vpack.c.b16 %v311, %v303
    %v424 = vpack.c.b16 %v312, %v304
    %v425 = vpack.c.b16 %v313, %v305
    %v426 = vpack.c.b16 %v314, %v306
    %v427 = vpack.c.b16 %v315, %v307
    %v428 = vpack.c.b16 %v316, %v308
    %v429 = vpack.c.b16 %v317, %v309
    %v430 = vpack.c.b16 %v318, %v310
    %v431 = vpack.c.b16 %v327, %v319
    %v432 = vpack.c.b16 %v328, %v320
    %v433 = vpack.c.b16 %v329, %v321
    %v434 = vpack.c.b16 %v330, %v322
    %v435 = vpack.c.b16 %v331, %v323
    %v436 = vpack.c.b16 %v332, %v324
    %v437 = vpack.c.b16 %v333, %v325
    %v438 = vpack.c.b16 %v334, %v326
    %v439 = vpack.c.b16 %v343, %v335
    %v440 = vpack.c.b16 %v344, %v336
    %v441 = vpack.c.b16 %v345, %v337
    %v442 = vpack.c.b16 %v346, %v338
    %v443 = vpack.c.b16 %v347, %v339
    %v444 = vpack.c.b16 %v348, %v340
    %v445 = vpack.c.b16 %v349, %v341
    %v446 = vpack.c.b16 %v350, %v342
    %v447 = vpack.c.b16 %v359, %v351
    %v448 = vpack.c.b16 %v360, %v352
    %v449 = vpack.c.b16 %v361, %v353
    %v450 = vpack.c.b16 %v362, %v354
    %v451 = vpack.c.b16 %v363, %v355
    %v452 = vpack.c.b16 %v364, %v356
    %v453 = vpack.c.b16 %v365, %v357
    %v454 = vpack.c.b16 %v366, %v358
    %v455 = vpack.c.b16 %v375, %v367
    %v456 = vpack.c.b16 %v376, %v368
    %v457 = vpack.c.b16 %v377, %v369
    %v458 = vpack.c.b16 %v378, %v370
    %v459 = vpack.c.b16 %v379, %v371
    %v460 = vpack.c.b16 %v380, %v372
    %v461 = vpack.c.b16 %v381, %v373
    %v462 = vpack.c.b16 %v382, %v374
    %v463 = vpack.c.b16 %v391, %v383
    %v464 = vpack.c.b16 %v392, %v384
    %v465 = vpack.c.b16 %v393, %v385
    %v466 = vpack.c.b16 %v394, %v386
    %v467 = vpack.c.b16 %v395, %v387
    %v468 = vpack.c.b16 %v396, %v388
    %v469 = vpack.c.b16 %v397, %v389
    %v470 = vpack.c.b16 %v398, %v390
    %v471 = vpack.c.b16 %v407, %v399
    %v472 = vpack.c.b16 %v408, %v400
    %v473 = vpack.c.b16 %v409, %v401
    %v474 = vpack.c.b16 %v410, %v402
    %v475 = vpack.c.b16 %v411, %v403
    %v476 = vpack.c.b16 %v412, %v404
    %v477 = vpack.c.b16 %v413, %v405
    %v478 = vpack.c.b16 %v414, %v406
    %543 = vmatprep.subr.bf16.mxu0 %v472
    %544 = vmatpush1.bf16.msra.mxu0 %v471
    %545 = vmatprep.subr.bf16.mxu0 %v464
    %546 = vmatpush1.bf16.msra.mxu0 %v463
    %547 = vmatprep.subr.bf16.mxu0 %v456
    %548 = vmatpush1.bf16.msra.mxu0 %v455
    %549 = vmatprep.subr.bf16.mxu0 %v448
    %550 = vmatpush1.bf16.msra.mxu0 %v447
    %551 = vmatprep.subr.bf16.mxu0 %v440
    %552 = vmatpush1.bf16.msra.mxu0 %v439
    %553 = vmatprep.subr.bf16.mxu0 %v432
    %554 = vmatpush1.bf16.msra.mxu0 %v431
    %555 = vmatprep.subr.bf16.mxu0 %v424
    %556 = vmatpush1.bf16.msra.mxu0 %v423
    %557 = vmatprep.subr.bf16.mxu0 %v416
    %558 = vmatpush1.bf16.msra.mxu0 %v415
    %559 = vmatprep.subr.bf16.mxu0 0
    %560 = vmatpush2.bf16.msra.mxu0 0
    %561 = vmatprep.subr.bf16.mxu0 0
    %562 = vmatpush2.bf16.msra.mxu0 0
    %563 = vmatprep.subr.bf16.mxu0 0
    %564 = vmatpush2.bf16.msra.mxu0 0
    %565 = vmatprep.subr.bf16.mxu0 0
    %566 = vmatpush2.bf16.msra.mxu0 0
    %567 = vmatprep.subr.bf16.mxu0 0
    %568 = vmatpush2.bf16.msra.mxu0 0
    %569 = vmatprep.subr.bf16.mxu0 0
    %570 = vmatpush2.bf16.msra.mxu0 0
    %571 = vmatprep.subr.bf16.mxu0 0
    %572 = vmatpush2.bf16.msra.mxu0 0
    %573 = vmatprep.subr.bf16.mxu0 0
    %574 = vmatpush2.bf16.msra.mxu0 0
    %575 = vmatprep.mubr.bf16.mxu0 0
    %576 = vmatmul.mubr.bf16.gmra.mxu0 %v116
    %v577 = vpop.f32.mrf.mxu0
    %v578 = vadd.f32 %v186, %v577
    %v579 = vpop.f32.mrf.mxu0
    %v580 = vadd.f32 %v190, %v579
    %v581 = vpop.f32.mrf.mxu0
    %v582 = vpop.f32.mrf.mxu0
    %583 = vdwg.mxu0
    %584 = vmatprep.subr.bf16.mxu0 %v474
    %585 = vmatpush1.bf16.msra.mxu0 %v473
    %586 = vmatprep.subr.bf16.mxu0 %v466
    %587 = vmatpush1.bf16.msra.mxu0 %v465
    %588 = vmatprep.subr.bf16.mxu0 %v458
    %589 = vmatpush1.bf16.msra.mxu0 %v457
    %590 = vmatprep.subr.bf16.mxu0 %v450
    %591 = vmatpush1.bf16.msra.mxu0 %v449
    %592 = vmatprep.subr.bf16.mxu0 %v442
    %593 = vmatpush1.bf16.msra.mxu0 %v441
    %594 = vmatprep.subr.bf16.mxu0 %v434
    %595 = vmatpush1.bf16.msra.mxu0 %v433
    %596 = vmatprep.subr.bf16.mxu0 %v426
    %597 = vmatpush1.bf16.msra.mxu0 %v425
    %598 = vmatprep.subr.bf16.mxu0 %v418
    %599 = vmatpush1.bf16.msra.mxu0 %v417
    %600 = vmatprep.subr.bf16.mxu0 0
    %601 = vmatpush2.bf16.msra.mxu0 0
    %602 = vmatprep.subr.bf16.mxu0 0
    %603 = vmatpush2.bf16.msra.mxu0 0
    %604 = vmatprep.subr.bf16.mxu0 0
    %605 = vmatpush2.bf16.msra.mxu0 0
    %606 = vmatprep.subr.bf16.mxu0 0
    %607 = vmatpush2.bf16.msra.mxu0 0
    %608 = vmatprep.subr.bf16.mxu0 0
    %609 = vmatpush2.bf16.msra.mxu0 0
    %610 = vmatprep.subr.bf16.mxu0 0
    %611 = vmatpush2.bf16.msra.mxu0 0
    %612 = vmatprep.subr.bf16.mxu0 0
    %613 = vmatpush2.bf16.msra.mxu0 0
    %614 = vmatprep.subr.bf16.mxu0 0
    %615 = vmatpush2.bf16.msra.mxu0 0
    %616 = vmatprep.mubr.bf16.mxu0 0
    %617 = vmatmul.mubr.bf16.gmra.mxu0 %v116
    %v618 = vpop.f32.mrf.mxu0
    %v619 = vadd.f32 %v194, %v618
    %v620 = vpop.f32.mrf.mxu0
    %v621 = vadd.f32 %v198, %v620
    %v622 = vpop.f32.mrf.mxu0
    %v623 = vpop.f32.mrf.mxu0
    %624 = vdwg.mxu0
    %625 = vmatprep.subr.bf16.mxu0 %v476
    %626 = vmatpush1.bf16.msra.mxu0 %v475
    %627 = vmatprep.subr.bf16.mxu0 %v468
    %628 = vmatpush1.bf16.msra.mxu0 %v467
    %629 = vmatprep.subr.bf16.mxu0 %v460
    %630 = vmatpush1.bf16.msra.mxu0 %v459
    %631 = vmatprep.subr.bf16.mxu0 %v452
    %632 = vmatpush1.bf16.msra.mxu0 %v451
    %633 = vmatprep.subr.bf16.mxu0 %v444
    %634 = vmatpush1.bf16.msra.mxu0 %v443
    %635 = vmatprep.subr.bf16.mxu0 %v436
    %636 = vmatpush1.bf16.msra.mxu0 %v435
    %637 = vmatprep.subr.bf16.mxu0 %v428
    %638 = vmatpush1.bf16.msra.mxu0 %v427
    %639 = vmatprep.subr.bf16.mxu0 %v420
    %640 = vmatpush1.bf16.msra.mxu0 %v419
    %641 = vmatprep.subr.bf16.mxu0 0
    %642 = vmatpush2.bf16.msra.mxu0 0
    %643 = vmatprep.subr.bf16.mxu0 0
    %644 = vmatpush2.bf16.msra.mxu0 0
    %645 = vmatprep.subr.bf16.mxu0 0
    %646 = vmatpush2.bf16.msra.mxu0 0
    %647 = vmatprep.subr.bf16.mxu0 0
    %648 = vmatpush2.bf16.msra.mxu0 0
    %649 = vmatprep.subr.bf16.mxu0 0
    %650 = vmatpush2.bf16.msra.mxu0 0
    %651 = vmatprep.subr.bf16.mxu0 0
    %652 = vmatpush2.bf16.msra.mxu0 0
    %653 = vmatprep.subr.bf16.mxu0 0
    %654 = vmatpush2.bf16.msra.mxu0 0
    %655 = vmatprep.subr.bf16.mxu0 0
    %656 = vmatpush2.bf16.msra.mxu0 0
    %657 = vmatprep.mubr.bf16.mxu0 0
    %658 = vmatmul.mubr.bf16.gmra.mxu0 %v116
    %v659 = vpop.f32.mrf.mxu0
    %v660 = vadd.f32 %v202, %v659
    %v661 = vpop.f32.mrf.mxu0
    %v662 = vadd.f32 %v206, %v661
    %v663 = vpop.f32.mrf.mxu0
    %v664 = vpop.f32.mrf.mxu0
    %665 = vdwg.mxu0
    %666 = vmatprep.subr.bf16.mxu0 %v478
    %667 = vmatpush1.bf16.msra.mxu0 %v477
    %668 = vmatprep.subr.bf16.mxu0 %v470
    %669 = vmatpush1.bf16.msra.mxu0 %v469
    %670 = vmatprep.subr.bf16.mxu0 %v462
    %671 = vmatpush1.bf16.msra.mxu0 %v461
    %672 = vmatprep.subr.bf16.mxu0 %v454
    %673 = vmatpush1.bf16.msra.mxu0 %v453
    %674 = vmatprep.subr.bf16.mxu0 %v446
    %675 = vmatpush1.bf16.msra.mxu0 %v445
    %676 = vmatprep.subr.bf16.mxu0 %v438
    %677 = vmatpush1.bf16.msra.mxu0 %v437
    %678 = vmatprep.subr.bf16.mxu0 %v430
    %679 = vmatpush1.bf16.msra.mxu0 %v429
    %680 = vmatprep.subr.bf16.mxu0 %v422
    %681 = vmatpush1.bf16.msra.mxu0 %v421
    %682 = vmatprep.subr.bf16.mxu0 0
    %683 = vmatpush2.bf16.msra.mxu0 0
    %684 = vmatprep.subr.bf16.mxu0 0
    %685 = vmatpush2.bf16.msra.mxu0 0
    %686 = vmatprep.subr.bf16.mxu0 0
    %687 = vmatpush2.bf16.msra.mxu0 0
    %688 = vmatprep.subr.bf16.mxu0 0
    %689 = vmatpush2.bf16.msra.mxu0 0
    %690 = vmatprep.subr.bf16.mxu0 0
    %691 = vmatpush2.bf16.msra.mxu0 0
    %692 = vmatprep.subr.bf16.mxu0 0
    %693 = vmatpush2.bf16.msra.mxu0 0
    %694 = vmatprep.subr.bf16.mxu0 0
    %695 = vmatpush2.bf16.msra.mxu0 0
    %696 = vmatprep.subr.bf16.mxu0 0
    %697 = vmatpush2.bf16.msra.mxu0 0
    %698 = vmatprep.mubr.bf16.mxu0 0
    %699 = vmatmul.mubr.bf16.gmra.mxu0 %v116
    %v700 = vpop.f32.mrf.mxu0
    %v701 = vadd.f32 %v210, %v700
    %v702 = vpop.f32.mrf.mxu0
    %v703 = vadd.f32 %v214, %v702
    %v704 = vpop.f32.mrf.mxu0
    %v705 = vpop.f32.mrf.mxu0
    %706 = vdwg.mxu0
    %v707 = vmax.f32 %v578, 0.0
    %v708 = vmax.f32 %v580, 0.0
    %v709 = vmax.f32 %v619, 0.0
    %v710 = vmax.f32 %v621, 0.0
    %v711 = vmax.f32 %v660, 0.0
    %v712 = vmax.f32 %v662, 0.0
    %v713 = vmax.f32 %v701, 0.0
    %v714 = vmax.f32 %v703, 0.0
    %v715 = vpack.c.bf16 %v707, %v707
    %v716 = vpack.c.bf16 %v708, %v708
    %v717 = vpack.c.bf16 %v709, %v709
    %v718 = vpack.c.bf16 %v710, %v710
    %v719 = vpack.c.bf16 %v711, %v711
    %v720 = vpack.c.bf16 %v712, %v712
    %v721 = vpack.c.bf16 %v713, %v713
    %v722 = vpack.c.bf16 %v714, %v714
    %v723 = vld [vmem:[#allocation8] sm:$0xff]
    %v724 = vld [vmem:[#allocation8 + $0x8] sm:$0xff]
    %v725 = vld [vmem:[#allocation8 + $0x10] sm:$0xff]
    %v726 = vld [vmem:[#allocation8 + $0x18] sm:$0xff]
    %v727 = vld [vmem:[#allocation8 + $0x20] sm:$0xff]
    %v728 = vld [vmem:[#allocation8 + $0x28] sm:$0xff]
    %v729 = vld [vmem:[#allocation8 + $0x30] sm:$0xff]
    %v730 = vld [vmem:[#allocation8 + $0x38] sm:$0xff]
    %v731 = vld [vmem:[#allocation8 + $0x40] sm:$0xff]
    %v732 = vld [vmem:[#allocation8 + $0x48] sm:$0xff]
    %v733 = vld [vmem:[#allocation8 + $0x50] sm:$0xff]
    %v734 = vld [vmem:[#allocation8 + $0x58] sm:$0xff]
    %v735 = vld [vmem:[#allocation8 + $0x60] sm:$0xff]
    %v736 = vld [vmem:[#allocation8 + $0x68] sm:$0xff]
    %v737 = vld [vmem:[#allocation8 + $0x70] sm:$0xff]
    %v738 = vld [vmem:[#allocation8 + $0x78] sm:$0xff]
    %v739 = vld [vmem:[#allocation8 + $0x80] sm:$0xff]
    %v740 = vld [vmem:[#allocation8 + $0x88] sm:$0xff]
    %v741 = vld [vmem:[#allocation8 + $0x90] sm:$0xff]
    %v742 = vld [vmem:[#allocation8 + $0x98] sm:$0xff]
    %v743 = vld [vmem:[#allocation8 + $0xa0] sm:$0xff]
    %v744 = vld [vmem:[#allocation8 + $0xa8] sm:$0xff]
    %v745 = vld [vmem:[#allocation8 + $0xb0] sm:$0xff]
    %v746 = vld [vmem:[#allocation8 + $0xb8] sm:$0xff]
    %v747 = vld [vmem:[#allocation8 + $0xc0] sm:$0xff]
    %v748 = vld [vmem:[#allocation8 + $0xc8] sm:$0xff]
    %v749 = vld [vmem:[#allocation8 + $0xd0] sm:$0xff]
    %v750 = vld [vmem:[#allocation8 + $0xd8] sm:$0xff]
    %v751 = vld [vmem:[#allocation8 + $0xe0] sm:$0xff]
    %v752 = vld [vmem:[#allocation8 + $0xe8] sm:$0xff]
    %v753 = vld [vmem:[#allocation8 + $0xf0] sm:$0xff]
    %v754 = vld [vmem:[#allocation8 + $0xf8] sm:$0xff]
    %v755 = vld [vmem:[#allocation8 + $0x100] sm:$0xff]
    %v756 = vld [vmem:[#allocation8 + $0x108] sm:$0xff]
    %v757 = vld [vmem:[#allocation8 + $0x110] sm:$0xff]
    %v758 = vld [vmem:[#allocation8 + $0x118] sm:$0xff]
    %v759 = vld [vmem:[#allocation8 + $0x120] sm:$0xff]
    %v760 = vld [vmem:[#allocation8 + $0x128] sm:$0xff]
    %v761 = vld [vmem:[#allocation8 + $0x130] sm:$0xff]
    %v762 = vld [vmem:[#allocation8 + $0x138] sm:$0xff]
    %v763 = vld [vmem:[#allocation8 + $0x140] sm:$0xff]
    %v764 = vld [vmem:[#allocation8 + $0x148] sm:$0xff]
    %v765 = vld [vmem:[#allocation8 + $0x150] sm:$0xff]
    %v766 = vld [vmem:[#allocation8 + $0x158] sm:$0xff]
    %v767 = vld [vmem:[#allocation8 + $0x160] sm:$0xff]
    %v768 = vld [vmem:[#allocation8 + $0x168] sm:$0xff]
    %v769 = vld [vmem:[#allocation8 + $0x170] sm:$0xff]
    %v770 = vld [vmem:[#allocation8 + $0x178] sm:$0xff]
    %v771 = vld [vmem:[#allocation8 + $0x180] sm:$0xff]
    %v772 = vld [vmem:[#allocation8 + $0x188] sm:$0xff]
    %v773 = vld [vmem:[#allocation8 + $0x190] sm:$0xff]
    %v774 = vld [vmem:[#allocation8 + $0x198] sm:$0xff]
    %v775 = vld [vmem:[#allocation8 + $0x1a0] sm:$0xff]
    %v776 = vld [vmem:[#allocation8 + $0x1a8] sm:$0xff]
    %v777 = vld [vmem:[#allocation8 + $0x1b0] sm:$0xff]
    %v778 = vld [vmem:[#allocation8 + $0x1b8] sm:$0xff]
    %v779 = vld [vmem:[#allocation8 + $0x1c0] sm:$0xff]
    %v780 = vld [vmem:[#allocation8 + $0x1c8] sm:$0xff]
    %v781 = vld [vmem:[#allocation8 + $0x1d0] sm:$0xff]
    %v782 = vld [vmem:[#allocation8 + $0x1d8] sm:$0xff]
    %v783 = vld [vmem:[#allocation8 + $0x1e0] sm:$0xff]
    %v784 = vld [vmem:[#allocation8 + $0x1e8] sm:$0xff]
    %v785 = vld [vmem:[#allocation8 + $0x1f0] sm:$0xff]
    %v786 = vld [vmem:[#allocation8 + $0x1f8] sm:$0xff]
    %v787 = vld [vmem:[#allocation8 + $0x200] sm:$0xff]
    %v788 = vld [vmem:[#allocation8 + $0x208] sm:$0xff]
    %v789 = vld [vmem:[#allocation8 + $0x210] sm:$0xff]
    %v790 = vld [vmem:[#allocation8 + $0x218] sm:$0xff]
    %v791 = vld [vmem:[#allocation8 + $0x220] sm:$0xff]
    %v792 = vld [vmem:[#allocation8 + $0x228] sm:$0xff]
    %v793 = vld [vmem:[#allocation8 + $0x230] sm:$0xff]
    %v794 = vld [vmem:[#allocation8 + $0x238] sm:$0xff]
    %v795 = vld [vmem:[#allocation8 + $0x240] sm:$0xff]
    %v796 = vld [vmem:[#allocation8 + $0x248] sm:$0xff]
    %v797 = vld [vmem:[#allocation8 + $0x250] sm:$0xff]
    %v798 = vld [vmem:[#allocation8 + $0x258] sm:$0xff]
    %v799 = vld [vmem:[#allocation8 + $0x260] sm:$0xff]
    %v800 = vld [vmem:[#allocation8 + $0x268] sm:$0xff]
    %v801 = vld [vmem:[#allocation8 + $0x270] sm:$0xff]
    %v802 = vld [vmem:[#allocation8 + $0x278] sm:$0xff]
    %v803 = vld [vmem:[#allocation8 + $0x280] sm:$0xff]
    %v804 = vld [vmem:[#allocation8 + $0x288] sm:$0xff]
    %v805 = vld [vmem:[#allocation8 + $0x290] sm:$0xff]
    %v806 = vld [vmem:[#allocation8 + $0x298] sm:$0xff]
    %v807 = vld [vmem:[#allocation8 + $0x2a0] sm:$0xff]
    %v808 = vld [vmem:[#allocation8 + $0x2a8] sm:$0xff]
    %v809 = vld [vmem:[#allocation8 + $0x2b0] sm:$0xff]
    %v810 = vld [vmem:[#allocation8 + $0x2b8] sm:$0xff]
    %v811 = vld [vmem:[#allocation8 + $0x2c0] sm:$0xff]
    %v812 = vld [vmem:[#allocation8 + $0x2c8] sm:$0xff]
    %v813 = vld [vmem:[#allocation8 + $0x2d0] sm:$0xff]
    %v814 = vld [vmem:[#allocation8 + $0x2d8] sm:$0xff]
    %v815 = vld [vmem:[#allocation8 + $0x2e0] sm:$0xff]
    %v816 = vld [vmem:[#allocation8 + $0x2e8] sm:$0xff]
    %v817 = vld [vmem:[#allocation8 + $0x2f0] sm:$0xff]
    %v818 = vld [vmem:[#allocation8 + $0x2f8] sm:$0xff]
    %v819 = vld [vmem:[#allocation8 + $0x300] sm:$0xff]
    %v820 = vld [vmem:[#allocation8 + $0x308] sm:$0xff]
    %v821 = vld [vmem:[#allocation8 + $0x310] sm:$0xff]
    %v822 = vld [vmem:[#allocation8 + $0x318] sm:$0xff]
    %v823 = vld [vmem:[#allocation8 + $0x320] sm:$0xff]
    %v824 = vld [vmem:[#allocation8 + $0x328] sm:$0xff]
    %v825 = vld [vmem:[#allocation8 + $0x330] sm:$0xff]
    %v826 = vld [vmem:[#allocation8 + $0x338] sm:$0xff]
    %v827 = vld [vmem:[#allocation8 + $0x340] sm:$0xff]
    %v828 = vld [vmem:[#allocation8 + $0x348] sm:$0xff]
    %v829 = vld [vmem:[#allocation8 + $0x350] sm:$0xff]
    %v830 = vld [vmem:[#allocation8 + $0x358] sm:$0xff]
    %v831 = vld [vmem:[#allocation8 + $0x360] sm:$0xff]
    %v832 = vld [vmem:[#allocation8 + $0x368] sm:$0xff]
    %v833 = vld [vmem:[#allocation8 + $0x370] sm:$0xff]
    %v834 = vld [vmem:[#allocation8 + $0x378] sm:$0xff]
    %v835 = vld [vmem:[#allocation8 + $0x380] sm:$0xff]
    %v836 = vld [vmem:[#allocation8 + $0x388] sm:$0xff]
    %v837 = vld [vmem:[#allocation8 + $0x390] sm:$0xff]
    %v838 = vld [vmem:[#allocation8 + $0x398] sm:$0xff]
    %v839 = vld [vmem:[#allocation8 + $0x3a0] sm:$0xff]
    %v840 = vld [vmem:[#allocation8 + $0x3a8] sm:$0xff]
    %v841 = vld [vmem:[#allocation8 + $0x3b0] sm:$0xff]
    %v842 = vld [vmem:[#allocation8 + $0x3b8] sm:$0xff]
    %v843 = vld [vmem:[#allocation8 + $0x3c0] sm:$0xff]
    %v844 = vld [vmem:[#allocation8 + $0x3c8] sm:$0xff]
    %v845 = vld [vmem:[#allocation8 + $0x3d0] sm:$0xff]
    %v846 = vld [vmem:[#allocation8 + $0x3d8] sm:$0xff]
    %v847 = vld [vmem:[#allocation8 + $0x3e0] sm:$0xff]
    %v848 = vld [vmem:[#allocation8 + $0x3e8] sm:$0xff]
    %v849 = vld [vmem:[#allocation8 + $0x3f0] sm:$0xff]
    %v850 = vld [vmem:[#allocation8 + $0x3f8] sm:$0xff]
    %v851 = vld [vmem:[#allocation8 + $0x400] sm:$0xff]
    %v852 = vld [vmem:[#allocation8 + $0x408] sm:$0xff]
    %v853 = vld [vmem:[#allocation8 + $0x410] sm:$0xff]
    %v854 = vld [vmem:[#allocation8 + $0x418] sm:$0xff]
    %v855 = vld [vmem:[#allocation8 + $0x420] sm:$0xff]
    %v856 = vld [vmem:[#allocation8 + $0x428] sm:$0xff]
    %v857 = vld [vmem:[#allocation8 + $0x430] sm:$0xff]
    %v858 = vld [vmem:[#allocation8 + $0x438] sm:$0xff]
    %v859 = vld [vmem:[#allocation8 + $0x440] sm:$0xff]
    %v860 = vld [vmem:[#allocation8 + $0x448] sm:$0xff]
    %v861 = vld [vmem:[#allocation8 + $0x450] sm:$0xff]
    %v862 = vld [vmem:[#allocation8 + $0x458] sm:$0xff]
    %v863 = vld [vmem:[#allocation8 + $0x460] sm:$0xff]
    %v864 = vld [vmem:[#allocation8 + $0x468] sm:$0xff]
    %v865 = vld [vmem:[#allocation8 + $0x470] sm:$0xff]
    %v866 = vld [vmem:[#allocation8 + $0x478] sm:$0xff]
    %v867 = vld [vmem:[#allocation8 + $0x480] sm:$0xff]
    %v868 = vld [vmem:[#allocation8 + $0x488] sm:$0xff]
    %v869 = vld [vmem:[#allocation8 + $0x490] sm:$0xff]
    %v870 = vld [vmem:[#allocation8 + $0x498] sm:$0xff]
    %v871 = vld [vmem:[#allocation8 + $0x4a0] sm:$0xff]
    %v872 = vld [vmem:[#allocation8 + $0x4a8] sm:$0xff]
    %v873 = vld [vmem:[#allocation8 + $0x4b0] sm:$0xff]
    %v874 = vld [vmem:[#allocation8 + $0x4b8] sm:$0xff]
    %v875 = vld [vmem:[#allocation8 + $0x4c0] sm:$0xff]
    %v876 = vld [vmem:[#allocation8 + $0x4c8] sm:$0xff]
    %v877 = vld [vmem:[#allocation8 + $0x4d0] sm:$0xff]
    %v878 = vld [vmem:[#allocation8 + $0x4d8] sm:$0xff]
    %v879 = vld [vmem:[#allocation8 + $0x4e0] sm:$0xff]
    %v880 = vld [vmem:[#allocation8 + $0x4e8] sm:$0xff]
    %v881 = vld [vmem:[#allocation8 + $0x4f0] sm:$0xff]
    %v882 = vld [vmem:[#allocation8 + $0x4f8] sm:$0xff]
    %v883 = vld [vmem:[#allocation8 + $0x500] sm:$0xff]
    %v884 = vld [vmem:[#allocation8 + $0x508] sm:$0xff]
    %v885 = vld [vmem:[#allocation8 + $0x510] sm:$0xff]
    %v886 = vld [vmem:[#allocation8 + $0x518] sm:$0xff]
    %v887 = vld [vmem:[#allocation8 + $0x520] sm:$0xff]
    %v888 = vld [vmem:[#allocation8 + $0x528] sm:$0xff]
    %v889 = vld [vmem:[#allocation8 + $0x530] sm:$0xff]
    %v890 = vld [vmem:[#allocation8 + $0x538] sm:$0xff]
    %v891 = vld [vmem:[#allocation8 + $0x540] sm:$0xff]
    %v892 = vld [vmem:[#allocation8 + $0x548] sm:$0xff]
    %v893 = vld [vmem:[#allocation8 + $0x550] sm:$0xff]
    %v894 = vld [vmem:[#allocation8 + $0x558] sm:$0xff]
    %v895 = vld [vmem:[#allocation8 + $0x560] sm:$0xff]
    %v896 = vld [vmem:[#allocation8 + $0x568] sm:$0xff]
    %v897 = vld [vmem:[#allocation8 + $0x570] sm:$0xff]
    %v898 = vld [vmem:[#allocation8 + $0x578] sm:$0xff]
    %v899 = vld [vmem:[#allocation8 + $0x580] sm:$0xff]
    %v900 = vld [vmem:[#allocation8 + $0x588] sm:$0xff]
    %v901 = vld [vmem:[#allocation8 + $0x590] sm:$0xff]
    %v902 = vld [vmem:[#allocation8 + $0x598] sm:$0xff]
    %v903 = vld [vmem:[#allocation8 + $0x5a0] sm:$0xff]
    %v904 = vld [vmem:[#allocation8 + $0x5a8] sm:$0xff]
    %v905 = vld [vmem:[#allocation8 + $0x5b0] sm:$0xff]
    %v906 = vld [vmem:[#allocation8 + $0x5b8] sm:$0xff]
    %v907 = vld [vmem:[#allocation8 + $0x5c0] sm:$0xff]
    %v908 = vld [vmem:[#allocation8 + $0x5c8] sm:$0xff]
    %v909 = vld [vmem:[#allocation8 + $0x5d0] sm:$0xff]
    %v910 = vld [vmem:[#allocation8 + $0x5d8] sm:$0xff]
    %v911 = vld [vmem:[#allocation8 + $0x5e0] sm:$0xff]
    %v912 = vld [vmem:[#allocation8 + $0x5e8] sm:$0xff]
    %v913 = vld [vmem:[#allocation8 + $0x5f0] sm:$0xff]
    %v914 = vld [vmem:[#allocation8 + $0x5f8] sm:$0xff]
    %v915 = vld [vmem:[#allocation8 + $0x600] sm:$0xff]
    %v916 = vld [vmem:[#allocation8 + $0x608] sm:$0xff]
    %v917 = vld [vmem:[#allocation8 + $0x610] sm:$0xff]
    %v918 = vld [vmem:[#allocation8 + $0x618] sm:$0xff]
    %v919 = vld [vmem:[#allocation8 + $0x620] sm:$0xff]
    %v920 = vld [vmem:[#allocation8 + $0x628] sm:$0xff]
    %v921 = vld [vmem:[#allocation8 + $0x630] sm:$0xff]
    %v922 = vld [vmem:[#allocation8 + $0x638] sm:$0xff]
    %v923 = vld [vmem:[#allocation8 + $0x640] sm:$0xff]
    %v924 = vld [vmem:[#allocation8 + $0x648] sm:$0xff]
    %v925 = vld [vmem:[#allocation8 + $0x650] sm:$0xff]
    %v926 = vld [vmem:[#allocation8 + $0x658] sm:$0xff]
    %v927 = vld [vmem:[#allocation8 + $0x660] sm:$0xff]
    %v928 = vld [vmem:[#allocation8 + $0x668] sm:$0xff]
    %v929 = vld [vmem:[#allocation8 + $0x670] sm:$0xff]
    %v930 = vld [vmem:[#allocation8 + $0x678] sm:$0xff]
    %v931 = vld [vmem:[#allocation8 + $0x680] sm:$0xff]
    %v932 = vld [vmem:[#allocation8 + $0x688] sm:$0xff]
    %v933 = vld [vmem:[#allocation8 + $0x690] sm:$0xff]
    %v934 = vld [vmem:[#allocation8 + $0x698] sm:$0xff]
    %v935 = vld [vmem:[#allocation8 + $0x6a0] sm:$0xff]
    %v936 = vld [vmem:[#allocation8 + $0x6a8] sm:$0xff]
    %v937 = vld [vmem:[#allocation8 + $0x6b0] sm:$0xff]
    %v938 = vld [vmem:[#allocation8 + $0x6b8] sm:$0xff]
    %v939 = vld [vmem:[#allocation8 + $0x6c0] sm:$0xff]
    %v940 = vld [vmem:[#allocation8 + $0x6c8] sm:$0xff]
    %v941 = vld [vmem:[#allocation8 + $0x6d0] sm:$0xff]
    %v942 = vld [vmem:[#allocation8 + $0x6d8] sm:$0xff]
    %v943 = vld [vmem:[#allocation8 + $0x6e0] sm:$0xff]
    %v944 = vld [vmem:[#allocation8 + $0x6e8] sm:$0xff]
    %v945 = vld [vmem:[#allocation8 + $0x6f0] sm:$0xff]
    %v946 = vld [vmem:[#allocation8 + $0x6f8] sm:$0xff]
    %v947 = vld [vmem:[#allocation8 + $0x700] sm:$0xff]
    %v948 = vld [vmem:[#allocation8 + $0x708] sm:$0xff]
    %v949 = vld [vmem:[#allocation8 + $0x710] sm:$0xff]
    %v950 = vld [vmem:[#allocation8 + $0x718] sm:$0xff]
    %v951 = vld [vmem:[#allocation8 + $0x720] sm:$0xff]
    %v952 = vld [vmem:[#allocation8 + $0x728] sm:$0xff]
    %v953 = vld [vmem:[#allocation8 + $0x730] sm:$0xff]
    %v954 = vld [vmem:[#allocation8 + $0x738] sm:$0xff]
    %v955 = vld [vmem:[#allocation8 + $0x740] sm:$0xff]
    %v956 = vld [vmem:[#allocation8 + $0x748] sm:$0xff]
    %v957 = vld [vmem:[#allocation8 + $0x750] sm:$0xff]
    %v958 = vld [vmem:[#allocation8 + $0x758] sm:$0xff]
    %v959 = vld [vmem:[#allocation8 + $0x760] sm:$0xff]
    %v960 = vld [vmem:[#allocation8 + $0x768] sm:$0xff]
    %v961 = vld [vmem:[#allocation8 + $0x770] sm:$0xff]
    %v962 = vld [vmem:[#allocation8 + $0x778] sm:$0xff]
    %v963 = vld [vmem:[#allocation8 + $0x780] sm:$0xff]
    %v964 = vld [vmem:[#allocation8 + $0x788] sm:$0xff]
    %v965 = vld [vmem:[#allocation8 + $0x790] sm:$0xff]
    %v966 = vld [vmem:[#allocation8 + $0x798] sm:$0xff]
    %v967 = vld [vmem:[#allocation8 + $0x7a0] sm:$0xff]
    %v968 = vld [vmem:[#allocation8 + $0x7a8] sm:$0xff]
    %v969 = vld [vmem:[#allocation8 + $0x7b0] sm:$0xff]
    %v970 = vld [vmem:[#allocation8 + $0x7b8] sm:$0xff]
    %v971 = vld [vmem:[#allocation8 + $0x7c0] sm:$0xff]
    %v972 = vld [vmem:[#allocation8 + $0x7c8] sm:$0xff]
    %v973 = vld [vmem:[#allocation8 + $0x7d0] sm:$0xff]
    %v974 = vld [vmem:[#allocation8 + $0x7d8] sm:$0xff]
    %v975 = vld [vmem:[#allocation8 + $0x7e0] sm:$0xff]
    %v976 = vld [vmem:[#allocation8 + $0x7e8] sm:$0xff]
    %v977 = vld [vmem:[#allocation8 + $0x7f0] sm:$0xff]
    %v978 = vld [vmem:[#allocation8 + $0x7f8] sm:$0xff]
    %v979 = vld [vmem:[#allocation8 + $0x800] sm:$0xff]
    %v980 = vld [vmem:[#allocation8 + $0x808] sm:$0xff]
    %v981 = vld [vmem:[#allocation8 + $0x810] sm:$0xff]
    %v982 = vld [vmem:[#allocation8 + $0x818] sm:$0xff]
    %v983 = vld [vmem:[#allocation8 + $0x820] sm:$0xff]
    %v984 = vld [vmem:[#allocation8 + $0x828] sm:$0xff]
    %v985 = vld [vmem:[#allocation8 + $0x830] sm:$0xff]
    %v986 = vld [vmem:[#allocation8 + $0x838] sm:$0xff]
    %v987 = vld [vmem:[#allocation8 + $0x840] sm:$0xff]
    %v988 = vld [vmem:[#allocation8 + $0x848] sm:$0xff]
    %v989 = vld [vmem:[#allocation8 + $0x850] sm:$0xff]
    %v990 = vld [vmem:[#allocation8 + $0x858] sm:$0xff]
    %v991 = vld [vmem:[#allocation8 + $0x860] sm:$0xff]
    %v992 = vld [vmem:[#allocation8 + $0x868] sm:$0xff]
    %v993 = vld [vmem:[#allocation8 + $0x870] sm:$0xff]
    %v994 = vld [vmem:[#allocation8 + $0x878] sm:$0xff]
    %v995 = vld [vmem:[#allocation8 + $0x880] sm:$0xff]
    %v996 = vld [vmem:[#allocation8 + $0x888] sm:$0xff]
    %v997 = vld [vmem:[#allocation8 + $0x890] sm:$0xff]
    %v998 = vld [vmem:[#allocation8 + $0x898] sm:$0xff]
    %v999 = vld [vmem:[#allocation8 + $0x8a0] sm:$0xff]
    %v1000 = vld [vmem:[#allocation8 + $0x8a8] sm:$0xff]
    %v1001 = vld [vmem:[#allocation8 + $0x8b0] sm:$0xff]
    %v1002 = vld [vmem:[#allocation8 + $0x8b8] sm:$0xff]
    %v1003 = vld [vmem:[#allocation8 + $0x8c0] sm:$0xff]
    %v1004 = vld [vmem:[#allocation8 + $0x8c8] sm:$0xff]
    %v1005 = vld [vmem:[#allocation8 + $0x8d0] sm:$0xff]
    %v1006 = vld [vmem:[#allocation8 + $0x8d8] sm:$0xff]
    %v1007 = vld [vmem:[#allocation8 + $0x8e0] sm:$0xff]
    %v1008 = vld [vmem:[#allocation8 + $0x8e8] sm:$0xff]
    %v1009 = vld [vmem:[#allocation8 + $0x8f0] sm:$0xff]
    %v1010 = vld [vmem:[#allocation8 + $0x8f8] sm:$0xff]
    %v1011 = vld [vmem:[#allocation8 + $0x900] sm:$0xff]
    %v1012 = vld [vmem:[#allocation8 + $0x908] sm:$0xff]
    %v1013 = vld [vmem:[#allocation8 + $0x910] sm:$0xff]
    %v1014 = vld [vmem:[#allocation8 + $0x918] sm:$0xff]
    %v1015 = vld [vmem:[#allocation8 + $0x920] sm:$0xff]
    %v1016 = vld [vmem:[#allocation8 + $0x928] sm:$0xff]
    %v1017 = vld [vmem:[#allocation8 + $0x930] sm:$0xff]
    %v1018 = vld [vmem:[#allocation8 + $0x938] sm:$0xff]
    %v1019 = vld [vmem:[#allocation8 + $0x940] sm:$0xff]
    %v1020 = vld [vmem:[#allocation8 + $0x948] sm:$0xff]
    %v1021 = vld [vmem:[#allocation8 + $0x950] sm:$0xff]
    %v1022 = vld [vmem:[#allocation8 + $0x958] sm:$0xff]
    %v1023 = vld [vmem:[#allocation8 + $0x960] sm:$0xff]
    %v1024 = vld [vmem:[#allocation8 + $0x968] sm:$0xff]
    %v1025 = vld [vmem:[#allocation8 + $0x970] sm:$0xff]
    %v1026 = vld [vmem:[#allocation8 + $0x978] sm:$0xff]
    %v1027 = vld [vmem:[#allocation8 + $0x980] sm:$0xff]
    %v1028 = vld [vmem:[#allocation8 + $0x988] sm:$0xff]
    %v1029 = vld [vmem:[#allocation8 + $0x990] sm:$0xff]
    %v1030 = vld [vmem:[#allocation8 + $0x998] sm:$0xff]
    %v1031 = vld [vmem:[#allocation8 + $0x9a0] sm:$0xff]
    %v1032 = vld [vmem:[#allocation8 + $0x9a8] sm:$0xff]
    %v1033 = vld [vmem:[#allocation8 + $0x9b0] sm:$0xff]
    %v1034 = vld [vmem:[#allocation8 + $0x9b8] sm:$0xff]
    %v1035 = vld [vmem:[#allocation8 + $0x9c0] sm:$0xff]
    %v1036 = vld [vmem:[#allocation8 + $0x9c8] sm:$0xff]
    %v1037 = vld [vmem:[#allocation8 + $0x9d0] sm:$0xff]
    %v1038 = vld [vmem:[#allocation8 + $0x9d8] sm:$0xff]
    %v1039 = vld [vmem:[#allocation8 + $0x9e0] sm:$0xff]
    %v1040 = vld [vmem:[#allocation8 + $0x9e8] sm:$0xff]
    %v1041 = vld [vmem:[#allocation8 + $0x9f0] sm:$0xff]
    %v1042 = vld [vmem:[#allocation8 + $0x9f8] sm:$0xff]
    %v1043 = vld [vmem:[#allocation8 + $0xa00] sm:$0xff]
    %v1044 = vld [vmem:[#allocation8 + $0xa08] sm:$0xff]
    %v1045 = vld [vmem:[#allocation8 + $0xa10] sm:$0xff]
    %v1046 = vld [vmem:[#allocation8 + $0xa18] sm:$0xff]
    %v1047 = vld [vmem:[#allocation8 + $0xa20] sm:$0xff]
    %v1048 = vld [vmem:[#allocation8 + $0xa28] sm:$0xff]
    %v1049 = vld [vmem:[#allocation8 + $0xa30] sm:$0xff]
    %v1050 = vld [vmem:[#allocation8 + $0xa38] sm:$0xff]
    %v1051 = vld [vmem:[#allocation8 + $0xa40] sm:$0xff]
    %v1052 = vld [vmem:[#allocation8 + $0xa48] sm:$0xff]
    %v1053 = vld [vmem:[#allocation8 + $0xa50] sm:$0xff]
    %v1054 = vld [vmem:[#allocation8 + $0xa58] sm:$0xff]
    %v1055 = vld [vmem:[#allocation8 + $0xa60] sm:$0xff]
    %v1056 = vld [vmem:[#allocation8 + $0xa68] sm:$0xff]
    %v1057 = vld [vmem:[#allocation8 + $0xa70] sm:$0xff]
    %v1058 = vld [vmem:[#allocation8 + $0xa78] sm:$0xff]
    %v1059 = vld [vmem:[#allocation8 + $0xa80] sm:$0xff]
    %v1060 = vld [vmem:[#allocation8 + $0xa88] sm:$0xff]
    %v1061 = vld [vmem:[#allocation8 + $0xa90] sm:$0xff]
    %v1062 = vld [vmem:[#allocation8 + $0xa98] sm:$0xff]
    %v1063 = vld [vmem:[#allocation8 + $0xaa0] sm:$0xff]
    %v1064 = vld [vmem:[#allocation8 + $0xaa8] sm:$0xff]
    %v1065 = vld [vmem:[#allocation8 + $0xab0] sm:$0xff]
    %v1066 = vld [vmem:[#allocation8 + $0xab8] sm:$0xff]
    %v1067 = vld [vmem:[#allocation8 + $0xac0] sm:$0xff]
    %v1068 = vld [vmem:[#allocation8 + $0xac8] sm:$0xff]
    %v1069 = vld [vmem:[#allocation8 + $0xad0] sm:$0xff]
    %v1070 = vld [vmem:[#allocation8 + $0xad8] sm:$0xff]
    %v1071 = vld [vmem:[#allocation8 + $0xae0] sm:$0xff]
    %v1072 = vld [vmem:[#allocation8 + $0xae8] sm:$0xff]
    %v1073 = vld [vmem:[#allocation8 + $0xaf0] sm:$0xff]
    %v1074 = vld [vmem:[#allocation8 + $0xaf8] sm:$0xff]
    %v1075 = vld [vmem:[#allocation8 + $0xb00] sm:$0xff]
    %v1076 = vld [vmem:[#allocation8 + $0xb08] sm:$0xff]
    %v1077 = vld [vmem:[#allocation8 + $0xb10] sm:$0xff]
    %v1078 = vld [vmem:[#allocation8 + $0xb18] sm:$0xff]
    %v1079 = vld [vmem:[#allocation8 + $0xb20] sm:$0xff]
    %v1080 = vld [vmem:[#allocation8 + $0xb28] sm:$0xff]
    %v1081 = vld [vmem:[#allocation8 + $0xb30] sm:$0xff]
    %v1082 = vld [vmem:[#allocation8 + $0xb38] sm:$0xff]
    %v1083 = vld [vmem:[#allocation8 + $0xb40] sm:$0xff]
    %v1084 = vld [vmem:[#allocation8 + $0xb48] sm:$0xff]
    %v1085 = vld [vmem:[#allocation8 + $0xb50] sm:$0xff]
    %v1086 = vld [vmem:[#allocation8 + $0xb58] sm:$0xff]
    %v1087 = vld [vmem:[#allocation8 + $0xb60] sm:$0xff]
    %v1088 = vld [vmem:[#allocation8 + $0xb68] sm:$0xff]
    %v1089 = vld [vmem:[#allocation8 + $0xb70] sm:$0xff]
    %v1090 = vld [vmem:[#allocation8 + $0xb78] sm:$0xff]
    %v1091 = vld [vmem:[#allocation8 + $0xb80] sm:$0xff]
    %v1092 = vld [vmem:[#allocation8 + $0xb88] sm:$0xff]
    %v1093 = vld [vmem:[#allocation8 + $0xb90] sm:$0xff]
    %v1094 = vld [vmem:[#allocation8 + $0xb98] sm:$0xff]
    %v1095 = vld [vmem:[#allocation8 + $0xba0] sm:$0xff]
    %v1096 = vld [vmem:[#allocation8 + $0xba8] sm:$0xff]
    %v1097 = vld [vmem:[#allocation8 + $0xbb0] sm:$0xff]
    %v1098 = vld [vmem:[#allocation8 + $0xbb8] sm:$0xff]
    %v1099 = vld [vmem:[#allocation8 + $0xbc0] sm:$0xff]
    %v1100 = vld [vmem:[#allocation8 + $0xbc8] sm:$0xff]
    %v1101 = vld [vmem:[#allocation8 + $0xbd0] sm:$0xff]
    %v1102 = vld [vmem:[#allocation8 + $0xbd8] sm:$0xff]
    %v1103 = vld [vmem:[#allocation8 + $0xbe0] sm:$0xff]
    %v1104 = vld [vmem:[#allocation8 + $0xbe8] sm:$0xff]
    %v1105 = vld [vmem:[#allocation8 + $0xbf0] sm:$0xff]
    %v1106 = vld [vmem:[#allocation8 + $0xbf8] sm:$0xff]
    %v1107 = vld [vmem:[#allocation8 + $0xc00] sm:$0xff]
    %v1108 = vld [vmem:[#allocation8 + $0xc08] sm:$0xff]
    %v1109 = vld [vmem:[#allocation8 + $0xc10] sm:$0xff]
    %v1110 = vld [vmem:[#allocation8 + $0xc18] sm:$0xff]
    %v1111 = vld [vmem:[#allocation8 + $0xc20] sm:$0xff]
    %v1112 = vld [vmem:[#allocation8 + $0xc28] sm:$0xff]
    %v1113 = vld [vmem:[#allocation8 + $0xc30] sm:$0xff]
    %v1114 = vld [vmem:[#allocation8 + $0xc38] sm:$0xff]
    %v1115 = vld [vmem:[#allocation8 + $0xc40] sm:$0xff]
    %v1116 = vld [vmem:[#allocation8 + $0xc48] sm:$0xff]
    %v1117 = vld [vmem:[#allocation8 + $0xc50] sm:$0xff]
    %v1118 = vld [vmem:[#allocation8 + $0xc58] sm:$0xff]
    %v1119 = vld [vmem:[#allocation8 + $0xc60] sm:$0xff]
    %v1120 = vld [vmem:[#allocation8 + $0xc68] sm:$0xff]
    %v1121 = vld [vmem:[#allocation8 + $0xc70] sm:$0xff]
    %v1122 = vld [vmem:[#allocation8 + $0xc78] sm:$0xff]
    %v1123 = vld [vmem:[#allocation8 + $0xc80] sm:$0xff]
    %v1124 = vld [vmem:[#allocation8 + $0xc88] sm:$0xff]
    %v1125 = vld [vmem:[#allocation8 + $0xc90] sm:$0xff]
    %v1126 = vld [vmem:[#allocation8 + $0xc98] sm:$0xff]
    %v1127 = vld [vmem:[#allocation8 + $0xca0] sm:$0xff]
    %v1128 = vld [vmem:[#allocation8 + $0xca8] sm:$0xff]
    %v1129 = vld [vmem:[#allocation8 + $0xcb0] sm:$0xff]
    %v1130 = vld [vmem:[#allocation8 + $0xcb8] sm:$0xff]
    %v1131 = vld [vmem:[#allocation8 + $0xcc0] sm:$0xff]
    %v1132 = vld [vmem:[#allocation8 + $0xcc8] sm:$0xff]
    %v1133 = vld [vmem:[#allocation8 + $0xcd0] sm:$0xff]
    %v1134 = vld [vmem:[#allocation8 + $0xcd8] sm:$0xff]
    %v1135 = vld [vmem:[#allocation8 + $0xce0] sm:$0xff]
    %v1136 = vld [vmem:[#allocation8 + $0xce8] sm:$0xff]
    %v1137 = vld [vmem:[#allocation8 + $0xcf0] sm:$0xff]
    %v1138 = vld [vmem:[#allocation8 + $0xcf8] sm:$0xff]
    %v1139 = vld [vmem:[#allocation8 + $0xd00] sm:$0xff]
    %v1140 = vld [vmem:[#allocation8 + $0xd08] sm:$0xff]
    %v1141 = vld [vmem:[#allocation8 + $0xd10] sm:$0xff]
    %v1142 = vld [vmem:[#allocation8 + $0xd18] sm:$0xff]
    %v1143 = vld [vmem:[#allocation8 + $0xd20] sm:$0xff]
    %v1144 = vld [vmem:[#allocation8 + $0xd28] sm:$0xff]
    %v1145 = vld [vmem:[#allocation8 + $0xd30] sm:$0xff]
    %v1146 = vld [vmem:[#allocation8 + $0xd38] sm:$0xff]
    %v1147 = vld [vmem:[#allocation8 + $0xd40] sm:$0xff]
    %v1148 = vld [vmem:[#allocation8 + $0xd48] sm:$0xff]
    %v1149 = vld [vmem:[#allocation8 + $0xd50] sm:$0xff]
    %v1150 = vld [vmem:[#allocation8 + $0xd58] sm:$0xff]
    %v1151 = vld [vmem:[#allocation8 + $0xd60] sm:$0xff]
    %v1152 = vld [vmem:[#allocation8 + $0xd68] sm:$0xff]
    %v1153 = vld [vmem:[#allocation8 + $0xd70] sm:$0xff]
    %v1154 = vld [vmem:[#allocation8 + $0xd78] sm:$0xff]
    %v1155 = vld [vmem:[#allocation8 + $0xd80] sm:$0xff]
    %v1156 = vld [vmem:[#allocation8 + $0xd88] sm:$0xff]
    %v1157 = vld [vmem:[#allocation8 + $0xd90] sm:$0xff]
    %v1158 = vld [vmem:[#allocation8 + $0xd98] sm:$0xff]
    %v1159 = vld [vmem:[#allocation8 + $0xda0] sm:$0xff]
    %v1160 = vld [vmem:[#allocation8 + $0xda8] sm:$0xff]
    %v1161 = vld [vmem:[#allocation8 + $0xdb0] sm:$0xff]
    %v1162 = vld [vmem:[#allocation8 + $0xdb8] sm:$0xff]
    %v1163 = vld [vmem:[#allocation8 + $0xdc0] sm:$0xff]
    %v1164 = vld [vmem:[#allocation8 + $0xdc8] sm:$0xff]
    %v1165 = vld [vmem:[#allocation8 + $0xdd0] sm:$0xff]
    %v1166 = vld [vmem:[#allocation8 + $0xdd8] sm:$0xff]
    %v1167 = vld [vmem:[#allocation8 + $0xde0] sm:$0xff]
    %v1168 = vld [vmem:[#allocation8 + $0xde8] sm:$0xff]
    %v1169 = vld [vmem:[#allocation8 + $0xdf0] sm:$0xff]
    %v1170 = vld [vmem:[#allocation8 + $0xdf8] sm:$0xff]
    %v1171 = vld [vmem:[#allocation8 + $0xe00] sm:$0xff]
    %v1172 = vld [vmem:[#allocation8 + $0xe08] sm:$0xff]
    %v1173 = vld [vmem:[#allocation8 + $0xe10] sm:$0xff]
    %v1174 = vld [vmem:[#allocation8 + $0xe18] sm:$0xff]
    %v1175 = vld [vmem:[#allocation8 + $0xe20] sm:$0xff]
    %v1176 = vld [vmem:[#allocation8 + $0xe28] sm:$0xff]
    %v1177 = vld [vmem:[#allocation8 + $0xe30] sm:$0xff]
    %v1178 = vld [vmem:[#allocation8 + $0xe38] sm:$0xff]
    %v1179 = vld [vmem:[#allocation8 + $0xe40] sm:$0xff]
    %v1180 = vld [vmem:[#allocation8 + $0xe48] sm:$0xff]
    %v1181 = vld [vmem:[#allocation8 + $0xe50] sm:$0xff]
    %v1182 = vld [vmem:[#allocation8 + $0xe58] sm:$0xff]
    %v1183 = vld [vmem:[#allocation8 + $0xe60] sm:$0xff]
    %v1184 = vld [vmem:[#allocation8 + $0xe68] sm:$0xff]
    %v1185 = vld [vmem:[#allocation8 + $0xe70] sm:$0xff]
    %v1186 = vld [vmem:[#allocation8 + $0xe78] sm:$0xff]
    %v1187 = vld [vmem:[#allocation8 + $0xe80] sm:$0xff]
    %v1188 = vld [vmem:[#allocation8 + $0xe88] sm:$0xff]
    %v1189 = vld [vmem:[#allocation8 + $0xe90] sm:$0xff]
    %v1190 = vld [vmem:[#allocation8 + $0xe98] sm:$0xff]
    %v1191 = vld [vmem:[#allocation8 + $0xea0] sm:$0xff]
    %v1192 = vld [vmem:[#allocation8 + $0xea8] sm:$0xff]
    %v1193 = vld [vmem:[#allocation8 + $0xeb0] sm:$0xff]
    %v1194 = vld [vmem:[#allocation8 + $0xeb8] sm:$0xff]
    %v1195 = vld [vmem:[#allocation8 + $0xec0] sm:$0xff]
    %v1196 = vld [vmem:[#allocation8 + $0xec8] sm:$0xff]
    %v1197 = vld [vmem:[#allocation8 + $0xed0] sm:$0xff]
    %v1198 = vld [vmem:[#allocation8 + $0xed8] sm:$0xff]
    %v1199 = vld [vmem:[#allocation8 + $0xee0] sm:$0xff]
    %v1200 = vld [vmem:[#allocation8 + $0xee8] sm:$0xff]
    %v1201 = vld [vmem:[#allocation8 + $0xef0] sm:$0xff]
    %v1202 = vld [vmem:[#allocation8 + $0xef8] sm:$0xff]
    %v1203 = vld [vmem:[#allocation8 + $0xf00] sm:$0xff]
    %v1204 = vld [vmem:[#allocation8 + $0xf08] sm:$0xff]
    %v1205 = vld [vmem:[#allocation8 + $0xf10] sm:$0xff]
    %v1206 = vld [vmem:[#allocation8 + $0xf18] sm:$0xff]
    %v1207 = vld [vmem:[#allocation8 + $0xf20] sm:$0xff]
    %v1208 = vld [vmem:[#allocation8 + $0xf28] sm:$0xff]
    %v1209 = vld [vmem:[#allocation8 + $0xf30] sm:$0xff]
    %v1210 = vld [vmem:[#allocation8 + $0xf38] sm:$0xff]
    %v1211 = vld [vmem:[#allocation8 + $0xf40] sm:$0xff]
    %v1212 = vld [vmem:[#allocation8 + $0xf48] sm:$0xff]
    %v1213 = vld [vmem:[#allocation8 + $0xf50] sm:$0xff]
    %v1214 = vld [vmem:[#allocation8 + $0xf58] sm:$0xff]
    %v1215 = vld [vmem:[#allocation8 + $0xf60] sm:$0xff]
    %v1216 = vld [vmem:[#allocation8 + $0xf68] sm:$0xff]
    %v1217 = vld [vmem:[#allocation8 + $0xf70] sm:$0xff]
    %v1218 = vld [vmem:[#allocation8 + $0xf78] sm:$0xff]
    %v1219 = vld [vmem:[#allocation8 + $0xf80] sm:$0xff]
    %v1220 = vld [vmem:[#allocation8 + $0xf88] sm:$0xff]
    %v1221 = vld [vmem:[#allocation8 + $0xf90] sm:$0xff]
    %v1222 = vld [vmem:[#allocation8 + $0xf98] sm:$0xff]
    %v1223 = vld [vmem:[#allocation8 + $0xfa0] sm:$0xff]
    %v1224 = vld [vmem:[#allocation8 + $0xfa8] sm:$0xff]
    %v1225 = vld [vmem:[#allocation8 + $0xfb0] sm:$0xff]
    %v1226 = vld [vmem:[#allocation8 + $0xfb8] sm:$0xff]
    %v1227 = vld [vmem:[#allocation8 + $0xfc0] sm:$0xff]
    %v1228 = vld [vmem:[#allocation8 + $0xfc8] sm:$0xff]
    %v1229 = vld [vmem:[#allocation8 + $0xfd0] sm:$0xff]
    %v1230 = vld [vmem:[#allocation8 + $0xfd8] sm:$0xff]
    %v1231 = vld [vmem:[#allocation8 + $0xfe0] sm:$0xff]
    %v1232 = vld [vmem:[#allocation8 + $0xfe8] sm:$0xff]
    %v1233 = vld [vmem:[#allocation8 + $0xff0] sm:$0xff]
    %v1234 = vld [vmem:[#allocation8 + $0xff8] sm:$0xff]
    %v1235 = vld [vmem:[#allocation10] sm:$0xff]
    %v1237 = vlaneseq
    %v1238 = vshrl.u32 %v1237, 7
    %v1239 = vsub.s32 0, %v1238
    %v1240 = vrot.slane %v1235, %v1239
    %v1241 = vlaneseq
    %v1242 = vshrl.u32 %v1241, 7
    %v1243 = vsub.s32 1, %v1242
    %v1244 = vrot.slane %v1235, %v1243
    %v1245 = vlaneseq
    %v1246 = vshrl.u32 %v1245, 7
    %v1247 = vsub.s32 2, %v1246
    %v1248 = vrot.slane %v1235, %v1247
    %v1249 = vlaneseq
    %v1250 = vshrl.u32 %v1249, 7
    %v1251 = vsub.s32 3, %v1250
    %v1252 = vrot.slane %v1235, %v1251
    %v1253 = vlaneseq
    %v1254 = vshrl.u32 %v1253, 7
    %v1255 = vsub.s32 4, %v1254
    %v1256 = vrot.slane %v1235, %v1255
    %v1257 = vlaneseq
    %v1258 = vshrl.u32 %v1257, 7
    %v1259 = vsub.s32 5, %v1258
    %v1260 = vrot.slane %v1235, %v1259
    %v1261 = vlaneseq
    %v1262 = vshrl.u32 %v1261, 7
    %v1263 = vsub.s32 6, %v1262
    %v1264 = vrot.slane %v1235, %v1263
    %v1265 = vlaneseq
    %v1266 = vshrl.u32 %v1265, 7
    %v1267 = vsub.s32 7, %v1266
    %v1268 = vrot.slane %v1235, %v1267
    %v1789 = vunpack.c.l.b16 %v723
    %v1790 = vunpack.c.h.b16 %v723
    %v1791 = vunpack.c.l.b16 %v724
    %v1792 = vunpack.c.h.b16 %v724
    %v1793 = vunpack.c.l.b16 %v725
    %v1794 = vunpack.c.h.b16 %v725
    %v1795 = vunpack.c.l.b16 %v726
    %v1796 = vunpack.c.h.b16 %v726
    %v1797 = vunpack.c.l.b16 %v727
    %v1798 = vunpack.c.h.b16 %v727
    %v1799 = vunpack.c.l.b16 %v728
    %v1800 = vunpack.c.h.b16 %v728
    %v1801 = vunpack.c.l.b16 %v729
    %v1802 = vunpack.c.h.b16 %v729
    %v1803 = vunpack.c.l.b16 %v730
    %v1804 = vunpack.c.h.b16 %v730
    %v1805 = vunpack.c.l.b16 %v731
    %v1806 = vunpack.c.h.b16 %v731
    %v1807 = vunpack.c.l.b16 %v732
    %v1808 = vunpack.c.h.b16 %v732
    %v1809 = vunpack.c.l.b16 %v733
    %v1810 = vunpack.c.h.b16 %v733
    %v1811 = vunpack.c.l.b16 %v734
    %v1812 = vunpack.c.h.b16 %v734
    %v1813 = vunpack.c.l.b16 %v735
    %v1814 = vunpack.c.h.b16 %v735
    %v1815 = vunpack.c.l.b16 %v736
    %v1816 = vunpack.c.h.b16 %v736
    %v1817 = vunpack.c.l.b16 %v737
    %v1818 = vunpack.c.h.b16 %v737
    %v1819 = vunpack.c.l.b16 %v738
    %v1820 = vunpack.c.h.b16 %v738
    %v1821 = vunpack.c.l.b16 %v739
    %v1822 = vunpack.c.h.b16 %v739
    %v1823 = vunpack.c.l.b16 %v740
    %v1824 = vunpack.c.h.b16 %v740
    %v1825 = vunpack.c.l.b16 %v741
    %v1826 = vunpack.c.h.b16 %v741
    %v1827 = vunpack.c.l.b16 %v742
    %v1828 = vunpack.c.h.b16 %v742
    %v1829 = vunpack.c.l.b16 %v743
    %v1830 = vunpack.c.h.b16 %v743
    %v1831 = vunpack.c.l.b16 %v744
    %v1832 = vunpack.c.h.b16 %v744
    %v1833 = vunpack.c.l.b16 %v745
    %v1834 = vunpack.c.h.b16 %v745
    %v1835 = vunpack.c.l.b16 %v746
    %v1836 = vunpack.c.h.b16 %v746
    %v1837 = vunpack.c.l.b16 %v747
    %v1838 = vunpack.c.h.b16 %v747
    %v1839 = vunpack.c.l.b16 %v748
    %v1840 = vunpack.c.h.b16 %v748
    %v1841 = vunpack.c.l.b16 %v749
    %v1842 = vunpack.c.h.b16 %v749
    %v1843 = vunpack.c.l.b16 %v750
    %v1844 = vunpack.c.h.b16 %v750
    %v1845 = vunpack.c.l.b16 %v751
    %v1846 = vunpack.c.h.b16 %v751
    %v1847 = vunpack.c.l.b16 %v752
    %v1848 = vunpack.c.h.b16 %v752
    %v1849 = vunpack.c.l.b16 %v753
    %v1850 = vunpack.c.h.b16 %v753
    %v1851 = vunpack.c.l.b16 %v754
    %v1852 = vunpack.c.h.b16 %v754
    %v1853 = vunpack.c.l.b16 %v755
    %v1854 = vunpack.c.h.b16 %v755
    %v1855 = vunpack.c.l.b16 %v756
    %v1856 = vunpack.c.h.b16 %v756
    %v1857 = vunpack.c.l.b16 %v757
    %v1858 = vunpack.c.h.b16 %v757
    %v1859 = vunpack.c.l.b16 %v758
    %v1860 = vunpack.c.h.b16 %v758
    %v1861 = vunpack.c.l.b16 %v759
    %v1862 = vunpack.c.h.b16 %v759
    %v1863 = vunpack.c.l.b16 %v760
    %v1864 = vunpack.c.h.b16 %v760
    %v1865 = vunpack.c.l.b16 %v761
    %v1866 = vunpack.c.h.b16 %v761
    %v1867 = vunpack.c.l.b16 %v762
    %v1868 = vunpack.c.h.b16 %v762
    %v1869 = vunpack.c.l.b16 %v763
    %v1870 = vunpack.c.h.b16 %v763
    %v1871 = vunpack.c.l.b16 %v764
    %v1872 = vunpack.c.h.b16 %v764
    %v1873 = vunpack.c.l.b16 %v765
    %v1874 = vunpack.c.h.b16 %v765
    %v1875 = vunpack.c.l.b16 %v766
    %v1876 = vunpack.c.h.b16 %v766
    %v1877 = vunpack.c.l.b16 %v767
    %v1878 = vunpack.c.h.b16 %v767
    %v1879 = vunpack.c.l.b16 %v768
    %v1880 = vunpack.c.h.b16 %v768
    %v1881 = vunpack.c.l.b16 %v769
    %v1882 = vunpack.c.h.b16 %v769
    %v1883 = vunpack.c.l.b16 %v770
    %v1884 = vunpack.c.h.b16 %v770
    %v1885 = vunpack.c.l.b16 %v771
    %v1886 = vunpack.c.h.b16 %v771
    %v1887 = vunpack.c.l.b16 %v772
    %v1888 = vunpack.c.h.b16 %v772
    %v1889 = vunpack.c.l.b16 %v773
    %v1890 = vunpack.c.h.b16 %v773
    %v1891 = vunpack.c.l.b16 %v774
    %v1892 = vunpack.c.h.b16 %v774
    %v1893 = vunpack.c.l.b16 %v775
    %v1894 = vunpack.c.h.b16 %v775
    %v1895 = vunpack.c.l.b16 %v776
    %v1896 = vunpack.c.h.b16 %v776
    %v1897 = vunpack.c.l.b16 %v777
    %v1898 = vunpack.c.h.b16 %v777
    %v1899 = vunpack.c.l.b16 %v778
    %v1900 = vunpack.c.h.b16 %v778
    %v1901 = vunpack.c.l.b16 %v779
    %v1902 = vunpack.c.h.b16 %v779
    %v1903 = vunpack.c.l.b16 %v780
    %v1904 = vunpack.c.h.b16 %v780
    %v1905 = vunpack.c.l.b16 %v781
    %v1906 = vunpack.c.h.b16 %v781
    %v1907 = vunpack.c.l.b16 %v782
    %v1908 = vunpack.c.h.b16 %v782
    %v1909 = vunpack.c.l.b16 %v783
    %v1910 = vunpack.c.h.b16 %v783
    %v1911 = vunpack.c.l.b16 %v784
    %v1912 = vunpack.c.h.b16 %v784
    %v1913 = vunpack.c.l.b16 %v785
    %v1914 = vunpack.c.h.b16 %v785
    %v1915 = vunpack.c.l.b16 %v786
    %v1916 = vunpack.c.h.b16 %v786
    %v1917 = vunpack.c.l.b16 %v787
    %v1918 = vunpack.c.h.b16 %v787
    %v1919 = vunpack.c.l.b16 %v788
    %v1920 = vunpack.c.h.b16 %v788
    %v1921 = vunpack.c.l.b16 %v789
    %v1922 = vunpack.c.h.b16 %v789
    %v1923 = vunpack.c.l.b16 %v790
    %v1924 = vunpack.c.h.b16 %v790
    %v1925 = vunpack.c.l.b16 %v791
    %v1926 = vunpack.c.h.b16 %v791
    %v1927 = vunpack.c.l.b16 %v792
    %v1928 = vunpack.c.h.b16 %v792
    %v1929 = vunpack.c.l.b16 %v793
    %v1930 = vunpack.c.h.b16 %v793
    %v1931 = vunpack.c.l.b16 %v794
    %v1932 = vunpack.c.h.b16 %v794
    %v1933 = vunpack.c.l.b16 %v795
    %v1934 = vunpack.c.h.b16 %v795
    %v1935 = vunpack.c.l.b16 %v796
    %v1936 = vunpack.c.h.b16 %v796
    %v1937 = vunpack.c.l.b16 %v797
    %v1938 = vunpack.c.h.b16 %v797
    %v1939 = vunpack.c.l.b16 %v798
    %v1940 = vunpack.c.h.b16 %v798
    %v1941 = vunpack.c.l.b16 %v799
    %v1942 = vunpack.c.h.b16 %v799
    %v1943 = vunpack.c.l.b16 %v800
    %v1944 = vunpack.c.h.b16 %v800
    %v1945 = vunpack.c.l.b16 %v801
    %v1946 = vunpack.c.h.b16 %v801
    %v1947 = vunpack.c.l.b16 %v802
    %v1948 = vunpack.c.h.b16 %v802
    %v1949 = vunpack.c.l.b16 %v803
    %v1950 = vunpack.c.h.b16 %v803
    %v1951 = vunpack.c.l.b16 %v804
    %v1952 = vunpack.c.h.b16 %v804
    %v1953 = vunpack.c.l.b16 %v805
    %v1954 = vunpack.c.h.b16 %v805
    %v1955 = vunpack.c.l.b16 %v806
    %v1956 = vunpack.c.h.b16 %v806
    %v1957 = vunpack.c.l.b16 %v807
    %v1958 = vunpack.c.h.b16 %v807
    %v1959 = vunpack.c.l.b16 %v808
    %v1960 = vunpack.c.h.b16 %v808
    %v1961 = vunpack.c.l.b16 %v809
    %v1962 = vunpack.c.h.b16 %v809
    %v1963 = vunpack.c.l.b16 %v810
    %v1964 = vunpack.c.h.b16 %v810
    %v1965 = vunpack.c.l.b16 %v811
    %v1966 = vunpack.c.h.b16 %v811
    %v1967 = vunpack.c.l.b16 %v812
    %v1968 = vunpack.c.h.b16 %v812
    %v1969 = vunpack.c.l.b16 %v813
    %v1970 = vunpack.c.h.b16 %v813
    %v1971 = vunpack.c.l.b16 %v814
    %v1972 = vunpack.c.h.b16 %v814
    %v1973 = vunpack.c.l.b16 %v815
    %v1974 = vunpack.c.h.b16 %v815
    %v1975 = vunpack.c.l.b16 %v816
    %v1976 = vunpack.c.h.b16 %v816
    %v1977 = vunpack.c.l.b16 %v817
    %v1978 = vunpack.c.h.b16 %v817
    %v1979 = vunpack.c.l.b16 %v818
    %v1980 = vunpack.c.h.b16 %v818
    %v1981 = vunpack.c.l.b16 %v819
    %v1982 = vunpack.c.h.b16 %v819
    %v1983 = vunpack.c.l.b16 %v820
    %v1984 = vunpack.c.h.b16 %v820
    %v1985 = vunpack.c.l.b16 %v821
    %v1986 = vunpack.c.h.b16 %v821
    %v1987 = vunpack.c.l.b16 %v822
    %v1988 = vunpack.c.h.b16 %v822
    %v1989 = vunpack.c.l.b16 %v823
    %v1990 = vunpack.c.h.b16 %v823
    %v1991 = vunpack.c.l.b16 %v824
    %v1992 = vunpack.c.h.b16 %v824
    %v1993 = vunpack.c.l.b16 %v825
    %v1994 = vunpack.c.h.b16 %v825
    %v1995 = vunpack.c.l.b16 %v826
    %v1996 = vunpack.c.h.b16 %v826
    %v1997 = vunpack.c.l.b16 %v827
    %v1998 = vunpack.c.h.b16 %v827
    %v1999 = vunpack.c.l.b16 %v828
    %v2000 = vunpack.c.h.b16 %v828
    %v2001 = vunpack.c.l.b16 %v829
    %v2002 = vunpack.c.h.b16 %v829
    %v2003 = vunpack.c.l.b16 %v830
    %v2004 = vunpack.c.h.b16 %v830
    %v2005 = vunpack.c.l.b16 %v831
    %v2006 = vunpack.c.h.b16 %v831
    %v2007 = vunpack.c.l.b16 %v832
    %v2008 = vunpack.c.h.b16 %v832
    %v2009 = vunpack.c.l.b16 %v833
    %v2010 = vunpack.c.h.b16 %v833
    %v2011 = vunpack.c.l.b16 %v834
    %v2012 = vunpack.c.h.b16 %v834
    %v2013 = vunpack.c.l.b16 %v835
    %v2014 = vunpack.c.h.b16 %v835
    %v2015 = vunpack.c.l.b16 %v836
    %v2016 = vunpack.c.h.b16 %v836
    %v2017 = vunpack.c.l.b16 %v837
    %v2018 = vunpack.c.h.b16 %v837
    %v2019 = vunpack.c.l.b16 %v838
    %v2020 = vunpack.c.h.b16 %v838
    %v2021 = vunpack.c.l.b16 %v839
    %v2022 = vunpack.c.h.b16 %v839
    %v2023 = vunpack.c.l.b16 %v840
    %v2024 = vunpack.c.h.b16 %v840
    %v2025 = vunpack.c.l.b16 %v841
    %v2026 = vunpack.c.h.b16 %v841
    %v2027 = vunpack.c.l.b16 %v842
    %v2028 = vunpack.c.h.b16 %v842
    %v2029 = vunpack.c.l.b16 %v843
    %v2030 = vunpack.c.h.b16 %v843
    %v2031 = vunpack.c.l.b16 %v844
    %v2032 = vunpack.c.h.b16 %v844
    %v2033 = vunpack.c.l.b16 %v845
    %v2034 = vunpack.c.h.b16 %v845
    %v2035 = vunpack.c.l.b16 %v846
    %v2036 = vunpack.c.h.b16 %v846
    %v2037 = vunpack.c.l.b16 %v847
    %v2038 = vunpack.c.h.b16 %v847
    %v2039 = vunpack.c.l.b16 %v848
    %v2040 = vunpack.c.h.b16 %v848
    %v2041 = vunpack.c.l.b16 %v849
    %v2042 = vunpack.c.h.b16 %v849
    %v2043 = vunpack.c.l.b16 %v850
    %v2044 = vunpack.c.h.b16 %v850
    %v2045 = vunpack.c.l.b16 %v851
    %v2046 = vunpack.c.h.b16 %v851
    %v2047 = vunpack.c.l.b16 %v852
    %v2048 = vunpack.c.h.b16 %v852
    %v2049 = vunpack.c.l.b16 %v853
    %v2050 = vunpack.c.h.b16 %v853
    %v2051 = vunpack.c.l.b16 %v854
    %v2052 = vunpack.c.h.b16 %v854
    %v2053 = vunpack.c.l.b16 %v855
    %v2054 = vunpack.c.h.b16 %v855
    %v2055 = vunpack.c.l.b16 %v856
    %v2056 = vunpack.c.h.b16 %v856
    %v2057 = vunpack.c.l.b16 %v857
    %v2058 = vunpack.c.h.b16 %v857
    %v2059 = vunpack.c.l.b16 %v858
    %v2060 = vunpack.c.h.b16 %v858
    %v2061 = vunpack.c.l.b16 %v859
    %v2062 = vunpack.c.h.b16 %v859
    %v2063 = vunpack.c.l.b16 %v860
    %v2064 = vunpack.c.h.b16 %v860
    %v2065 = vunpack.c.l.b16 %v861
    %v2066 = vunpack.c.h.b16 %v861
    %v2067 = vunpack.c.l.b16 %v862
    %v2068 = vunpack.c.h.b16 %v862
    %v2069 = vunpack.c.l.b16 %v863
    %v2070 = vunpack.c.h.b16 %v863
    %v2071 = vunpack.c.l.b16 %v864
    %v2072 = vunpack.c.h.b16 %v864
    %v2073 = vunpack.c.l.b16 %v865
    %v2074 = vunpack.c.h.b16 %v865
    %v2075 = vunpack.c.l.b16 %v866
    %v2076 = vunpack.c.h.b16 %v866
    %v2077 = vunpack.c.l.b16 %v867
    %v2078 = vunpack.c.h.b16 %v867
    %v2079 = vunpack.c.l.b16 %v868
    %v2080 = vunpack.c.h.b16 %v868
    %v2081 = vunpack.c.l.b16 %v869
    %v2082 = vunpack.c.h.b16 %v869
    %v2083 = vunpack.c.l.b16 %v870
    %v2084 = vunpack.c.h.b16 %v870
    %v2085 = vunpack.c.l.b16 %v871
    %v2086 = vunpack.c.h.b16 %v871
    %v2087 = vunpack.c.l.b16 %v872
    %v2088 = vunpack.c.h.b16 %v872
    %v2089 = vunpack.c.l.b16 %v873
    %v2090 = vunpack.c.h.b16 %v873
    %v2091 = vunpack.c.l.b16 %v874
    %v2092 = vunpack.c.h.b16 %v874
    %v2093 = vunpack.c.l.b16 %v875
    %v2094 = vunpack.c.h.b16 %v875
    %v2095 = vunpack.c.l.b16 %v876
    %v2096 = vunpack.c.h.b16 %v876
    %v2097 = vunpack.c.l.b16 %v877
    %v2098 = vunpack.c.h.b16 %v877
    %v2099 = vunpack.c.l.b16 %v878
    %v2100 = vunpack.c.h.b16 %v878
    %v2101 = vunpack.c.l.b16 %v879
    %v2102 = vunpack.c.h.b16 %v879
    %v2103 = vunpack.c.l.b16 %v880
    %v2104 = vunpack.c.h.b16 %v880
    %v2105 = vunpack.c.l.b16 %v881
    %v2106 = vunpack.c.h.b16 %v881
    %v2107 = vunpack.c.l.b16 %v882
    %v2108 = vunpack.c.h.b16 %v882
    %v2109 = vunpack.c.l.b16 %v883
    %v2110 = vunpack.c.h.b16 %v883
    %v2111 = vunpack.c.l.b16 %v884
    %v2112 = vunpack.c.h.b16 %v884
    %v2113 = vunpack.c.l.b16 %v885
    %v2114 = vunpack.c.h.b16 %v885
    %v2115 = vunpack.c.l.b16 %v886
    %v2116 = vunpack.c.h.b16 %v886
    %v2117 = vunpack.c.l.b16 %v887
    %v2118 = vunpack.c.h.b16 %v887
    %v2119 = vunpack.c.l.b16 %v888
    %v2120 = vunpack.c.h.b16 %v888
    %v2121 = vunpack.c.l.b16 %v889
    %v2122 = vunpack.c.h.b16 %v889
    %v2123 = vunpack.c.l.b16 %v890
    %v2124 = vunpack.c.h.b16 %v890
    %v2125 = vunpack.c.l.b16 %v891
    %v2126 = vunpack.c.h.b16 %v891
    %v2127 = vunpack.c.l.b16 %v892
    %v2128 = vunpack.c.h.b16 %v892
    %v2129 = vunpack.c.l.b16 %v893
    %v2130 = vunpack.c.h.b16 %v893
    %v2131 = vunpack.c.l.b16 %v894
    %v2132 = vunpack.c.h.b16 %v894
    %v2133 = vunpack.c.l.b16 %v895
    %v2134 = vunpack.c.h.b16 %v895
    %v2135 = vunpack.c.l.b16 %v896
    %v2136 = vunpack.c.h.b16 %v896
    %v2137 = vunpack.c.l.b16 %v897
    %v2138 = vunpack.c.h.b16 %v897
    %v2139 = vunpack.c.l.b16 %v898
    %v2140 = vunpack.c.h.b16 %v898
    %v2141 = vunpack.c.l.b16 %v899
    %v2142 = vunpack.c.h.b16 %v899
    %v2143 = vunpack.c.l.b16 %v900
    %v2144 = vunpack.c.h.b16 %v900
    %v2145 = vunpack.c.l.b16 %v901
    %v2146 = vunpack.c.h.b16 %v901
    %v2147 = vunpack.c.l.b16 %v902
    %v2148 = vunpack.c.h.b16 %v902
    %v2149 = vunpack.c.l.b16 %v903
    %v2150 = vunpack.c.h.b16 %v903
    %v2151 = vunpack.c.l.b16 %v904
    %v2152 = vunpack.c.h.b16 %v904
    %v2153 = vunpack.c.l.b16 %v905
    %v2154 = vunpack.c.h.b16 %v905
    %v2155 = vunpack.c.l.b16 %v906
    %v2156 = vunpack.c.h.b16 %v906
    %v2157 = vunpack.c.l.b16 %v907
    %v2158 = vunpack.c.h.b16 %v907
    %v2159 = vunpack.c.l.b16 %v908
    %v2160 = vunpack.c.h.b16 %v908
    %v2161 = vunpack.c.l.b16 %v909
    %v2162 = vunpack.c.h.b16 %v909
    %v2163 = vunpack.c.l.b16 %v910
    %v2164 = vunpack.c.h.b16 %v910
    %v2165 = vunpack.c.l.b16 %v911
    %v2166 = vunpack.c.h.b16 %v911
    %v2167 = vunpack.c.l.b16 %v912
    %v2168 = vunpack.c.h.b16 %v912
    %v2169 = vunpack.c.l.b16 %v913
    %v2170 = vunpack.c.h.b16 %v913
    %v2171 = vunpack.c.l.b16 %v914
    %v2172 = vunpack.c.h.b16 %v914
    %v2173 = vunpack.c.l.b16 %v915
    %v2174 = vunpack.c.h.b16 %v915
    %v2175 = vunpack.c.l.b16 %v916
    %v2176 = vunpack.c.h.b16 %v916
    %v2177 = vunpack.c.l.b16 %v917
    %v2178 = vunpack.c.h.b16 %v917
    %v2179 = vunpack.c.l.b16 %v918
    %v2180 = vunpack.c.h.b16 %v918
    %v2181 = vunpack.c.l.b16 %v919
    %v2182 = vunpack.c.h.b16 %v919
    %v2183 = vunpack.c.l.b16 %v920
    %v2184 = vunpack.c.h.b16 %v920
    %v2185 = vunpack.c.l.b16 %v921
    %v2186 = vunpack.c.h.b16 %v921
    %v2187 = vunpack.c.l.b16 %v922
    %v2188 = vunpack.c.h.b16 %v922
    %v2189 = vunpack.c.l.b16 %v923
    %v2190 = vunpack.c.h.b16 %v923
    %v2191 = vunpack.c.l.b16 %v924
    %v2192 = vunpack.c.h.b16 %v924
    %v2193 = vunpack.c.l.b16 %v925
    %v2194 = vunpack.c.h.b16 %v925
    %v2195 = vunpack.c.l.b16 %v926
    %v2196 = vunpack.c.h.b16 %v926
    %v2197 = vunpack.c.l.b16 %v927
    %v2198 = vunpack.c.h.b16 %v927
    %v2199 = vunpack.c.l.b16 %v928
    %v2200 = vunpack.c.h.b16 %v928
    %v2201 = vunpack.c.l.b16 %v929
    %v2202 = vunpack.c.h.b16 %v929
    %v2203 = vunpack.c.l.b16 %v930
    %v2204 = vunpack.c.h.b16 %v930
    %v2205 = vunpack.c.l.b16 %v931
    %v2206 = vunpack.c.h.b16 %v931
    %v2207 = vunpack.c.l.b16 %v932
    %v2208 = vunpack.c.h.b16 %v932
    %v2209 = vunpack.c.l.b16 %v933
    %v2210 = vunpack.c.h.b16 %v933
    %v2211 = vunpack.c.l.b16 %v934
    %v2212 = vunpack.c.h.b16 %v934
    %v2213 = vunpack.c.l.b16 %v935
    %v2214 = vunpack.c.h.b16 %v935
    %v2215 = vunpack.c.l.b16 %v936
    %v2216 = vunpack.c.h.b16 %v936
    %v2217 = vunpack.c.l.b16 %v937
    %v2218 = vunpack.c.h.b16 %v937
    %v2219 = vunpack.c.l.b16 %v938
    %v2220 = vunpack.c.h.b16 %v938
    %v2221 = vunpack.c.l.b16 %v939
    %v2222 = vunpack.c.h.b16 %v939
    %v2223 = vunpack.c.l.b16 %v940
    %v2224 = vunpack.c.h.b16 %v940
    %v2225 = vunpack.c.l.b16 %v941
    %v2226 = vunpack.c.h.b16 %v941
    %v2227 = vunpack.c.l.b16 %v942
    %v2228 = vunpack.c.h.b16 %v942
    %v2229 = vunpack.c.l.b16 %v943
    %v2230 = vunpack.c.h.b16 %v943
    %v2231 = vunpack.c.l.b16 %v944
    %v2232 = vunpack.c.h.b16 %v944
    %v2233 = vunpack.c.l.b16 %v945
    %v2234 = vunpack.c.h.b16 %v945
    %v2235 = vunpack.c.l.b16 %v946
    %v2236 = vunpack.c.h.b16 %v946
    %v2237 = vunpack.c.l.b16 %v947
    %v2238 = vunpack.c.h.b16 %v947
    %v2239 = vunpack.c.l.b16 %v948
    %v2240 = vunpack.c.h.b16 %v948
    %v2241 = vunpack.c.l.b16 %v949
    %v2242 = vunpack.c.h.b16 %v949
    %v2243 = vunpack.c.l.b16 %v950
    %v2244 = vunpack.c.h.b16 %v950
    %v2245 = vunpack.c.l.b16 %v951
    %v2246 = vunpack.c.h.b16 %v951
    %v2247 = vunpack.c.l.b16 %v952
    %v2248 = vunpack.c.h.b16 %v952
    %v2249 = vunpack.c.l.b16 %v953
    %v2250 = vunpack.c.h.b16 %v953
    %v2251 = vunpack.c.l.b16 %v954
    %v2252 = vunpack.c.h.b16 %v954
    %v2253 = vunpack.c.l.b16 %v955
    %v2254 = vunpack.c.h.b16 %v955
    %v2255 = vunpack.c.l.b16 %v956
    %v2256 = vunpack.c.h.b16 %v956
    %v2257 = vunpack.c.l.b16 %v957
    %v2258 = vunpack.c.h.b16 %v957
    %v2259 = vunpack.c.l.b16 %v958
    %v2260 = vunpack.c.h.b16 %v958
    %v2261 = vunpack.c.l.b16 %v959
    %v2262 = vunpack.c.h.b16 %v959
    %v2263 = vunpack.c.l.b16 %v960
    %v2264 = vunpack.c.h.b16 %v960
    %v2265 = vunpack.c.l.b16 %v961
    %v2266 = vunpack.c.h.b16 %v961
    %v2267 = vunpack.c.l.b16 %v962
    %v2268 = vunpack.c.h.b16 %v962
    %v2269 = vunpack.c.l.b16 %v963
    %v2270 = vunpack.c.h.b16 %v963
    %v2271 = vunpack.c.l.b16 %v964
    %v2272 = vunpack.c.h.b16 %v964
    %v2273 = vunpack.c.l.b16 %v965
    %v2274 = vunpack.c.h.b16 %v965
    %v2275 = vunpack.c.l.b16 %v966
    %v2276 = vunpack.c.h.b16 %v966
    %v2277 = vunpack.c.l.b16 %v967
    %v2278 = vunpack.c.h.b16 %v967
    %v2279 = vunpack.c.l.b16 %v968
    %v2280 = vunpack.c.h.b16 %v968
    %v2281 = vunpack.c.l.b16 %v969
    %v2282 = vunpack.c.h.b16 %v969
    %v2283 = vunpack.c.l.b16 %v970
    %v2284 = vunpack.c.h.b16 %v970
    %v2285 = vunpack.c.l.b16 %v971
    %v2286 = vunpack.c.h.b16 %v971
    %v2287 = vunpack.c.l.b16 %v972
    %v2288 = vunpack.c.h.b16 %v972
    %v2289 = vunpack.c.l.b16 %v973
    %v2290 = vunpack.c.h.b16 %v973
    %v2291 = vunpack.c.l.b16 %v974
    %v2292 = vunpack.c.h.b16 %v974
    %v2293 = vunpack.c.l.b16 %v975
    %v2294 = vunpack.c.h.b16 %v975
    %v2295 = vunpack.c.l.b16 %v976
    %v2296 = vunpack.c.h.b16 %v976
    %v2297 = vunpack.c.l.b16 %v977
    %v2298 = vunpack.c.h.b16 %v977
    %v2299 = vunpack.c.l.b16 %v978
    %v2300 = vunpack.c.h.b16 %v978
    %v2301 = vunpack.c.l.b16 %v979
    %v2302 = vunpack.c.h.b16 %v979
    %v2303 = vunpack.c.l.b16 %v980
    %v2304 = vunpack.c.h.b16 %v980
    %v2305 = vunpack.c.l.b16 %v981
    %v2306 = vunpack.c.h.b16 %v981
    %v2307 = vunpack.c.l.b16 %v982
    %v2308 = vunpack.c.h.b16 %v982
    %v2309 = vunpack.c.l.b16 %v983
    %v2310 = vunpack.c.h.b16 %v983
    %v2311 = vunpack.c.l.b16 %v984
    %v2312 = vunpack.c.h.b16 %v984
    %v2313 = vunpack.c.l.b16 %v985
    %v2314 = vunpack.c.h.b16 %v985
    %v2315 = vunpack.c.l.b16 %v986
    %v2316 = vunpack.c.h.b16 %v986
    %v2317 = vunpack.c.l.b16 %v987
    %v2318 = vunpack.c.h.b16 %v987
    %v2319 = vunpack.c.l.b16 %v988
    %v2320 = vunpack.c.h.b16 %v988
    %v2321 = vunpack.c.l.b16 %v989
    %v2322 = vunpack.c.h.b16 %v989
    %v2323 = vunpack.c.l.b16 %v990
    %v2324 = vunpack.c.h.b16 %v990
    %v2325 = vunpack.c.l.b16 %v991
    %v2326 = vunpack.c.h.b16 %v991
    %v2327 = vunpack.c.l.b16 %v992
    %v2328 = vunpack.c.h.b16 %v992
    %v2329 = vunpack.c.l.b16 %v993
    %v2330 = vunpack.c.h.b16 %v993
    %v2331 = vunpack.c.l.b16 %v994
    %v2332 = vunpack.c.h.b16 %v994
    %v2333 = vunpack.c.l.b16 %v995
    %v2334 = vunpack.c.h.b16 %v995
    %v2335 = vunpack.c.l.b16 %v996
    %v2336 = vunpack.c.h.b16 %v996
    %v2337 = vunpack.c.l.b16 %v997
    %v2338 = vunpack.c.h.b16 %v997
    %v2339 = vunpack.c.l.b16 %v998
    %v2340 = vunpack.c.h.b16 %v998
    %v2341 = vunpack.c.l.b16 %v999
    %v2342 = vunpack.c.h.b16 %v999
    %v2343 = vunpack.c.l.b16 %v1000
    %v2344 = vunpack.c.h.b16 %v1000
    %v2345 = vunpack.c.l.b16 %v1001
    %v2346 = vunpack.c.h.b16 %v1001
    %v2347 = vunpack.c.l.b16 %v1002
    %v2348 = vunpack.c.h.b16 %v1002
    %v2349 = vunpack.c.l.b16 %v1003
    %v2350 = vunpack.c.h.b16 %v1003
    %v2351 = vunpack.c.l.b16 %v1004
    %v2352 = vunpack.c.h.b16 %v1004
    %v2353 = vunpack.c.l.b16 %v1005
    %v2354 = vunpack.c.h.b16 %v1005
    %v2355 = vunpack.c.l.b16 %v1006
    %v2356 = vunpack.c.h.b16 %v1006
    %v2357 = vunpack.c.l.b16 %v1007
    %v2358 = vunpack.c.h.b16 %v1007
    %v2359 = vunpack.c.l.b16 %v1008
    %v2360 = vunpack.c.h.b16 %v1008
    %v2361 = vunpack.c.l.b16 %v1009
    %v2362 = vunpack.c.h.b16 %v1009
    %v2363 = vunpack.c.l.b16 %v1010
    %v2364 = vunpack.c.h.b16 %v1010
    %v2365 = vunpack.c.l.b16 %v1011
    %v2366 = vunpack.c.h.b16 %v1011
    %v2367 = vunpack.c.l.b16 %v1012
    %v2368 = vunpack.c.h.b16 %v1012
    %v2369 = vunpack.c.l.b16 %v1013
    %v2370 = vunpack.c.h.b16 %v1013
    %v2371 = vunpack.c.l.b16 %v1014
    %v2372 = vunpack.c.h.b16 %v1014
    %v2373 = vunpack.c.l.b16 %v1015
    %v2374 = vunpack.c.h.b16 %v1015
    %v2375 = vunpack.c.l.b16 %v1016
    %v2376 = vunpack.c.h.b16 %v1016
    %v2377 = vunpack.c.l.b16 %v1017
    %v2378 = vunpack.c.h.b16 %v1017
    %v2379 = vunpack.c.l.b16 %v1018
    %v2380 = vunpack.c.h.b16 %v1018
    %v2381 = vunpack.c.l.b16 %v1019
    %v2382 = vunpack.c.h.b16 %v1019
    %v2383 = vunpack.c.l.b16 %v1020
    %v2384 = vunpack.c.h.b16 %v1020
    %v2385 = vunpack.c.l.b16 %v1021
    %v2386 = vunpack.c.h.b16 %v1021
    %v2387 = vunpack.c.l.b16 %v1022
    %v2388 = vunpack.c.h.b16 %v1022
    %v2389 = vunpack.c.l.b16 %v1023
    %v2390 = vunpack.c.h.b16 %v1023
    %v2391 = vunpack.c.l.b16 %v1024
    %v2392 = vunpack.c.h.b16 %v1024
    %v2393 = vunpack.c.l.b16 %v1025
    %v2394 = vunpack.c.h.b16 %v1025
    %v2395 = vunpack.c.l.b16 %v1026
    %v2396 = vunpack.c.h.b16 %v1026
    %v2397 = vunpack.c.l.b16 %v1027
    %v2398 = vunpack.c.h.b16 %v1027
    %v2399 = vunpack.c.l.b16 %v1028
    %v2400 = vunpack.c.h.b16 %v1028
    %v2401 = vunpack.c.l.b16 %v1029
    %v2402 = vunpack.c.h.b16 %v1029
    %v2403 = vunpack.c.l.b16 %v1030
    %v2404 = vunpack.c.h.b16 %v1030
    %v2405 = vunpack.c.l.b16 %v1031
    %v2406 = vunpack.c.h.b16 %v1031
    %v2407 = vunpack.c.l.b16 %v1032
    %v2408 = vunpack.c.h.b16 %v1032
    %v2409 = vunpack.c.l.b16 %v1033
    %v2410 = vunpack.c.h.b16 %v1033
    %v2411 = vunpack.c.l.b16 %v1034
    %v2412 = vunpack.c.h.b16 %v1034
    %v2413 = vunpack.c.l.b16 %v1035
    %v2414 = vunpack.c.h.b16 %v1035
    %v2415 = vunpack.c.l.b16 %v1036
    %v2416 = vunpack.c.h.b16 %v1036
    %v2417 = vunpack.c.l.b16 %v1037
    %v2418 = vunpack.c.h.b16 %v1037
    %v2419 = vunpack.c.l.b16 %v1038
    %v2420 = vunpack.c.h.b16 %v1038
    %v2421 = vunpack.c.l.b16 %v1039
    %v2422 = vunpack.c.h.b16 %v1039
    %v2423 = vunpack.c.l.b16 %v1040
    %v2424 = vunpack.c.h.b16 %v1040
    %v2425 = vunpack.c.l.b16 %v1041
    %v2426 = vunpack.c.h.b16 %v1041
    %v2427 = vunpack.c.l.b16 %v1042
    %v2428 = vunpack.c.h.b16 %v1042
    %v2429 = vunpack.c.l.b16 %v1043
    %v2430 = vunpack.c.h.b16 %v1043
    %v2431 = vunpack.c.l.b16 %v1044
    %v2432 = vunpack.c.h.b16 %v1044
    %v2433 = vunpack.c.l.b16 %v1045
    %v2434 = vunpack.c.h.b16 %v1045
    %v2435 = vunpack.c.l.b16 %v1046
    %v2436 = vunpack.c.h.b16 %v1046
    %v2437 = vunpack.c.l.b16 %v1047
    %v2438 = vunpack.c.h.b16 %v1047
    %v2439 = vunpack.c.l.b16 %v1048
    %v2440 = vunpack.c.h.b16 %v1048
    %v2441 = vunpack.c.l.b16 %v1049
    %v2442 = vunpack.c.h.b16 %v1049
    %v2443 = vunpack.c.l.b16 %v1050
    %v2444 = vunpack.c.h.b16 %v1050
    %v2445 = vunpack.c.l.b16 %v1051
    %v2446 = vunpack.c.h.b16 %v1051
    %v2447 = vunpack.c.l.b16 %v1052
    %v2448 = vunpack.c.h.b16 %v1052
    %v2449 = vunpack.c.l.b16 %v1053
    %v2450 = vunpack.c.h.b16 %v1053
    %v2451 = vunpack.c.l.b16 %v1054
    %v2452 = vunpack.c.h.b16 %v1054
    %v2453 = vunpack.c.l.b16 %v1055
    %v2454 = vunpack.c.h.b16 %v1055
    %v2455 = vunpack.c.l.b16 %v1056
    %v2456 = vunpack.c.h.b16 %v1056
    %v2457 = vunpack.c.l.b16 %v1057
    %v2458 = vunpack.c.h.b16 %v1057
    %v2459 = vunpack.c.l.b16 %v1058
    %v2460 = vunpack.c.h.b16 %v1058
    %v2461 = vunpack.c.l.b16 %v1059
    %v2462 = vunpack.c.h.b16 %v1059
    %v2463 = vunpack.c.l.b16 %v1060
    %v2464 = vunpack.c.h.b16 %v1060
    %v2465 = vunpack.c.l.b16 %v1061
    %v2466 = vunpack.c.h.b16 %v1061
    %v2467 = vunpack.c.l.b16 %v1062
    %v2468 = vunpack.c.h.b16 %v1062
    %v2469 = vunpack.c.l.b16 %v1063
    %v2470 = vunpack.c.h.b16 %v1063
    %v2471 = vunpack.c.l.b16 %v1064
    %v2472 = vunpack.c.h.b16 %v1064
    %v2473 = vunpack.c.l.b16 %v1065
    %v2474 = vunpack.c.h.b16 %v1065
    %v2475 = vunpack.c.l.b16 %v1066
    %v2476 = vunpack.c.h.b16 %v1066
    %v2477 = vunpack.c.l.b16 %v1067
    %v2478 = vunpack.c.h.b16 %v1067
    %v2479 = vunpack.c.l.b16 %v1068
    %v2480 = vunpack.c.h.b16 %v1068
    %v2481 = vunpack.c.l.b16 %v1069
    %v2482 = vunpack.c.h.b16 %v1069
    %v2483 = vunpack.c.l.b16 %v1070
    %v2484 = vunpack.c.h.b16 %v1070
    %v2485 = vunpack.c.l.b16 %v1071
    %v2486 = vunpack.c.h.b16 %v1071
    %v2487 = vunpack.c.l.b16 %v1072
    %v2488 = vunpack.c.h.b16 %v1072
    %v2489 = vunpack.c.l.b16 %v1073
    %v2490 = vunpack.c.h.b16 %v1073
    %v2491 = vunpack.c.l.b16 %v1074
    %v2492 = vunpack.c.h.b16 %v1074
    %v2493 = vunpack.c.l.b16 %v1075
    %v2494 = vunpack.c.h.b16 %v1075
    %v2495 = vunpack.c.l.b16 %v1076
    %v2496 = vunpack.c.h.b16 %v1076
    %v2497 = vunpack.c.l.b16 %v1077
    %v2498 = vunpack.c.h.b16 %v1077
    %v2499 = vunpack.c.l.b16 %v1078
    %v2500 = vunpack.c.h.b16 %v1078
    %v2501 = vunpack.c.l.b16 %v1079
    %v2502 = vunpack.c.h.b16 %v1079
    %v2503 = vunpack.c.l.b16 %v1080
    %v2504 = vunpack.c.h.b16 %v1080
    %v2505 = vunpack.c.l.b16 %v1081
    %v2506 = vunpack.c.h.b16 %v1081
    %v2507 = vunpack.c.l.b16 %v1082
    %v2508 = vunpack.c.h.b16 %v1082
    %v2509 = vunpack.c.l.b16 %v1083
    %v2510 = vunpack.c.h.b16 %v1083
    %v2511 = vunpack.c.l.b16 %v1084
    %v2512 = vunpack.c.h.b16 %v1084
    %v2513 = vunpack.c.l.b16 %v1085
    %v2514 = vunpack.c.h.b16 %v1085
    %v2515 = vunpack.c.l.b16 %v1086
    %v2516 = vunpack.c.h.b16 %v1086
    %v2517 = vunpack.c.l.b16 %v1087
    %v2518 = vunpack.c.h.b16 %v1087
    %v2519 = vunpack.c.l.b16 %v1088
    %v2520 = vunpack.c.h.b16 %v1088
    %v2521 = vunpack.c.l.b16 %v1089
    %v2522 = vunpack.c.h.b16 %v1089
    %v2523 = vunpack.c.l.b16 %v1090
    %v2524 = vunpack.c.h.b16 %v1090
    %v2525 = vunpack.c.l.b16 %v1091
    %v2526 = vunpack.c.h.b16 %v1091
    %v2527 = vunpack.c.l.b16 %v1092
    %v2528 = vunpack.c.h.b16 %v1092
    %v2529 = vunpack.c.l.b16 %v1093
    %v2530 = vunpack.c.h.b16 %v1093
    %v2531 = vunpack.c.l.b16 %v1094
    %v2532 = vunpack.c.h.b16 %v1094
    %v2533 = vunpack.c.l.b16 %v1095
    %v2534 = vunpack.c.h.b16 %v1095
    %v2535 = vunpack.c.l.b16 %v1096
    %v2536 = vunpack.c.h.b16 %v1096
    %v2537 = vunpack.c.l.b16 %v1097
    %v2538 = vunpack.c.h.b16 %v1097
    %v2539 = vunpack.c.l.b16 %v1098
    %v2540 = vunpack.c.h.b16 %v1098
    %v2541 = vunpack.c.l.b16 %v1099
    %v2542 = vunpack.c.h.b16 %v1099
    %v2543 = vunpack.c.l.b16 %v1100
    %v2544 = vunpack.c.h.b16 %v1100
    %v2545 = vunpack.c.l.b16 %v1101
    %v2546 = vunpack.c.h.b16 %v1101
    %v2547 = vunpack.c.l.b16 %v1102
    %v2548 = vunpack.c.h.b16 %v1102
    %v2549 = vunpack.c.l.b16 %v1103
    %v2550 = vunpack.c.h.b16 %v1103
    %v2551 = vunpack.c.l.b16 %v1104
    %v2552 = vunpack.c.h.b16 %v1104
    %v2553 = vunpack.c.l.b16 %v1105
    %v2554 = vunpack.c.h.b16 %v1105
    %v2555 = vunpack.c.l.b16 %v1106
    %v2556 = vunpack.c.h.b16 %v1106
    %v2557 = vunpack.c.l.b16 %v1107
    %v2558 = vunpack.c.h.b16 %v1107
    %v2559 = vunpack.c.l.b16 %v1108
    %v2560 = vunpack.c.h.b16 %v1108
    %v2561 = vunpack.c.l.b16 %v1109
    %v2562 = vunpack.c.h.b16 %v1109
    %v2563 = vunpack.c.l.b16 %v1110
    %v2564 = vunpack.c.h.b16 %v1110
    %v2565 = vunpack.c.l.b16 %v1111
    %v2566 = vunpack.c.h.b16 %v1111
    %v2567 = vunpack.c.l.b16 %v1112
    %v2568 = vunpack.c.h.b16 %v1112
    %v2569 = vunpack.c.l.b16 %v1113
    %v2570 = vunpack.c.h.b16 %v1113
    %v2571 = vunpack.c.l.b16 %v1114
    %v2572 = vunpack.c.h.b16 %v1114
    %v2573 = vunpack.c.l.b16 %v1115
    %v2574 = vunpack.c.h.b16 %v1115
    %v2575 = vunpack.c.l.b16 %v1116
    %v2576 = vunpack.c.h.b16 %v1116
    %v2577 = vunpack.c.l.b16 %v1117
    %v2578 = vunpack.c.h.b16 %v1117
    %v2579 = vunpack.c.l.b16 %v1118
    %v2580 = vunpack.c.h.b16 %v1118
    %v2581 = vunpack.c.l.b16 %v1119
    %v2582 = vunpack.c.h.b16 %v1119
    %v2583 = vunpack.c.l.b16 %v1120
    %v2584 = vunpack.c.h.b16 %v1120
    %v2585 = vunpack.c.l.b16 %v1121
    %v2586 = vunpack.c.h.b16 %v1121
    %v2587 = vunpack.c.l.b16 %v1122
    %v2588 = vunpack.c.h.b16 %v1122
    %v2589 = vunpack.c.l.b16 %v1123
    %v2590 = vunpack.c.h.b16 %v1123
    %v2591 = vunpack.c.l.b16 %v1124
    %v2592 = vunpack.c.h.b16 %v1124
    %v2593 = vunpack.c.l.b16 %v1125
    %v2594 = vunpack.c.h.b16 %v1125
    %v2595 = vunpack.c.l.b16 %v1126
    %v2596 = vunpack.c.h.b16 %v1126
    %v2597 = vunpack.c.l.b16 %v1127
    %v2598 = vunpack.c.h.b16 %v1127
    %v2599 = vunpack.c.l.b16 %v1128
    %v2600 = vunpack.c.h.b16 %v1128
    %v2601 = vunpack.c.l.b16 %v1129
    %v2602 = vunpack.c.h.b16 %v1129
    %v2603 = vunpack.c.l.b16 %v1130
    %v2604 = vunpack.c.h.b16 %v1130
    %v2605 = vunpack.c.l.b16 %v1131
    %v2606 = vunpack.c.h.b16 %v1131
    %v2607 = vunpack.c.l.b16 %v1132
    %v2608 = vunpack.c.h.b16 %v1132
    %v2609 = vunpack.c.l.b16 %v1133
    %v2610 = vunpack.c.h.b16 %v1133
    %v2611 = vunpack.c.l.b16 %v1134
    %v2612 = vunpack.c.h.b16 %v1134
    %v2613 = vunpack.c.l.b16 %v1135
    %v2614 = vunpack.c.h.b16 %v1135
    %v2615 = vunpack.c.l.b16 %v1136
    %v2616 = vunpack.c.h.b16 %v1136
    %v2617 = vunpack.c.l.b16 %v1137
    %v2618 = vunpack.c.h.b16 %v1137
    %v2619 = vunpack.c.l.b16 %v1138
    %v2620 = vunpack.c.h.b16 %v1138
    %v2621 = vunpack.c.l.b16 %v1139
    %v2622 = vunpack.c.h.b16 %v1139
    %v2623 = vunpack.c.l.b16 %v1140
    %v2624 = vunpack.c.h.b16 %v1140
    %v2625 = vunpack.c.l.b16 %v1141
    %v2626 = vunpack.c.h.b16 %v1141
    %v2627 = vunpack.c.l.b16 %v1142
    %v2628 = vunpack.c.h.b16 %v1142
    %v2629 = vunpack.c.l.b16 %v1143
    %v2630 = vunpack.c.h.b16 %v1143
    %v2631 = vunpack.c.l.b16 %v1144
    %v2632 = vunpack.c.h.b16 %v1144
    %v2633 = vunpack.c.l.b16 %v1145
    %v2634 = vunpack.c.h.b16 %v1145
    %v2635 = vunpack.c.l.b16 %v1146
    %v2636 = vunpack.c.h.b16 %v1146
    %v2637 = vunpack.c.l.b16 %v1147
    %v2638 = vunpack.c.h.b16 %v1147
    %v2639 = vunpack.c.l.b16 %v1148
    %v2640 = vunpack.c.h.b16 %v1148
    %v2641 = vunpack.c.l.b16 %v1149
    %v2642 = vunpack.c.h.b16 %v1149
    %v2643 = vunpack.c.l.b16 %v1150
    %v2644 = vunpack.c.h.b16 %v1150
    %v2645 = vunpack.c.l.b16 %v1151
    %v2646 = vunpack.c.h.b16 %v1151
    %v2647 = vunpack.c.l.b16 %v1152
    %v2648 = vunpack.c.h.b16 %v1152
    %v2649 = vunpack.c.l.b16 %v1153
    %v2650 = vunpack.c.h.b16 %v1153
    %v2651 = vunpack.c.l.b16 %v1154
    %v2652 = vunpack.c.h.b16 %v1154
    %v2653 = vunpack.c.l.b16 %v1155
    %v2654 = vunpack.c.h.b16 %v1155
    %v2655 = vunpack.c.l.b16 %v1156
    %v2656 = vunpack.c.h.b16 %v1156
    %v2657 = vunpack.c.l.b16 %v1157
    %v2658 = vunpack.c.h.b16 %v1157
    %v2659 = vunpack.c.l.b16 %v1158
    %v2660 = vunpack.c.h.b16 %v1158
    %v2661 = vunpack.c.l.b16 %v1159
    %v2662 = vunpack.c.h.b16 %v1159
    %v2663 = vunpack.c.l.b16 %v1160
    %v2664 = vunpack.c.h.b16 %v1160
    %v2665 = vunpack.c.l.b16 %v1161
    %v2666 = vunpack.c.h.b16 %v1161
    %v2667 = vunpack.c.l.b16 %v1162
    %v2668 = vunpack.c.h.b16 %v1162
    %v2669 = vunpack.c.l.b16 %v1163
    %v2670 = vunpack.c.h.b16 %v1163
    %v2671 = vunpack.c.l.b16 %v1164
    %v2672 = vunpack.c.h.b16 %v1164
    %v2673 = vunpack.c.l.b16 %v1165
    %v2674 = vunpack.c.h.b16 %v1165
    %v2675 = vunpack.c.l.b16 %v1166
    %v2676 = vunpack.c.h.b16 %v1166
    %v2677 = vunpack.c.l.b16 %v1167
    %v2678 = vunpack.c.h.b16 %v1167
    %v2679 = vunpack.c.l.b16 %v1168
    %v2680 = vunpack.c.h.b16 %v1168
    %v2681 = vunpack.c.l.b16 %v1169
    %v2682 = vunpack.c.h.b16 %v1169
    %v2683 = vunpack.c.l.b16 %v1170
    %v2684 = vunpack.c.h.b16 %v1170
    %v2685 = vunpack.c.l.b16 %v1171
    %v2686 = vunpack.c.h.b16 %v1171
    %v2687 = vunpack.c.l.b16 %v1172
    %v2688 = vunpack.c.h.b16 %v1172
    %v2689 = vunpack.c.l.b16 %v1173
    %v2690 = vunpack.c.h.b16 %v1173
    %v2691 = vunpack.c.l.b16 %v1174
    %v2692 = vunpack.c.h.b16 %v1174
    %v2693 = vunpack.c.l.b16 %v1175
    %v2694 = vunpack.c.h.b16 %v1175
    %v2695 = vunpack.c.l.b16 %v1176
    %v2696 = vunpack.c.h.b16 %v1176
    %v2697 = vunpack.c.l.b16 %v1177
    %v2698 = vunpack.c.h.b16 %v1177
    %v2699 = vunpack.c.l.b16 %v1178
    %v2700 = vunpack.c.h.b16 %v1178
    %v2701 = vunpack.c.l.b16 %v1179
    %v2702 = vunpack.c.h.b16 %v1179
    %v2703 = vunpack.c.l.b16 %v1180
    %v2704 = vunpack.c.h.b16 %v1180
    %v2705 = vunpack.c.l.b16 %v1181
    %v2706 = vunpack.c.h.b16 %v1181
    %v2707 = vunpack.c.l.b16 %v1182
    %v2708 = vunpack.c.h.b16 %v1182
    %v2709 = vunpack.c.l.b16 %v1183
    %v2710 = vunpack.c.h.b16 %v1183
    %v2711 = vunpack.c.l.b16 %v1184
    %v2712 = vunpack.c.h.b16 %v1184
    %v2713 = vunpack.c.l.b16 %v1185
    %v2714 = vunpack.c.h.b16 %v1185
    %v2715 = vunpack.c.l.b16 %v1186
    %v2716 = vunpack.c.h.b16 %v1186
    %v2717 = vunpack.c.l.b16 %v1187
    %v2718 = vunpack.c.h.b16 %v1187
    %v2719 = vunpack.c.l.b16 %v1188
    %v2720 = vunpack.c.h.b16 %v1188
    %v2721 = vunpack.c.l.b16 %v1189
    %v2722 = vunpack.c.h.b16 %v1189
    %v2723 = vunpack.c.l.b16 %v1190
    %v2724 = vunpack.c.h.b16 %v1190
    %v2725 = vunpack.c.l.b16 %v1191
    %v2726 = vunpack.c.h.b16 %v1191
    %v2727 = vunpack.c.l.b16 %v1192
    %v2728 = vunpack.c.h.b16 %v1192
    %v2729 = vunpack.c.l.b16 %v1193
    %v2730 = vunpack.c.h.b16 %v1193
    %v2731 = vunpack.c.l.b16 %v1194
    %v2732 = vunpack.c.h.b16 %v1194
    %v2733 = vunpack.c.l.b16 %v1195
    %v2734 = vunpack.c.h.b16 %v1195
    %v2735 = vunpack.c.l.b16 %v1196
    %v2736 = vunpack.c.h.b16 %v1196
    %v2737 = vunpack.c.l.b16 %v1197
    %v2738 = vunpack.c.h.b16 %v1197
    %v2739 = vunpack.c.l.b16 %v1198
    %v2740 = vunpack.c.h.b16 %v1198
    %v2741 = vunpack.c.l.b16 %v1199
    %v2742 = vunpack.c.h.b16 %v1199
    %v2743 = vunpack.c.l.b16 %v1200
    %v2744 = vunpack.c.h.b16 %v1200
    %v2745 = vunpack.c.l.b16 %v1201
    %v2746 = vunpack.c.h.b16 %v1201
    %v2747 = vunpack.c.l.b16 %v1202
    %v2748 = vunpack.c.h.b16 %v1202
    %v2749 = vunpack.c.l.b16 %v1203
    %v2750 = vunpack.c.h.b16 %v1203
    %v2751 = vunpack.c.l.b16 %v1204
    %v2752 = vunpack.c.h.b16 %v1204
    %v2753 = vunpack.c.l.b16 %v1205
    %v2754 = vunpack.c.h.b16 %v1205
    %v2755 = vunpack.c.l.b16 %v1206
    %v2756 = vunpack.c.h.b16 %v1206
    %v2757 = vunpack.c.l.b16 %v1207
    %v2758 = vunpack.c.h.b16 %v1207
    %v2759 = vunpack.c.l.b16 %v1208
    %v2760 = vunpack.c.h.b16 %v1208
    %v2761 = vunpack.c.l.b16 %v1209
    %v2762 = vunpack.c.h.b16 %v1209
    %v2763 = vunpack.c.l.b16 %v1210
    %v2764 = vunpack.c.h.b16 %v1210
    %v2765 = vunpack.c.l.b16 %v1211
    %v2766 = vunpack.c.h.b16 %v1211
    %v2767 = vunpack.c.l.b16 %v1212
    %v2768 = vunpack.c.h.b16 %v1212
    %v2769 = vunpack.c.l.b16 %v1213
    %v2770 = vunpack.c.h.b16 %v1213
    %v2771 = vunpack.c.l.b16 %v1214
    %v2772 = vunpack.c.h.b16 %v1214
    %v2773 = vunpack.c.l.b16 %v1215
    %v2774 = vunpack.c.h.b16 %v1215
    %v2775 = vunpack.c.l.b16 %v1216
    %v2776 = vunpack.c.h.b16 %v1216
    %v2777 = vunpack.c.l.b16 %v1217
    %v2778 = vunpack.c.h.b16 %v1217
    %v2779 = vunpack.c.l.b16 %v1218
    %v2780 = vunpack.c.h.b16 %v1218
    %v2781 = vunpack.c.l.b16 %v1219
    %v2782 = vunpack.c.h.b16 %v1219
    %v2783 = vunpack.c.l.b16 %v1220
    %v2784 = vunpack.c.h.b16 %v1220
    %v2785 = vunpack.c.l.b16 %v1221
    %v2786 = vunpack.c.h.b16 %v1221
    %v2787 = vunpack.c.l.b16 %v1222
    %v2788 = vunpack.c.h.b16 %v1222
    %v2789 = vunpack.c.l.b16 %v1223
    %v2790 = vunpack.c.h.b16 %v1223
    %v2791 = vunpack.c.l.b16 %v1224
    %v2792 = vunpack.c.h.b16 %v1224
    %v2793 = vunpack.c.l.b16 %v1225
    %v2794 = vunpack.c.h.b16 %v1225
    %v2795 = vunpack.c.l.b16 %v1226
    %v2796 = vunpack.c.h.b16 %v1226
    %v2797 = vunpack.c.l.b16 %v1227
    %v2798 = vunpack.c.h.b16 %v1227
    %v2799 = vunpack.c.l.b16 %v1228
    %v2800 = vunpack.c.h.b16 %v1228
    %v2801 = vunpack.c.l.b16 %v1229
    %v2802 = vunpack.c.h.b16 %v1229
    %v2803 = vunpack.c.l.b16 %v1230
    %v2804 = vunpack.c.h.b16 %v1230
    %v2805 = vunpack.c.l.b16 %v1231
    %v2806 = vunpack.c.h.b16 %v1231
    %v2807 = vunpack.c.l.b16 %v1232
    %v2808 = vunpack.c.h.b16 %v1232
    %v2809 = vunpack.c.l.b16 %v1233
    %v2810 = vunpack.c.h.b16 %v1233
    %v2811 = vunpack.c.l.b16 %v1234
    %v2812 = vunpack.c.h.b16 %v1234
    %v2813 = vpack.c.b16 %v1797, %v1789
    %v2814 = vpack.c.b16 %v1798, %v1790
    %v2815 = vpack.c.b16 %v1799, %v1791
    %v2816 = vpack.c.b16 %v1800, %v1792
    %v2817 = vpack.c.b16 %v1801, %v1793
    %v2818 = vpack.c.b16 %v1802, %v1794
    %v2819 = vpack.c.b16 %v1803, %v1795
    %v2820 = vpack.c.b16 %v1804, %v1796
    %v2821 = vpack.c.b16 %v1813, %v1805
    %v2822 = vpack.c.b16 %v1814, %v1806
    %v2823 = vpack.c.b16 %v1815, %v1807
    %v2824 = vpack.c.b16 %v1816, %v1808
    %v2825 = vpack.c.b16 %v1817, %v1809
    %v2826 = vpack.c.b16 %v1818, %v1810
    %v2827 = vpack.c.b16 %v1819, %v1811
    %v2828 = vpack.c.b16 %v1820, %v1812
    %v2829 = vpack.c.b16 %v1829, %v1821
    %v2830 = vpack.c.b16 %v1830, %v1822
    %v2831 = vpack.c.b16 %v1831, %v1823
    %v2832 = vpack.c.b16 %v1832, %v1824
    %v2833 = vpack.c.b16 %v1833, %v1825
    %v2834 = vpack.c.b16 %v1834, %v1826
    %v2835 = vpack.c.b16 %v1835, %v1827
    %v2836 = vpack.c.b16 %v1836, %v1828
    %v2837 = vpack.c.b16 %v1845, %v1837
    %v2838 = vpack.c.b16 %v1846, %v1838
    %v2839 = vpack.c.b16 %v1847, %v1839
    %v2840 = vpack.c.b16 %v1848, %v1840
    %v2841 = vpack.c.b16 %v1849, %v1841
    %v2842 = vpack.c.b16 %v1850, %v1842
    %v2843 = vpack.c.b16 %v1851, %v1843
    %v2844 = vpack.c.b16 %v1852, %v1844
    %v2845 = vpack.c.b16 %v1861, %v1853
    %v2846 = vpack.c.b16 %v1862, %v1854
    %v2847 = vpack.c.b16 %v1863, %v1855
    %v2848 = vpack.c.b16 %v1864, %v1856
    %v2849 = vpack.c.b16 %v1865, %v1857
    %v2850 = vpack.c.b16 %v1866, %v1858
    %v2851 = vpack.c.b16 %v1867, %v1859
    %v2852 = vpack.c.b16 %v1868, %v1860
    %v2853 = vpack.c.b16 %v1877, %v1869
    %v2854 = vpack.c.b16 %v1878, %v1870
    %v2855 = vpack.c.b16 %v1879, %v1871
    %v2856 = vpack.c.b16 %v1880, %v1872
    %v2857 = vpack.c.b16 %v1881, %v1873
    %v2858 = vpack.c.b16 %v1882, %v1874
    %v2859 = vpack.c.b16 %v1883, %v1875
    %v2860 = vpack.c.b16 %v1884, %v1876
    %v2861 = vpack.c.b16 %v1893, %v1885
    %v2862 = vpack.c.b16 %v1894, %v1886
    %v2863 = vpack.c.b16 %v1895, %v1887
    %v2864 = vpack.c.b16 %v1896, %v1888
    %v2865 = vpack.c.b16 %v1897, %v1889
    %v2866 = vpack.c.b16 %v1898, %v1890
    %v2867 = vpack.c.b16 %v1899, %v1891
    %v2868 = vpack.c.b16 %v1900, %v1892
    %v2869 = vpack.c.b16 %v1909, %v1901
    %v2870 = vpack.c.b16 %v1910, %v1902
    %v2871 = vpack.c.b16 %v1911, %v1903
    %v2872 = vpack.c.b16 %v1912, %v1904
    %v2873 = vpack.c.b16 %v1913, %v1905
    %v2874 = vpack.c.b16 %v1914, %v1906
    %v2875 = vpack.c.b16 %v1915, %v1907
    %v2876 = vpack.c.b16 %v1916, %v1908
    %v2877 = vpack.c.b16 %v1925, %v1917
    %v2878 = vpack.c.b16 %v1926, %v1918
    %v2879 = vpack.c.b16 %v1927, %v1919
    %v2880 = vpack.c.b16 %v1928, %v1920
    %v2881 = vpack.c.b16 %v1929, %v1921
    %v2882 = vpack.c.b16 %v1930, %v1922
    %v2883 = vpack.c.b16 %v1931, %v1923
    %v2884 = vpack.c.b16 %v1932, %v1924
    %v2885 = vpack.c.b16 %v1941, %v1933
    %v2886 = vpack.c.b16 %v1942, %v1934
    %v2887 = vpack.c.b16 %v1943, %v1935
    %v2888 = vpack.c.b16 %v1944, %v1936
    %v2889 = vpack.c.b16 %v1945, %v1937
    %v2890 = vpack.c.b16 %v1946, %v1938
    %v2891 = vpack.c.b16 %v1947, %v1939
    %v2892 = vpack.c.b16 %v1948, %v1940
    %v2893 = vpack.c.b16 %v1957, %v1949
    %v2894 = vpack.c.b16 %v1958, %v1950
    %v2895 = vpack.c.b16 %v1959, %v1951
    %v2896 = vpack.c.b16 %v1960, %v1952
    %v2897 = vpack.c.b16 %v1961, %v1953
    %v2898 = vpack.c.b16 %v1962, %v1954
    %v2899 = vpack.c.b16 %v1963, %v1955
    %v2900 = vpack.c.b16 %v1964, %v1956
    %v2901 = vpack.c.b16 %v1973, %v1965
    %v2902 = vpack.c.b16 %v1974, %v1966
    %v2903 = vpack.c.b16 %v1975, %v1967
    %v2904 = vpack.c.b16 %v1976, %v1968
    %v2905 = vpack.c.b16 %v1977, %v1969
    %v2906 = vpack.c.b16 %v1978, %v1970
    %v2907 = vpack.c.b16 %v1979, %v1971
    %v2908 = vpack.c.b16 %v1980, %v1972
    %v2909 = vpack.c.b16 %v1989, %v1981
    %v2910 = vpack.c.b16 %v1990, %v1982
    %v2911 = vpack.c.b16 %v1991, %v1983
    %v2912 = vpack.c.b16 %v1992, %v1984
    %v2913 = vpack.c.b16 %v1993, %v1985
    %v2914 = vpack.c.b16 %v1994, %v1986
    %v2915 = vpack.c.b16 %v1995, %v1987
    %v2916 = vpack.c.b16 %v1996, %v1988
    %v2917 = vpack.c.b16 %v2005, %v1997
    %v2918 = vpack.c.b16 %v2006, %v1998
    %v2919 = vpack.c.b16 %v2007, %v1999
    %v2920 = vpack.c.b16 %v2008, %v2000
    %v2921 = vpack.c.b16 %v2009, %v2001
    %v2922 = vpack.c.b16 %v2010, %v2002
    %v2923 = vpack.c.b16 %v2011, %v2003
    %v2924 = vpack.c.b16 %v2012, %v2004
    %v2925 = vpack.c.b16 %v2021, %v2013
    %v2926 = vpack.c.b16 %v2022, %v2014
    %v2927 = vpack.c.b16 %v2023, %v2015
    %v2928 = vpack.c.b16 %v2024, %v2016
    %v2929 = vpack.c.b16 %v2025, %v2017
    %v2930 = vpack.c.b16 %v2026, %v2018
    %v2931 = vpack.c.b16 %v2027, %v2019
    %v2932 = vpack.c.b16 %v2028, %v2020
    %v2933 = vpack.c.b16 %v2037, %v2029
    %v2934 = vpack.c.b16 %v2038, %v2030
    %v2935 = vpack.c.b16 %v2039, %v2031
    %v2936 = vpack.c.b16 %v2040, %v2032
    %v2937 = vpack.c.b16 %v2041, %v2033
    %v2938 = vpack.c.b16 %v2042, %v2034
    %v2939 = vpack.c.b16 %v2043, %v2035
    %v2940 = vpack.c.b16 %v2044, %v2036
    %v2941 = vpack.c.b16 %v2053, %v2045
    %v2942 = vpack.c.b16 %v2054, %v2046
    %v2943 = vpack.c.b16 %v2055, %v2047
    %v2944 = vpack.c.b16 %v2056, %v2048
    %v2945 = vpack.c.b16 %v2057, %v2049
    %v2946 = vpack.c.b16 %v2058, %v2050
    %v2947 = vpack.c.b16 %v2059, %v2051
    %v2948 = vpack.c.b16 %v2060, %v2052
    %v2949 = vpack.c.b16 %v2069, %v2061
    %v2950 = vpack.c.b16 %v2070, %v2062
    %v2951 = vpack.c.b16 %v2071, %v2063
    %v2952 = vpack.c.b16 %v2072, %v2064
    %v2953 = vpack.c.b16 %v2073, %v2065
    %v2954 = vpack.c.b16 %v2074, %v2066
    %v2955 = vpack.c.b16 %v2075, %v2067
    %v2956 = vpack.c.b16 %v2076, %v2068
    %v2957 = vpack.c.b16 %v2085, %v2077
    %v2958 = vpack.c.b16 %v2086, %v2078
    %v2959 = vpack.c.b16 %v2087, %v2079
    %v2960 = vpack.c.b16 %v2088, %v2080
    %v2961 = vpack.c.b16 %v2089, %v2081
    %v2962 = vpack.c.b16 %v2090, %v2082
    %v2963 = vpack.c.b16 %v2091, %v2083
    %v2964 = vpack.c.b16 %v2092, %v2084
    %v2965 = vpack.c.b16 %v2101, %v2093
    %v2966 = vpack.c.b16 %v2102, %v2094
    %v2967 = vpack.c.b16 %v2103, %v2095
    %v2968 = vpack.c.b16 %v2104, %v2096
    %v2969 = vpack.c.b16 %v2105, %v2097
    %v2970 = vpack.c.b16 %v2106, %v2098
    %v2971 = vpack.c.b16 %v2107, %v2099
    %v2972 = vpack.c.b16 %v2108, %v2100
    %v2973 = vpack.c.b16 %v2117, %v2109
    %v2974 = vpack.c.b16 %v2118, %v2110
    %v2975 = vpack.c.b16 %v2119, %v2111
    %v2976 = vpack.c.b16 %v2120, %v2112
    %v2977 = vpack.c.b16 %v2121, %v2113
    %v2978 = vpack.c.b16 %v2122, %v2114
    %v2979 = vpack.c.b16 %v2123, %v2115
    %v2980 = vpack.c.b16 %v2124, %v2116
    %v2981 = vpack.c.b16 %v2133, %v2125
    %v2982 = vpack.c.b16 %v2134, %v2126
    %v2983 = vpack.c.b16 %v2135, %v2127
    %v2984 = vpack.c.b16 %v2136, %v2128
    %v2985 = vpack.c.b16 %v2137, %v2129
    %v2986 = vpack.c.b16 %v2138, %v2130
    %v2987 = vpack.c.b16 %v2139, %v2131
    %v2988 = vpack.c.b16 %v2140, %v2132
    %v2989 = vpack.c.b16 %v2149, %v2141
    %v2990 = vpack.c.b16 %v2150, %v2142
    %v2991 = vpack.c.b16 %v2151, %v2143
    %v2992 = vpack.c.b16 %v2152, %v2144
    %v2993 = vpack.c.b16 %v2153, %v2145
    %v2994 = vpack.c.b16 %v2154, %v2146
    %v2995 = vpack.c.b16 %v2155, %v2147
    %v2996 = vpack.c.b16 %v2156, %v2148
    %v2997 = vpack.c.b16 %v2165, %v2157
    %v2998 = vpack.c.b16 %v2166, %v2158
    %v2999 = vpack.c.b16 %v2167, %v2159
    %v3000 = vpack.c.b16 %v2168, %v2160
    %v3001 = vpack.c.b16 %v2169, %v2161
    %v3002 = vpack.c.b16 %v2170, %v2162
    %v3003 = vpack.c.b16 %v2171, %v2163
    %v3004 = vpack.c.b16 %v2172, %v2164
    %v3005 = vpack.c.b16 %v2181, %v2173
    %v3006 = vpack.c.b16 %v2182, %v2174
    %v3007 = vpack.c.b16 %v2183, %v2175
    %v3008 = vpack.c.b16 %v2184, %v2176
    %v3009 = vpack.c.b16 %v2185, %v2177
    %v3010 = vpack.c.b16 %v2186, %v2178
    %v3011 = vpack.c.b16 %v2187, %v2179
    %v3012 = vpack.c.b16 %v2188, %v2180
    %v3013 = vpack.c.b16 %v2197, %v2189
    %v3014 = vpack.c.b16 %v2198, %v2190
    %v3015 = vpack.c.b16 %v2199, %v2191
    %v3016 = vpack.c.b16 %v2200, %v2192
    %v3017 = vpack.c.b16 %v2201, %v2193
    %v3018 = vpack.c.b16 %v2202, %v2194
    %v3019 = vpack.c.b16 %v2203, %v2195
    %v3020 = vpack.c.b16 %v2204, %v2196
    %v3021 = vpack.c.b16 %v2213, %v2205
    %v3022 = vpack.c.b16 %v2214, %v2206
    %v3023 = vpack.c.b16 %v2215, %v2207
    %v3024 = vpack.c.b16 %v2216, %v2208
    %v3025 = vpack.c.b16 %v2217, %v2209
    %v3026 = vpack.c.b16 %v2218, %v2210
    %v3027 = vpack.c.b16 %v2219, %v2211
    %v3028 = vpack.c.b16 %v2220, %v2212
    %v3029 = vpack.c.b16 %v2229, %v2221
    %v3030 = vpack.c.b16 %v2230, %v2222
    %v3031 = vpack.c.b16 %v2231, %v2223
    %v3032 = vpack.c.b16 %v2232, %v2224
    %v3033 = vpack.c.b16 %v2233, %v2225
    %v3034 = vpack.c.b16 %v2234, %v2226
    %v3035 = vpack.c.b16 %v2235, %v2227
    %v3036 = vpack.c.b16 %v2236, %v2228
    %v3037 = vpack.c.b16 %v2245, %v2237
    %v3038 = vpack.c.b16 %v2246, %v2238
    %v3039 = vpack.c.b16 %v2247, %v2239
    %v3040 = vpack.c.b16 %v2248, %v2240
    %v3041 = vpack.c.b16 %v2249, %v2241
    %v3042 = vpack.c.b16 %v2250, %v2242
    %v3043 = vpack.c.b16 %v2251, %v2243
    %v3044 = vpack.c.b16 %v2252, %v2244
    %v3045 = vpack.c.b16 %v2261, %v2253
    %v3046 = vpack.c.b16 %v2262, %v2254
    %v3047 = vpack.c.b16 %v2263, %v2255
    %v3048 = vpack.c.b16 %v2264, %v2256
    %v3049 = vpack.c.b16 %v2265, %v2257
    %v3050 = vpack.c.b16 %v2266, %v2258
    %v3051 = vpack.c.b16 %v2267, %v2259
    %v3052 = vpack.c.b16 %v2268, %v2260
    %v3053 = vpack.c.b16 %v2277, %v2269
    %v3054 = vpack.c.b16 %v2278, %v2270
    %v3055 = vpack.c.b16 %v2279, %v2271
    %v3056 = vpack.c.b16 %v2280, %v2272
    %v3057 = vpack.c.b16 %v2281, %v2273
    %v3058 = vpack.c.b16 %v2282, %v2274
    %v3059 = vpack.c.b16 %v2283, %v2275
    %v3060 = vpack.c.b16 %v2284, %v2276
    %v3061 = vpack.c.b16 %v2293, %v2285
    %v3062 = vpack.c.b16 %v2294, %v2286
    %v3063 = vpack.c.b16 %v2295, %v2287
    %v3064 = vpack.c.b16 %v2296, %v2288
    %v3065 = vpack.c.b16 %v2297, %v2289
    %v3066 = vpack.c.b16 %v2298, %v2290
    %v3067 = vpack.c.b16 %v2299, %v2291
    %v3068 = vpack.c.b16 %v2300, %v2292
    %v3069 = vpack.c.b16 %v2309, %v2301
    %v3070 = vpack.c.b16 %v2310, %v2302
    %v3071 = vpack.c.b16 %v2311, %v2303
    %v3072 = vpack.c.b16 %v2312, %v2304
    %v3073 = vpack.c.b16 %v2313, %v2305
    %v3074 = vpack.c.b16 %v2314, %v2306
    %v3075 = vpack.c.b16 %v2315, %v2307
    %v3076 = vpack.c.b16 %v2316, %v2308
    %v3077 = vpack.c.b16 %v2325, %v2317
    %v3078 = vpack.c.b16 %v2326, %v2318
    %v3079 = vpack.c.b16 %v2327, %v2319
    %v3080 = vpack.c.b16 %v2328, %v2320
    %v3081 = vpack.c.b16 %v2329, %v2321
    %v3082 = vpack.c.b16 %v2330, %v2322
    %v3083 = vpack.c.b16 %v2331, %v2323
    %v3084 = vpack.c.b16 %v2332, %v2324
    %v3085 = vpack.c.b16 %v2341, %v2333
    %v3086 = vpack.c.b16 %v2342, %v2334
    %v3087 = vpack.c.b16 %v2343, %v2335
    %v3088 = vpack.c.b16 %v2344, %v2336
    %v3089 = vpack.c.b16 %v2345, %v2337
    %v3090 = vpack.c.b16 %v2346, %v2338
    %v3091 = vpack.c.b16 %v2347, %v2339
    %v3092 = vpack.c.b16 %v2348, %v2340
    %v3093 = vpack.c.b16 %v2357, %v2349
    %v3094 = vpack.c.b16 %v2358, %v2350
    %v3095 = vpack.c.b16 %v2359, %v2351
    %v3096 = vpack.c.b16 %v2360, %v2352
    %v3097 = vpack.c.b16 %v2361, %v2353
    %v3098 = vpack.c.b16 %v2362, %v2354
    %v3099 = vpack.c.b16 %v2363, %v2355
    %v3100 = vpack.c.b16 %v2364, %v2356
    %v3101 = vpack.c.b16 %v2373, %v2365
    %v3102 = vpack.c.b16 %v2374, %v2366
    %v3103 = vpack.c.b16 %v2375, %v2367
    %v3104 = vpack.c.b16 %v2376, %v2368
    %v3105 = vpack.c.b16 %v2377, %v2369
    %v3106 = vpack.c.b16 %v2378, %v2370
    %v3107 = vpack.c.b16 %v2379, %v2371
    %v3108 = vpack.c.b16 %v2380, %v2372
    %v3109 = vpack.c.b16 %v2389, %v2381
    %v3110 = vpack.c.b16 %v2390, %v2382
    %v3111 = vpack.c.b16 %v2391, %v2383
    %v3112 = vpack.c.b16 %v2392, %v2384
    %v3113 = vpack.c.b16 %v2393, %v2385
    %v3114 = vpack.c.b16 %v2394, %v2386
    %v3115 = vpack.c.b16 %v2395, %v2387
    %v3116 = vpack.c.b16 %v2396, %v2388
    %v3117 = vpack.c.b16 %v2405, %v2397
    %v3118 = vpack.c.b16 %v2406, %v2398
    %v3119 = vpack.c.b16 %v2407, %v2399
    %v3120 = vpack.c.b16 %v2408, %v2400
    %v3121 = vpack.c.b16 %v2409, %v2401
    %v3122 = vpack.c.b16 %v2410, %v2402
    %v3123 = vpack.c.b16 %v2411, %v2403
    %v3124 = vpack.c.b16 %v2412, %v2404
    %v3125 = vpack.c.b16 %v2421, %v2413
    %v3126 = vpack.c.b16 %v2422, %v2414
    %v3127 = vpack.c.b16 %v2423, %v2415
    %v3128 = vpack.c.b16 %v2424, %v2416
    %v3129 = vpack.c.b16 %v2425, %v2417
    %v3130 = vpack.c.b16 %v2426, %v2418
    %v3131 = vpack.c.b16 %v2427, %v2419
    %v3132 = vpack.c.b16 %v2428, %v2420
    %v3133 = vpack.c.b16 %v2437, %v2429
    %v3134 = vpack.c.b16 %v2438, %v2430
    %v3135 = vpack.c.b16 %v2439, %v2431
    %v3136 = vpack.c.b16 %v2440, %v2432
    %v3137 = vpack.c.b16 %v2441, %v2433
    %v3138 = vpack.c.b16 %v2442, %v2434
    %v3139 = vpack.c.b16 %v2443, %v2435
    %v3140 = vpack.c.b16 %v2444, %v2436
    %v3141 = vpack.c.b16 %v2453, %v2445
    %v3142 = vpack.c.b16 %v2454, %v2446
    %v3143 = vpack.c.b16 %v2455, %v2447
    %v3144 = vpack.c.b16 %v2456, %v2448
    %v3145 = vpack.c.b16 %v2457, %v2449
    %v3146 = vpack.c.b16 %v2458, %v2450
    %v3147 = vpack.c.b16 %v2459, %v2451
    %v3148 = vpack.c.b16 %v2460, %v2452
    %v3149 = vpack.c.b16 %v2469, %v2461
    %v3150 = vpack.c.b16 %v2470, %v2462
    %v3151 = vpack.c.b16 %v2471, %v2463
    %v3152 = vpack.c.b16 %v2472, %v2464
    %v3153 = vpack.c.b16 %v2473, %v2465
    %v3154 = vpack.c.b16 %v2474, %v2466
    %v3155 = vpack.c.b16 %v2475, %v2467
    %v3156 = vpack.c.b16 %v2476, %v2468
    %v3157 = vpack.c.b16 %v2485, %v2477
    %v3158 = vpack.c.b16 %v2486, %v2478
    %v3159 = vpack.c.b16 %v2487, %v2479
    %v3160 = vpack.c.b16 %v2488, %v2480
    %v3161 = vpack.c.b16 %v2489, %v2481
    %v3162 = vpack.c.b16 %v2490, %v2482
    %v3163 = vpack.c.b16 %v2491, %v2483
    %v3164 = vpack.c.b16 %v2492, %v2484
    %v3165 = vpack.c.b16 %v2501, %v2493
    %v3166 = vpack.c.b16 %v2502, %v2494
    %v3167 = vpack.c.b16 %v2503, %v2495
    %v3168 = vpack.c.b16 %v2504, %v2496
    %v3169 = vpack.c.b16 %v2505, %v2497
    %v3170 = vpack.c.b16 %v2506, %v2498
    %v3171 = vpack.c.b16 %v2507, %v2499
    %v3172 = vpack.c.b16 %v2508, %v2500
    %v3173 = vpack.c.b16 %v2517, %v2509
    %v3174 = vpack.c.b16 %v2518, %v2510
    %v3175 = vpack.c.b16 %v2519, %v2511
    %v3176 = vpack.c.b16 %v2520, %v2512
    %v3177 = vpack.c.b16 %v2521, %v2513
    %v3178 = vpack.c.b16 %v2522, %v2514
    %v3179 = vpack.c.b16 %v2523, %v2515
    %v3180 = vpack.c.b16 %v2524, %v2516
    %v3181 = vpack.c.b16 %v2533, %v2525
    %v3182 = vpack.c.b16 %v2534, %v2526
    %v3183 = vpack.c.b16 %v2535, %v2527
    %v3184 = vpack.c.b16 %v2536, %v2528
    %v3185 = vpack.c.b16 %v2537, %v2529
    %v3186 = vpack.c.b16 %v2538, %v2530
    %v3187 = vpack.c.b16 %v2539, %v2531
    %v3188 = vpack.c.b16 %v2540, %v2532
    %v3189 = vpack.c.b16 %v2549, %v2541
    %v3190 = vpack.c.b16 %v2550, %v2542
    %v3191 = vpack.c.b16 %v2551, %v2543
    %v3192 = vpack.c.b16 %v2552, %v2544
    %v3193 = vpack.c.b16 %v2553, %v2545
    %v3194 = vpack.c.b16 %v2554, %v2546
    %v3195 = vpack.c.b16 %v2555, %v2547
    %v3196 = vpack.c.b16 %v2556, %v2548
    %v3197 = vpack.c.b16 %v2565, %v2557
    %v3198 = vpack.c.b16 %v2566, %v2558
    %v3199 = vpack.c.b16 %v2567, %v2559
    %v3200 = vpack.c.b16 %v2568, %v2560
    %v3201 = vpack.c.b16 %v2569, %v2561
    %v3202 = vpack.c.b16 %v2570, %v2562
    %v3203 = vpack.c.b16 %v2571, %v2563
    %v3204 = vpack.c.b16 %v2572, %v2564
    %v3205 = vpack.c.b16 %v2581, %v2573
    %v3206 = vpack.c.b16 %v2582, %v2574
    %v3207 = vpack.c.b16 %v2583, %v2575
    %v3208 = vpack.c.b16 %v2584, %v2576
    %v3209 = vpack.c.b16 %v2585, %v2577
    %v3210 = vpack.c.b16 %v2586, %v2578
    %v3211 = vpack.c.b16 %v2587, %v2579
    %v3212 = vpack.c.b16 %v2588, %v2580
    %v3213 = vpack.c.b16 %v2597, %v2589
    %v3214 = vpack.c.b16 %v2598, %v2590
    %v3215 = vpack.c.b16 %v2599, %v2591
    %v3216 = vpack.c.b16 %v2600, %v2592
    %v3217 = vpack.c.b16 %v2601, %v2593
    %v3218 = vpack.c.b16 %v2602, %v2594
    %v3219 = vpack.c.b16 %v2603, %v2595
    %v3220 = vpack.c.b16 %v2604, %v2596
    %v3221 = vpack.c.b16 %v2613, %v2605
    %v3222 = vpack.c.b16 %v2614, %v2606
    %v3223 = vpack.c.b16 %v2615, %v2607
    %v3224 = vpack.c.b16 %v2616, %v2608
    %v3225 = vpack.c.b16 %v2617, %v2609
    %v3226 = vpack.c.b16 %v2618, %v2610
    %v3227 = vpack.c.b16 %v2619, %v2611
    %v3228 = vpack.c.b16 %v2620, %v2612
    %v3229 = vpack.c.b16 %v2629, %v2621
    %v3230 = vpack.c.b16 %v2630, %v2622
    %v3231 = vpack.c.b16 %v2631, %v2623
    %v3232 = vpack.c.b16 %v2632, %v2624
    %v3233 = vpack.c.b16 %v2633, %v2625
    %v3234 = vpack.c.b16 %v2634, %v2626
    %v3235 = vpack.c.b16 %v2635, %v2627
    %v3236 = vpack.c.b16 %v2636, %v2628
    %v3237 = vpack.c.b16 %v2645, %v2637
    %v3238 = vpack.c.b16 %v2646, %v2638
    %v3239 = vpack.c.b16 %v2647, %v2639
    %v3240 = vpack.c.b16 %v2648, %v2640
    %v3241 = vpack.c.b16 %v2649, %v2641
    %v3242 = vpack.c.b16 %v2650, %v2642
    %v3243 = vpack.c.b16 %v2651, %v2643
    %v3244 = vpack.c.b16 %v2652, %v2644
    %v3245 = vpack.c.b16 %v2661, %v2653
    %v3246 = vpack.c.b16 %v2662, %v2654
    %v3247 = vpack.c.b16 %v2663, %v2655
    %v3248 = vpack.c.b16 %v2664, %v2656
    %v3249 = vpack.c.b16 %v2665, %v2657
    %v3250 = vpack.c.b16 %v2666, %v2658
    %v3251 = vpack.c.b16 %v2667, %v2659
    %v3252 = vpack.c.b16 %v2668, %v2660
    %v3253 = vpack.c.b16 %v2677, %v2669
    %v3254 = vpack.c.b16 %v2678, %v2670
    %v3255 = vpack.c.b16 %v2679, %v2671
    %v3256 = vpack.c.b16 %v2680, %v2672
    %v3257 = vpack.c.b16 %v2681, %v2673
    %v3258 = vpack.c.b16 %v2682, %v2674
    %v3259 = vpack.c.b16 %v2683, %v2675
    %v3260 = vpack.c.b16 %v2684, %v2676
    %v3261 = vpack.c.b16 %v2693, %v2685
    %v3262 = vpack.c.b16 %v2694, %v2686
    %v3263 = vpack.c.b16 %v2695, %v2687
    %v3264 = vpack.c.b16 %v2696, %v2688
    %v3265 = vpack.c.b16 %v2697, %v2689
    %v3266 = vpack.c.b16 %v2698, %v2690
    %v3267 = vpack.c.b16 %v2699, %v2691
    %v3268 = vpack.c.b16 %v2700, %v2692
    %v3269 = vpack.c.b16 %v2709, %v2701
    %v3270 = vpack.c.b16 %v2710, %v2702
    %v3271 = vpack.c.b16 %v2711, %v2703
    %v3272 = vpack.c.b16 %v2712, %v2704
    %v3273 = vpack.c.b16 %v2713, %v2705
    %v3274 = vpack.c.b16 %v2714, %v2706
    %v3275 = vpack.c.b16 %v2715, %v2707
    %v3276 = vpack.c.b16 %v2716, %v2708
    %v3277 = vpack.c.b16 %v2725, %v2717
    %v3278 = vpack.c.b16 %v2726, %v2718
    %v3279 = vpack.c.b16 %v2727, %v2719
    %v3280 = vpack.c.b16 %v2728, %v2720
    %v3281 = vpack.c.b16 %v2729, %v2721
    %v3282 = vpack.c.b16 %v2730, %v2722
    %v3283 = vpack.c.b16 %v2731, %v2723
    %v3284 = vpack.c.b16 %v2732, %v2724
    %v3285 = vpack.c.b16 %v2741, %v2733
    %v3286 = vpack.c.b16 %v2742, %v2734
    %v3287 = vpack.c.b16 %v2743, %v2735
    %v3288 = vpack.c.b16 %v2744, %v2736
    %v3289 = vpack.c.b16 %v2745, %v2737
    %v3290 = vpack.c.b16 %v2746, %v2738
    %v3291 = vpack.c.b16 %v2747, %v2739
    %v3292 = vpack.c.b16 %v2748, %v2740
    %v3293 = vpack.c.b16 %v2757, %v2749
    %v3294 = vpack.c.b16 %v2758, %v2750
    %v3295 = vpack.c.b16 %v2759, %v2751
    %v3296 = vpack.c.b16 %v2760, %v2752
    %v3297 = vpack.c.b16 %v2761, %v2753
    %v3298 = vpack.c.b16 %v2762, %v2754
    %v3299 = vpack.c.b16 %v2763, %v2755
    %v3300 = vpack.c.b16 %v2764, %v2756
    %v3301 = vpack.c.b16 %v2773, %v2765
    %v3302 = vpack.c.b16 %v2774, %v2766
    %v3303 = vpack.c.b16 %v2775, %v2767
    %v3304 = vpack.c.b16 %v2776, %v2768
    %v3305 = vpack.c.b16 %v2777, %v2769
    %v3306 = vpack.c.b16 %v2778, %v2770
    %v3307 = vpack.c.b16 %v2779, %v2771
    %v3308 = vpack.c.b16 %v2780, %v2772
    %v3309 = vpack.c.b16 %v2789, %v2781
    %v3310 = vpack.c.b16 %v2790, %v2782
    %v3311 = vpack.c.b16 %v2791, %v2783
    %v3312 = vpack.c.b16 %v2792, %v2784
    %v3313 = vpack.c.b16 %v2793, %v2785
    %v3314 = vpack.c.b16 %v2794, %v2786
    %v3315 = vpack.c.b16 %v2795, %v2787
    %v3316 = vpack.c.b16 %v2796, %v2788
    %v3317 = vpack.c.b16 %v2805, %v2797
    %v3318 = vpack.c.b16 %v2806, %v2798
    %v3319 = vpack.c.b16 %v2807, %v2799
    %v3320 = vpack.c.b16 %v2808, %v2800
    %v3321 = vpack.c.b16 %v2809, %v2801
    %v3322 = vpack.c.b16 %v2810, %v2802
    %v3323 = vpack.c.b16 %v2811, %v2803
    %v3324 = vpack.c.b16 %v2812, %v2804
    %3837 = vmatprep.subr.bf16.mxu0 %v2870
    %3838 = vmatpush1.bf16.msra.mxu0 %v2869
    %3839 = vmatprep.subr.bf16.mxu0 %v2862
    %3840 = vmatpush1.bf16.msra.mxu0 %v2861
    %3841 = vmatprep.subr.bf16.mxu0 %v2854
    %3842 = vmatpush1.bf16.msra.mxu0 %v2853
    %3843 = vmatprep.subr.bf16.mxu0 %v2846
    %3844 = vmatpush1.bf16.msra.mxu0 %v2845
    %3845 = vmatprep.subr.bf16.mxu0 %v2838
    %3846 = vmatpush1.bf16.msra.mxu0 %v2837
    %3847 = vmatprep.subr.bf16.mxu0 %v2830
    %3848 = vmatpush1.bf16.msra.mxu0 %v2829
    %3849 = vmatprep.subr.bf16.mxu0 %v2822
    %3850 = vmatpush1.bf16.msra.mxu0 %v2821
    %3851 = vmatprep.subr.bf16.mxu0 %v2814
    %3852 = vmatpush1.bf16.msra.mxu0 %v2813
    %3853 = vmatprep.subr.bf16.mxu0 %v2934
    %3854 = vmatpush2.bf16.msra.mxu0 %v2933
    %3855 = vmatprep.subr.bf16.mxu0 %v2926
    %3856 = vmatpush2.bf16.msra.mxu0 %v2925
    %3857 = vmatprep.subr.bf16.mxu0 %v2918
    %3858 = vmatpush2.bf16.msra.mxu0 %v2917
    %3859 = vmatprep.subr.bf16.mxu0 %v2910
    %3860 = vmatpush2.bf16.msra.mxu0 %v2909
    %3861 = vmatprep.subr.bf16.mxu0 %v2902
    %3862 = vmatpush2.bf16.msra.mxu0 %v2901
    %3863 = vmatprep.subr.bf16.mxu0 %v2894
    %3864 = vmatpush2.bf16.msra.mxu0 %v2893
    %3865 = vmatprep.subr.bf16.mxu0 %v2886
    %3866 = vmatpush2.bf16.msra.mxu0 %v2885
    %3867 = vmatprep.subr.bf16.mxu0 %v2878
    %3868 = vmatpush2.bf16.msra.mxu0 %v2877
    %3869 = vmatprep.mubr.bf16.mxu0 %v716
    %3870 = vmatmul.mubr.bf16.gmra.mxu0 %v715
    %v3871 = vpop.f32.mrf.mxu0
    %v3872 = vadd.f32 %v1240, %v3871
    %v3873 = vpop.f32.mrf.mxu0
    %v3874 = vadd.f32 %v1244, %v3873
    %v3875 = vpop.f32.mrf.mxu0
    %v3876 = vpop.f32.mrf.mxu0
    %3877 = vdwg.mxu0
    %3878 = vmatprep.subr.bf16.mxu0 %v2998
    %3879 = vmatpush1.bf16.msra.mxu0 %v2997
    %3880 = vmatprep.subr.bf16.mxu0 %v2990
    %3881 = vmatpush1.bf16.msra.mxu0 %v2989
    %3882 = vmatprep.subr.bf16.mxu0 %v2982
    %3883 = vmatpush1.bf16.msra.mxu0 %v2981
    %3884 = vmatprep.subr.bf16.mxu0 %v2974
    %3885 = vmatpush1.bf16.msra.mxu0 %v2973
    %3886 = vmatprep.subr.bf16.mxu0 %v2966
    %3887 = vmatpush1.bf16.msra.mxu0 %v2965
    %3888 = vmatprep.subr.bf16.mxu0 %v2958
    %3889 = vmatpush1.bf16.msra.mxu0 %v2957
    %3890 = vmatprep.subr.bf16.mxu0 %v2950
    %3891 = vmatpush1.bf16.msra.mxu0 %v2949
    %3892 = vmatprep.subr.bf16.mxu0 %v2942
    %3893 = vmatpush1.bf16.msra.mxu0 %v2941
    %3894 = vmatprep.subr.bf16.mxu0 %v3062
    %3895 = vmatpush2.bf16.msra.mxu0 %v3061
    %3896 = vmatprep.subr.bf16.mxu0 %v3054
    %3897 = vmatpush2.bf16.msra.mxu0 %v3053
    %3898 = vmatprep.subr.bf16.mxu0 %v3046
    %3899 = vmatpush2.bf16.msra.mxu0 %v3045
    %3900 = vmatprep.subr.bf16.mxu0 %v3038
    %3901 = vmatpush2.bf16.msra.mxu0 %v3037
    %3902 = vmatprep.subr.bf16.mxu0 %v3030
    %3903 = vmatpush2.bf16.msra.mxu0 %v3029
    %3904 = vmatprep.subr.bf16.mxu0 %v3022
    %3905 = vmatpush2.bf16.msra.mxu0 %v3021
    %3906 = vmatprep.subr.bf16.mxu0 %v3014
    %3907 = vmatpush2.bf16.msra.mxu0 %v3013
    %3908 = vmatprep.subr.bf16.mxu0 %v3006
    %3909 = vmatpush2.bf16.msra.mxu0 %v3005
    %3910 = vmatprep.mubr.bf16.mxu0 %v718
    %3911 = vmatmul.mubr.bf16.gmra.mxu0 %v717
    %v3912 = vpop.f32.mrf.mxu0
    %v3913 = vadd.f32 %v3872, %v3912
    %v3914 = vpop.f32.mrf.mxu0
    %v3915 = vadd.f32 %v3874, %v3914
    %v3916 = vpop.f32.mrf.mxu0
    %v3917 = vpop.f32.mrf.mxu0
    %3918 = vdwg.mxu0
    %3919 = vmatprep.subr.bf16.mxu0 %v3126
    %3920 = vmatpush1.bf16.msra.mxu0 %v3125
    %3921 = vmatprep.subr.bf16.mxu0 %v3118
    %3922 = vmatpush1.bf16.msra.mxu0 %v3117
    %3923 = vmatprep.subr.bf16.mxu0 %v3110
    %3924 = vmatpush1.bf16.msra.mxu0 %v3109
    %3925 = vmatprep.subr.bf16.mxu0 %v3102
    %3926 = vmatpush1.bf16.msra.mxu0 %v3101
    %3927 = vmatprep.subr.bf16.mxu0 %v3094
    %3928 = vmatpush1.bf16.msra.mxu0 %v3093
    %3929 = vmatprep.subr.bf16.mxu0 %v3086
    %3930 = vmatpush1.bf16.msra.mxu0 %v3085
    %3931 = vmatprep.subr.bf16.mxu0 %v3078
    %3932 = vmatpush1.bf16.msra.mxu0 %v3077
    %3933 = vmatprep.subr.bf16.mxu0 %v3070
    %3934 = vmatpush1.bf16.msra.mxu0 %v3069
    %3935 = vmatprep.subr.bf16.mxu0 %v3190
    %3936 = vmatpush2.bf16.msra.mxu0 %v3189
    %3937 = vmatprep.subr.bf16.mxu0 %v3182
    %3938 = vmatpush2.bf16.msra.mxu0 %v3181
    %3939 = vmatprep.subr.bf16.mxu0 %v3174
    %3940 = vmatpush2.bf16.msra.mxu0 %v3173
    %3941 = vmatprep.subr.bf16.mxu0 %v3166
    %3942 = vmatpush2.bf16.msra.mxu0 %v3165
    %3943 = vmatprep.subr.bf16.mxu0 %v3158
    %3944 = vmatpush2.bf16.msra.mxu0 %v3157
    %3945 = vmatprep.subr.bf16.mxu0 %v3150
    %3946 = vmatpush2.bf16.msra.mxu0 %v3149
    %3947 = vmatprep.subr.bf16.mxu0 %v3142
    %3948 = vmatpush2.bf16.msra.mxu0 %v3141
    %3949 = vmatprep.subr.bf16.mxu0 %v3134
    %3950 = vmatpush2.bf16.msra.mxu0 %v3133
    %3951 = vmatprep.mubr.bf16.mxu0 %v720
    %3952 = vmatmul.mubr.bf16.gmra.mxu0 %v719
    %v3953 = vpop.f32.mrf.mxu0
    %v3954 = vadd.f32 %v3913, %v3953
    %v3955 = vpop.f32.mrf.mxu0
    %v3956 = vadd.f32 %v3915, %v3955
    %v3957 = vpop.f32.mrf.mxu0
    %v3958 = vpop.f32.mrf.mxu0
    %3959 = vdwg.mxu0
    %3960 = vmatprep.subr.bf16.mxu0 %v3254
    %3961 = vmatpush1.bf16.msra.mxu0 %v3253
    %3962 = vmatprep.subr.bf16.mxu0 %v3246
    %3963 = vmatpush1.bf16.msra.mxu0 %v3245
    %3964 = vmatprep.subr.bf16.mxu0 %v3238
    %3965 = vmatpush1.bf16.msra.mxu0 %v3237
    %3966 = vmatprep.subr.bf16.mxu0 %v3230
    %3967 = vmatpush1.bf16.msra.mxu0 %v3229
    %3968 = vmatprep.subr.bf16.mxu0 %v3222
    %3969 = vmatpush1.bf16.msra.mxu0 %v3221
    %3970 = vmatprep.subr.bf16.mxu0 %v3214
    %3971 = vmatpush1.bf16.msra.mxu0 %v3213
    %3972 = vmatprep.subr.bf16.mxu0 %v3206
    %3973 = vmatpush1.bf16.msra.mxu0 %v3205
    %3974 = vmatprep.subr.bf16.mxu0 %v3198
    %3975 = vmatpush1.bf16.msra.mxu0 %v3197
    %3976 = vmatprep.subr.bf16.mxu0 %v3318
    %3977 = vmatpush2.bf16.msra.mxu0 %v3317
    %3978 = vmatprep.subr.bf16.mxu0 %v3310
    %3979 = vmatpush2.bf16.msra.mxu0 %v3309
    %3980 = vmatprep.subr.bf16.mxu0 %v3302
    %3981 = vmatpush2.bf16.msra.mxu0 %v3301
    %3982 = vmatprep.subr.bf16.mxu0 %v3294
    %3983 = vmatpush2.bf16.msra.mxu0 %v3293
    %3984 = vmatprep.subr.bf16.mxu0 %v3286
    %3985 = vmatpush2.bf16.msra.mxu0 %v3285
    %3986 = vmatprep.subr.bf16.mxu0 %v3278
    %3987 = vmatpush2.bf16.msra.mxu0 %v3277
    %3988 = vmatprep.subr.bf16.mxu0 %v3270
    %3989 = vmatpush2.bf16.msra.mxu0 %v3269
    %3990 = vmatprep.subr.bf16.mxu0 %v3262
    %3991 = vmatpush2.bf16.msra.mxu0 %v3261
    %3992 = vmatprep.mubr.bf16.mxu0 %v722
    %3993 = vmatmul.mubr.bf16.gmra.mxu0 %v721
    %v3994 = vpop.f32.mrf.mxu0
    %v3995 = vadd.f32 %v3954, %v3994
    %v3996 = vpop.f32.mrf.mxu0
    %v3997 = vadd.f32 %v3956, %v3996
    %v3998 = vpop.f32.mrf.mxu0
    %v3999 = vpop.f32.mrf.mxu0
    %4000 = vdwg.mxu0
    %4001 = vmatprep.subr.bf16.mxu0 %v2872
    %4002 = vmatpush1.bf16.msra.mxu0 %v2871
    %4003 = vmatprep.subr.bf16.mxu0 %v2864
    %4004 = vmatpush1.bf16.msra.mxu0 %v2863
    %4005 = vmatprep.subr.bf16.mxu0 %v2856
    %4006 = vmatpush1.bf16.msra.mxu0 %v2855
    %4007 = vmatprep.subr.bf16.mxu0 %v2848
    %4008 = vmatpush1.bf16.msra.mxu0 %v2847
    %4009 = vmatprep.subr.bf16.mxu0 %v2840
    %4010 = vmatpush1.bf16.msra.mxu0 %v2839
    %4011 = vmatprep.subr.bf16.mxu0 %v2832
    %4012 = vmatpush1.bf16.msra.mxu0 %v2831
    %4013 = vmatprep.subr.bf16.mxu0 %v2824
    %4014 = vmatpush1.bf16.msra.mxu0 %v2823
    %4015 = vmatprep.subr.bf16.mxu0 %v2816
    %4016 = vmatpush1.bf16.msra.mxu0 %v2815
    %4017 = vmatprep.subr.bf16.mxu0 %v2936
    %4018 = vmatpush2.bf16.msra.mxu0 %v2935
    %4019 = vmatprep.subr.bf16.mxu0 %v2928
    %4020 = vmatpush2.bf16.msra.mxu0 %v2927
    %4021 = vmatprep.subr.bf16.mxu0 %v2920
    %4022 = vmatpush2.bf16.msra.mxu0 %v2919
    %4023 = vmatprep.subr.bf16.mxu0 %v2912
    %4024 = vmatpush2.bf16.msra.mxu0 %v2911
    %4025 = vmatprep.subr.bf16.mxu0 %v2904
    %4026 = vmatpush2.bf16.msra.mxu0 %v2903
    %4027 = vmatprep.subr.bf16.mxu0 %v2896
    %4028 = vmatpush2.bf16.msra.mxu0 %v2895
    %4029 = vmatprep.subr.bf16.mxu0 %v2888
    %4030 = vmatpush2.bf16.msra.mxu0 %v2887
    %4031 = vmatprep.subr.bf16.mxu0 %v2880
    %4032 = vmatpush2.bf16.msra.mxu0 %v2879
    %4033 = vmatprep.mubr.bf16.mxu0 %v716
    %4034 = vmatmul.mubr.bf16.gmra.mxu0 %v715
    %v4035 = vpop.f32.mrf.mxu0
    %v4036 = vadd.f32 %v1248, %v4035
    %v4037 = vpop.f32.mrf.mxu0
    %v4038 = vadd.f32 %v1252, %v4037
    %v4039 = vpop.f32.mrf.mxu0
    %v4040 = vpop.f32.mrf.mxu0
    %4041 = vdwg.mxu0
    %4042 = vmatprep.subr.bf16.mxu0 %v3000
    %4043 = vmatpush1.bf16.msra.mxu0 %v2999
    %4044 = vmatprep.subr.bf16.mxu0 %v2992
    %4045 = vmatpush1.bf16.msra.mxu0 %v2991
    %4046 = vmatprep.subr.bf16.mxu0 %v2984
    %4047 = vmatpush1.bf16.msra.mxu0 %v2983
    %4048 = vmatprep.subr.bf16.mxu0 %v2976
    %4049 = vmatpush1.bf16.msra.mxu0 %v2975
    %4050 = vmatprep.subr.bf16.mxu0 %v2968
    %4051 = vmatpush1.bf16.msra.mxu0 %v2967
    %4052 = vmatprep.subr.bf16.mxu0 %v2960
    %4053 = vmatpush1.bf16.msra.mxu0 %v2959
    %4054 = vmatprep.subr.bf16.mxu0 %v2952
    %4055 = vmatpush1.bf16.msra.mxu0 %v2951
    %4056 = vmatprep.subr.bf16.mxu0 %v2944
    %4057 = vmatpush1.bf16.msra.mxu0 %v2943
    %4058 = vmatprep.subr.bf16.mxu0 %v3064
    %4059 = vmatpush2.bf16.msra.mxu0 %v3063
    %4060 = vmatprep.subr.bf16.mxu0 %v3056
    %4061 = vmatpush2.bf16.msra.mxu0 %v3055
    %4062 = vmatprep.subr.bf16.mxu0 %v3048
    %4063 = vmatpush2.bf16.msra.mxu0 %v3047
    %4064 = vmatprep.subr.bf16.mxu0 %v3040
    %4065 = vmatpush2.bf16.msra.mxu0 %v3039
    %4066 = vmatprep.subr.bf16.mxu0 %v3032
    %4067 = vmatpush2.bf16.msra.mxu0 %v3031
    %4068 = vmatprep.subr.bf16.mxu0 %v3024
    %4069 = vmatpush2.bf16.msra.mxu0 %v3023
    %4070 = vmatprep.subr.bf16.mxu0 %v3016
    %4071 = vmatpush2.bf16.msra.mxu0 %v3015
    %4072 = vmatprep.subr.bf16.mxu0 %v3008
    %4073 = vmatpush2.bf16.msra.mxu0 %v3007
    %4074 = vmatprep.mubr.bf16.mxu0 %v718
    %4075 = vmatmul.mubr.bf16.gmra.mxu0 %v717
    %v4076 = vpop.f32.mrf.mxu0
    %v4077 = vadd.f32 %v4036, %v4076
    %v4078 = vpop.f32.mrf.mxu0
    %v4079 = vadd.f32 %v4038, %v4078
    %v4080 = vpop.f32.mrf.mxu0
    %v4081 = vpop.f32.mrf.mxu0
    %4082 = vdwg.mxu0
    %4083 = vmatprep.subr.bf16.mxu0 %v3128
    %4084 = vmatpush1.bf16.msra.mxu0 %v3127
    %4085 = vmatprep.subr.bf16.mxu0 %v3120
    %4086 = vmatpush1.bf16.msra.mxu0 %v3119
    %4087 = vmatprep.subr.bf16.mxu0 %v3112
    %4088 = vmatpush1.bf16.msra.mxu0 %v3111
    %4089 = vmatprep.subr.bf16.mxu0 %v3104
    %4090 = vmatpush1.bf16.msra.mxu0 %v3103
    %4091 = vmatprep.subr.bf16.mxu0 %v3096
    %4092 = vmatpush1.bf16.msra.mxu0 %v3095
    %4093 = vmatprep.subr.bf16.mxu0 %v3088
    %4094 = vmatpush1.bf16.msra.mxu0 %v3087
    %4095 = vmatprep.subr.bf16.mxu0 %v3080
    %4096 = vmatpush1.bf16.msra.mxu0 %v3079
    %4097 = vmatprep.subr.bf16.mxu0 %v3072
    %4098 = vmatpush1.bf16.msra.mxu0 %v3071
    %4099 = vmatprep.subr.bf16.mxu0 %v3192
    %4100 = vmatpush2.bf16.msra.mxu0 %v3191
    %4101 = vmatprep.subr.bf16.mxu0 %v3184
    %4102 = vmatpush2.bf16.msra.mxu0 %v3183
    %4103 = vmatprep.subr.bf16.mxu0 %v3176
    %4104 = vmatpush2.bf16.msra.mxu0 %v3175
    %4105 = vmatprep.subr.bf16.mxu0 %v3168
    %4106 = vmatpush2.bf16.msra.mxu0 %v3167
    %4107 = vmatprep.subr.bf16.mxu0 %v3160
    %4108 = vmatpush2.bf16.msra.mxu0 %v3159
    %4109 = vmatprep.subr.bf16.mxu0 %v3152
    %4110 = vmatpush2.bf16.msra.mxu0 %v3151
    %4111 = vmatprep.subr.bf16.mxu0 %v3144
    %4112 = vmatpush2.bf16.msra.mxu0 %v3143
    %4113 = vmatprep.subr.bf16.mxu0 %v3136
    %4114 = vmatpush2.bf16.msra.mxu0 %v3135
    %4115 = vmatprep.mubr.bf16.mxu0 %v720
    %4116 = vmatmul.mubr.bf16.gmra.mxu0 %v719
    %v4117 = vpop.f32.mrf.mxu0
    %v4118 = vadd.f32 %v4077, %v4117
    %v4119 = vpop.f32.mrf.mxu0
    %v4120 = vadd.f32 %v4079, %v4119
    %v4121 = vpop.f32.mrf.mxu0
    %v4122 = vpop.f32.mrf.mxu0
    %4123 = vdwg.mxu0
    %4124 = vmatprep.subr.bf16.mxu0 %v3256
    %4125 = vmatpush1.bf16.msra.mxu0 %v3255
    %4126 = vmatprep.subr.bf16.mxu0 %v3248
    %4127 = vmatpush1.bf16.msra.mxu0 %v3247
    %4128 = vmatprep.subr.bf16.mxu0 %v3240
    %4129 = vmatpush1.bf16.msra.mxu0 %v3239
    %4130 = vmatprep.subr.bf16.mxu0 %v3232
    %4131 = vmatpush1.bf16.msra.mxu0 %v3231
    %4132 = vmatprep.subr.bf16.mxu0 %v3224
    %4133 = vmatpush1.bf16.msra.mxu0 %v3223
    %4134 = vmatprep.subr.bf16.mxu0 %v3216
    %4135 = vmatpush1.bf16.msra.mxu0 %v3215
    %4136 = vmatprep.subr.bf16.mxu0 %v3208
    %4137 = vmatpush1.bf16.msra.mxu0 %v3207
    %4138 = vmatprep.subr.bf16.mxu0 %v3200
    %4139 = vmatpush1.bf16.msra.mxu0 %v3199
    %4140 = vmatprep.subr.bf16.mxu0 %v3320
    %4141 = vmatpush2.bf16.msra.mxu0 %v3319
    %4142 = vmatprep.subr.bf16.mxu0 %v3312
    %4143 = vmatpush2.bf16.msra.mxu0 %v3311
    %4144 = vmatprep.subr.bf16.mxu0 %v3304
    %4145 = vmatpush2.bf16.msra.mxu0 %v3303
    %4146 = vmatprep.subr.bf16.mxu0 %v3296
    %4147 = vmatpush2.bf16.msra.mxu0 %v3295
    %4148 = vmatprep.subr.bf16.mxu0 %v3288
    %4149 = vmatpush2.bf16.msra.mxu0 %v3287
    %4150 = vmatprep.subr.bf16.mxu0 %v3280
    %4151 = vmatpush2.bf16.msra.mxu0 %v3279
    %4152 = vmatprep.subr.bf16.mxu0 %v3272
    %4153 = vmatpush2.bf16.msra.mxu0 %v3271
    %4154 = vmatprep.subr.bf16.mxu0 %v3264
    %4155 = vmatpush2.bf16.msra.mxu0 %v3263
    %4156 = vmatprep.mubr.bf16.mxu0 %v722
    %4157 = vmatmul.mubr.bf16.gmra.mxu0 %v721
    %v4158 = vpop.f32.mrf.mxu0
    %v4159 = vadd.f32 %v4118, %v4158
    %v4160 = vpop.f32.mrf.mxu0
    %v4161 = vadd.f32 %v4120, %v4160
    %v4162 = vpop.f32.mrf.mxu0
    %v4163 = vpop.f32.mrf.mxu0
    %4164 = vdwg.mxu0
    %4165 = vmatprep.subr.bf16.mxu0 %v2874
    %4166 = vmatpush1.bf16.msra.mxu0 %v2873
    %4167 = vmatprep.subr.bf16.mxu0 %v2866
    %4168 = vmatpush1.bf16.msra.mxu0 %v2865
    %4169 = vmatprep.subr.bf16.mxu0 %v2858
    %4170 = vmatpush1.bf16.msra.mxu0 %v2857
    %4171 = vmatprep.subr.bf16.mxu0 %v2850
    %4172 = vmatpush1.bf16.msra.mxu0 %v2849
    %4173 = vmatprep.subr.bf16.mxu0 %v2842
    %4174 = vmatpush1.bf16.msra.mxu0 %v2841
    %4175 = vmatprep.subr.bf16.mxu0 %v2834
    %4176 = vmatpush1.bf16.msra.mxu0 %v2833
    %4177 = vmatprep.subr.bf16.mxu0 %v2826
    %4178 = vmatpush1.bf16.msra.mxu0 %v2825
    %4179 = vmatprep.subr.bf16.mxu0 %v2818
    %4180 = vmatpush1.bf16.msra.mxu0 %v2817
    %4181 = vmatprep.subr.bf16.mxu0 %v2938
    %4182 = vmatpush2.bf16.msra.mxu0 %v2937
    %4183 = vmatprep.subr.bf16.mxu0 %v2930
    %4184 = vmatpush2.bf16.msra.mxu0 %v2929
    %4185 = vmatprep.subr.bf16.mxu0 %v2922
    %4186 = vmatpush2.bf16.msra.mxu0 %v2921
    %4187 = vmatprep.subr.bf16.mxu0 %v2914
    %4188 = vmatpush2.bf16.msra.mxu0 %v2913
    %4189 = vmatprep.subr.bf16.mxu0 %v2906
    %4190 = vmatpush2.bf16.msra.mxu0 %v2905
    %4191 = vmatprep.subr.bf16.mxu0 %v2898
    %4192 = vmatpush2.bf16.msra.mxu0 %v2897
    %4193 = vmatprep.subr.bf16.mxu0 %v2890
    %4194 = vmatpush2.bf16.msra.mxu0 %v2889
    %4195 = vmatprep.subr.bf16.mxu0 %v2882
    %4196 = vmatpush2.bf16.msra.mxu0 %v2881
    %4197 = vmatprep.mubr.bf16.mxu0 %v716
    %4198 = vmatmul.mubr.bf16.gmra.mxu0 %v715
    %v4199 = vpop.f32.mrf.mxu0
    %v4200 = vadd.f32 %v1256, %v4199
    %v4201 = vpop.f32.mrf.mxu0
    %v4202 = vadd.f32 %v1260, %v4201
    %v4203 = vpop.f32.mrf.mxu0
    %v4204 = vpop.f32.mrf.mxu0
    %4205 = vdwg.mxu0
    %4206 = vmatprep.subr.bf16.mxu0 %v3002
    %4207 = vmatpush1.bf16.msra.mxu0 %v3001
    %4208 = vmatprep.subr.bf16.mxu0 %v2994
    %4209 = vmatpush1.bf16.msra.mxu0 %v2993
    %4210 = vmatprep.subr.bf16.mxu0 %v2986
    %4211 = vmatpush1.bf16.msra.mxu0 %v2985
    %4212 = vmatprep.subr.bf16.mxu0 %v2978
    %4213 = vmatpush1.bf16.msra.mxu0 %v2977
    %4214 = vmatprep.subr.bf16.mxu0 %v2970
    %4215 = vmatpush1.bf16.msra.mxu0 %v2969
    %4216 = vmatprep.subr.bf16.mxu0 %v2962
    %4217 = vmatpush1.bf16.msra.mxu0 %v2961
    %4218 = vmatprep.subr.bf16.mxu0 %v2954
    %4219 = vmatpush1.bf16.msra.mxu0 %v2953
    %4220 = vmatprep.subr.bf16.mxu0 %v2946
    %4221 = vmatpush1.bf16.msra.mxu0 %v2945
    %4222 = vmatprep.subr.bf16.mxu0 %v3066
    %4223 = vmatpush2.bf16.msra.mxu0 %v3065
    %4224 = vmatprep.subr.bf16.mxu0 %v3058
    %4225 = vmatpush2.bf16.msra.mxu0 %v3057
    %4226 = vmatprep.subr.bf16.mxu0 %v3050
    %4227 = vmatpush2.bf16.msra.mxu0 %v3049
    %4228 = vmatprep.subr.bf16.mxu0 %v3042
    %4229 = vmatpush2.bf16.msra.mxu0 %v3041
    %4230 = vmatprep.subr.bf16.mxu0 %v3034
    %4231 = vmatpush2.bf16.msra.mxu0 %v3033
    %4232 = vmatprep.subr.bf16.mxu0 %v3026
    %4233 = vmatpush2.bf16.msra.mxu0 %v3025
    %4234 = vmatprep.subr.bf16.mxu0 %v3018
    %4235 = vmatpush2.bf16.msra.mxu0 %v3017
    %4236 = vmatprep.subr.bf16.mxu0 %v3010
    %4237 = vmatpush2.bf16.msra.mxu0 %v3009
    %4238 = vmatprep.mubr.bf16.mxu0 %v718
    %4239 = vmatmul.mubr.bf16.gmra.mxu0 %v717
    %v4240 = vpop.f32.mrf.mxu0
    %v4241 = vadd.f32 %v4200, %v4240
    %v4242 = vpop.f32.mrf.mxu0
    %v4243 = vadd.f32 %v4202, %v4242
    %v4244 = vpop.f32.mrf.mxu0
    %v4245 = vpop.f32.mrf.mxu0
    %4246 = vdwg.mxu0
    %4247 = vmatprep.subr.bf16.mxu0 %v3130
    %4248 = vmatpush1.bf16.msra.mxu0 %v3129
    %4249 = vmatprep.subr.bf16.mxu0 %v3122
    %4250 = vmatpush1.bf16.msra.mxu0 %v3121
    %4251 = vmatprep.subr.bf16.mxu0 %v3114
    %4252 = vmatpush1.bf16.msra.mxu0 %v3113
    %4253 = vmatprep.subr.bf16.mxu0 %v3106
    %4254 = vmatpush1.bf16.msra.mxu0 %v3105
    %4255 = vmatprep.subr.bf16.mxu0 %v3098
    %4256 = vmatpush1.bf16.msra.mxu0 %v3097
    %4257 = vmatprep.subr.bf16.mxu0 %v3090
    %4258 = vmatpush1.bf16.msra.mxu0 %v3089
    %4259 = vmatprep.subr.bf16.mxu0 %v3082
    %4260 = vmatpush1.bf16.msra.mxu0 %v3081
    %4261 = vmatprep.subr.bf16.mxu0 %v3074
    %4262 = vmatpush1.bf16.msra.mxu0 %v3073
    %4263 = vmatprep.subr.bf16.mxu0 %v3194
    %4264 = vmatpush2.bf16.msra.mxu0 %v3193
    %4265 = vmatprep.subr.bf16.mxu0 %v3186
    %4266 = vmatpush2.bf16.msra.mxu0 %v3185
    %4267 = vmatprep.subr.bf16.mxu0 %v3178
    %4268 = vmatpush2.bf16.msra.mxu0 %v3177
    %4269 = vmatprep.subr.bf16.mxu0 %v3170
    %4270 = vmatpush2.bf16.msra.mxu0 %v3169
    %4271 = vmatprep.subr.bf16.mxu0 %v3162
    %4272 = vmatpush2.bf16.msra.mxu0 %v3161
    %4273 = vmatprep.subr.bf16.mxu0 %v3154
    %4274 = vmatpush2.bf16.msra.mxu0 %v3153
    %4275 = vmatprep.subr.bf16.mxu0 %v3146
    %4276 = vmatpush2.bf16.msra.mxu0 %v3145
    %4277 = vmatprep.subr.bf16.mxu0 %v3138
    %4278 = vmatpush2.bf16.msra.mxu0 %v3137
    %4279 = vmatprep.mubr.bf16.mxu0 %v720
    %4280 = vmatmul.mubr.bf16.gmra.mxu0 %v719
    %v4281 = vpop.f32.mrf.mxu0
    %v4282 = vadd.f32 %v4241, %v4281
    %v4283 = vpop.f32.mrf.mxu0
    %v4284 = vadd.f32 %v4243, %v4283
    %v4285 = vpop.f32.mrf.mxu0
    %v4286 = vpop.f32.mrf.mxu0
    %4287 = vdwg.mxu0
    %4288 = vmatprep.subr.bf16.mxu0 %v3258
    %4289 = vmatpush1.bf16.msra.mxu0 %v3257
    %4290 = vmatprep.subr.bf16.mxu0 %v3250
    %4291 = vmatpush1.bf16.msra.mxu0 %v3249
    %4292 = vmatprep.subr.bf16.mxu0 %v3242
    %4293 = vmatpush1.bf16.msra.mxu0 %v3241
    %4294 = vmatprep.subr.bf16.mxu0 %v3234
    %4295 = vmatpush1.bf16.msra.mxu0 %v3233
    %4296 = vmatprep.subr.bf16.mxu0 %v3226
    %4297 = vmatpush1.bf16.msra.mxu0 %v3225
    %4298 = vmatprep.subr.bf16.mxu0 %v3218
    %4299 = vmatpush1.bf16.msra.mxu0 %v3217
    %4300 = vmatprep.subr.bf16.mxu0 %v3210
    %4301 = vmatpush1.bf16.msra.mxu0 %v3209
    %4302 = vmatprep.subr.bf16.mxu0 %v3202
    %4303 = vmatpush1.bf16.msra.mxu0 %v3201
    %4304 = vmatprep.subr.bf16.mxu0 %v3322
    %4305 = vmatpush2.bf16.msra.mxu0 %v3321
    %4306 = vmatprep.subr.bf16.mxu0 %v3314
    %4307 = vmatpush2.bf16.msra.mxu0 %v3313
    %4308 = vmatprep.subr.bf16.mxu0 %v3306
    %4309 = vmatpush2.bf16.msra.mxu0 %v3305
    %4310 = vmatprep.subr.bf16.mxu0 %v3298
    %4311 = vmatpush2.bf16.msra.mxu0 %v3297
    %4312 = vmatprep.subr.bf16.mxu0 %v3290
    %4313 = vmatpush2.bf16.msra.mxu0 %v3289
    %4314 = vmatprep.subr.bf16.mxu0 %v3282
    %4315 = vmatpush2.bf16.msra.mxu0 %v3281
    %4316 = vmatprep.subr.bf16.mxu0 %v3274
    %4317 = vmatpush2.bf16.msra.mxu0 %v3273
    %4318 = vmatprep.subr.bf16.mxu0 %v3266
    %4319 = vmatpush2.bf16.msra.mxu0 %v3265
    %4320 = vmatprep.mubr.bf16.mxu0 %v722
    %4321 = vmatmul.mubr.bf16.gmra.mxu0 %v721
    %v4322 = vpop.f32.mrf.mxu0
    %v4323 = vadd.f32 %v4282, %v4322
    %v4324 = vpop.f32.mrf.mxu0
    %v4325 = vadd.f32 %v4284, %v4324
    %v4326 = vpop.f32.mrf.mxu0
    %v4327 = vpop.f32.mrf.mxu0
    %4328 = vdwg.mxu0
    %4329 = vmatprep.subr.bf16.mxu0 %v2876
    %4330 = vmatpush1.bf16.msra.mxu0 %v2875
    %4331 = vmatprep.subr.bf16.mxu0 %v2868
    %4332 = vmatpush1.bf16.msra.mxu0 %v2867
    %4333 = vmatprep.subr.bf16.mxu0 %v2860
    %4334 = vmatpush1.bf16.msra.mxu0 %v2859
    %4335 = vmatprep.subr.bf16.mxu0 %v2852
    %4336 = vmatpush1.bf16.msra.mxu0 %v2851
    %4337 = vmatprep.subr.bf16.mxu0 %v2844
    %4338 = vmatpush1.bf16.msra.mxu0 %v2843
    %4339 = vmatprep.subr.bf16.mxu0 %v2836
    %4340 = vmatpush1.bf16.msra.mxu0 %v2835
    %4341 = vmatprep.subr.bf16.mxu0 %v2828
    %4342 = vmatpush1.bf16.msra.mxu0 %v2827
    %4343 = vmatprep.subr.bf16.mxu0 %v2820
    %4344 = vmatpush1.bf16.msra.mxu0 %v2819
    %4345 = vmatprep.subr.bf16.mxu0 %v2940
    %4346 = vmatpush2.bf16.msra.mxu0 %v2939
    %4347 = vmatprep.subr.bf16.mxu0 %v2932
    %4348 = vmatpush2.bf16.msra.mxu0 %v2931
    %4349 = vmatprep.subr.bf16.mxu0 %v2924
    %4350 = vmatpush2.bf16.msra.mxu0 %v2923
    %4351 = vmatprep.subr.bf16.mxu0 %v2916
    %4352 = vmatpush2.bf16.msra.mxu0 %v2915
    %4353 = vmatprep.subr.bf16.mxu0 %v2908
    %4354 = vmatpush2.bf16.msra.mxu0 %v2907
    %4355 = vmatprep.subr.bf16.mxu0 %v2900
    %4356 = vmatpush2.bf16.msra.mxu0 %v2899
    %4357 = vmatprep.subr.bf16.mxu0 %v2892
    %4358 = vmatpush2.bf16.msra.mxu0 %v2891
    %4359 = vmatprep.subr.bf16.mxu0 %v2884
    %4360 = vmatpush2.bf16.msra.mxu0 %v2883
    %4361 = vmatprep.mubr.bf16.mxu0 %v716
    %4362 = vmatmul.mubr.bf16.gmra.mxu0 %v715
    %v4363 = vpop.f32.mrf.mxu0
    %v4364 = vadd.f32 %v1264, %v4363
    %v4365 = vpop.f32.mrf.mxu0
    %v4366 = vadd.f32 %v1268, %v4365
    %v4367 = vpop.f32.mrf.mxu0
    %v4368 = vpop.f32.mrf.mxu0
    %4369 = vdwg.mxu0
    %4370 = vmatprep.subr.bf16.mxu0 %v3004
    %4371 = vmatpush1.bf16.msra.mxu0 %v3003
    %4372 = vmatprep.subr.bf16.mxu0 %v2996
    %4373 = vmatpush1.bf16.msra.mxu0 %v2995
    %4374 = vmatprep.subr.bf16.mxu0 %v2988
    %4375 = vmatpush1.bf16.msra.mxu0 %v2987
    %4376 = vmatprep.subr.bf16.mxu0 %v2980
    %4377 = vmatpush1.bf16.msra.mxu0 %v2979
    %4378 = vmatprep.subr.bf16.mxu0 %v2972
    %4379 = vmatpush1.bf16.msra.mxu0 %v2971
    %4380 = vmatprep.subr.bf16.mxu0 %v2964
    %4381 = vmatpush1.bf16.msra.mxu0 %v2963
    %4382 = vmatprep.subr.bf16.mxu0 %v2956
    %4383 = vmatpush1.bf16.msra.mxu0 %v2955
    %4384 = vmatprep.subr.bf16.mxu0 %v2948
    %4385 = vmatpush1.bf16.msra.mxu0 %v2947
    %4386 = vmatprep.subr.bf16.mxu0 %v3068
    %4387 = vmatpush2.bf16.msra.mxu0 %v3067
    %4388 = vmatprep.subr.bf16.mxu0 %v3060
    %4389 = vmatpush2.bf16.msra.mxu0 %v3059
    %4390 = vmatprep.subr.bf16.mxu0 %v3052
    %4391 = vmatpush2.bf16.msra.mxu0 %v3051
    %4392 = vmatprep.subr.bf16.mxu0 %v3044
    %4393 = vmatpush2.bf16.msra.mxu0 %v3043
    %4394 = vmatprep.subr.bf16.mxu0 %v3036
    %4395 = vmatpush2.bf16.msra.mxu0 %v3035
    %4396 = vmatprep.subr.bf16.mxu0 %v3028
    %4397 = vmatpush2.bf16.msra.mxu0 %v3027
    %4398 = vmatprep.subr.bf16.mxu0 %v3020
    %4399 = vmatpush2.bf16.msra.mxu0 %v3019
    %4400 = vmatprep.subr.bf16.mxu0 %v3012
    %4401 = vmatpush2.bf16.msra.mxu0 %v3011
    %4402 = vmatprep.mubr.bf16.mxu0 %v718
    %4403 = vmatmul.mubr.bf16.gmra.mxu0 %v717
    %v4404 = vpop.f32.mrf.mxu0
    %v4405 = vadd.f32 %v4364, %v4404
    %v4406 = vpop.f32.mrf.mxu0
    %v4407 = vadd.f32 %v4366, %v4406
    %v4408 = vpop.f32.mrf.mxu0
    %v4409 = vpop.f32.mrf.mxu0
    %4410 = vdwg.mxu0
    %4411 = vmatprep.subr.bf16.mxu0 %v3132
    %4412 = vmatpush1.bf16.msra.mxu0 %v3131
    %4413 = vmatprep.subr.bf16.mxu0 %v3124
    %4414 = vmatpush1.bf16.msra.mxu0 %v3123
    %4415 = vmatprep.subr.bf16.mxu0 %v3116
    %4416 = vmatpush1.bf16.msra.mxu0 %v3115
    %4417 = vmatprep.subr.bf16.mxu0 %v3108
    %4418 = vmatpush1.bf16.msra.mxu0 %v3107
    %4419 = vmatprep.subr.bf16.mxu0 %v3100
    %4420 = vmatpush1.bf16.msra.mxu0 %v3099
    %4421 = vmatprep.subr.bf16.mxu0 %v3092
    %4422 = vmatpush1.bf16.msra.mxu0 %v3091
    %4423 = vmatprep.subr.bf16.mxu0 %v3084
    %4424 = vmatpush1.bf16.msra.mxu0 %v3083
    %4425 = vmatprep.subr.bf16.mxu0 %v3076
    %4426 = vmatpush1.bf16.msra.mxu0 %v3075
    %4427 = vmatprep.subr.bf16.mxu0 %v3196
    %4428 = vmatpush2.bf16.msra.mxu0 %v3195
    %4429 = vmatprep.subr.bf16.mxu0 %v3188
    %4430 = vmatpush2.bf16.msra.mxu0 %v3187
    %4431 = vmatprep.subr.bf16.mxu0 %v3180
    %4432 = vmatpush2.bf16.msra.mxu0 %v3179
    %4433 = vmatprep.subr.bf16.mxu0 %v3172
    %4434 = vmatpush2.bf16.msra.mxu0 %v3171
    %4435 = vmatprep.subr.bf16.mxu0 %v3164
    %4436 = vmatpush2.bf16.msra.mxu0 %v3163
    %4437 = vmatprep.subr.bf16.mxu0 %v3156
    %4438 = vmatpush2.bf16.msra.mxu0 %v3155
    %4439 = vmatprep.subr.bf16.mxu0 %v3148
    %4440 = vmatpush2.bf16.msra.mxu0 %v3147
    %4441 = vmatprep.subr.bf16.mxu0 %v3140
    %4442 = vmatpush2.bf16.msra.mxu0 %v3139
    %4443 = vmatprep.mubr.bf16.mxu0 %v720
    %4444 = vmatmul.mubr.bf16.gmra.mxu0 %v719
    %v4445 = vpop.f32.mrf.mxu0
    %v4446 = vadd.f32 %v4405, %v4445
    %v4447 = vpop.f32.mrf.mxu0
    %v4448 = vadd.f32 %v4407, %v4447
    %v4449 = vpop.f32.mrf.mxu0
    %v4450 = vpop.f32.mrf.mxu0
    %4451 = vdwg.mxu0
    %4452 = vmatprep.subr.bf16.mxu0 %v3260
    %4453 = vmatpush1.bf16.msra.mxu0 %v3259
    %4454 = vmatprep.subr.bf16.mxu0 %v3252
    %4455 = vmatpush1.bf16.msra.mxu0 %v3251
    %4456 = vmatprep.subr.bf16.mxu0 %v3244
    %4457 = vmatpush1.bf16.msra.mxu0 %v3243
    %4458 = vmatprep.subr.bf16.mxu0 %v3236
    %4459 = vmatpush1.bf16.msra.mxu0 %v3235
    %4460 = vmatprep.subr.bf16.mxu0 %v3228
    %4461 = vmatpush1.bf16.msra.mxu0 %v3227
    %4462 = vmatprep.subr.bf16.mxu0 %v3220
    %4463 = vmatpush1.bf16.msra.mxu0 %v3219
    %4464 = vmatprep.subr.bf16.mxu0 %v3212
    %4465 = vmatpush1.bf16.msra.mxu0 %v3211
    %4466 = vmatprep.subr.bf16.mxu0 %v3204
    %4467 = vmatpush1.bf16.msra.mxu0 %v3203
    %4468 = vmatprep.subr.bf16.mxu0 %v3324
    %4469 = vmatpush2.bf16.msra.mxu0 %v3323
    %4470 = vmatprep.subr.bf16.mxu0 %v3316
    %4471 = vmatpush2.bf16.msra.mxu0 %v3315
    %4472 = vmatprep.subr.bf16.mxu0 %v3308
    %4473 = vmatpush2.bf16.msra.mxu0 %v3307
    %4474 = vmatprep.subr.bf16.mxu0 %v3300
    %4475 = vmatpush2.bf16.msra.mxu0 %v3299
    %4476 = vmatprep.subr.bf16.mxu0 %v3292
    %4477 = vmatpush2.bf16.msra.mxu0 %v3291
    %4478 = vmatprep.subr.bf16.mxu0 %v3284
    %4479 = vmatpush2.bf16.msra.mxu0 %v3283
    %4480 = vmatprep.subr.bf16.mxu0 %v3276
    %4481 = vmatpush2.bf16.msra.mxu0 %v3275
    %4482 = vmatprep.subr.bf16.mxu0 %v3268
    %4483 = vmatpush2.bf16.msra.mxu0 %v3267
    %4484 = vmatprep.mubr.bf16.mxu0 %v722
    %4485 = vmatmul.mubr.bf16.gmra.mxu0 %v721
    %v4486 = vpop.f32.mrf.mxu0
    %v4487 = vadd.f32 %v4446, %v4486
    %v4488 = vpop.f32.mrf.mxu0
    %v4489 = vadd.f32 %v4448, %v4488
    %v4490 = vpop.f32.mrf.mxu0
    %v4491 = vpop.f32.mrf.mxu0
    %4492 = vdwg.mxu0
    %v4493 = vmax.f32 %v3995, 0.0
    %v4494 = vmax.f32 %v3997, 0.0
    %v4495 = vmax.f32 %v4159, 0.0
    %v4496 = vmax.f32 %v4161, 0.0
    %v4497 = vmax.f32 %v4323, 0.0
    %v4498 = vmax.f32 %v4325, 0.0
    %v4499 = vmax.f32 %v4487, 0.0
    %v4500 = vmax.f32 %v4489, 0.0
    %v4501 = vpack.c.bf16 %v4493, %v4493
    %v4502 = vpack.c.bf16 %v4494, %v4494
    %v4503 = vpack.c.bf16 %v4495, %v4495
    %v4504 = vpack.c.bf16 %v4496, %v4496
    %v4505 = vpack.c.bf16 %v4497, %v4497
    %v4506 = vpack.c.bf16 %v4498, %v4498
    %v4507 = vpack.c.bf16 %v4499, %v4499
    %v4508 = vpack.c.bf16 %v4500, %v4500
    %v4509 = vld [vmem:[#allocation11] sm:$0xf]
    %v4510 = vld [vmem:[#allocation11 + $0x4] sm:$0xf]
    %v4511 = vld [vmem:[#allocation11 + $0x8] sm:$0xf]
    %v4512 = vld [vmem:[#allocation11 + $0xc] sm:$0xf]
    %v4513 = vld [vmem:[#allocation11 + $0x10] sm:$0xf]
    %v4514 = vld [vmem:[#allocation11 + $0x14] sm:$0xf]
    %v4515 = vld [vmem:[#allocation11 + $0x18] sm:$0xf]
    %v4516 = vld [vmem:[#allocation11 + $0x1c] sm:$0xf]
    %v4517 = vld [vmem:[#allocation11 + $0x20] sm:$0xf]
    %v4518 = vld [vmem:[#allocation11 + $0x24] sm:$0xf]
    %v4519 = vld [vmem:[#allocation11 + $0x28] sm:$0xf]
    %v4520 = vld [vmem:[#allocation11 + $0x2c] sm:$0xf]
    %v4521 = vld [vmem:[#allocation11 + $0x30] sm:$0xf]
    %v4522 = vld [vmem:[#allocation11 + $0x34] sm:$0xf]
    %v4523 = vld [vmem:[#allocation11 + $0x38] sm:$0xf]
    %v4524 = vld [vmem:[#allocation11 + $0x3c] sm:$0xf]
    %v4525 = vld [vmem:[#allocation11 + $0x40] sm:$0xf]
    %v4526 = vld [vmem:[#allocation11 + $0x44] sm:$0xf]
    %v4527 = vld [vmem:[#allocation11 + $0x48] sm:$0xf]
    %v4528 = vld [vmem:[#allocation11 + $0x4c] sm:$0xf]
    %v4529 = vld [vmem:[#allocation11 + $0x50] sm:$0xf]
    %v4530 = vld [vmem:[#allocation11 + $0x54] sm:$0xf]
    %v4531 = vld [vmem:[#allocation11 + $0x58] sm:$0xf]
    %v4532 = vld [vmem:[#allocation11 + $0x5c] sm:$0xf]
    %v4533 = vld [vmem:[#allocation11 + $0x60] sm:$0xf]
    %v4534 = vld [vmem:[#allocation11 + $0x64] sm:$0xf]
    %v4535 = vld [vmem:[#allocation11 + $0x68] sm:$0xf]
    %v4536 = vld [vmem:[#allocation11 + $0x6c] sm:$0xf]
    %v4537 = vld [vmem:[#allocation11 + $0x70] sm:$0xf]
    %v4538 = vld [vmem:[#allocation11 + $0x74] sm:$0xf]
    %v4539 = vld [vmem:[#allocation11 + $0x78] sm:$0xf]
    %v4540 = vld [vmem:[#allocation11 + $0x7c] sm:$0xf]
    %v4541 = vld [vmem:[#allocation11 + $0x80] sm:$0xf]
    %v4542 = vld [vmem:[#allocation11 + $0x84] sm:$0xf]
    %v4543 = vld [vmem:[#allocation11 + $0x88] sm:$0xf]
    %v4544 = vld [vmem:[#allocation11 + $0x8c] sm:$0xf]
    %v4545 = vld [vmem:[#allocation11 + $0x90] sm:$0xf]
    %v4546 = vld [vmem:[#allocation11 + $0x94] sm:$0xf]
    %v4547 = vld [vmem:[#allocation11 + $0x98] sm:$0xf]
    %v4548 = vld [vmem:[#allocation11 + $0x9c] sm:$0xf]
    %v4549 = vld [vmem:[#allocation11 + $0xa0] sm:$0xf]
    %v4550 = vld [vmem:[#allocation11 + $0xa4] sm:$0xf]
    %v4551 = vld [vmem:[#allocation11 + $0xa8] sm:$0xf]
    %v4552 = vld [vmem:[#allocation11 + $0xac] sm:$0xf]
    %v4553 = vld [vmem:[#allocation11 + $0xb0] sm:$0xf]
    %v4554 = vld [vmem:[#allocation11 + $0xb4] sm:$0xf]
    %v4555 = vld [vmem:[#allocation11 + $0xb8] sm:$0xf]
    %v4556 = vld [vmem:[#allocation11 + $0xbc] sm:$0xf]
    %v4557 = vld [vmem:[#allocation11 + $0xc0] sm:$0xf]
    %v4558 = vld [vmem:[#allocation11 + $0xc4] sm:$0xf]
    %v4559 = vld [vmem:[#allocation11 + $0xc8] sm:$0xf]
    %v4560 = vld [vmem:[#allocation11 + $0xcc] sm:$0xf]
    %v4561 = vld [vmem:[#allocation11 + $0xd0] sm:$0xf]
    %v4562 = vld [vmem:[#allocation11 + $0xd4] sm:$0xf]
    %v4563 = vld [vmem:[#allocation11 + $0xd8] sm:$0xf]
    %v4564 = vld [vmem:[#allocation11 + $0xdc] sm:$0xf]
    %v4565 = vld [vmem:[#allocation11 + $0xe0] sm:$0xf]
    %v4566 = vld [vmem:[#allocation11 + $0xe4] sm:$0xf]
    %v4567 = vld [vmem:[#allocation11 + $0xe8] sm:$0xf]
    %v4568 = vld [vmem:[#allocation11 + $0xec] sm:$0xf]
    %v4569 = vld [vmem:[#allocation11 + $0xf0] sm:$0xf]
    %v4570 = vld [vmem:[#allocation11 + $0xf4] sm:$0xf]
    %v4571 = vld [vmem:[#allocation11 + $0xf8] sm:$0xf]
    %v4572 = vld [vmem:[#allocation11 + $0xfc] sm:$0xf]
    %v4573 = vld [vmem:[#allocation11 + $0x100] sm:$0xf]
    %v4574 = vld [vmem:[#allocation11 + $0x104] sm:$0xf]
    %v4575 = vld [vmem:[#allocation11 + $0x108] sm:$0xf]
    %v4576 = vld [vmem:[#allocation11 + $0x10c] sm:$0xf]
    %v4577 = vld [vmem:[#allocation11 + $0x110] sm:$0xf]
    %v4578 = vld [vmem:[#allocation11 + $0x114] sm:$0xf]
    %v4579 = vld [vmem:[#allocation11 + $0x118] sm:$0xf]
    %v4580 = vld [vmem:[#allocation11 + $0x11c] sm:$0xf]
    %v4581 = vld [vmem:[#allocation11 + $0x120] sm:$0xf]
    %v4582 = vld [vmem:[#allocation11 + $0x124] sm:$0xf]
    %v4583 = vld [vmem:[#allocation11 + $0x128] sm:$0xf]
    %v4584 = vld [vmem:[#allocation11 + $0x12c] sm:$0xf]
    %v4585 = vld [vmem:[#allocation11 + $0x130] sm:$0xf]
    %v4586 = vld [vmem:[#allocation11 + $0x134] sm:$0xf]
    %v4587 = vld [vmem:[#allocation11 + $0x138] sm:$0xf]
    %v4588 = vld [vmem:[#allocation11 + $0x13c] sm:$0xf]
    %v4589 = vld [vmem:[#allocation11 + $0x140] sm:$0xf]
    %v4590 = vld [vmem:[#allocation11 + $0x144] sm:$0xf]
    %v4591 = vld [vmem:[#allocation11 + $0x148] sm:$0xf]
    %v4592 = vld [vmem:[#allocation11 + $0x14c] sm:$0xf]
    %v4593 = vld [vmem:[#allocation11 + $0x150] sm:$0xf]
    %v4594 = vld [vmem:[#allocation11 + $0x154] sm:$0xf]
    %v4595 = vld [vmem:[#allocation11 + $0x158] sm:$0xf]
    %v4596 = vld [vmem:[#allocation11 + $0x15c] sm:$0xf]
    %v4597 = vld [vmem:[#allocation11 + $0x160] sm:$0xf]
    %v4598 = vld [vmem:[#allocation11 + $0x164] sm:$0xf]
    %v4599 = vld [vmem:[#allocation11 + $0x168] sm:$0xf]
    %v4600 = vld [vmem:[#allocation11 + $0x16c] sm:$0xf]
    %v4601 = vld [vmem:[#allocation11 + $0x170] sm:$0xf]
    %v4602 = vld [vmem:[#allocation11 + $0x174] sm:$0xf]
    %v4603 = vld [vmem:[#allocation11 + $0x178] sm:$0xf]
    %v4604 = vld [vmem:[#allocation11 + $0x17c] sm:$0xf]
    %v4605 = vld [vmem:[#allocation11 + $0x180] sm:$0xf]
    %v4606 = vld [vmem:[#allocation11 + $0x184] sm:$0xf]
    %v4607 = vld [vmem:[#allocation11 + $0x188] sm:$0xf]
    %v4608 = vld [vmem:[#allocation11 + $0x18c] sm:$0xf]
    %v4609 = vld [vmem:[#allocation11 + $0x190] sm:$0xf]
    %v4610 = vld [vmem:[#allocation11 + $0x194] sm:$0xf]
    %v4611 = vld [vmem:[#allocation11 + $0x198] sm:$0xf]
    %v4612 = vld [vmem:[#allocation11 + $0x19c] sm:$0xf]
    %v4613 = vld [vmem:[#allocation11 + $0x1a0] sm:$0xf]
    %v4614 = vld [vmem:[#allocation11 + $0x1a4] sm:$0xf]
    %v4615 = vld [vmem:[#allocation11 + $0x1a8] sm:$0xf]
    %v4616 = vld [vmem:[#allocation11 + $0x1ac] sm:$0xf]
    %v4617 = vld [vmem:[#allocation11 + $0x1b0] sm:$0xf]
    %v4618 = vld [vmem:[#allocation11 + $0x1b4] sm:$0xf]
    %v4619 = vld [vmem:[#allocation11 + $0x1b8] sm:$0xf]
    %v4620 = vld [vmem:[#allocation11 + $0x1bc] sm:$0xf]
    %v4621 = vld [vmem:[#allocation11 + $0x1c0] sm:$0xf]
    %v4622 = vld [vmem:[#allocation11 + $0x1c4] sm:$0xf]
    %v4623 = vld [vmem:[#allocation11 + $0x1c8] sm:$0xf]
    %v4624 = vld [vmem:[#allocation11 + $0x1cc] sm:$0xf]
    %v4625 = vld [vmem:[#allocation11 + $0x1d0] sm:$0xf]
    %v4626 = vld [vmem:[#allocation11 + $0x1d4] sm:$0xf]
    %v4627 = vld [vmem:[#allocation11 + $0x1d8] sm:$0xf]
    %v4628 = vld [vmem:[#allocation11 + $0x1dc] sm:$0xf]
    %v4629 = vld [vmem:[#allocation11 + $0x1e0] sm:$0xf]
    %v4630 = vld [vmem:[#allocation11 + $0x1e4] sm:$0xf]
    %v4631 = vld [vmem:[#allocation11 + $0x1e8] sm:$0xf]
    %v4632 = vld [vmem:[#allocation11 + $0x1ec] sm:$0xf]
    %v4633 = vld [vmem:[#allocation11 + $0x1f0] sm:$0xf]
    %v4634 = vld [vmem:[#allocation11 + $0x1f4] sm:$0xf]
    %v4635 = vld [vmem:[#allocation11 + $0x1f8] sm:$0xf]
    %v4636 = vld [vmem:[#allocation11 + $0x1fc] sm:$0xf]
    %v4637 = vld [vmem:[#allocation13] sm:$0x1]
    %v4639 = vlaneseq
    %v4640 = vshrl.u32 %v4639, 7
    %v4641 = vsub.s32 0, %v4640
    %v4642 = vrot.slane %v4637, %v4641
    %v4772 = vunpack.c.l.b16 %v4509
    %v4773 = vunpack.c.l.b16 %v4510
    %v4774 = vunpack.c.l.b16 %v4511
    %v4775 = vunpack.c.l.b16 %v4512
    %v4776 = vunpack.c.l.b16 %v4513
    %v4777 = vunpack.c.l.b16 %v4514
    %v4778 = vunpack.c.l.b16 %v4515
    %v4779 = vunpack.c.l.b16 %v4516
    %v4780 = vunpack.c.l.b16 %v4517
    %v4781 = vunpack.c.l.b16 %v4518
    %v4782 = vunpack.c.l.b16 %v4519
    %v4783 = vunpack.c.l.b16 %v4520
    %v4784 = vunpack.c.l.b16 %v4521
    %v4785 = vunpack.c.l.b16 %v4522
    %v4786 = vunpack.c.l.b16 %v4523
    %v4787 = vunpack.c.l.b16 %v4524
    %v4788 = vunpack.c.l.b16 %v4525
    %v4789 = vunpack.c.l.b16 %v4526
    %v4790 = vunpack.c.l.b16 %v4527
    %v4791 = vunpack.c.l.b16 %v4528
    %v4792 = vunpack.c.l.b16 %v4529
    %v4793 = vunpack.c.l.b16 %v4530
    %v4794 = vunpack.c.l.b16 %v4531
    %v4795 = vunpack.c.l.b16 %v4532
    %v4796 = vunpack.c.l.b16 %v4533
    %v4797 = vunpack.c.l.b16 %v4534
    %v4798 = vunpack.c.l.b16 %v4535
    %v4799 = vunpack.c.l.b16 %v4536
    %v4800 = vunpack.c.l.b16 %v4537
    %v4801 = vunpack.c.l.b16 %v4538
    %v4802 = vunpack.c.l.b16 %v4539
    %v4803 = vunpack.c.l.b16 %v4540
    %v4804 = vunpack.c.l.b16 %v4541
    %v4805 = vunpack.c.l.b16 %v4542
    %v4806 = vunpack.c.l.b16 %v4543
    %v4807 = vunpack.c.l.b16 %v4544
    %v4808 = vunpack.c.l.b16 %v4545
    %v4809 = vunpack.c.l.b16 %v4546
    %v4810 = vunpack.c.l.b16 %v4547
    %v4811 = vunpack.c.l.b16 %v4548
    %v4812 = vunpack.c.l.b16 %v4549
    %v4813 = vunpack.c.l.b16 %v4550
    %v4814 = vunpack.c.l.b16 %v4551
    %v4815 = vunpack.c.l.b16 %v4552
    %v4816 = vunpack.c.l.b16 %v4553
    %v4817 = vunpack.c.l.b16 %v4554
    %v4818 = vunpack.c.l.b16 %v4555
    %v4819 = vunpack.c.l.b16 %v4556
    %v4820 = vunpack.c.l.b16 %v4557
    %v4821 = vunpack.c.l.b16 %v4558
    %v4822 = vunpack.c.l.b16 %v4559
    %v4823 = vunpack.c.l.b16 %v4560
    %v4824 = vunpack.c.l.b16 %v4561
    %v4825 = vunpack.c.l.b16 %v4562
    %v4826 = vunpack.c.l.b16 %v4563
    %v4827 = vunpack.c.l.b16 %v4564
    %v4828 = vunpack.c.l.b16 %v4565
    %v4829 = vunpack.c.l.b16 %v4566
    %v4830 = vunpack.c.l.b16 %v4567
    %v4831 = vunpack.c.l.b16 %v4568
    %v4832 = vunpack.c.l.b16 %v4569
    %v4833 = vunpack.c.l.b16 %v4570
    %v4834 = vunpack.c.l.b16 %v4571
    %v4835 = vunpack.c.l.b16 %v4572
    %v4836 = vunpack.c.l.b16 %v4573
    %v4837 = vunpack.c.l.b16 %v4574
    %v4838 = vunpack.c.l.b16 %v4575
    %v4839 = vunpack.c.l.b16 %v4576
    %v4840 = vunpack.c.l.b16 %v4577
    %v4841 = vunpack.c.l.b16 %v4578
    %v4842 = vunpack.c.l.b16 %v4579
    %v4843 = vunpack.c.l.b16 %v4580
    %v4844 = vunpack.c.l.b16 %v4581
    %v4845 = vunpack.c.l.b16 %v4582
    %v4846 = vunpack.c.l.b16 %v4583
    %v4847 = vunpack.c.l.b16 %v4584
    %v4848 = vunpack.c.l.b16 %v4585
    %v4849 = vunpack.c.l.b16 %v4586
    %v4850 = vunpack.c.l.b16 %v4587
    %v4851 = vunpack.c.l.b16 %v4588
    %v4852 = vunpack.c.l.b16 %v4589
    %v4853 = vunpack.c.l.b16 %v4590
    %v4854 = vunpack.c.l.b16 %v4591
    %v4855 = vunpack.c.l.b16 %v4592
    %v4856 = vunpack.c.l.b16 %v4593
    %v4857 = vunpack.c.l.b16 %v4594
    %v4858 = vunpack.c.l.b16 %v4595
    %v4859 = vunpack.c.l.b16 %v4596
    %v4860 = vunpack.c.l.b16 %v4597
    %v4861 = vunpack.c.l.b16 %v4598
    %v4862 = vunpack.c.l.b16 %v4599
    %v4863 = vunpack.c.l.b16 %v4600
    %v4864 = vunpack.c.l.b16 %v4601
    %v4865 = vunpack.c.l.b16 %v4602
    %v4866 = vunpack.c.l.b16 %v4603
    %v4867 = vunpack.c.l.b16 %v4604
    %v4868 = vunpack.c.l.b16 %v4605
    %v4869 = vunpack.c.l.b16 %v4606
    %v4870 = vunpack.c.l.b16 %v4607
    %v4871 = vunpack.c.l.b16 %v4608
    %v4872 = vunpack.c.l.b16 %v4609
    %v4873 = vunpack.c.l.b16 %v4610
    %v4874 = vunpack.c.l.b16 %v4611
    %v4875 = vunpack.c.l.b16 %v4612
    %v4876 = vunpack.c.l.b16 %v4613
    %v4877 = vunpack.c.l.b16 %v4614
    %v4878 = vunpack.c.l.b16 %v4615
    %v4879 = vunpack.c.l.b16 %v4616
    %v4880 = vunpack.c.l.b16 %v4617
    %v4881 = vunpack.c.l.b16 %v4618
    %v4882 = vunpack.c.l.b16 %v4619
    %v4883 = vunpack.c.l.b16 %v4620
    %v4884 = vunpack.c.l.b16 %v4621
    %v4885 = vunpack.c.l.b16 %v4622
    %v4886 = vunpack.c.l.b16 %v4623
    %v4887 = vunpack.c.l.b16 %v4624
    %v4888 = vunpack.c.l.b16 %v4625
    %v4889 = vunpack.c.l.b16 %v4626
    %v4890 = vunpack.c.l.b16 %v4627
    %v4891 = vunpack.c.l.b16 %v4628
    %v4892 = vunpack.c.l.b16 %v4629
    %v4893 = vunpack.c.l.b16 %v4630
    %v4894 = vunpack.c.l.b16 %v4631
    %v4895 = vunpack.c.l.b16 %v4632
    %v4896 = vunpack.c.l.b16 %v4633
    %v4897 = vunpack.c.l.b16 %v4634
    %v4898 = vunpack.c.l.b16 %v4635
    %v4899 = vunpack.c.l.b16 %v4636
    %v4900 = vpack.c.b16 %v4773, %v4772
    %v4901 = vpack.c.b16 %v4775, %v4774
    %v4902 = vpack.c.b16 %v4777, %v4776
    %v4903 = vpack.c.b16 %v4779, %v4778
    %v4904 = vpack.c.b16 %v4781, %v4780
    %v4905 = vpack.c.b16 %v4783, %v4782
    %v4906 = vpack.c.b16 %v4785, %v4784
    %v4907 = vpack.c.b16 %v4787, %v4786
    %v4908 = vpack.c.b16 %v4789, %v4788
    %v4909 = vpack.c.b16 %v4791, %v4790
    %v4910 = vpack.c.b16 %v4793, %v4792
    %v4911 = vpack.c.b16 %v4795, %v4794
    %v4912 = vpack.c.b16 %v4797, %v4796
    %v4913 = vpack.c.b16 %v4799, %v4798
    %v4914 = vpack.c.b16 %v4801, %v4800
    %v4915 = vpack.c.b16 %v4803, %v4802
    %v4916 = vpack.c.b16 %v4805, %v4804
    %v4917 = vpack.c.b16 %v4807, %v4806
    %v4918 = vpack.c.b16 %v4809, %v4808
    %v4919 = vpack.c.b16 %v4811, %v4810
    %v4920 = vpack.c.b16 %v4813, %v4812
    %v4921 = vpack.c.b16 %v4815, %v4814
    %v4922 = vpack.c.b16 %v4817, %v4816
    %v4923 = vpack.c.b16 %v4819, %v4818
    %v4924 = vpack.c.b16 %v4821, %v4820
    %v4925 = vpack.c.b16 %v4823, %v4822
    %v4926 = vpack.c.b16 %v4825, %v4824
    %v4927 = vpack.c.b16 %v4827, %v4826
    %v4928 = vpack.c.b16 %v4829, %v4828
    %v4929 = vpack.c.b16 %v4831, %v4830
    %v4930 = vpack.c.b16 %v4833, %v4832
    %v4931 = vpack.c.b16 %v4835, %v4834
    %v4932 = vpack.c.b16 %v4837, %v4836
    %v4933 = vpack.c.b16 %v4839, %v4838
    %v4934 = vpack.c.b16 %v4841, %v4840
    %v4935 = vpack.c.b16 %v4843, %v4842
    %v4936 = vpack.c.b16 %v4845, %v4844
    %v4937 = vpack.c.b16 %v4847, %v4846
    %v4938 = vpack.c.b16 %v4849, %v4848
    %v4939 = vpack.c.b16 %v4851, %v4850
    %v4940 = vpack.c.b16 %v4853, %v4852
    %v4941 = vpack.c.b16 %v4855, %v4854
    %v4942 = vpack.c.b16 %v4857, %v4856
    %v4943 = vpack.c.b16 %v4859, %v4858
    %v4944 = vpack.c.b16 %v4861, %v4860
    %v4945 = vpack.c.b16 %v4863, %v4862
    %v4946 = vpack.c.b16 %v4865, %v4864
    %v4947 = vpack.c.b16 %v4867, %v4866
    %v4948 = vpack.c.b16 %v4869, %v4868
    %v4949 = vpack.c.b16 %v4871, %v4870
    %v4950 = vpack.c.b16 %v4873, %v4872
    %v4951 = vpack.c.b16 %v4875, %v4874
    %v4952 = vpack.c.b16 %v4877, %v4876
    %v4953 = vpack.c.b16 %v4879, %v4878
    %v4954 = vpack.c.b16 %v4881, %v4880
    %v4955 = vpack.c.b16 %v4883, %v4882
    %v4956 = vpack.c.b16 %v4885, %v4884
    %v4957 = vpack.c.b16 %v4887, %v4886
    %v4958 = vpack.c.b16 %v4889, %v4888
    %v4959 = vpack.c.b16 %v4891, %v4890
    %v4960 = vpack.c.b16 %v4893, %v4892
    %v4961 = vpack.c.b16 %v4895, %v4894
    %v4962 = vpack.c.b16 %v4897, %v4896
    %v4963 = vpack.c.b16 %v4899, %v4898
    %5028 = vmatprep.subr.bf16.mxu0 0
    %5029 = vmatpush1.bf16.msra.mxu0 %v4907
    %5030 = vmatprep.subr.bf16.mxu0 0
    %5031 = vmatpush1.bf16.msra.mxu0 %v4906
    %5032 = vmatprep.subr.bf16.mxu0 0
    %5033 = vmatpush1.bf16.msra.mxu0 %v4905
    %5034 = vmatprep.subr.bf16.mxu0 0
    %5035 = vmatpush1.bf16.msra.mxu0 %v4904
    %5036 = vmatprep.subr.bf16.mxu0 0
    %5037 = vmatpush1.bf16.msra.mxu0 %v4903
    %5038 = vmatprep.subr.bf16.mxu0 0
    %5039 = vmatpush1.bf16.msra.mxu0 %v4902
    %5040 = vmatprep.subr.bf16.mxu0 0
    %5041 = vmatpush1.bf16.msra.mxu0 %v4901
    %5042 = vmatprep.subr.bf16.mxu0 0
    %5043 = vmatpush1.bf16.msra.mxu0 %v4900
    %5044 = vmatprep.subr.bf16.mxu0 0
    %5045 = vmatpush2.bf16.msra.mxu0 %v4915
    %5046 = vmatprep.subr.bf16.mxu0 0
    %5047 = vmatpush2.bf16.msra.mxu0 %v4914
    %5048 = vmatprep.subr.bf16.mxu0 0
    %5049 = vmatpush2.bf16.msra.mxu0 %v4913
    %5050 = vmatprep.subr.bf16.mxu0 0
    %5051 = vmatpush2.bf16.msra.mxu0 %v4912
    %5052 = vmatprep.subr.bf16.mxu0 0
    %5053 = vmatpush2.bf16.msra.mxu0 %v4911
    %5054 = vmatprep.subr.bf16.mxu0 0
    %5055 = vmatpush2.bf16.msra.mxu0 %v4910
    %5056 = vmatprep.subr.bf16.mxu0 0
    %5057 = vmatpush2.bf16.msra.mxu0 %v4909
    %5058 = vmatprep.subr.bf16.mxu0 0
    %5059 = vmatpush2.bf16.msra.mxu0 %v4908
    %5060 = vmatprep.mubr.bf16.mxu0 %v4502
    %5061 = vmatmul.mubr.bf16.gmra.mxu0 %v4501
    %v5062 = vpop.f32.mrf.mxu0
    %v5063 = vadd.f32 %v4642, %v5062
    %v5064 = vpop.f32.mrf.mxu0
    %v5065 = vpop.f32.mrf.mxu0
    %v5066 = vpop.f32.mrf.mxu0
    %5067 = vdwg.mxu0
    %5068 = vmatprep.subr.bf16.mxu0 0
    %5069 = vmatpush1.bf16.msra.mxu0 %v4923
    %5070 = vmatprep.subr.bf16.mxu0 0
    %5071 = vmatpush1.bf16.msra.mxu0 %v4922
    %5072 = vmatprep.subr.bf16.mxu0 0
    %5073 = vmatpush1.bf16.msra.mxu0 %v4921
    %5074 = vmatprep.subr.bf16.mxu0 0
    %5075 = vmatpush1.bf16.msra.mxu0 %v4920
    %5076 = vmatprep.subr.bf16.mxu0 0
    %5077 = vmatpush1.bf16.msra.mxu0 %v4919
    %5078 = vmatprep.subr.bf16.mxu0 0
    %5079 = vmatpush1.bf16.msra.mxu0 %v4918
    %5080 = vmatprep.subr.bf16.mxu0 0
    %5081 = vmatpush1.bf16.msra.mxu0 %v4917
    %5082 = vmatprep.subr.bf16.mxu0 0
    %5083 = vmatpush1.bf16.msra.mxu0 %v4916
    %5084 = vmatprep.subr.bf16.mxu0 0
    %5085 = vmatpush2.bf16.msra.mxu0 %v4931
    %5086 = vmatprep.subr.bf16.mxu0 0
    %5087 = vmatpush2.bf16.msra.mxu0 %v4930
    %5088 = vmatprep.subr.bf16.mxu0 0
    %5089 = vmatpush2.bf16.msra.mxu0 %v4929
    %5090 = vmatprep.subr.bf16.mxu0 0
    %5091 = vmatpush2.bf16.msra.mxu0 %v4928
    %5092 = vmatprep.subr.bf16.mxu0 0
    %5093 = vmatpush2.bf16.msra.mxu0 %v4927
    %5094 = vmatprep.subr.bf16.mxu0 0
    %5095 = vmatpush2.bf16.msra.mxu0 %v4926
    %5096 = vmatprep.subr.bf16.mxu0 0
    %5097 = vmatpush2.bf16.msra.mxu0 %v4925
    %5098 = vmatprep.subr.bf16.mxu0 0
    %5099 = vmatpush2.bf16.msra.mxu0 %v4924
    %5100 = vmatprep.mubr.bf16.mxu0 %v4504
    %5101 = vmatmul.mubr.bf16.gmra.mxu0 %v4503
    %v5102 = vpop.f32.mrf.mxu0
    %v5103 = vadd.f32 %v5063, %v5102
    %v5104 = vpop.f32.mrf.mxu0
    %v5105 = vpop.f32.mrf.mxu0
    %v5106 = vpop.f32.mrf.mxu0
    %5107 = vdwg.mxu0
    %5108 = vmatprep.subr.bf16.mxu0 0
    %5109 = vmatpush1.bf16.msra.mxu0 %v4939
    %5110 = vmatprep.subr.bf16.mxu0 0
    %5111 = vmatpush1.bf16.msra.mxu0 %v4938
    %5112 = vmatprep.subr.bf16.mxu0 0
    %5113 = vmatpush1.bf16.msra.mxu0 %v4937
    %5114 = vmatprep.subr.bf16.mxu0 0
    %5115 = vmatpush1.bf16.msra.mxu0 %v4936
    %5116 = vmatprep.subr.bf16.mxu0 0
    %5117 = vmatpush1.bf16.msra.mxu0 %v4935
    %5118 = vmatprep.subr.bf16.mxu0 0
    %5119 = vmatpush1.bf16.msra.mxu0 %v4934
    %5120 = vmatprep.subr.bf16.mxu0 0
    %5121 = vmatpush1.bf16.msra.mxu0 %v4933
    %5122 = vmatprep.subr.bf16.mxu0 0
    %5123 = vmatpush1.bf16.msra.mxu0 %v4932
    %5124 = vmatprep.subr.bf16.mxu0 0
    %5125 = vmatpush2.bf16.msra.mxu0 %v4947
    %5126 = vmatprep.subr.bf16.mxu0 0
    %5127 = vmatpush2.bf16.msra.mxu0 %v4946
    %5128 = vmatprep.subr.bf16.mxu0 0
    %5129 = vmatpush2.bf16.msra.mxu0 %v4945
    %5130 = vmatprep.subr.bf16.mxu0 0
    %5131 = vmatpush2.bf16.msra.mxu0 %v4944
    %5132 = vmatprep.subr.bf16.mxu0 0
    %5133 = vmatpush2.bf16.msra.mxu0 %v4943
    %5134 = vmatprep.subr.bf16.mxu0 0
    %5135 = vmatpush2.bf16.msra.mxu0 %v4942
    %5136 = vmatprep.subr.bf16.mxu0 0
    %5137 = vmatpush2.bf16.msra.mxu0 %v4941
    %5138 = vmatprep.subr.bf16.mxu0 0
    %5139 = vmatpush2.bf16.msra.mxu0 %v4940
    %5140 = vmatprep.mubr.bf16.mxu0 %v4506
    %5141 = vmatmul.mubr.bf16.gmra.mxu0 %v4505
    %v5142 = vpop.f32.mrf.mxu0
    %v5143 = vadd.f32 %v5103, %v5142
    %v5144 = vpop.f32.mrf.mxu0
    %v5145 = vpop.f32.mrf.mxu0
    %v5146 = vpop.f32.mrf.mxu0
    %5147 = vdwg.mxu0
    %5148 = vmatprep.subr.bf16.mxu0 0
    %5149 = vmatpush1.bf16.msra.mxu0 %v4955
    %5150 = vmatprep.subr.bf16.mxu0 0
    %5151 = vmatpush1.bf16.msra.mxu0 %v4954
    %5152 = vmatprep.subr.bf16.mxu0 0
    %5153 = vmatpush1.bf16.msra.mxu0 %v4953
    %5154 = vmatprep.subr.bf16.mxu0 0
    %5155 = vmatpush1.bf16.msra.mxu0 %v4952
    %5156 = vmatprep.subr.bf16.mxu0 0
    %5157 = vmatpush1.bf16.msra.mxu0 %v4951
    %5158 = vmatprep.subr.bf16.mxu0 0
    %5159 = vmatpush1.bf16.msra.mxu0 %v4950
    %5160 = vmatprep.subr.bf16.mxu0 0
    %5161 = vmatpush1.bf16.msra.mxu0 %v4949
    %5162 = vmatprep.subr.bf16.mxu0 0
    %5163 = vmatpush1.bf16.msra.mxu0 %v4948
    %5164 = vmatprep.subr.bf16.mxu0 0
    %5165 = vmatpush2.bf16.msra.mxu0 %v4963
    %5166 = vmatprep.subr.bf16.mxu0 0
    %5167 = vmatpush2.bf16.msra.mxu0 %v4962
    %5168 = vmatprep.subr.bf16.mxu0 0
    %5169 = vmatpush2.bf16.msra.mxu0 %v4961
    %5170 = vmatprep.subr.bf16.mxu0 0
    %5171 = vmatpush2.bf16.msra.mxu0 %v4960
    %5172 = vmatprep.subr.bf16.mxu0 0
    %5173 = vmatpush2.bf16.msra.mxu0 %v4959
    %5174 = vmatprep.subr.bf16.mxu0 0
    %5175 = vmatpush2.bf16.msra.mxu0 %v4958
    %5176 = vmatprep.subr.bf16.mxu0 0
    %5177 = vmatpush2.bf16.msra.mxu0 %v4957
    %5178 = vmatprep.subr.bf16.mxu0 0
    %5179 = vmatpush2.bf16.msra.mxu0 %v4956
    %5180 = vmatprep.mubr.bf16.mxu0 %v4508
    %5181 = vmatmul.mubr.bf16.gmra.mxu0 %v4507
    %v5182 = vpop.f32.mrf.mxu0
    %v5183 = vadd.f32 %v5143, %v5182
    %v5184 = vpop.f32.mrf.mxu0
    %v5185 = vpop.f32.mrf.mxu0
    %v5186 = vpop.f32.mrf.mxu0
    %5187 = vdwg.mxu0
    %5188 = vst [vmem:[#allocation14] sm:$0xff] %v5183
    // Predicated region
    $region58: #{tpu_custom_call.1} parent=1 // pred_check
      _
    $region59: #{tpu_custom_call.1} parent=1 // pred_check_branch
      %5190 = sbr.rel (0) target = $region61
    $region60: #{tpu_custom_call.1} parent=1 // pred_region
      %s5192 = ssub.s32 128, 128
      %5193 = vsyncadd [#allocation4], %s5192
      %s5195 = sshll.u32 [#allocation14], 4
      %s5196 = int_to_ptr.vmem [resolvable:$true] %s5195
      %5198 = dma.vmem_to_hbm [thread:$0]  %s5196, 128, %s7, [#allocation4]
    $region61: #{tpu_custom_call.1} parent=1 // pred_fallthru
      _
    // Predicated region
    $region62: #{tpu_custom_call.1} parent=1 // pred_check
      _
    $region63: #{tpu_custom_call.1} parent=1 // pred_check_branch
      %5200 = sbr.rel (0) target = $region65
    $region64: #{tpu_custom_call.1} parent=1 // pred_region
      %5201 = dma.done [#allocation4], 128
    $region65: #{tpu_custom_call.1} parent=1 // pred_fallthru
      _
    %5202 = vsyncpa [#allocation3], 1
    %5203 = vsyncpa [#allocation6], 1
    %5204 = vsyncpa [#allocation9], 1
    %5205 = vsyncpa [#allocation12], 1
    %5206 = vsyncpa [#allocation4], 1

</llo_original>
